<compile_context>
chip_gen: v7x
topology: tpu7x:2x2x1
jax: 0.10.0
libtpu: 0.0.40
codegen_flags: <defaults>
</compile_context>

<pallas_src>
import functools

import jax
import jax.numpy as jnp
from jax.experimental import pallas as pl
from jax.experimental.pallas import tpu as pltpu


def _round_up(v, m):
    return ((v + m - 1) // m) * m


def _best_tile(total, base, cap):
    """Largest multiple of `base` that divides `total` and is <= cap (total % base == 0)."""
    q = total // base
    best = 1
    for d in range(1, q + 1):
        if q % d == 0 and base * d <= cap:
            best = d
    return base * best


def _pick_spt(n_samples, spatial):
    """Samples per tile: largest divisor of n_samples with spt*spatial <= 1024 rows."""
    spt = 1
    for d in range(1, n_samples + 1):
        if n_samples % d == 0 and d * spatial <= 1024:
            spt = d
    if (spt * spatial) % 8 != 0:
        spt = n_samples          # tm == M (full dim) is always a legal block shape
    return spt


# ---------------------------------------------------------------------------
# Kernel 1: fused GEMM (bf16 x bf16 -> f32 acc) + bias + InstanceNorm + LeakyReLU(0.2).
# Used for every convolution via im2col.  Each (tm, tn) output tile holds whole samples
# (tm = spt * S), so the per-(sample, channel) normalization over the spatial extent S
# can be computed entirely inside the epilogue.
# ---------------------------------------------------------------------------
def _gemm_in_lrelu_kernel(x_ref, w_ref, b_ref, o_ref, acc_ref, *, spt, S):
    k = pl.program_id(2)

    @pl.when(k == 0)
    def _():
        acc_ref[...] = jnp.zeros_like(acc_ref)

    acc_ref[...] += jnp.dot(x_ref[...], w_ref[...],
                            preferred_element_type=jnp.float32)

    @pl.when(k == pl.num_programs(2) - 1)
    def _():
        y = acc_ref[...] + b_ref[...]                        # (tm, tn), f32
        for s in range(spt):                                 # static unroll over whole samples
            ys = y[s * S:(s + 1) * S, :]                     # (S, tn) — one sample
            mean = jnp.mean(ys, axis=0, keepdims=True)
            yc = ys - mean
            var = jnp.mean(yc * yc, axis=0, keepdims=True)   # biased variance (PyTorch)
            z = yc * jax.lax.rsqrt(var + 1e-5)
            z = jnp.where(z >= 0.0, z, 0.2 * z)              # LeakyReLU(0.2)
            o_ref[s * S:(s + 1) * S, :] = z.astype(o_ref.dtype)


def gemm_in_lrelu(patches, w_packed, b_packed, n_out, *, n_samples, S):
    """Fused conv GEMM: patches (M=n_samples*S, K) bf16, w (Kp, Np) bf16, b (1, Np) f32."""
    M, K = patches.shape
    Kp, Np = w_packed.shape
    if Kp != K:
        patches = jnp.pad(patches, ((0, 0), (0, Kp - K)))

    spt = _pick_spt(n_samples, S)
    tm = spt * S
    tk = _best_tile(Kp, 128, 4096)       # big K tiles for the huge-K motion GEMM (8 steps)
    tn = _best_tile(Np, 128, 512)        # tn<=512 keeps 2 j-blocks for N=1024 (v7x megacore)

    out = pl.pallas_call(
        functools.partial(_gemm_in_lrelu_kernel, spt=spt, S=S),
        out_shape=jax.ShapeDtypeStruct((M, Np), jnp.float32),
        grid_spec=pltpu.PrefetchScalarGridSpec(
            num_scalar_prefetch=0,
            grid=(M // tm, Np // tn, Kp // tk),
            in_specs=[
                pl.BlockSpec((tm, tk), lambda i, j, k: (i, k)),
                pl.BlockSpec((tk, tn), lambda i, j, k: (k, j)),
                pl.BlockSpec((1, tn), lambda i, j, k: (0, j)),
            ],
            out_specs=pl.BlockSpec((tm, tn), lambda i, j, k: (i, j)),
            scratch_shapes=[pltpu.VMEM((tm, tn), jnp.float32)],
        ),
        compiler_params=pltpu.CompilerParams(
            dimension_semantics=("parallel", "parallel", "arbitrary")),
    )(patches, w_packed, b_packed)
    return out[:, :n_out]


# ---------------------------------------------------------------------------
# Kernel 2: mean over axis 1 (DimensionAvg(dim=2) for the video path).
# ---------------------------------------------------------------------------
def _mean_axis1_kernel(x_ref, o_ref):
    o_ref[...] = jnp.mean(x_ref[...].astype(jnp.float32), axis=1)


def temporal_mean(x_ndhwc):
    """NDHWC -> mean over D -> NHWC  (== DimensionAvg(dim=2) on NCDHW)."""
    N, D, H, W, C = x_ndhwc.shape
    F = H * W * C
    out = pl.pallas_call(
        _mean_axis1_kernel,
        out_shape=jax.ShapeDtypeStruct((N, F), jnp.float32),
        grid=(N,),
        in_specs=[pl.BlockSpec((1, D, F), lambda n: (n, 0, 0))],
        out_specs=pl.BlockSpec((1, F), lambda n: (n, 0)),
        compiler_params=pltpu.CompilerParams(dimension_semantics=("parallel",)),
    )(x_ndhwc.reshape(N, D, F))
    return out.reshape(N, H, W, C)


# ---------------------------------------------------------------------------
# Kernel 3: fused AdaptiveAvgPool2d(1) + final centre-tap conv (matmul + bias).
# ---------------------------------------------------------------------------
def _pool_head_kernel(x_ref, w_ref, b_ref, o_ref):
    x = x_ref[...].astype(jnp.float32)                       # (N, S, C)
    pooled = jnp.mean(x, axis=1)                             # (N, C)
    o_ref[...] = (jnp.dot(pooled, w_ref[...], preferred_element_type=jnp.float32)
                  + b_ref[...]).astype(o_ref.dtype)


def pool_head(x_nsc, w_cd, b_1d):
    N, _, _ = x_nsc.shape
    D = w_cd.shape[1]
    return pl.pallas_call(
        _pool_head_kernel,
        out_shape=jax.ShapeDtypeStruct((N, D), jnp.float32),
    )(x_nsc, w_cd, b_1d)


# ---------------------------------------------------------------------------
# Convolutions lowered to im2col + fused Pallas GEMM (channels-last / lane-dense).
# Weights arrive pre-packed in GEMM layout (Kp, Np) bf16; bias as (1, Np) f32.
# ---------------------------------------------------------------------------
def conv2d_in_lrelu(x, w_packed, b_packed, n_out, *, k, pad):
    """Stride-2 Conv2d + InstanceNorm + LeakyReLU. x:(N,H,W,C) NHWC."""
    N, H, W, C = x.shape
    Ho = (H + 2 * pad - k) // 2 + 1
    Wo = (W + 2 * pad - k) // 2 + 1
    xp = jnp.pad(x, ((0, 0), (pad, pad), (pad, pad), (0, 0)))
    cols = [xp[:, kh:kh + 2 * Ho:2, kw:kw + 2 * Wo:2, :]
            for kh in range(k) for kw in range(k)]
    patches = jnp.concatenate(cols, axis=-1).reshape(N * Ho * Wo, k * k * C)
    patches = patches.astype(jnp.bfloat16)
    y = gemm_in_lrelu(patches, w_packed, b_packed, n_out, n_samples=N, S=Ho * Wo)
    return y.reshape(N, Ho, Wo, n_out)


def conv3d_in_lrelu(x, w_packed, b_packed, n_out):
    """Stride-2 Conv3d (k=3, p=1) + InstanceNorm + LeakyReLU. x:(N,D,H,W,C)."""
    N, D, H, W, C = x.shape
    Do = (D + 2 - 3) // 2 + 1
    Ho = (H + 2 - 3) // 2 + 1
    Wo = (W + 2 - 3) // 2 + 1
    xp = jnp.pad(x, ((0, 0), (1, 1), (1, 1), (1, 1), (0, 0)))
    cols = [xp[:, kd:kd + 2 * Do:2, kh:kh + 2 * Ho:2, kw:kw + 2 * Wo:2, :]
            for kd in range(3) for kh in range(3) for kw in range(3)]
    patches = jnp.concatenate(cols, axis=-1).reshape(N * Do * Ho * Wo, 27 * C)
    patches = patches.astype(jnp.bfloat16)
    y = gemm_in_lrelu(patches, w_packed, b_packed, n_out, n_samples=N, S=Do * Ho * Wo)
    return y.reshape(N, Do, Ho, Wo, n_out)


# ---------------------------------------------------------------------------
# Parameters: raw (PyTorch layout) init + one-time GEMM-layout packing (outside jit).
# ---------------------------------------------------------------------------
def init_params(key, *, input_nc=3, ngf=4, n_downsample=2, code_length=8):
    def conv_init(k, shape):
        fan_in = 1
        for d in shape[1:]:
            fan_in *= d
        kw, kb = jax.random.split(k)
        w = jax.random.normal(kw, shape, jnp.float32) / (float(fan_in) ** 0.5)
        b = 0.01 * jax.random.normal(kb, (shape[0],), jnp.float32)
        return w, b

    keys = jax.random.split(key, 2 * n_downsample + 3)
    ki = 0
    params = {"image_encoder": [], "video_encoder": []}

    nf, nf_prev = ngf, input_nc
    for _ in range(n_downsample):
        params["image_encoder"].append(conv_init(keys[ki], (nf, nf_prev, 3, 3))); ki += 1
        nf_prev, nf = nf, min(nf * 2, 512)

    nf, nf_prev = ngf, input_nc
    for _ in range(n_downsample):
        params["video_encoder"].append(conv_init(keys[ki], (nf, nf_prev, 3, 3, 3))); ki += 1
        nf_prev, nf = nf, min(nf * 2, 512)

    content_nc = nf_prev
    params["motion_conv1"] = conv_init(keys[ki], (1024, content_nc, 5, 5)); ki += 1
    params["motion_conv2"] = conv_init(keys[ki], (1024, 1024, 5, 5)); ki += 1
    params["motion_conv3"] = conv_init(keys[ki], (code_length, 1024, 5, 5)); ki += 1
    return params


def pack_params(raw):
    """One-time weight prep OUTSIDE the jitted forward: transpose to GEMM layout
    (k*k*Cin, Cout), pad K/N to multiples of 128 and cast to bf16 (biases stay f32)."""
    def pack_gemm(w2d, b):
        K, N = w2d.shape
        Kp, Np = _round_up(K, 128), _round_up(N, 128)
        wp = jnp.pad(w2d, ((0, Kp - K), (0, Np - N))).astype(jnp.bfloat16)
        bp = jnp.pad(b.astype(jnp.float32).reshape(1, N), ((0, 0), (0, Np - N)))
        return wp, bp

    def pack_conv2d(w, b):
        Cout, Cin, kh, kw = w.shape
        w2d = jnp.transpose(w, (2, 3, 1, 0)).reshape(kh * kw * Cin, Cout)
        return pack_gemm(w2d, b)

    def pack_conv3d(w, b):
        Cout, Cin, kd, kh, kw = w.shape
        w2d = jnp.transpose(w, (2, 3, 4, 1, 0)).reshape(kd * kh * kw * Cin, Cout)
        return pack_gemm(w2d, b)

    packed = {
        "image_encoder": [pack_conv2d(w, b) for (w, b) in raw["image_encoder"]],
        "video_encoder": [pack_conv3d(w, b) for (w, b) in raw["video_encoder"]],
        "motion_conv1": pack_conv2d(*raw["motion_conv1"]),
        "motion_conv2": pack_conv2d(*raw["motion_conv2"]),
    }
    # Final conv acts on the 1x1 pooled map with padding 2 -> only the centre tap matters.
    w3, b3 = raw["motion_conv3"]
    packed["motion_head"] = (jnp.transpose(w3[:, :, 2, 2]).astype(jnp.float32),
                             b3.reshape(1, -1).astype(jnp.float32))
    return packed


# ---------------------------------------------------------------------------
# Top-level forward (mirrors DisentangledExtractor.forward).  Static architecture
# info (kernel sizes, per-layer channel counts) is closed over, so the jitted
# params pytree contains only arrays.
# ---------------------------------------------------------------------------
def make_forward(*, input_nc=3, ngf=4, n_downsample=2, code_length=8):
    del input_nc, code_length  # only needed for init; channel plan derived from ngf below
    enc_channels = []
    nf = ngf
    for _ in range(n_downsample):
        enc_channels.append(nf)
        nf = min(nf * 2, 512)

    def forward(params, x, text=None):
        """Returns (content, motion). `text` accepted but unused (as in the PyTorch module)."""
        del text
        if x.ndim == 4:                                      # image path: NCHW
            h = jnp.transpose(x, (0, 2, 3, 1))               # -> NHWC (channels on lanes)
            for (w, b), cout in zip(params["image_encoder"], enc_channels):
                h = conv2d_in_lrelu(h, w, b, cout, k=3, pad=1)
        elif x.ndim == 5:                                    # video path: NCDHW
            h = jnp.transpose(x, (0, 2, 3, 4, 1))            # -> NDHWC
            for (w, b), cout in zip(params["video_encoder"], enc_channels):
                h = conv3d_in_lrelu(h, w, b, cout)
            h = temporal_mean(h)                             # DimensionAvg(dim=2) -> NHWC
        else:
            raise ValueError("input must be 4-D (image) or 5-D (video)")

        content = jnp.transpose(h, (0, 3, 1, 2))             # NCHW, like the PyTorch module

        # motion_ext: two fused conv+IN+LReLU GEMMs, then pool + centre-tap conv.
        w1, b1 = params["motion_conv1"]
        w2, b2 = params["motion_conv2"]
        m = conv2d_in_lrelu(h, w1, b1, 1024, k=5, pad=2)
        m = conv2d_in_lrelu(m, w2, b2, 1024, k=5, pad=2)
        N, Ho, Wo, C = m.shape
        wh, bh = params["motion_head"]
        motion = pool_head(m.reshape(N, Ho * Wo, C), wh, bh)
        return content, motion

    return forward


if __name__ == "__main__":
    key = jax.random.PRNGKey(0)
    kp, kx, kv = jax.random.split(key, 3)
    raw = init_params(kp, input_nc=3, ngf=4, n_downsample=2, code_length=8)
    params = pack_params(raw)           # one-time GEMM-layout / bf16 weight packing
    fwd = jax.jit(make_forward(input_nc=3, ngf=4, n_downsample=2, code_length=8))

    # Image path (4-D NCHW) — the default input_type='image'.
    x = jax.random.normal(kx, (2, 3, 32, 32), dtype=jnp.float32)
    content, motion = fwd(params, x)
    jax.block_until_ready((content, motion))
    assert content.shape == (2, 8, 8, 8), content.shape
    assert motion.shape == (2, 8), motion.shape
    assert bool(jnp.all(jnp.isfinite(content))) and bool(jnp.all(jnp.isfinite(motion)))

    # Video path (5-D NCDHW) — exercises Conv3d + DimensionAvg with the same kernels.
    xv = jax.random.normal(kv, (2, 3, 8, 32, 32), dtype=jnp.float32)
    content_v, motion_v = fwd(params, xv)
    jax.block_until_ready((content_v, motion_v))
    assert content_v.shape == (2, 8, 8, 8), content_v.shape
    assert motion_v.shape == (2, 8), motion_v.shape
    assert bool(jnp.all(jnp.isfinite(content_v))) and bool(jnp.all(jnp.isfinite(motion_v)))

    print("KERNEL_OK")
</pallas_src>

<mosaic_0001>
module attributes {stable_mosaic.version = 11 : i64} {
  func.func @_gemm_in_lrelu_kernel(%arg0: i32, %arg1: i32, %arg2: i32, %arg3: memref<512x128xbf16, #tpu.memory_space<vmem>>, %arg4: memref<128x128xbf16, #tpu.memory_space<vmem>>, %arg5: memref<1x128xf32, #tpu.memory_space<vmem>>, %arg6: memref<512x128xf32, #tpu.memory_space<vmem>>, %arg7: memref<512x128xf32, #tpu.memory_space<vmem>>) attributes {dimension_semantics = [#tpu.dimension_semantics<parallel>, #tpu.dimension_semantics<parallel>, #tpu.dimension_semantics<arbitrary>], iteration_bounds = array<i64: 1, 1, 1>, scalar_prefetch = 0 : i64, scratch_operands = 1 : i64, tpu.core_type = #tpu.core_type<tc>, window_params = [{transform_indices = @transform_0, window_bounds = array<i64: 512, 128>}, {transform_indices = @transform_1, window_bounds = array<i64: 128, 128>}, {transform_indices = @transform_2, window_bounds = array<i64: 1, 128>}, {transform_indices = @transform_3, window_bounds = array<i64: 512, 128>}]} {
    %c0_i32 = arith.constant 0 : i32
    %0 = arith.cmpi eq, %arg2, %c0_i32 : i32
    %1 = arith.extui %0 : i1 to i32
    %c0_i32_0 = arith.constant 0 : i32
    %2 = arith.cmpi ne, %1, %c0_i32_0 : i32
    scf.if %2 {
      %cst_10 = arith.constant 0.000000e+00 : f32
      %12 = vector.broadcast %cst_10 : f32 to vector<512x128xf32>
      %c0_11 = arith.constant 0 : index
      %c0_12 = arith.constant 0 : index
      %13 = vector.load %arg7[%c0_11, %c0_12] : memref<512x128xf32, #tpu.memory_space<vmem>>, vector<512x128xf32>
      tpu.vector_store %arg7[%c0_11, %c0_12], %12 {strides = array<i32>} : memref<512x128xf32, #tpu.memory_space<vmem>>, vector<512x128xf32>,
    } else {
    }
    %c0 = arith.constant 0 : index
    %c0_1 = arith.constant 0 : index
    %3 = vector.load %arg7[%c0, %c0_1] : memref<512x128xf32, #tpu.memory_space<vmem>>, vector<512x128xf32>
    %c0_2 = arith.constant 0 : index
    %c0_3 = arith.constant 0 : index
    %4 = vector.load %arg3[%c0_2, %c0_3] : memref<512x128xbf16, #tpu.memory_space<vmem>>, vector<512x128xbf16>
    %c0_4 = arith.constant 0 : index
    %c0_5 = arith.constant 0 : index
    %5 = vector.load %arg4[%c0_4, %c0_5] : memref<128x128xbf16, #tpu.memory_space<vmem>>, vector<128x128xbf16>
    %cst = arith.constant dense<0.000000e+00> : vector<512x128xf32>
    %6 = tpu.matmul %4, %5, %cst {dimension_numbers = #tpu.dot_dimension_numbers<[1], [0], [0], [1], [0, 0, 1, 1], [], []>} : vector<512x128xbf16>, vector<128x128xbf16>, vector<512x128xf32> -> vector<512x128xf32>
    %7 = arith.addf %3, %6 : vector<512x128xf32>
    %c0_6 = arith.constant 0 : index
    %c0_7 = arith.constant 0 : index
    %8 = vector.load %arg7[%c0_6, %c0_7] : memref<512x128xf32, #tpu.memory_space<vmem>>, vector<512x128xf32>
    tpu.vector_store %arg7[%c0_6, %c0_7], %7 {strides = array<i32>} : memref<512x128xf32, #tpu.memory_space<vmem>>, vector<512x128xf32>,
    %c0_i32_8 = arith.constant 0 : i32
    %9 = arith.cmpi eq, %arg2, %c0_i32_8 : i32
    %10 = arith.extui %9 : i1 to i32
    %c0_i32_9 = arith.constant 0 : i32
    %11 = arith.cmpi ne, %10, %c0_i32_9 : i32
    scf.if %11 {
      %c0_10 = arith.constant 0 : index
      %c0_11 = arith.constant 0 : index
      %12 = vector.load %arg7[%c0_10, %c0_11] : memref<512x128xf32, #tpu.memory_space<vmem>>, vector<512x128xf32>
      %c0_12 = arith.constant 0 : index
      %c0_13 = arith.constant 0 : index
      %13 = vector.load %arg5[%c0_12, %c0_13] : memref<1x128xf32, #tpu.memory_space<vmem>>, vector<1x128xf32>
      %14 = vector.broadcast %13 : vector<1x128xf32> to vector<512x128xf32>
      %15 = arith.addf %12, %14 : vector<512x128xf32>
      %16 = vector.extract_strided_slice %15 {offsets = [0, 0], sizes = [256, 128], strides = [1, 1]} : vector<512x128xf32> to vector<256x128xf32>
      %cst_14 = arith.constant dense<0.000000e+00> : vector<128xf32>
      %17 = vector.multi_reduction <add>, %16, %cst_14 [0] : vector<256x128xf32> to vector<128xf32>
      %18 = vector.shape_cast %17 : vector<128xf32> to vector<1x128xf32>
      %cst_15 = arith.constant 2.560000e+02 : f32
      %19 = vector.broadcast %cst_15 : f32 to vector<1x128xf32>
      %20 = arith.divf %18, %19 : vector<1x128xf32>
      %21 = vector.broadcast %20 : vector<1x128xf32> to vector<256x128xf32>
      %22 = arith.subf %16, %21 : vector<256x128xf32>
      %23 = arith.mulf %22, %22 : vector<256x128xf32>
      %cst_16 = arith.constant dense<0.000000e+00> : vector<128xf32>
      %24 = vector.multi_reduction <add>, %23, %cst_16 [0] : vector<256x128xf32> to vector<128xf32>
      %25 = vector.shape_cast %24 : vector<128xf32> to vector<1x128xf32>
      %cst_17 = arith.constant 2.560000e+02 : f32
      %26 = vector.broadcast %cst_17 : f32 to vector<1x128xf32>
      %27 = arith.divf %25, %26 : vector<1x128xf32>
      %cst_18 = arith.constant 9.99999974E-6 : f32
      %28 = vector.broadcast %cst_18 : f32 to vector<1x128xf32>
      %29 = arith.addf %27, %28 : vector<1x128xf32>
      %30 = math.rsqrt %29 : vector<1x128xf32>
      %31 = vector.broadcast %30 : vector<1x128xf32> to vector<256x128xf32>
      %32 = arith.mulf %22, %31 : vector<256x128xf32>
      %cst_19 = arith.constant 0.000000e+00 : f32
      %33 = vector.broadcast %cst_19 : f32 to vector<256x128xf32>
      %34 = arith.cmpf oge, %32, %33 : vector<256x128xf32>
      %cst_20 = arith.constant 2.000000e-01 : f32
      %35 = vector.broadcast %cst_20 : f32 to vector<256x128xf32>
      %36 = arith.mulf %35, %32 : vector<256x128xf32>
      %37 = arith.select %34, %32, %36 : vector<256x128xi1>, vector<256x128xf32>
      %c0_21 = arith.constant 0 : index
      %c0_22 = arith.constant 0 : index
      %38 = vector.load %arg6[%c0_21, %c0_22] : memref<512x128xf32, #tpu.memory_space<vmem>>, vector<256x128xf32>
      tpu.vector_store %arg6[%c0_21, %c0_22], %37 {strides = array<i32>} : memref<512x128xf32, #tpu.memory_space<vmem>>, vector<256x128xf32>,
      %39 = vector.extract_strided_slice %15 {offsets = [256, 0], sizes = [256, 128], strides = [1, 1]} : vector<512x128xf32> to vector<256x128xf32>
      %cst_23 = arith.constant dense<0.000000e+00> : vector<128xf32>
      %40 = vector.multi_reduction <add>, %39, %cst_23 [0] : vector<256x128xf32> to vector<128xf32>
      %41 = vector.shape_cast %40 : vector<128xf32> to vector<1x128xf32>
      %cst_24 = arith.constant 2.560000e+02 : f32
      %42 = vector.broadcast %cst_24 : f32 to vector<1x128xf32>
      %43 = arith.divf %41, %42 : vector<1x128xf32>
      %44 = vector.broadcast %43 : vector<1x128xf32> to vector<256x128xf32>
      %45 = arith.subf %39, %44 : vector<256x128xf32>
      %46 = arith.mulf %45, %45 : vector<256x128xf32>
      %cst_25 = arith.constant dense<0.000000e+00> : vector<128xf32>
      %47 = vector.multi_reduction <add>, %46, %cst_25 [0] : vector<256x128xf32> to vector<128xf32>
      %48 = vector.shape_cast %47 : vector<128xf32> to vector<1x128xf32>
      %cst_26 = arith.constant 2.560000e+02 : f32
      %49 = vector.broadcast %cst_26 : f32 to vector<1x128xf32>
      %50 = arith.divf %48, %49 : vector<1x128xf32>
      %cst_27 = arith.constant 9.99999974E-6 : f32
      %51 = vector.broadcast %cst_27 : f32 to vector<1x128xf32>
      %52 = arith.addf %50, %51 : vector<1x128xf32>
      %53 = math.rsqrt %52 : vector<1x128xf32>
      %54 = vector.broadcast %53 : vector<1x128xf32> to vector<256x128xf32>
      %55 = arith.mulf %45, %54 : vector<256x128xf32>
      %cst_28 = arith.constant 0.000000e+00 : f32
      %56 = vector.broadcast %cst_28 : f32 to vector<256x128xf32>
      %57 = arith.cmpf oge, %55, %56 : vector<256x128xf32>
      %cst_29 = arith.constant 2.000000e-01 : f32
      %58 = vector.broadcast %cst_29 : f32 to vector<256x128xf32>
      %59 = arith.mulf %58, %55 : vector<256x128xf32>
      %60 = arith.select %57, %55, %59 : vector<256x128xi1>, vector<256x128xf32>
      %c256 = arith.constant 256 : index
      %c0_30 = arith.constant 0 : index
      %61 = vector.load %arg6[%c256, %c0_30] : memref<512x128xf32, #tpu.memory_space<vmem>>, vector<256x128xf32>
      tpu.vector_store %arg6[%c256, %c0_30], %60 {strides = array<i32>} : memref<512x128xf32, #tpu.memory_space<vmem>>, vector<256x128xf32>,
    } else {
    }
    return
  }
  func.func @transform_0(%arg0: i32, %arg1: i32, %arg2: i32) -> (i32, i32) {
    %c0_i32 = arith.constant 0 : i32
    return %arg0, %arg2 : i32, i32
  }
  func.func @transform_1(%arg0: i32, %arg1: i32, %arg2: i32) -> (i32, i32) {
    %c0_i32 = arith.constant 0 : i32
    return %arg2, %arg1 : i32, i32
  }
  func.func @transform_2(%arg0: i32, %arg1: i32, %arg2: i32) -> (i32, i32) {
    %c0_i32 = arith.constant 0 : i32
    %c0_i32_0 = arith.constant 0 : i32
    return %c0_i32, %arg1 : i32, i32
  }
  func.func @transform_3(%arg0: i32, %arg1: i32, %arg2: i32) -> (i32, i32) {
    %c0_i32 = arith.constant 0 : i32
    return %arg0, %arg1 : i32, i32
  }
}

module attributes {stable_mosaic.version = 11 : i64} {
  func.func @_gemm_in_lrelu_kernel(%arg0: i32, %arg1: i32, %arg2: i32, %arg3: memref<128x128xbf16, #tpu.memory_space<vmem>>, %arg4: memref<128x128xbf16, #tpu.memory_space<vmem>>, %arg5: memref<1x128xf32, #tpu.memory_space<vmem>>, %arg6: memref<128x128xf32, #tpu.memory_space<vmem>>, %arg7: memref<128x128xf32, #tpu.memory_space<vmem>>) attributes {dimension_semantics = [#tpu.dimension_semantics<parallel>, #tpu.dimension_semantics<parallel>, #tpu.dimension_semantics<arbitrary>], iteration_bounds = array<i64: 1, 1, 1>, scalar_prefetch = 0 : i64, scratch_operands = 1 : i64, tpu.core_type = #tpu.core_type<tc>, window_params = [{transform_indices = @transform_0, window_bounds = array<i64: 128, 128>}, {transform_indices = @transform_1, window_bounds = array<i64: 128, 128>}, {transform_indices = @transform_2, window_bounds = array<i64: 1, 128>}, {transform_indices = @transform_3, window_bounds = array<i64: 128, 128>}]} {
    %c0_i32 = arith.constant 0 : i32
    %0 = arith.cmpi eq, %arg2, %c0_i32 : i32
    %1 = arith.extui %0 : i1 to i32
    %c0_i32_0 = arith.constant 0 : i32
    %2 = arith.cmpi ne, %1, %c0_i32_0 : i32
    scf.if %2 {
      %cst_10 = arith.constant 0.000000e+00 : f32
      %12 = vector.broadcast %cst_10 : f32 to vector<128x128xf32>
      %c0_11 = arith.constant 0 : index
      %c0_12 = arith.constant 0 : index
      %13 = vector.load %arg7[%c0_11, %c0_12] : memref<128x128xf32, #tpu.memory_space<vmem>>, vector<128x128xf32>
      tpu.vector_store %arg7[%c0_11, %c0_12], %12 {strides = array<i32>} : memref<128x128xf32, #tpu.memory_space<vmem>>, vector<128x128xf32>,
    } else {
    }
    %c0 = arith.constant 0 : index
    %c0_1 = arith.constant 0 : index
    %3 = vector.load %arg7[%c0, %c0_1] : memref<128x128xf32, #tpu.memory_space<vmem>>, vector<128x128xf32>
    %c0_2 = arith.constant 0 : index
    %c0_3 = arith.constant 0 : index
    %4 = vector.load %arg3[%c0_2, %c0_3] : memref<128x128xbf16, #tpu.memory_space<vmem>>, vector<128x128xbf16>
    %c0_4 = arith.constant 0 : index
    %c0_5 = arith.constant 0 : index
    %5 = vector.load %arg4[%c0_4, %c0_5] : memref<128x128xbf16, #tpu.memory_space<vmem>>, vector<128x128xbf16>
    %cst = arith.constant dense<0.000000e+00> : vector<128x128xf32>
    %6 = tpu.matmul %4, %5, %cst {dimension_numbers = #tpu.dot_dimension_numbers<[1], [0], [0], [1], [0, 0, 1, 1], [], []>} : vector<128x128xbf16>, vector<128x128xbf16>, vector<128x128xf32> -> vector<128x128xf32>
    %7 = arith.addf %3, %6 : vector<128x128xf32>
    %c0_6 = arith.constant 0 : index
    %c0_7 = arith.constant 0 : index
    %8 = vector.load %arg7[%c0_6, %c0_7] : memref<128x128xf32, #tpu.memory_space<vmem>>, vector<128x128xf32>
    tpu.vector_store %arg7[%c0_6, %c0_7], %7 {strides = array<i32>} : memref<128x128xf32, #tpu.memory_space<vmem>>, vector<128x128xf32>,
    %c0_i32_8 = arith.constant 0 : i32
    %9 = arith.cmpi eq, %arg2, %c0_i32_8 : i32
    %10 = arith.extui %9 : i1 to i32
    %c0_i32_9 = arith.constant 0 : i32
    %11 = arith.cmpi ne, %10, %c0_i32_9 : i32
    scf.if %11 {
      %c0_10 = arith.constant 0 : index
      %c0_11 = arith.constant 0 : index
      %12 = vector.load %arg7[%c0_10, %c0_11] : memref<128x128xf32, #tpu.memory_space<vmem>>, vector<128x128xf32>
      %c0_12 = arith.constant 0 : index
      %c0_13 = arith.constant 0 : index
      %13 = vector.load %arg5[%c0_12, %c0_13] : memref<1x128xf32, #tpu.memory_space<vmem>>, vector<1x128xf32>
      %14 = vector.broadcast %13 : vector<1x128xf32> to vector<128x128xf32>
      %15 = arith.addf %12, %14 : vector<128x128xf32>
      %16 = vector.extract_strided_slice %15 {offsets = [0, 0], sizes = [64, 128], strides = [1, 1]} : vector<128x128xf32> to vector<64x128xf32>
      %cst_14 = arith.constant dense<0.000000e+00> : vector<128xf32>
      %17 = vector.multi_reduction <add>, %16, %cst_14 [0] : vector<64x128xf32> to vector<128xf32>
      %18 = vector.shape_cast %17 : vector<128xf32> to vector<1x128xf32>
      %cst_15 = arith.constant 6.400000e+01 : f32
      %19 = vector.broadcast %cst_15 : f32 to vector<1x128xf32>
      %20 = arith.divf %18, %19 : vector<1x128xf32>
      %21 = vector.broadcast %20 : vector<1x128xf32> to vector<64x128xf32>
      %22 = arith.subf %16, %21 : vector<64x128xf32>
      %23 = arith.mulf %22, %22 : vector<64x128xf32>
      %cst_16 = arith.constant dense<0.000000e+00> : vector<128xf32>
      %24 = vector.multi_reduction <add>, %23, %cst_16 [0] : vector<64x128xf32> to vector<128xf32>
      %25 = vector.shape_cast %24 : vector<128xf32> to vector<1x128xf32>
      %cst_17 = arith.constant 6.400000e+01 : f32
      %26 = vector.broadcast %cst_17 : f32 to vector<1x128xf32>
      %27 = arith.divf %25, %26 : vector<1x128xf32>
      %cst_18 = arith.constant 9.99999974E-6 : f32
      %28 = vector.broadcast %cst_18 : f32 to vector<1x128xf32>
      %29 = arith.addf %27, %28 : vector<1x128xf32>
      %30 = math.rsqrt %29 : vector<1x128xf32>
      %31 = vector.broadcast %30 : vector<1x128xf32> to vector<64x128xf32>
      %32 = arith.mulf %22, %31 : vector<64x128xf32>
      %cst_19 = arith.constant 0.000000e+00 : f32
      %33 = vector.broadcast %cst_19 : f32 to vector<64x128xf32>
      %34 = arith.cmpf oge, %32, %33 : vector<64x128xf32>
      %cst_20 = arith.constant 2.000000e-01 : f32
      %35 = vector.broadcast %cst_20 : f32 to vector<64x128xf32>
      %36 = arith.mulf %35, %32 : vector<64x128xf32>
      %37 = arith.select %34, %32, %36 : vector<64x128xi1>, vector<64x128xf32>
      %c0_21 = arith.constant 0 : index
      %c0_22 = arith.constant 0 : index
      %38 = vector.load %arg6[%c0_21, %c0_22] : memref<128x128xf32, #tpu.memory_space<vmem>>, vector<64x128xf32>
      tpu.vector_store %arg6[%c0_21, %c0_22], %37 {strides = array<i32>} : memref<128x128xf32, #tpu.memory_space<vmem>>, vector<64x128xf32>,
      %39 = vector.extract_strided_slice %15 {offsets = [64, 0], sizes = [64, 128], strides = [1, 1]} : vector<128x128xf32> to vector<64x128xf32>
      %cst_23 = arith.constant dense<0.000000e+00> : vector<128xf32>
      %40 = vector.multi_reduction <add>, %39, %cst_23 [0] : vector<64x128xf32> to vector<128xf32>
      %41 = vector.shape_cast %40 : vector<128xf32> to vector<1x128xf32>
      %cst_24 = arith.constant 6.400000e+01 : f32
      %42 = vector.broadcast %cst_24 : f32 to vector<1x128xf32>
      %43 = arith.divf %41, %42 : vector<1x128xf32>
      %44 = vector.broadcast %43 : vector<1x128xf32> to vector<64x128xf32>
      %45 = arith.subf %39, %44 : vector<64x128xf32>
      %46 = arith.mulf %45, %45 : vector<64x128xf32>
      %cst_25 = arith.constant dense<0.000000e+00> : vector<128xf32>
      %47 = vector.multi_reduction <add>, %46, %cst_25 [0] : vector<64x128xf32> to vector<128xf32>
      %48 = vector.shape_cast %47 : vector<128xf32> to vector<1x128xf32>
      %cst_26 = arith.constant 6.400000e+01 : f32
      %49 = vector.broadcast %cst_26 : f32 to vector<1x128xf32>
      %50 = arith.divf %48, %49 : vector<1x128xf32>
      %cst_27 = arith.constant 9.99999974E-6 : f32
      %51 = vector.broadcast %cst_27 : f32 to vector<1x128xf32>
      %52 = arith.addf %50, %51 : vector<1x128xf32>
      %53 = math.rsqrt %52 : vector<1x128xf32>
      %54 = vector.broadcast %53 : vector<1x128xf32> to vector<64x128xf32>
      %55 = arith.mulf %45, %54 : vector<64x128xf32>
      %cst_28 = arith.constant 0.000000e+00 : f32
      %56 = vector.broadcast %cst_28 : f32 to vector<64x128xf32>
      %57 = arith.cmpf oge, %55, %56 : vector<64x128xf32>
      %cst_29 = arith.constant 2.000000e-01 : f32
      %58 = vector.broadcast %cst_29 : f32 to vector<64x128xf32>
      %59 = arith.mulf %58, %55 : vector<64x128xf32>
      %60 = arith.select %57, %55, %59 : vector<64x128xi1>, vector<64x128xf32>
      %c64 = arith.constant 64 : index
      %c0_30 = arith.constant 0 : index
      %61 = vector.load %arg6[%c64, %c0_30] : memref<128x128xf32, #tpu.memory_space<vmem>>, vector<64x128xf32>
      tpu.vector_store %arg6[%c64, %c0_30], %60 {strides = array<i32>} : memref<128x128xf32, #tpu.memory_space<vmem>>, vector<64x128xf32>,
    } else {
    }
    return
  }
  func.func @transform_0(%arg0: i32, %arg1: i32, %arg2: i32) -> (i32, i32) {
    %c0_i32 = arith.constant 0 : i32
    return %arg0, %arg2 : i32, i32
  }
  func.func @transform_1(%arg0: i32, %arg1: i32, %arg2: i32) -> (i32, i32) {
    %c0_i32 = arith.constant 0 : i32
    return %arg2, %arg1 : i32, i32
  }
  func.func @transform_2(%arg0: i32, %arg1: i32, %arg2: i32) -> (i32, i32) {
    %c0_i32 = arith.constant 0 : i32
    %c0_i32_0 = arith.constant 0 : i32
    return %c0_i32, %arg1 : i32, i32
  }
  func.func @transform_3(%arg0: i32, %arg1: i32, %arg2: i32) -> (i32, i32) {
    %c0_i32 = arith.constant 0 : i32
    return %arg0, %arg1 : i32, i32
  }
}

module attributes {stable_mosaic.version = 11 : i64} {
  func.func @_gemm_in_lrelu_kernel(%arg0: i32, %arg1: i32, %arg2: i32, %arg3: memref<32x256xbf16, #tpu.memory_space<vmem>>, %arg4: memref<256x512xbf16, #tpu.memory_space<vmem>>, %arg5: memref<1x512xf32, #tpu.memory_space<vmem>>, %arg6: memref<32x512xf32, #tpu.memory_space<vmem>>, %arg7: memref<32x512xf32, #tpu.memory_space<vmem>>) attributes {dimension_semantics = [#tpu.dimension_semantics<parallel>, #tpu.dimension_semantics<parallel>, #tpu.dimension_semantics<arbitrary>], iteration_bounds = array<i64: 1, 2, 1>, scalar_prefetch = 0 : i64, scratch_operands = 1 : i64, tpu.core_type = #tpu.core_type<tc>, window_params = [{transform_indices = @transform_0, window_bounds = array<i64: 32, 256>}, {transform_indices = @transform_1, window_bounds = array<i64: 256, 512>}, {transform_indices = @transform_2, window_bounds = array<i64: 1, 512>}, {transform_indices = @transform_3, window_bounds = array<i64: 32, 512>}]} {
    %c0_i32 = arith.constant 0 : i32
    %0 = arith.cmpi eq, %arg2, %c0_i32 : i32
    %1 = arith.extui %0 : i1 to i32
    %c0_i32_0 = arith.constant 0 : i32
    %2 = arith.cmpi ne, %1, %c0_i32_0 : i32
    scf.if %2 {
      %cst_10 = arith.constant 0.000000e+00 : f32
      %12 = vector.broadcast %cst_10 : f32 to vector<32x512xf32>
      %c0_11 = arith.constant 0 : index
      %c0_12 = arith.constant 0 : index
      %13 = vector.load %arg7[%c0_11, %c0_12] : memref<32x512xf32, #tpu.memory_space<vmem>>, vector<32x512xf32>
      tpu.vector_store %arg7[%c0_11, %c0_12], %12 {strides = array<i32>} : memref<32x512xf32, #tpu.memory_space<vmem>>, vector<32x512xf32>,
    } else {
    }
    %c0 = arith.constant 0 : index
    %c0_1 = arith.constant 0 : index
    %3 = vector.load %arg7[%c0, %c0_1] : memref<32x512xf32, #tpu.memory_space<vmem>>, vector<32x512xf32>
    %c0_2 = arith.constant 0 : index
    %c0_3 = arith.constant 0 : index
    %4 = vector.load %arg3[%c0_2, %c0_3] : memref<32x256xbf16, #tpu.memory_space<vmem>>, vector<32x256xbf16>
    %c0_4 = arith.constant 0 : index
    %c0_5 = arith.constant 0 : index
    %5 = vector.load %arg4[%c0_4, %c0_5] : memref<256x512xbf16, #tpu.memory_space<vmem>>, vector<256x512xbf16>
    %cst = arith.constant dense<0.000000e+00> : vector<32x512xf32>
    %6 = tpu.matmul %4, %5, %cst {dimension_numbers = #tpu.dot_dimension_numbers<[1], [0], [0], [1], [0, 0, 1, 1], [], []>} : vector<32x256xbf16>, vector<256x512xbf16>, vector<32x512xf32> -> vector<32x512xf32>
    %7 = arith.addf %3, %6 : vector<32x512xf32>
    %c0_6 = arith.constant 0 : index
    %c0_7 = arith.constant 0 : index
    %8 = vector.load %arg7[%c0_6, %c0_7] : memref<32x512xf32, #tpu.memory_space<vmem>>, vector<32x512xf32>
    tpu.vector_store %arg7[%c0_6, %c0_7], %7 {strides = array<i32>} : memref<32x512xf32, #tpu.memory_space<vmem>>, vector<32x512xf32>,
    %c0_i32_8 = arith.constant 0 : i32
    %9 = arith.cmpi eq, %arg2, %c0_i32_8 : i32
    %10 = arith.extui %9 : i1 to i32
    %c0_i32_9 = arith.constant 0 : i32
    %11 = arith.cmpi ne, %10, %c0_i32_9 : i32
    scf.if %11 {
      %c0_10 = arith.constant 0 : index
      %c0_11 = arith.constant 0 : index
      %12 = vector.load %arg7[%c0_10, %c0_11] : memref<32x512xf32, #tpu.memory_space<vmem>>, vector<32x512xf32>
      %c0_12 = arith.constant 0 : index
      %c0_13 = arith.constant 0 : index
      %13 = vector.load %arg5[%c0_12, %c0_13] : memref<1x512xf32, #tpu.memory_space<vmem>>, vector<1x512xf32>
      %14 = vector.broadcast %13 : vector<1x512xf32> to vector<32x512xf32>
      %15 = arith.addf %12, %14 : vector<32x512xf32>
      %16 = vector.extract_strided_slice %15 {offsets = [0, 0], sizes = [16, 512], strides = [1, 1]} : vector<32x512xf32> to vector<16x512xf32>
      %cst_14 = arith.constant dense<0.000000e+00> : vector<512xf32>
      %17 = vector.multi_reduction <add>, %16, %cst_14 [0] : vector<16x512xf32> to vector<512xf32>
      %18 = vector.shape_cast %17 : vector<512xf32> to vector<1x512xf32>
      %cst_15 = arith.constant 1.600000e+01 : f32
      %19 = vector.broadcast %cst_15 : f32 to vector<1x512xf32>
      %20 = arith.divf %18, %19 : vector<1x512xf32>
      %21 = vector.broadcast %20 : vector<1x512xf32> to vector<16x512xf32>
      %22 = arith.subf %16, %21 : vector<16x512xf32>
      %23 = arith.mulf %22, %22 : vector<16x512xf32>
      %cst_16 = arith.constant dense<0.000000e+00> : vector<512xf32>
      %24 = vector.multi_reduction <add>, %23, %cst_16 [0] : vector<16x512xf32> to vector<512xf32>
      %25 = vector.shape_cast %24 : vector<512xf32> to vector<1x512xf32>
      %cst_17 = arith.constant 1.600000e+01 : f32
      %26 = vector.broadcast %cst_17 : f32 to vector<1x512xf32>
      %27 = arith.divf %25, %26 : vector<1x512xf32>
      %cst_18 = arith.constant 9.99999974E-6 : f32
      %28 = vector.broadcast %cst_18 : f32 to vector<1x512xf32>
      %29 = arith.addf %27, %28 : vector<1x512xf32>
      %30 = math.rsqrt %29 : vector<1x512xf32>
      %31 = vector.broadcast %30 : vector<1x512xf32> to vector<16x512xf32>
      %32 = arith.mulf %22, %31 : vector<16x512xf32>
      %cst_19 = arith.constant 0.000000e+00 : f32
      %33 = vector.broadcast %cst_19 : f32 to vector<16x512xf32>
      %34 = arith.cmpf oge, %32, %33 : vector<16x512xf32>
      %cst_20 = arith.constant 2.000000e-01 : f32
      %35 = vector.broadcast %cst_20 : f32 to vector<16x512xf32>
      %36 = arith.mulf %35, %32 : vector<16x512xf32>
      %37 = arith.select %34, %32, %36 : vector<16x512xi1>, vector<16x512xf32>
      %c0_21 = arith.constant 0 : index
      %c0_22 = arith.constant 0 : index
      %38 = vector.load %arg6[%c0_21, %c0_22] : memref<32x512xf32, #tpu.memory_space<vmem>>, vector<16x512xf32>
      tpu.vector_store %arg6[%c0_21, %c0_22], %37 {strides = array<i32>} : memref<32x512xf32, #tpu.memory_space<vmem>>, vector<16x512xf32>,
      %39 = vector.extract_strided_slice %15 {offsets = [16, 0], sizes = [16, 512], strides = [1, 1]} : vector<32x512xf32> to vector<16x512xf32>
      %cst_23 = arith.constant dense<0.000000e+00> : vector<512xf32>
      %40 = vector.multi_reduction <add>, %39, %cst_23 [0] : vector<16x512xf32> to vector<512xf32>
      %41 = vector.shape_cast %40 : vector<512xf32> to vector<1x512xf32>
      %cst_24 = arith.constant 1.600000e+01 : f32
      %42 = vector.broadcast %cst_24 : f32 to vector<1x512xf32>
      %43 = arith.divf %41, %42 : vector<1x512xf32>
      %44 = vector.broadcast %43 : vector<1x512xf32> to vector<16x512xf32>
      %45 = arith.subf %39, %44 : vector<16x512xf32>
      %46 = arith.mulf %45, %45 : vector<16x512xf32>
      %cst_25 = arith.constant dense<0.000000e+00> : vector<512xf32>
      %47 = vector.multi_reduction <add>, %46, %cst_25 [0] : vector<16x512xf32> to vector<512xf32>
      %48 = vector.shape_cast %47 : vector<512xf32> to vector<1x512xf32>
      %cst_26 = arith.constant 1.600000e+01 : f32
      %49 = vector.broadcast %cst_26 : f32 to vector<1x512xf32>
      %50 = arith.divf %48, %49 : vector<1x512xf32>
      %cst_27 = arith.constant 9.99999974E-6 : f32
      %51 = vector.broadcast %cst_27 : f32 to vector<1x512xf32>
      %52 = arith.addf %50, %51 : vector<1x512xf32>
      %53 = math.rsqrt %52 : vector<1x512xf32>
      %54 = vector.broadcast %53 : vector<1x512xf32> to vector<16x512xf32>
      %55 = arith.mulf %45, %54 : vector<16x512xf32>
      %cst_28 = arith.constant 0.000000e+00 : f32
      %56 = vector.broadcast %cst_28 : f32 to vector<16x512xf32>
      %57 = arith.cmpf oge, %55, %56 : vector<16x512xf32>
      %cst_29 = arith.constant 2.000000e-01 : f32
      %58 = vector.broadcast %cst_29 : f32 to vector<16x512xf32>
      %59 = arith.mulf %58, %55 : vector<16x512xf32>
      %60 = arith.select %57, %55, %59 : vector<16x512xi1>, vector<16x512xf32>
      %c16 = arith.constant 16 : index
      %c0_30 = arith.constant 0 : index
      %61 = vector.load %arg6[%c16, %c0_30] : memref<32x512xf32, #tpu.memory_space<vmem>>, vector<16x512xf32>
      tpu.vector_store %arg6[%c16, %c0_30], %60 {strides = array<i32>} : memref<32x512xf32, #tpu.memory_space<vmem>>, vector<16x512xf32>,
    } else {
    }
    return
  }
  func.func @transform_0(%arg0: i32, %arg1: i32, %arg2: i32) -> (i32, i32) {
    %c0_i32 = arith.constant 0 : i32
    return %arg0, %arg2 : i32, i32
  }
  func.func @transform_1(%arg0: i32, %arg1: i32, %arg2: i32) -> (i32, i32) {
    %c0_i32 = arith.constant 0 : i32
    return %arg2, %arg1 : i32, i32
  }
  func.func @transform_2(%arg0: i32, %arg1: i32, %arg2: i32) -> (i32, i32) {
    %c0_i32 = arith.constant 0 : i32
    %c0_i32_0 = arith.constant 0 : i32
    return %c0_i32, %arg1 : i32, i32
  }
  func.func @transform_3(%arg0: i32, %arg1: i32, %arg2: i32) -> (i32, i32) {
    %c0_i32 = arith.constant 0 : i32
    return %arg0, %arg1 : i32, i32
  }
}

module attributes {stable_mosaic.version = 11 : i64} {
  func.func @_pool_head_kernel(%arg0: memref<2x4x1024xf32, #tpu.memory_space<vmem>>, %arg1: memref<1024x8xf32, #tpu.memory_space<vmem>>, %arg2: memref<1x8xf32, #tpu.memory_space<vmem>>, %arg3: memref<2x8xf32, #tpu.memory_space<vmem>>) attributes {dimension_semantics = [], scalar_prefetch = 0 : i64, scratch_operands = 0 : i64, tpu.core_type = #tpu.core_type<tc>} {
    %c0 = arith.constant 0 : index
    %c0_0 = arith.constant 0 : index
    %c0_1 = arith.constant 0 : index
    %0 = vector.load %arg0[%c0, %c0_0, %c0_1] : memref<2x4x1024xf32, #tpu.memory_space<vmem>>, vector<2x4x1024xf32>
    %cst = arith.constant dense<0.000000e+00> : vector<2x1024xf32>
    %1 = vector.multi_reduction <add>, %0, %cst [1] : vector<2x4x1024xf32> to vector<2x1024xf32>
    %cst_2 = arith.constant 4.000000e+00 : f32
    %2 = vector.broadcast %cst_2 : f32 to vector<2x1024xf32>
    %3 = arith.divf %1, %2 : vector<2x1024xf32>
    %c0_3 = arith.constant 0 : index
    %c0_4 = arith.constant 0 : index
    %4 = vector.load %arg1[%c0_3, %c0_4] : memref<1024x8xf32, #tpu.memory_space<vmem>>, vector<1024x8xf32>
    %cst_5 = arith.constant dense<0.000000e+00> : vector<2x8xf32>
    %5 = tpu.matmul %3, %4, %cst_5 {dimension_numbers = #tpu.dot_dimension_numbers<[1], [0], [0], [1], [0, 0, 1, 1], [], []>} : vector<2x1024xf32>, vector<1024x8xf32>, vector<2x8xf32> -> vector<2x8xf32>
    %c0_6 = arith.constant 0 : index
    %c0_7 = arith.constant 0 : index
    %6 = vector.load %arg2[%c0_6, %c0_7] : memref<1x8xf32, #tpu.memory_space<vmem>>, vector<1x8xf32>
    %7 = vector.broadcast %6 : vector<1x8xf32> to vector<2x8xf32>
    %8 = arith.addf %5, %7 : vector<2x8xf32>
    %c0_8 = arith.constant 0 : index
    %c0_9 = arith.constant 0 : index
    %9 = vector.load %arg3[%c0_8, %c0_9] : memref<2x8xf32, #tpu.memory_space<vmem>>, vector<2x8xf32>
    tpu.vector_store %arg3[%c0_8, %c0_9], %8 {strides = array<i32>} : memref<2x8xf32, #tpu.memory_space<vmem>>, vector<2x8xf32>,
    return
  }
}

module attributes {stable_mosaic.version = 11 : i64} {
  func.func @_gemm_in_lrelu_kernel(%arg0: i32, %arg1: i32, %arg2: i32, %arg3: memref<8x3200xbf16, #tpu.memory_space<vmem>>, %arg4: memref<3200x512xbf16, #tpu.memory_space<vmem>>, %arg5: memref<1x512xf32, #tpu.memory_space<vmem>>, %arg6: memref<8x512xf32, #tpu.memory_space<vmem>>, %arg7: memref<8x512xf32, #tpu.memory_space<vmem>>) attributes {dimension_semantics = [#tpu.dimension_semantics<parallel>, #tpu.dimension_semantics<parallel>, #tpu.dimension_semantics<arbitrary>], iteration_bounds = array<i64: 1, 2, 8>, scalar_prefetch = 0 : i64, scratch_operands = 1 : i64, tpu.core_type = #tpu.core_type<tc>, window_params = [{transform_indices = @transform_0, window_bounds = array<i64: 8, 3200>}, {transform_indices = @transform_1, window_bounds = array<i64: 3200, 512>}, {transform_indices = @transform_2, window_bounds = array<i64: 1, 512>}, {transform_indices = @transform_3, window_bounds = array<i64: 8, 512>}]} {
    %c0_i32 = arith.constant 0 : i32
    %0 = arith.cmpi eq, %arg2, %c0_i32 : i32
    %1 = arith.extui %0 : i1 to i32
    %c0_i32_0 = arith.constant 0 : i32
    %2 = arith.cmpi ne, %1, %c0_i32_0 : i32
    scf.if %2 {
      %cst_9 = arith.constant 0.000000e+00 : f32
      %12 = vector.broadcast %cst_9 : f32 to vector<8x512xf32>
      %c0_10 = arith.constant 0 : index
      %c0_11 = arith.constant 0 : index
      %13 = vector.load %arg7[%c0_10, %c0_11] : memref<8x512xf32, #tpu.memory_space<vmem>>, vector<8x512xf32>
      tpu.vector_store %arg7[%c0_10, %c0_11], %12 {strides = array<i32>} : memref<8x512xf32, #tpu.memory_space<vmem>>, vector<8x512xf32>,
    } else {
    }
    %c0 = arith.constant 0 : index
    %c0_1 = arith.constant 0 : index
    %3 = vector.load %arg7[%c0, %c0_1] : memref<8x512xf32, #tpu.memory_space<vmem>>, vector<8x512xf32>
    %c0_2 = arith.constant 0 : index
    %c0_3 = arith.constant 0 : index
    %4 = vector.load %arg3[%c0_2, %c0_3] : memref<8x3200xbf16, #tpu.memory_space<vmem>>, vector<8x3200xbf16>
    %c0_4 = arith.constant 0 : index
    %c0_5 = arith.constant 0 : index
    %5 = vector.load %arg4[%c0_4, %c0_5] : memref<3200x512xbf16, #tpu.memory_space<vmem>>, vector<3200x512xbf16>
    %cst = arith.constant dense<0.000000e+00> : vector<8x512xf32>
    %6 = tpu.matmul %4, %5, %cst {dimension_numbers = #tpu.dot_dimension_numbers<[1], [0], [0], [1], [0, 0, 1, 1], [], []>} : vector<8x3200xbf16>, vector<3200x512xbf16>, vector<8x512xf32> -> vector<8x512xf32>
    %7 = arith.addf %3, %6 : vector<8x512xf32>
    %c0_6 = arith.constant 0 : index
    %c0_7 = arith.constant 0 : index
    %8 = vector.load %arg7[%c0_6, %c0_7] : memref<8x512xf32, #tpu.memory_space<vmem>>, vector<8x512xf32>
    tpu.vector_store %arg7[%c0_6, %c0_7], %7 {strides = array<i32>} : memref<8x512xf32, #tpu.memory_space<vmem>>, vector<8x512xf32>,
    %c7_i32 = arith.constant 7 : i32
    %9 = arith.cmpi eq, %arg2, %c7_i32 : i32
    %10 = arith.extui %9 : i1 to i32
    %c0_i32_8 = arith.constant 0 : i32
    %11 = arith.cmpi ne, %10, %c0_i32_8 : i32
    scf.if %11 {
      %c0_9 = arith.constant 0 : index
      %c0_10 = arith.constant 0 : index
      %12 = vector.load %arg7[%c0_9, %c0_10] : memref<8x512xf32, #tpu.memory_space<vmem>>, vector<8x512xf32>
      %c0_11 = arith.constant 0 : index
      %c0_12 = arith.constant 0 : index
      %13 = vector.load %arg5[%c0_11, %c0_12] : memref<1x512xf32, #tpu.memory_space<vmem>>, vector<1x512xf32>
      %14 = vector.broadcast %13 : vector<1x512xf32> to vector<8x512xf32>
      %15 = arith.addf %12, %14 : vector<8x512xf32>
      %16 = vector.extract_strided_slice %15 {offsets = [0, 0], sizes = [4, 512], strides = [1, 1]} : vector<8x512xf32> to vector<4x512xf32>
      %cst_13 = arith.constant dense<0.000000e+00> : vector<512xf32>
      %17 = vector.multi_reduction <add>, %16, %cst_13 [0] : vector<4x512xf32> to vector<512xf32>
      %18 = vector.shape_cast %17 : vector<512xf32> to vector<1x512xf32>
      %cst_14 = arith.constant 4.000000e+00 : f32
      %19 = vector.broadcast %cst_14 : f32 to vector<1x512xf32>
      %20 = arith.divf %18, %19 : vector<1x512xf32>
      %21 = vector.broadcast %20 : vector<1x512xf32> to vector<4x512xf32>
      %22 = arith.subf %16, %21 : vector<4x512xf32>
      %23 = arith.mulf %22, %22 : vector<4x512xf32>
      %cst_15 = arith.constant dense<0.000000e+00> : vector<512xf32>
      %24 = vector.multi_reduction <add>, %23, %cst_15 [0] : vector<4x512xf32> to vector<512xf32>
      %25 = vector.shape_cast %24 : vector<512xf32> to vector<1x512xf32>
      %cst_16 = arith.constant 4.000000e+00 : f32
      %26 = vector.broadcast %cst_16 : f32 to vector<1x512xf32>
      %27 = arith.divf %25, %26 : vector<1x512xf32>
      %cst_17 = arith.constant 9.99999974E-6 : f32
      %28 = vector.broadcast %cst_17 : f32 to vector<1x512xf32>
      %29 = arith.addf %27, %28 : vector<1x512xf32>
      %30 = math.rsqrt %29 : vector<1x512xf32>
      %31 = vector.broadcast %30 : vector<1x512xf32> to vector<4x512xf32>
      %32 = arith.mulf %22, %31 : vector<4x512xf32>
      %cst_18 = arith.constant 0.000000e+00 : f32
      %33 = vector.broadcast %cst_18 : f32 to vector<4x512xf32>
      %34 = arith.cmpf oge, %32, %33 : vector<4x512xf32>
      %cst_19 = arith.constant 2.000000e-01 : f32
      %35 = vector.broadcast %cst_19 : f32 to vector<4x512xf32>
      %36 = arith.mulf %35, %32 : vector<4x512xf32>
      %37 = arith.select %34, %32, %36 : vector<4x512xi1>, vector<4x512xf32>
      %c0_20 = arith.constant 0 : index
      %c0_21 = arith.constant 0 : index
      %38 = vector.load %arg6[%c0_20, %c0_21] : memref<8x512xf32, #tpu.memory_space<vmem>>, vector<4x512xf32>
      tpu.vector_store %arg6[%c0_20, %c0_21], %37 {strides = array<i32>} : memref<8x512xf32, #tpu.memory_space<vmem>>, vector<4x512xf32>,
      %39 = vector.extract_strided_slice %15 {offsets = [4, 0], sizes = [4, 512], strides = [1, 1]} : vector<8x512xf32> to vector<4x512xf32>
      %cst_22 = arith.constant dense<0.000000e+00> : vector<512xf32>
      %40 = vector.multi_reduction <add>, %39, %cst_22 [0] : vector<4x512xf32> to vector<512xf32>
      %41 = vector.shape_cast %40 : vector<512xf32> to vector<1x512xf32>
      %cst_23 = arith.constant 4.000000e+00 : f32
      %42 = vector.broadcast %cst_23 : f32 to vector<1x512xf32>
      %43 = arith.divf %41, %42 : vector<1x512xf32>
      %44 = vector.broadcast %43 : vector<1x512xf32> to vector<4x512xf32>
      %45 = arith.subf %39, %44 : vector<4x512xf32>
      %46 = arith.mulf %45, %45 : vector<4x512xf32>
      %cst_24 = arith.constant dense<0.000000e+00> : vector<512xf32>
      %47 = vector.multi_reduction <add>, %46, %cst_24 [0] : vector<4x512xf32> to vector<512xf32>
      %48 = vector.shape_cast %47 : vector<512xf32> to vector<1x512xf32>
      %cst_25 = arith.constant 4.000000e+00 : f32
      %49 = vector.broadcast %cst_25 : f32 to vector<1x512xf32>
      %50 = arith.divf %48, %49 : vector<1x512xf32>
      %cst_26 = arith.constant 9.99999974E-6 : f32
      %51 = vector.broadcast %cst_26 : f32 to vector<1x512xf32>
      %52 = arith.addf %50, %51 : vector<1x512xf32>
      %53 = math.rsqrt %52 : vector<1x512xf32>
      %54 = vector.broadcast %53 : vector<1x512xf32> to vector<4x512xf32>
      %55 = arith.mulf %45, %54 : vector<4x512xf32>
      %cst_27 = arith.constant 0.000000e+00 : f32
      %56 = vector.broadcast %cst_27 : f32 to vector<4x512xf32>
      %57 = arith.cmpf oge, %55, %56 : vector<4x512xf32>
      %cst_28 = arith.constant 2.000000e-01 : f32
      %58 = vector.broadcast %cst_28 : f32 to vector<4x512xf32>
      %59 = arith.mulf %58, %55 : vector<4x512xf32>
      %60 = arith.select %57, %55, %59 : vector<4x512xi1>, vector<4x512xf32>
      %c4 = arith.constant 4 : index
      %c0_29 = arith.constant 0 : index
      %61 = vector.load %arg6[%c4, %c0_29] : memref<8x512xf32, #tpu.memory_space<vmem>>, vector<4x512xf32>
      tpu.vector_store %arg6[%c4, %c0_29], %60 {strides = array<i32>} : memref<8x512xf32, #tpu.memory_space<vmem>>, vector<4x512xf32>,
    } else {
    }
    return
  }
  func.func @transform_0(%arg0: i32, %arg1: i32, %arg2: i32) -> (i32, i32) {
    %c0_i32 = arith.constant 0 : i32
    return %arg0, %arg2 : i32, i32
  }
  func.func @transform_1(%arg0: i32, %arg1: i32, %arg2: i32) -> (i32, i32) {
    %c0_i32 = arith.constant 0 : i32
    return %arg2, %arg1 : i32, i32
  }
  func.func @transform_2(%arg0: i32, %arg1: i32, %arg2: i32) -> (i32, i32) {
    %c0_i32 = arith.constant 0 : i32
    %c0_i32_0 = arith.constant 0 : i32
    return %c0_i32, %arg1 : i32, i32
  }
  func.func @transform_3(%arg0: i32, %arg1: i32, %arg2: i32) -> (i32, i32) {
    %c0_i32 = arith.constant 0 : i32
    return %arg0, %arg1 : i32, i32
  }
}

</mosaic_0001>

<llo_original>
// kernel: forward.5
$region0: #{forward.5}
  #allocation0 [shape = 'u32[]', space=smem, size = 0x4, offset = 0x4, fixed_abs, tag = 'smem constant byte address 0x4 - core index']
  #allocation1 [shape = 'u32[144,128]{1,0:T(1,128)}', space=vmem, size = 0x12000, scoped, tag = 'internal scratch']
  #allocation2 [shape = 'f32[512,128]{1,0:T(8,128)}', space=vmem, size = 0x40000, scoped, tag = 'scratch operand']
  %s0 = inlined_call_operand.vmem [shape: bf16[512,128], index: 0, kind: input, shape index: {}]
  %s1 = inlined_call_operand.hbm [shape: bf16[128,128], index: 1, kind: input, shape index: {}]
  %s2 = inlined_call_operand.hbm [shape: f32[1,128], index: 2, kind: input, shape index: {}]
  %s3 = inlined_call_operand.vmem [shape: f32[512,128], index: 3, kind: output, shape index: {}]
  %s4 = sld [smem:[#allocation0]]
  $region38: #{forward.5} parent=0
    _
  %s6 = ssub.s32 1, %s4
  %s7 = scalar_select 0, %s6, %s4
  $region1: #{forward.5} parent=0
    #allocation3 [shape = 'u8[32768]{0}', space=vmem, size = 0x8000, scoped, tag = 'input window, operand 1, single buffered']
    #allocation4 [shape = 's32[1]{0}', space=sflag, size = 0x4, scoped, tag = 'scoped memory for forward.5']
    #allocation5 [shape = 'u8[512]{0}', space=vmem, size = 0x400, scoped, tag = 'input window, operand 2, single buffered']
    #allocation6 [shape = 's32[1]{0}', space=sflag, size = 0x4, scoped, tag = 'scoped memory for forward.5']
    %8 = vsyncpa [#allocation4], 0
    %9 = vsyncpa [#allocation6], 0
    // Predicated region
    $region2: #{forward.5} parent=1 // pred_check
      _
    $region3: #{forward.5} parent=1 // pred_check_branch
      %11 = sbr.rel (0) target = $region5
    $region4: #{forward.5} parent=1 // pred_region
      _
    $region5: #{forward.5} parent=1 // pred_fallthru
      _
    // Predicated region
    $region6: #{forward.5} parent=1 // pred_check
      _
    $region7: #{forward.5} parent=1 // pred_check_branch
      %13 = sbr.rel (0) target = $region9
    $region8: #{forward.5} parent=1 // pred_region
      %s15 = ssub.s32 1024, 1024
      %16 = vsyncadd [#allocation4], %s15
      %s17 = sshll.u32 [#allocation3], 4
      %s18 = int_to_ptr.vmem [resolvable:$true] %s17
      %23 = dma.hbm_to_vmem [thread:$0]  %s1, 1024, %s18, [#allocation4], 64, 64, 4
    $region9: #{forward.5} parent=1 // pred_fallthru
      _
    // Predicated region
    $region10: #{forward.5} parent=1 // pred_check
      _
    $region11: #{forward.5} parent=1 // pred_check_branch
      %25 = sbr.rel (0) target = $region13
    $region12: #{forward.5} parent=1 // pred_region
      %s27 = ssub.s32 16, 16
      %28 = vsyncadd [#allocation6], %s27
      %s30 = sshll.u32 [#allocation5], 4
      %s31 = int_to_ptr.vmem [resolvable:$true] %s30
      %33 = dma.hbm_to_vmem [thread:$0]  %s2, 16, %s31, [#allocation6]
    $region13: #{forward.5} parent=1 // pred_fallthru
      _
    // Predicated region
    $region14: #{forward.5} parent=1 // pred_check
      _
    $region15: #{forward.5} parent=1 // pred_check_branch
      %35 = sbr.rel (0) target = $region17
    $region16: #{forward.5} parent=1 // pred_region
      %36 = dma.done [#allocation4], 1024
    $region17: #{forward.5} parent=1 // pred_fallthru
      _
    // Predicated region
    $region18: #{forward.5} parent=1 // pred_check
      _
    $region19: #{forward.5} parent=1 // pred_check_branch
      %38 = sbr.rel (0) target = $region21
    $region20: #{forward.5} parent=1 // pred_region
      %39 = dma.done [#allocation6], 16
    $region21: #{forward.5} parent=1 // pred_fallthru
      _
    %p41 = scmp.eq.s32.totalorder 0, 0
    // Predicated region
    $region22: #{forward.5} parent=1 // pred_check
      %p42 = pneg %p41
    $region23: #{forward.5} parent=1 // pred_check_branch
      %44 = sbr.rel (%p42) target = $region25
    $region24: #{forward.5} parent=1 // pred_region
      %45 = vst [vmem:[#allocation2] sm:$0xff] 0.0
      %46 = vst [vmem:[#allocation2 + $0x8] sm:$0xff] 0.0
      %47 = vst [vmem:[#allocation2 + $0x10] sm:$0xff] 0.0
      %48 = vst [vmem:[#allocation2 + $0x18] sm:$0xff] 0.0
      %49 = vst [vmem:[#allocation2 + $0x20] sm:$0xff] 0.0
      %50 = vst [vmem:[#allocation2 + $0x28] sm:$0xff] 0.0
      %51 = vst [vmem:[#allocation2 + $0x30] sm:$0xff] 0.0
      %52 = vst [vmem:[#allocation2 + $0x38] sm:$0xff] 0.0
      %53 = vst [vmem:[#allocation2 + $0x40] sm:$0xff] 0.0
      %54 = vst [vmem:[#allocation2 + $0x48] sm:$0xff] 0.0
      %55 = vst [vmem:[#allocation2 + $0x50] sm:$0xff] 0.0
      %56 = vst [vmem:[#allocation2 + $0x58] sm:$0xff] 0.0
      %57 = vst [vmem:[#allocation2 + $0x60] sm:$0xff] 0.0
      %58 = vst [vmem:[#allocation2 + $0x68] sm:$0xff] 0.0
      %59 = vst [vmem:[#allocation2 + $0x70] sm:$0xff] 0.0
      %60 = vst [vmem:[#allocation2 + $0x78] sm:$0xff] 0.0
      %61 = vst [vmem:[#allocation2 + $0x80] sm:$0xff] 0.0
      %62 = vst [vmem:[#allocation2 + $0x88] sm:$0xff] 0.0
      %63 = vst [vmem:[#allocation2 + $0x90] sm:$0xff] 0.0
      %64 = vst [vmem:[#allocation2 + $0x98] sm:$0xff] 0.0
      %65 = vst [vmem:[#allocation2 + $0xa0] sm:$0xff] 0.0
      %66 = vst [vmem:[#allocation2 + $0xa8] sm:$0xff] 0.0
      %67 = vst [vmem:[#allocation2 + $0xb0] sm:$0xff] 0.0
      %68 = vst [vmem:[#allocation2 + $0xb8] sm:$0xff] 0.0
      %69 = vst [vmem:[#allocation2 + $0xc0] sm:$0xff] 0.0
      %70 = vst [vmem:[#allocation2 + $0xc8] sm:$0xff] 0.0
      %71 = vst [vmem:[#allocation2 + $0xd0] sm:$0xff] 0.0
      %72 = vst [vmem:[#allocation2 + $0xd8] sm:$0xff] 0.0
      %73 = vst [vmem:[#allocation2 + $0xe0] sm:$0xff] 0.0
      %74 = vst [vmem:[#allocation2 + $0xe8] sm:$0xff] 0.0
      %75 = vst [vmem:[#allocation2 + $0xf0] sm:$0xff] 0.0
      %76 = vst [vmem:[#allocation2 + $0xf8] sm:$0xff] 0.0
      %77 = vst [vmem:[#allocation2 + $0x100] sm:$0xff] 0.0
      %78 = vst [vmem:[#allocation2 + $0x108] sm:$0xff] 0.0
      %79 = vst [vmem:[#allocation2 + $0x110] sm:$0xff] 0.0
      %80 = vst [vmem:[#allocation2 + $0x118] sm:$0xff] 0.0
      %81 = vst [vmem:[#allocation2 + $0x120] sm:$0xff] 0.0
      %82 = vst [vmem:[#allocation2 + $0x128] sm:$0xff] 0.0
      %83 = vst [vmem:[#allocation2 + $0x130] sm:$0xff] 0.0
      %84 = vst [vmem:[#allocation2 + $0x138] sm:$0xff] 0.0
      %85 = vst [vmem:[#allocation2 + $0x140] sm:$0xff] 0.0
      %86 = vst [vmem:[#allocation2 + $0x148] sm:$0xff] 0.0
      %87 = vst [vmem:[#allocation2 + $0x150] sm:$0xff] 0.0
      %88 = vst [vmem:[#allocation2 + $0x158] sm:$0xff] 0.0
      %89 = vst [vmem:[#allocation2 + $0x160] sm:$0xff] 0.0
      %90 = vst [vmem:[#allocation2 + $0x168] sm:$0xff] 0.0
      %91 = vst [vmem:[#allocation2 + $0x170] sm:$0xff] 0.0
      %92 = vst [vmem:[#allocation2 + $0x178] sm:$0xff] 0.0
      %93 = vst [vmem:[#allocation2 + $0x180] sm:$0xff] 0.0
      %94 = vst [vmem:[#allocation2 + $0x188] sm:$0xff] 0.0
      %95 = vst [vmem:[#allocation2 + $0x190] sm:$0xff] 0.0
      %96 = vst [vmem:[#allocation2 + $0x198] sm:$0xff] 0.0
      %97 = vst [vmem:[#allocation2 + $0x1a0] sm:$0xff] 0.0
      %98 = vst [vmem:[#allocation2 + $0x1a8] sm:$0xff] 0.0
      %99 = vst [vmem:[#allocation2 + $0x1b0] sm:$0xff] 0.0
      %100 = vst [vmem:[#allocation2 + $0x1b8] sm:$0xff] 0.0
      %101 = vst [vmem:[#allocation2 + $0x1c0] sm:$0xff] 0.0
      %102 = vst [vmem:[#allocation2 + $0x1c8] sm:$0xff] 0.0
      %103 = vst [vmem:[#allocation2 + $0x1d0] sm:$0xff] 0.0
      %104 = vst [vmem:[#allocation2 + $0x1d8] sm:$0xff] 0.0
      %105 = vst [vmem:[#allocation2 + $0x1e0] sm:$0xff] 0.0
      %106 = vst [vmem:[#allocation2 + $0x1e8] sm:$0xff] 0.0
      %107 = vst [vmem:[#allocation2 + $0x1f0] sm:$0xff] 0.0
      %108 = vst [vmem:[#allocation2 + $0x1f8] sm:$0xff] 0.0
    $region25: #{forward.5} parent=1 // pred_fallthru
      _
    %v109 = vld [vmem:[#allocation2] sm:$0xff]
    %v110 = vld [vmem:[#allocation2 + $0x8] sm:$0xff]
    %v111 = vld [vmem:[#allocation2 + $0x10] sm:$0xff]
    %v112 = vld [vmem:[#allocation2 + $0x18] sm:$0xff]
    %v113 = vld [vmem:[#allocation2 + $0x20] sm:$0xff]
    %v114 = vld [vmem:[#allocation2 + $0x28] sm:$0xff]
    %v115 = vld [vmem:[#allocation2 + $0x30] sm:$0xff]
    %v116 = vld [vmem:[#allocation2 + $0x38] sm:$0xff]
    %v117 = vld [vmem:[#allocation2 + $0x40] sm:$0xff]
    %v118 = vld [vmem:[#allocation2 + $0x48] sm:$0xff]
    %v119 = vld [vmem:[#allocation2 + $0x50] sm:$0xff]
    %v120 = vld [vmem:[#allocation2 + $0x58] sm:$0xff]
    %v121 = vld [vmem:[#allocation2 + $0x60] sm:$0xff]
    %v122 = vld [vmem:[#allocation2 + $0x68] sm:$0xff]
    %v123 = vld [vmem:[#allocation2 + $0x70] sm:$0xff]
    %v124 = vld [vmem:[#allocation2 + $0x78] sm:$0xff]
    %v125 = vld [vmem:[#allocation2 + $0x80] sm:$0xff]
    %v126 = vld [vmem:[#allocation2 + $0x88] sm:$0xff]
    %v127 = vld [vmem:[#allocation2 + $0x90] sm:$0xff]
    %v128 = vld [vmem:[#allocation2 + $0x98] sm:$0xff]
    %v129 = vld [vmem:[#allocation2 + $0xa0] sm:$0xff]
    %v130 = vld [vmem:[#allocation2 + $0xa8] sm:$0xff]
    %v131 = vld [vmem:[#allocation2 + $0xb0] sm:$0xff]
    %v132 = vld [vmem:[#allocation2 + $0xb8] sm:$0xff]
    %v133 = vld [vmem:[#allocation2 + $0xc0] sm:$0xff]
    %v134 = vld [vmem:[#allocation2 + $0xc8] sm:$0xff]
    %v135 = vld [vmem:[#allocation2 + $0xd0] sm:$0xff]
    %v136 = vld [vmem:[#allocation2 + $0xd8] sm:$0xff]
    %v137 = vld [vmem:[#allocation2 + $0xe0] sm:$0xff]
    %v138 = vld [vmem:[#allocation2 + $0xe8] sm:$0xff]
    %v139 = vld [vmem:[#allocation2 + $0xf0] sm:$0xff]
    %v140 = vld [vmem:[#allocation2 + $0xf8] sm:$0xff]
    %v141 = vld [vmem:[#allocation2 + $0x100] sm:$0xff]
    %v142 = vld [vmem:[#allocation2 + $0x108] sm:$0xff]
    %v143 = vld [vmem:[#allocation2 + $0x110] sm:$0xff]
    %v144 = vld [vmem:[#allocation2 + $0x118] sm:$0xff]
    %v145 = vld [vmem:[#allocation2 + $0x120] sm:$0xff]
    %v146 = vld [vmem:[#allocation2 + $0x128] sm:$0xff]
    %v147 = vld [vmem:[#allocation2 + $0x130] sm:$0xff]
    %v148 = vld [vmem:[#allocation2 + $0x138] sm:$0xff]
    %v149 = vld [vmem:[#allocation2 + $0x140] sm:$0xff]
    %v150 = vld [vmem:[#allocation2 + $0x148] sm:$0xff]
    %v151 = vld [vmem:[#allocation2 + $0x150] sm:$0xff]
    %v152 = vld [vmem:[#allocation2 + $0x158] sm:$0xff]
    %v153 = vld [vmem:[#allocation2 + $0x160] sm:$0xff]
    %v154 = vld [vmem:[#allocation2 + $0x168] sm:$0xff]
    %v155 = vld [vmem:[#allocation2 + $0x170] sm:$0xff]
    %v156 = vld [vmem:[#allocation2 + $0x178] sm:$0xff]
    %v157 = vld [vmem:[#allocation2 + $0x180] sm:$0xff]
    %v158 = vld [vmem:[#allocation2 + $0x188] sm:$0xff]
    %v159 = vld [vmem:[#allocation2 + $0x190] sm:$0xff]
    %v160 = vld [vmem:[#allocation2 + $0x198] sm:$0xff]
    %v161 = vld [vmem:[#allocation2 + $0x1a0] sm:$0xff]
    %v162 = vld [vmem:[#allocation2 + $0x1a8] sm:$0xff]
    %v163 = vld [vmem:[#allocation2 + $0x1b0] sm:$0xff]
    %v164 = vld [vmem:[#allocation2 + $0x1b8] sm:$0xff]
    %v165 = vld [vmem:[#allocation2 + $0x1c0] sm:$0xff]
    %v166 = vld [vmem:[#allocation2 + $0x1c8] sm:$0xff]
    %v167 = vld [vmem:[#allocation2 + $0x1d0] sm:$0xff]
    %v168 = vld [vmem:[#allocation2 + $0x1d8] sm:$0xff]
    %v169 = vld [vmem:[#allocation2 + $0x1e0] sm:$0xff]
    %v170 = vld [vmem:[#allocation2 + $0x1e8] sm:$0xff]
    %v171 = vld [vmem:[#allocation2 + $0x1f0] sm:$0xff]
    %v172 = vld [vmem:[#allocation2 + $0x1f8] sm:$0xff]
    %v173 = vld [vmem:[%s0] sm:$0xf]
    %v174 = vld [vmem:[%s0 + $0x4] sm:$0xf]
    %v175 = vld [vmem:[%s0 + $0x8] sm:$0xf]
    %v176 = vld [vmem:[%s0 + $0xc] sm:$0xf]
    %v177 = vld [vmem:[%s0 + $0x10] sm:$0xf]
    %v178 = vld [vmem:[%s0 + $0x14] sm:$0xf]
    %v179 = vld [vmem:[%s0 + $0x18] sm:$0xf]
    %v180 = vld [vmem:[%s0 + $0x1c] sm:$0xf]
    %v181 = vld [vmem:[%s0 + $0x20] sm:$0xf]
    %v182 = vld [vmem:[%s0 + $0x24] sm:$0xf]
    %v183 = vld [vmem:[%s0 + $0x28] sm:$0xf]
    %v184 = vld [vmem:[%s0 + $0x2c] sm:$0xf]
    %v185 = vld [vmem:[%s0 + $0x30] sm:$0xf]
    %v186 = vld [vmem:[%s0 + $0x34] sm:$0xf]
    %v187 = vld [vmem:[%s0 + $0x38] sm:$0xf]
    %v188 = vld [vmem:[%s0 + $0x3c] sm:$0xf]
    %v189 = vld [vmem:[%s0 + $0x40] sm:$0xf]
    %v190 = vld [vmem:[%s0 + $0x44] sm:$0xf]
    %v191 = vld [vmem:[%s0 + $0x48] sm:$0xf]
    %v192 = vld [vmem:[%s0 + $0x4c] sm:$0xf]
    %v193 = vld [vmem:[%s0 + $0x50] sm:$0xf]
    %v194 = vld [vmem:[%s0 + $0x54] sm:$0xf]
    %v195 = vld [vmem:[%s0 + $0x58] sm:$0xf]
    %v196 = vld [vmem:[%s0 + $0x5c] sm:$0xf]
    %v197 = vld [vmem:[%s0 + $0x60] sm:$0xf]
    %v198 = vld [vmem:[%s0 + $0x64] sm:$0xf]
    %v199 = vld [vmem:[%s0 + $0x68] sm:$0xf]
    %v200 = vld [vmem:[%s0 + $0x6c] sm:$0xf]
    %v201 = vld [vmem:[%s0 + $0x70] sm:$0xf]
    %v202 = vld [vmem:[%s0 + $0x74] sm:$0xf]
    %v203 = vld [vmem:[%s0 + $0x78] sm:$0xf]
    %v204 = vld [vmem:[%s0 + $0x7c] sm:$0xf]
    %v205 = vld [vmem:[%s0 + $0x80] sm:$0xf]
    %v206 = vld [vmem:[%s0 + $0x84] sm:$0xf]
    %v207 = vld [vmem:[%s0 + $0x88] sm:$0xf]
    %v208 = vld [vmem:[%s0 + $0x8c] sm:$0xf]
    %v209 = vld [vmem:[%s0 + $0x90] sm:$0xf]
    %v210 = vld [vmem:[%s0 + $0x94] sm:$0xf]
    %v211 = vld [vmem:[%s0 + $0x98] sm:$0xf]
    %v212 = vld [vmem:[%s0 + $0x9c] sm:$0xf]
    %v213 = vld [vmem:[%s0 + $0xa0] sm:$0xf]
    %v214 = vld [vmem:[%s0 + $0xa4] sm:$0xf]
    %v215 = vld [vmem:[%s0 + $0xa8] sm:$0xf]
    %v216 = vld [vmem:[%s0 + $0xac] sm:$0xf]
    %v217 = vld [vmem:[%s0 + $0xb0] sm:$0xf]
    %v218 = vld [vmem:[%s0 + $0xb4] sm:$0xf]
    %v219 = vld [vmem:[%s0 + $0xb8] sm:$0xf]
    %v220 = vld [vmem:[%s0 + $0xbc] sm:$0xf]
    %v221 = vld [vmem:[%s0 + $0xc0] sm:$0xf]
    %v222 = vld [vmem:[%s0 + $0xc4] sm:$0xf]
    %v223 = vld [vmem:[%s0 + $0xc8] sm:$0xf]
    %v224 = vld [vmem:[%s0 + $0xcc] sm:$0xf]
    %v225 = vld [vmem:[%s0 + $0xd0] sm:$0xf]
    %v226 = vld [vmem:[%s0 + $0xd4] sm:$0xf]
    %v227 = vld [vmem:[%s0 + $0xd8] sm:$0xf]
    %v228 = vld [vmem:[%s0 + $0xdc] sm:$0xf]
    %v229 = vld [vmem:[%s0 + $0xe0] sm:$0xf]
    %v230 = vld [vmem:[%s0 + $0xe4] sm:$0xf]
    %v231 = vld [vmem:[%s0 + $0xe8] sm:$0xf]
    %v232 = vld [vmem:[%s0 + $0xec] sm:$0xf]
    %v233 = vld [vmem:[%s0 + $0xf0] sm:$0xf]
    %v234 = vld [vmem:[%s0 + $0xf4] sm:$0xf]
    %v235 = vld [vmem:[%s0 + $0xf8] sm:$0xf]
    %v236 = vld [vmem:[%s0 + $0xfc] sm:$0xf]
    %v237 = vld [vmem:[#allocation3] sm:$0xf]
    %v238 = vld [vmem:[#allocation3 + $0x4] sm:$0xf]
    %v239 = vld [vmem:[#allocation3 + $0x8] sm:$0xf]
    %v240 = vld [vmem:[#allocation3 + $0xc] sm:$0xf]
    %v241 = vld [vmem:[#allocation3 + $0x10] sm:$0xf]
    %v242 = vld [vmem:[#allocation3 + $0x14] sm:$0xf]
    %v243 = vld [vmem:[#allocation3 + $0x18] sm:$0xf]
    %v244 = vld [vmem:[#allocation3 + $0x1c] sm:$0xf]
    %v245 = vld [vmem:[#allocation3 + $0x20] sm:$0xf]
    %v246 = vld [vmem:[#allocation3 + $0x24] sm:$0xf]
    %v247 = vld [vmem:[#allocation3 + $0x28] sm:$0xf]
    %v248 = vld [vmem:[#allocation3 + $0x2c] sm:$0xf]
    %v249 = vld [vmem:[#allocation3 + $0x30] sm:$0xf]
    %v250 = vld [vmem:[#allocation3 + $0x34] sm:$0xf]
    %v251 = vld [vmem:[#allocation3 + $0x38] sm:$0xf]
    %v252 = vld [vmem:[#allocation3 + $0x3c] sm:$0xf]
    %v317 = vunpack.c.l.b16 %v173
    %v318 = vunpack.c.l.b16 %v174
    %v319 = vunpack.c.l.b16 %v175
    %v320 = vunpack.c.l.b16 %v176
    %v321 = vunpack.c.l.b16 %v177
    %v322 = vunpack.c.l.b16 %v178
    %v323 = vunpack.c.l.b16 %v179
    %v324 = vunpack.c.l.b16 %v180
    %v325 = vunpack.c.l.b16 %v181
    %v326 = vunpack.c.l.b16 %v182
    %v327 = vunpack.c.l.b16 %v183
    %v328 = vunpack.c.l.b16 %v184
    %v329 = vunpack.c.l.b16 %v185
    %v330 = vunpack.c.l.b16 %v186
    %v331 = vunpack.c.l.b16 %v187
    %v332 = vunpack.c.l.b16 %v188
    %v333 = vunpack.c.l.b16 %v189
    %v334 = vunpack.c.l.b16 %v190
    %v335 = vunpack.c.l.b16 %v191
    %v336 = vunpack.c.l.b16 %v192
    %v337 = vunpack.c.l.b16 %v193
    %v338 = vunpack.c.l.b16 %v194
    %v339 = vunpack.c.l.b16 %v195
    %v340 = vunpack.c.l.b16 %v196
    %v341 = vunpack.c.l.b16 %v197
    %v342 = vunpack.c.l.b16 %v198
    %v343 = vunpack.c.l.b16 %v199
    %v344 = vunpack.c.l.b16 %v200
    %v345 = vunpack.c.l.b16 %v201
    %v346 = vunpack.c.l.b16 %v202
    %v347 = vunpack.c.l.b16 %v203
    %v348 = vunpack.c.l.b16 %v204
    %v349 = vunpack.c.l.b16 %v205
    %v350 = vunpack.c.l.b16 %v206
    %v351 = vunpack.c.l.b16 %v207
    %v352 = vunpack.c.l.b16 %v208
    %v353 = vunpack.c.l.b16 %v209
    %v354 = vunpack.c.l.b16 %v210
    %v355 = vunpack.c.l.b16 %v211
    %v356 = vunpack.c.l.b16 %v212
    %v357 = vunpack.c.l.b16 %v213
    %v358 = vunpack.c.l.b16 %v214
    %v359 = vunpack.c.l.b16 %v215
    %v360 = vunpack.c.l.b16 %v216
    %v361 = vunpack.c.l.b16 %v217
    %v362 = vunpack.c.l.b16 %v218
    %v363 = vunpack.c.l.b16 %v219
    %v364 = vunpack.c.l.b16 %v220
    %v365 = vunpack.c.l.b16 %v221
    %v366 = vunpack.c.l.b16 %v222
    %v367 = vunpack.c.l.b16 %v223
    %v368 = vunpack.c.l.b16 %v224
    %v369 = vunpack.c.l.b16 %v225
    %v370 = vunpack.c.l.b16 %v226
    %v371 = vunpack.c.l.b16 %v227
    %v372 = vunpack.c.l.b16 %v228
    %v373 = vunpack.c.l.b16 %v229
    %v374 = vunpack.c.l.b16 %v230
    %v375 = vunpack.c.l.b16 %v231
    %v376 = vunpack.c.l.b16 %v232
    %v377 = vunpack.c.l.b16 %v233
    %v378 = vunpack.c.l.b16 %v234
    %v379 = vunpack.c.l.b16 %v235
    %v380 = vunpack.c.l.b16 %v236
    %v381 = vpack.c.b16 %v318, %v317
    %v382 = vpack.c.b16 %v320, %v319
    %v383 = vpack.c.b16 %v322, %v321
    %v384 = vpack.c.b16 %v324, %v323
    %v385 = vpack.c.b16 %v326, %v325
    %v386 = vpack.c.b16 %v328, %v327
    %v387 = vpack.c.b16 %v330, %v329
    %v388 = vpack.c.b16 %v332, %v331
    %v389 = vpack.c.b16 %v334, %v333
    %v390 = vpack.c.b16 %v336, %v335
    %v391 = vpack.c.b16 %v338, %v337
    %v392 = vpack.c.b16 %v340, %v339
    %v393 = vpack.c.b16 %v342, %v341
    %v394 = vpack.c.b16 %v344, %v343
    %v395 = vpack.c.b16 %v346, %v345
    %v396 = vpack.c.b16 %v348, %v347
    %v397 = vpack.c.b16 %v350, %v349
    %v398 = vpack.c.b16 %v352, %v351
    %v399 = vpack.c.b16 %v354, %v353
    %v400 = vpack.c.b16 %v356, %v355
    %v401 = vpack.c.b16 %v358, %v357
    %v402 = vpack.c.b16 %v360, %v359
    %v403 = vpack.c.b16 %v362, %v361
    %v404 = vpack.c.b16 %v364, %v363
    %v405 = vpack.c.b16 %v366, %v365
    %v406 = vpack.c.b16 %v368, %v367
    %v407 = vpack.c.b16 %v370, %v369
    %v408 = vpack.c.b16 %v372, %v371
    %v409 = vpack.c.b16 %v374, %v373
    %v410 = vpack.c.b16 %v376, %v375
    %v411 = vpack.c.b16 %v378, %v377
    %v412 = vpack.c.b16 %v380, %v379
    %v461 = vunpack.c.l.b16 %v237
    %v462 = vunpack.c.l.b16 %v238
    %v463 = vunpack.c.l.b16 %v239
    %v464 = vunpack.c.l.b16 %v240
    %v465 = vunpack.c.l.b16 %v241
    %v466 = vunpack.c.l.b16 %v242
    %v467 = vunpack.c.l.b16 %v243
    %v468 = vunpack.c.l.b16 %v244
    %v469 = vunpack.c.l.b16 %v245
    %v470 = vunpack.c.l.b16 %v246
    %v471 = vunpack.c.l.b16 %v247
    %v472 = vunpack.c.l.b16 %v248
    %v473 = vunpack.c.l.b16 %v249
    %v474 = vunpack.c.l.b16 %v250
    %v475 = vunpack.c.l.b16 %v251
    %v476 = vunpack.c.l.b16 %v252
    %v477 = vpack.c.b16 %v462, %v461
    %v478 = vpack.c.b16 %v464, %v463
    %v479 = vpack.c.b16 %v466, %v465
    %v480 = vpack.c.b16 %v468, %v467
    %v481 = vpack.c.b16 %v470, %v469
    %v482 = vpack.c.b16 %v472, %v471
    %v483 = vpack.c.b16 %v474, %v473
    %v484 = vpack.c.b16 %v476, %v475
    %493 = vmatprep.subr.bf16.mxu0 0
    %494 = vmatpush1.bf16.msra.mxu0 %v477
    %495 = vmatprep.subr.bf16.mxu0 0
    %496 = vmatpush1.bf16.msra.mxu0 %v478
    %497 = vmatprep.subr.bf16.mxu0 0
    %498 = vmatpush1.bf16.msra.mxu0 %v479
    %499 = vmatprep.subr.bf16.mxu0 0
    %500 = vmatpush1.bf16.msra.mxu0 %v480
    %501 = vmatprep.subr.bf16.mxu0 0
    %502 = vmatpush1.bf16.msra.mxu0 %v481
    %503 = vmatprep.subr.bf16.mxu0 0
    %504 = vmatpush1.bf16.msra.mxu0 %v482
    %505 = vmatprep.subr.bf16.mxu0 0
    %506 = vmatpush1.bf16.msra.mxu0 %v483
    %507 = vmatprep.subr.bf16.mxu0 0
    %508 = vmatpush1.bf16.msra.mxu0 %v484
    %509 = vmatprep.subr.bf16.mxu0 0
    %510 = vmatpush1.bf16.msra.mxu0 0
    %511 = vmatprep.subr.bf16.mxu0 0
    %512 = vmatpush1.bf16.msra.mxu0 0
    %513 = vmatprep.subr.bf16.mxu0 0
    %514 = vmatpush1.bf16.msra.mxu0 0
    %515 = vmatprep.subr.bf16.mxu0 0
    %516 = vmatpush1.bf16.msra.mxu0 0
    %517 = vmatprep.subr.bf16.mxu0 0
    %518 = vmatpush1.bf16.msra.mxu0 0
    %519 = vmatprep.subr.bf16.mxu0 0
    %520 = vmatpush1.bf16.msra.mxu0 0
    %521 = vmatprep.subr.bf16.mxu0 0
    %522 = vmatpush1.bf16.msra.mxu0 0
    %523 = vmatprep.subr.bf16.mxu0 0
    %524 = vmatpush1.bf16.msra.mxu0 0
    %525 = vmatprep.mubr.bf16.mxu0 0
    %526 = vmatmul.mubr.bf16.gmra.mrb[0].mxu0 %v381
    %v527 = vpop.f32.mrb[0].mxu0
    %v528 = vadd.f32 0.0, %v527
    %v529 = vpop.f32.mrb[0].mxu0
    %v530 = vpop.f32.mrb[0].mxu0
    %v531 = vadd.f32 0.0, %v530
    %v532 = vpop.f32.mrb[0].mxu0
    %533 = vmatprep.mubr.bf16.mxu0 0
    %534 = vmatmul.mubr.bf16.gmra.mrb[0].mxu0 %v382
    %v535 = vpop.f32.mrb[0].mxu0
    %v536 = vadd.f32 0.0, %v535
    %v537 = vpop.f32.mrb[0].mxu0
    %v538 = vpop.f32.mrb[0].mxu0
    %v539 = vadd.f32 0.0, %v538
    %v540 = vpop.f32.mrb[0].mxu0
    %541 = vmatprep.mubr.bf16.mxu0 0
    %542 = vmatmul.mubr.bf16.gmra.mrb[0].mxu0 %v383
    %v543 = vpop.f32.mrb[0].mxu0
    %v544 = vadd.f32 0.0, %v543
    %v545 = vpop.f32.mrb[0].mxu0
    %v546 = vpop.f32.mrb[0].mxu0
    %v547 = vadd.f32 0.0, %v546
    %v548 = vpop.f32.mrb[0].mxu0
    %549 = vmatprep.mubr.bf16.mxu0 0
    %550 = vmatmul.mubr.bf16.gmra.mrb[0].mxu0 %v384
    %v551 = vpop.f32.mrb[0].mxu0
    %v552 = vadd.f32 0.0, %v551
    %v553 = vpop.f32.mrb[0].mxu0
    %v554 = vpop.f32.mrb[0].mxu0
    %v555 = vadd.f32 0.0, %v554
    %v556 = vpop.f32.mrb[0].mxu0
    %557 = vmatprep.mubr.bf16.mxu0 0
    %558 = vmatmul.mubr.bf16.gmra.mrb[0].mxu0 %v385
    %v559 = vpop.f32.mrb[0].mxu0
    %v560 = vadd.f32 0.0, %v559
    %v561 = vpop.f32.mrb[0].mxu0
    %v562 = vpop.f32.mrb[0].mxu0
    %v563 = vadd.f32 0.0, %v562
    %v564 = vpop.f32.mrb[0].mxu0
    %565 = vmatprep.mubr.bf16.mxu0 0
    %566 = vmatmul.mubr.bf16.gmra.mrb[0].mxu0 %v386
    %v567 = vpop.f32.mrb[0].mxu0
    %v568 = vadd.f32 0.0, %v567
    %v569 = vpop.f32.mrb[0].mxu0
    %v570 = vpop.f32.mrb[0].mxu0
    %v571 = vadd.f32 0.0, %v570
    %v572 = vpop.f32.mrb[0].mxu0
    %573 = vmatprep.mubr.bf16.mxu0 0
    %574 = vmatmul.mubr.bf16.gmra.mrb[0].mxu0 %v387
    %v575 = vpop.f32.mrb[0].mxu0
    %v576 = vadd.f32 0.0, %v575
    %v577 = vpop.f32.mrb[0].mxu0
    %v578 = vpop.f32.mrb[0].mxu0
    %v579 = vadd.f32 0.0, %v578
    %v580 = vpop.f32.mrb[0].mxu0
    %581 = vmatprep.mubr.bf16.mxu0 0
    %582 = vmatmul.mubr.bf16.gmra.mrb[0].mxu0 %v388
    %v583 = vpop.f32.mrb[0].mxu0
    %v584 = vadd.f32 0.0, %v583
    %v585 = vpop.f32.mrb[0].mxu0
    %v586 = vpop.f32.mrb[0].mxu0
    %v587 = vadd.f32 0.0, %v586
    %v588 = vpop.f32.mrb[0].mxu0
    %589 = vmatprep.mubr.bf16.mxu0 0
    %590 = vmatmul.mubr.bf16.gmra.mrb[0].mxu0 %v389
    %v591 = vpop.f32.mrb[0].mxu0
    %v592 = vadd.f32 0.0, %v591
    %v593 = vpop.f32.mrb[0].mxu0
    %v594 = vpop.f32.mrb[0].mxu0
    %v595 = vadd.f32 0.0, %v594
    %v596 = vpop.f32.mrb[0].mxu0
    %597 = vmatprep.mubr.bf16.mxu0 0
    %598 = vmatmul.mubr.bf16.gmra.mrb[0].mxu0 %v390
    %v599 = vpop.f32.mrb[0].mxu0
    %v600 = vadd.f32 0.0, %v599
    %v601 = vpop.f32.mrb[0].mxu0
    %v602 = vpop.f32.mrb[0].mxu0
    %v603 = vadd.f32 0.0, %v602
    %v604 = vpop.f32.mrb[0].mxu0
    %605 = vmatprep.mubr.bf16.mxu0 0
    %606 = vmatmul.mubr.bf16.gmra.mrb[0].mxu0 %v391
    %v607 = vpop.f32.mrb[0].mxu0
    %v608 = vadd.f32 0.0, %v607
    %v609 = vpop.f32.mrb[0].mxu0
    %v610 = vpop.f32.mrb[0].mxu0
    %v611 = vadd.f32 0.0, %v610
    %v612 = vpop.f32.mrb[0].mxu0
    %613 = vmatprep.mubr.bf16.mxu0 0
    %614 = vmatmul.mubr.bf16.gmra.mrb[0].mxu0 %v392
    %v615 = vpop.f32.mrb[0].mxu0
    %v616 = vadd.f32 0.0, %v615
    %v617 = vpop.f32.mrb[0].mxu0
    %v618 = vpop.f32.mrb[0].mxu0
    %v619 = vadd.f32 0.0, %v618
    %v620 = vpop.f32.mrb[0].mxu0
    %621 = vmatprep.mubr.bf16.mxu0 0
    %622 = vmatmul.mubr.bf16.gmra.mrb[0].mxu0 %v393
    %v623 = vpop.f32.mrb[0].mxu0
    %v624 = vadd.f32 0.0, %v623
    %v625 = vpop.f32.mrb[0].mxu0
    %v626 = vpop.f32.mrb[0].mxu0
    %v627 = vadd.f32 0.0, %v626
    %v628 = vpop.f32.mrb[0].mxu0
    %629 = vmatprep.mubr.bf16.mxu0 0
    %630 = vmatmul.mubr.bf16.gmra.mrb[0].mxu0 %v394
    %v631 = vpop.f32.mrb[0].mxu0
    %v632 = vadd.f32 0.0, %v631
    %v633 = vpop.f32.mrb[0].mxu0
    %v634 = vpop.f32.mrb[0].mxu0
    %v635 = vadd.f32 0.0, %v634
    %v636 = vpop.f32.mrb[0].mxu0
    %637 = vmatprep.mubr.bf16.mxu0 0
    %638 = vmatmul.mubr.bf16.gmra.mrb[0].mxu0 %v395
    %v639 = vpop.f32.mrb[0].mxu0
    %v640 = vadd.f32 0.0, %v639
    %v641 = vpop.f32.mrb[0].mxu0
    %v642 = vpop.f32.mrb[0].mxu0
    %v643 = vadd.f32 0.0, %v642
    %v644 = vpop.f32.mrb[0].mxu0
    %645 = vmatprep.mubr.bf16.mxu0 0
    %646 = vmatmul.mubr.bf16.gmra.mrb[0].mxu0 %v396
    %v647 = vpop.f32.mrb[0].mxu0
    %v648 = vadd.f32 0.0, %v647
    %v649 = vpop.f32.mrb[0].mxu0
    %v650 = vpop.f32.mrb[0].mxu0
    %v651 = vadd.f32 0.0, %v650
    %v652 = vpop.f32.mrb[0].mxu0
    %653 = vmatprep.mubr.bf16.mxu0 0
    %654 = vmatmul.mubr.bf16.gmra.mrb[0].mxu0 %v397
    %v655 = vpop.f32.mrb[0].mxu0
    %v656 = vadd.f32 0.0, %v655
    %v657 = vpop.f32.mrb[0].mxu0
    %v658 = vpop.f32.mrb[0].mxu0
    %v659 = vadd.f32 0.0, %v658
    %v660 = vpop.f32.mrb[0].mxu0
    %661 = vmatprep.mubr.bf16.mxu0 0
    %662 = vmatmul.mubr.bf16.gmra.mrb[0].mxu0 %v398
    %v663 = vpop.f32.mrb[0].mxu0
    %v664 = vadd.f32 0.0, %v663
    %v665 = vpop.f32.mrb[0].mxu0
    %v666 = vpop.f32.mrb[0].mxu0
    %v667 = vadd.f32 0.0, %v666
    %v668 = vpop.f32.mrb[0].mxu0
    %669 = vmatprep.mubr.bf16.mxu0 0
    %670 = vmatmul.mubr.bf16.gmra.mrb[0].mxu0 %v399
    %v671 = vpop.f32.mrb[0].mxu0
    %v672 = vadd.f32 0.0, %v671
    %v673 = vpop.f32.mrb[0].mxu0
    %v674 = vpop.f32.mrb[0].mxu0
    %v675 = vadd.f32 0.0, %v674
    %v676 = vpop.f32.mrb[0].mxu0
    %677 = vmatprep.mubr.bf16.mxu0 0
    %678 = vmatmul.mubr.bf16.gmra.mrb[0].mxu0 %v400
    %v679 = vpop.f32.mrb[0].mxu0
    %v680 = vadd.f32 0.0, %v679
    %v681 = vpop.f32.mrb[0].mxu0
    %v682 = vpop.f32.mrb[0].mxu0
    %v683 = vadd.f32 0.0, %v682
    %v684 = vpop.f32.mrb[0].mxu0
    %685 = vmatprep.mubr.bf16.mxu0 0
    %686 = vmatmul.mubr.bf16.gmra.mrb[0].mxu0 %v401
    %v687 = vpop.f32.mrb[0].mxu0
    %v688 = vadd.f32 0.0, %v687
    %v689 = vpop.f32.mrb[0].mxu0
    %v690 = vpop.f32.mrb[0].mxu0
    %v691 = vadd.f32 0.0, %v690
    %v692 = vpop.f32.mrb[0].mxu0
    %693 = vmatprep.mubr.bf16.mxu0 0
    %694 = vmatmul.mubr.bf16.gmra.mrb[0].mxu0 %v402
    %v695 = vpop.f32.mrb[0].mxu0
    %v696 = vadd.f32 0.0, %v695
    %v697 = vpop.f32.mrb[0].mxu0
    %v698 = vpop.f32.mrb[0].mxu0
    %v699 = vadd.f32 0.0, %v698
    %v700 = vpop.f32.mrb[0].mxu0
    %701 = vmatprep.mubr.bf16.mxu0 0
    %702 = vmatmul.mubr.bf16.gmra.mrb[0].mxu0 %v403
    %v703 = vpop.f32.mrb[0].mxu0
    %v704 = vadd.f32 0.0, %v703
    %v705 = vpop.f32.mrb[0].mxu0
    %v706 = vpop.f32.mrb[0].mxu0
    %v707 = vadd.f32 0.0, %v706
    %v708 = vpop.f32.mrb[0].mxu0
    %709 = vmatprep.mubr.bf16.mxu0 0
    %710 = vmatmul.mubr.bf16.gmra.mrb[0].mxu0 %v404
    %v711 = vpop.f32.mrb[0].mxu0
    %v712 = vadd.f32 0.0, %v711
    %v713 = vpop.f32.mrb[0].mxu0
    %v714 = vpop.f32.mrb[0].mxu0
    %v715 = vadd.f32 0.0, %v714
    %v716 = vpop.f32.mrb[0].mxu0
    %717 = vmatprep.mubr.bf16.mxu0 0
    %718 = vmatmul.mubr.bf16.gmra.mrb[0].mxu0 %v405
    %v719 = vpop.f32.mrb[0].mxu0
    %v720 = vadd.f32 0.0, %v719
    %v721 = vpop.f32.mrb[0].mxu0
    %v722 = vpop.f32.mrb[0].mxu0
    %v723 = vadd.f32 0.0, %v722
    %v724 = vpop.f32.mrb[0].mxu0
    %725 = vmatprep.mubr.bf16.mxu0 0
    %726 = vmatmul.mubr.bf16.gmra.mrb[0].mxu0 %v406
    %v727 = vpop.f32.mrb[0].mxu0
    %v728 = vadd.f32 0.0, %v727
    %v729 = vpop.f32.mrb[0].mxu0
    %v730 = vpop.f32.mrb[0].mxu0
    %v731 = vadd.f32 0.0, %v730
    %v732 = vpop.f32.mrb[0].mxu0
    %733 = vmatprep.mubr.bf16.mxu0 0
    %734 = vmatmul.mubr.bf16.gmra.mrb[0].mxu0 %v407
    %v735 = vpop.f32.mrb[0].mxu0
    %v736 = vadd.f32 0.0, %v735
    %v737 = vpop.f32.mrb[0].mxu0
    %v738 = vpop.f32.mrb[0].mxu0
    %v739 = vadd.f32 0.0, %v738
    %v740 = vpop.f32.mrb[0].mxu0
    %741 = vmatprep.mubr.bf16.mxu0 0
    %742 = vmatmul.mubr.bf16.gmra.mrb[0].mxu0 %v408
    %v743 = vpop.f32.mrb[0].mxu0
    %v744 = vadd.f32 0.0, %v743
    %v745 = vpop.f32.mrb[0].mxu0
    %v746 = vpop.f32.mrb[0].mxu0
    %v747 = vadd.f32 0.0, %v746
    %v748 = vpop.f32.mrb[0].mxu0
    %749 = vmatprep.mubr.bf16.mxu0 0
    %750 = vmatmul.mubr.bf16.gmra.mrb[0].mxu0 %v409
    %v751 = vpop.f32.mrb[0].mxu0
    %v752 = vadd.f32 0.0, %v751
    %v753 = vpop.f32.mrb[0].mxu0
    %v754 = vpop.f32.mrb[0].mxu0
    %v755 = vadd.f32 0.0, %v754
    %v756 = vpop.f32.mrb[0].mxu0
    %757 = vmatprep.mubr.bf16.mxu0 0
    %758 = vmatmul.mubr.bf16.gmra.mrb[0].mxu0 %v410
    %v759 = vpop.f32.mrb[0].mxu0
    %v760 = vadd.f32 0.0, %v759
    %v761 = vpop.f32.mrb[0].mxu0
    %v762 = vpop.f32.mrb[0].mxu0
    %v763 = vadd.f32 0.0, %v762
    %v764 = vpop.f32.mrb[0].mxu0
    %765 = vmatprep.mubr.bf16.mxu0 0
    %766 = vmatmul.mubr.bf16.gmra.mrb[0].mxu0 %v411
    %v767 = vpop.f32.mrb[0].mxu0
    %v768 = vadd.f32 0.0, %v767
    %v769 = vpop.f32.mrb[0].mxu0
    %v770 = vpop.f32.mrb[0].mxu0
    %v771 = vadd.f32 0.0, %v770
    %v772 = vpop.f32.mrb[0].mxu0
    %773 = vmatprep.mubr.bf16.mxu0 0
    %774 = vmatmul.mubr.bf16.gmra.mrb[0].mxu0 %v412
    %v775 = vpop.f32.mrb[0].mxu0
    %v776 = vadd.f32 0.0, %v775
    %v777 = vpop.f32.mrb[0].mxu0
    %v778 = vpop.f32.mrb[0].mxu0
    %v779 = vadd.f32 0.0, %v778
    %v780 = vpop.f32.mrb[0].mxu0
    %781 = vdwg.mxu0
    %v782 = vadd.f32 %v109, %v528
    %v783 = vadd.f32 %v110, %v531
    %v784 = vadd.f32 %v111, %v536
    %v785 = vadd.f32 %v112, %v539
    %v786 = vadd.f32 %v113, %v544
    %v787 = vadd.f32 %v114, %v547
    %v788 = vadd.f32 %v115, %v552
    %v789 = vadd.f32 %v116, %v555
    %v790 = vadd.f32 %v117, %v560
    %v791 = vadd.f32 %v118, %v563
    %v792 = vadd.f32 %v119, %v568
    %v793 = vadd.f32 %v120, %v571
    %v794 = vadd.f32 %v121, %v576
    %v795 = vadd.f32 %v122, %v579
    %v796 = vadd.f32 %v123, %v584
    %v797 = vadd.f32 %v124, %v587
    %v798 = vadd.f32 %v125, %v592
    %v799 = vadd.f32 %v126, %v595
    %v800 = vadd.f32 %v127, %v600
    %v801 = vadd.f32 %v128, %v603
    %v802 = vadd.f32 %v129, %v608
    %v803 = vadd.f32 %v130, %v611
    %v804 = vadd.f32 %v131, %v616
    %v805 = vadd.f32 %v132, %v619
    %v806 = vadd.f32 %v133, %v624
    %v807 = vadd.f32 %v134, %v627
    %v808 = vadd.f32 %v135, %v632
    %v809 = vadd.f32 %v136, %v635
    %v810 = vadd.f32 %v137, %v640
    %v811 = vadd.f32 %v138, %v643
    %v812 = vadd.f32 %v139, %v648
    %v813 = vadd.f32 %v140, %v651
    %v814 = vadd.f32 %v141, %v656
    %v815 = vadd.f32 %v142, %v659
    %v816 = vadd.f32 %v143, %v664
    %v817 = vadd.f32 %v144, %v667
    %v818 = vadd.f32 %v145, %v672
    %v819 = vadd.f32 %v146, %v675
    %v820 = vadd.f32 %v147, %v680
    %v821 = vadd.f32 %v148, %v683
    %v822 = vadd.f32 %v149, %v688
    %v823 = vadd.f32 %v150, %v691
    %v824 = vadd.f32 %v151, %v696
    %v825 = vadd.f32 %v152, %v699
    %v826 = vadd.f32 %v153, %v704
    %v827 = vadd.f32 %v154, %v707
    %v828 = vadd.f32 %v155, %v712
    %v829 = vadd.f32 %v156, %v715
    %v830 = vadd.f32 %v157, %v720
    %v831 = vadd.f32 %v158, %v723
    %v832 = vadd.f32 %v159, %v728
    %v833 = vadd.f32 %v160, %v731
    %v834 = vadd.f32 %v161, %v736
    %v835 = vadd.f32 %v162, %v739
    %v836 = vadd.f32 %v163, %v744
    %v837 = vadd.f32 %v164, %v747
    %v838 = vadd.f32 %v165, %v752
    %v839 = vadd.f32 %v166, %v755
    %v840 = vadd.f32 %v167, %v760
    %v841 = vadd.f32 %v168, %v763
    %v842 = vadd.f32 %v169, %v768
    %v843 = vadd.f32 %v170, %v771
    %v844 = vadd.f32 %v171, %v776
    %v845 = vadd.f32 %v172, %v779
    %846 = vst [vmem:[#allocation2] sm:$0xff] %v782
    %847 = vst [vmem:[#allocation2 + $0x8] sm:$0xff] %v783
    %848 = vst [vmem:[#allocation2 + $0x10] sm:$0xff] %v784
    %849 = vst [vmem:[#allocation2 + $0x18] sm:$0xff] %v785
    %850 = vst [vmem:[#allocation2 + $0x20] sm:$0xff] %v786
    %851 = vst [vmem:[#allocation2 + $0x28] sm:$0xff] %v787
    %852 = vst [vmem:[#allocation2 + $0x30] sm:$0xff] %v788
    %853 = vst [vmem:[#allocation2 + $0x38] sm:$0xff] %v789
    %854 = vst [vmem:[#allocation2 + $0x40] sm:$0xff] %v790
    %855 = vst [vmem:[#allocation2 + $0x48] sm:$0xff] %v791
    %856 = vst [vmem:[#allocation2 + $0x50] sm:$0xff] %v792
    %857 = vst [vmem:[#allocation2 + $0x58] sm:$0xff] %v793
    %858 = vst [vmem:[#allocation2 + $0x60] sm:$0xff] %v794
    %859 = vst [vmem:[#allocation2 + $0x68] sm:$0xff] %v795
    %860 = vst [vmem:[#allocation2 + $0x70] sm:$0xff] %v796
    %861 = vst [vmem:[#allocation2 + $0x78] sm:$0xff] %v797
    %862 = vst [vmem:[#allocation2 + $0x80] sm:$0xff] %v798
    %863 = vst [vmem:[#allocation2 + $0x88] sm:$0xff] %v799
    %864 = vst [vmem:[#allocation2 + $0x90] sm:$0xff] %v800
    %865 = vst [vmem:[#allocation2 + $0x98] sm:$0xff] %v801
    %866 = vst [vmem:[#allocation2 + $0xa0] sm:$0xff] %v802
    %867 = vst [vmem:[#allocation2 + $0xa8] sm:$0xff] %v803
    %868 = vst [vmem:[#allocation2 + $0xb0] sm:$0xff] %v804
    %869 = vst [vmem:[#allocation2 + $0xb8] sm:$0xff] %v805
    %870 = vst [vmem:[#allocation2 + $0xc0] sm:$0xff] %v806
    %871 = vst [vmem:[#allocation2 + $0xc8] sm:$0xff] %v807
    %872 = vst [vmem:[#allocation2 + $0xd0] sm:$0xff] %v808
    %873 = vst [vmem:[#allocation2 + $0xd8] sm:$0xff] %v809
    %874 = vst [vmem:[#allocation2 + $0xe0] sm:$0xff] %v810
    %875 = vst [vmem:[#allocation2 + $0xe8] sm:$0xff] %v811
    %876 = vst [vmem:[#allocation2 + $0xf0] sm:$0xff] %v812
    %877 = vst [vmem:[#allocation2 + $0xf8] sm:$0xff] %v813
    %878 = vst [vmem:[#allocation2 + $0x100] sm:$0xff] %v814
    %879 = vst [vmem:[#allocation2 + $0x108] sm:$0xff] %v815
    %880 = vst [vmem:[#allocation2 + $0x110] sm:$0xff] %v816
    %881 = vst [vmem:[#allocation2 + $0x118] sm:$0xff] %v817
    %882 = vst [vmem:[#allocation2 + $0x120] sm:$0xff] %v818
    %883 = vst [vmem:[#allocation2 + $0x128] sm:$0xff] %v819
    %884 = vst [vmem:[#allocation2 + $0x130] sm:$0xff] %v820
    %885 = vst [vmem:[#allocation2 + $0x138] sm:$0xff] %v821
    %886 = vst [vmem:[#allocation2 + $0x140] sm:$0xff] %v822
    %887 = vst [vmem:[#allocation2 + $0x148] sm:$0xff] %v823
    %888 = vst [vmem:[#allocation2 + $0x150] sm:$0xff] %v824
    %889 = vst [vmem:[#allocation2 + $0x158] sm:$0xff] %v825
    %890 = vst [vmem:[#allocation2 + $0x160] sm:$0xff] %v826
    %891 = vst [vmem:[#allocation2 + $0x168] sm:$0xff] %v827
    %892 = vst [vmem:[#allocation2 + $0x170] sm:$0xff] %v828
    %893 = vst [vmem:[#allocation2 + $0x178] sm:$0xff] %v829
    %894 = vst [vmem:[#allocation2 + $0x180] sm:$0xff] %v830
    %895 = vst [vmem:[#allocation2 + $0x188] sm:$0xff] %v831
    %896 = vst [vmem:[#allocation2 + $0x190] sm:$0xff] %v832
    %897 = vst [vmem:[#allocation2 + $0x198] sm:$0xff] %v833
    %898 = vst [vmem:[#allocation2 + $0x1a0] sm:$0xff] %v834
    %899 = vst [vmem:[#allocation2 + $0x1a8] sm:$0xff] %v835
    %900 = vst [vmem:[#allocation2 + $0x1b0] sm:$0xff] %v836
    %901 = vst [vmem:[#allocation2 + $0x1b8] sm:$0xff] %v837
    %902 = vst [vmem:[#allocation2 + $0x1c0] sm:$0xff] %v838
    %903 = vst [vmem:[#allocation2 + $0x1c8] sm:$0xff] %v839
    %904 = vst [vmem:[#allocation2 + $0x1d0] sm:$0xff] %v840
    %905 = vst [vmem:[#allocation2 + $0x1d8] sm:$0xff] %v841
    %906 = vst [vmem:[#allocation2 + $0x1e0] sm:$0xff] %v842
    %907 = vst [vmem:[#allocation2 + $0x1e8] sm:$0xff] %v843
    %908 = vst [vmem:[#allocation2 + $0x1f0] sm:$0xff] %v844
    %909 = vst [vmem:[#allocation2 + $0x1f8] sm:$0xff] %v845
    // Predicated region
    $region26: #{forward.5} parent=1 // pred_check
      %p910 = pneg %p41
    $region27: #{forward.5} parent=1 // pred_check_branch
      %912 = sbr.rel (%p910) target = $region29
    $region28: #{forward.5} parent=1 // pred_region
      %v913 = vld [vmem:[#allocation2] sm:$0xff]
      %v914 = vld [vmem:[#allocation2 + $0x8] sm:$0xff]
      %v915 = vld [vmem:[#allocation2 + $0x10] sm:$0xff]
      %v916 = vld [vmem:[#allocation2 + $0x18] sm:$0xff]
      %v917 = vld [vmem:[#allocation2 + $0x20] sm:$0xff]
      %v918 = vld [vmem:[#allocation2 + $0x28] sm:$0xff]
      %v919 = vld [vmem:[#allocation2 + $0x30] sm:$0xff]
      %v920 = vld [vmem:[#allocation2 + $0x38] sm:$0xff]
      %v921 = vld [vmem:[#allocation2 + $0x40] sm:$0xff]
      %v922 = vld [vmem:[#allocation2 + $0x48] sm:$0xff]
      %v923 = vld [vmem:[#allocation2 + $0x50] sm:$0xff]
      %v924 = vld [vmem:[#allocation2 + $0x58] sm:$0xff]
      %v925 = vld [vmem:[#allocation2 + $0x60] sm:$0xff]
      %v926 = vld [vmem:[#allocation2 + $0x68] sm:$0xff]
      %v927 = vld [vmem:[#allocation2 + $0x70] sm:$0xff]
      %v928 = vld [vmem:[#allocation2 + $0x78] sm:$0xff]
      %v929 = vld [vmem:[#allocation2 + $0x80] sm:$0xff]
      %v930 = vld [vmem:[#allocation2 + $0x88] sm:$0xff]
      %v931 = vld [vmem:[#allocation2 + $0x90] sm:$0xff]
      %v932 = vld [vmem:[#allocation2 + $0x98] sm:$0xff]
      %v933 = vld [vmem:[#allocation2 + $0xa0] sm:$0xff]
      %v934 = vld [vmem:[#allocation2 + $0xa8] sm:$0xff]
      %v935 = vld [vmem:[#allocation2 + $0xb0] sm:$0xff]
      %v936 = vld [vmem:[#allocation2 + $0xb8] sm:$0xff]
      %v937 = vld [vmem:[#allocation2 + $0xc0] sm:$0xff]
      %v938 = vld [vmem:[#allocation2 + $0xc8] sm:$0xff]
      %v939 = vld [vmem:[#allocation2 + $0xd0] sm:$0xff]
      %v940 = vld [vmem:[#allocation2 + $0xd8] sm:$0xff]
      %v941 = vld [vmem:[#allocation2 + $0xe0] sm:$0xff]
      %v942 = vld [vmem:[#allocation2 + $0xe8] sm:$0xff]
      %v943 = vld [vmem:[#allocation2 + $0xf0] sm:$0xff]
      %v944 = vld [vmem:[#allocation2 + $0xf8] sm:$0xff]
      %v945 = vld [vmem:[#allocation2 + $0x100] sm:$0xff]
      %v946 = vld [vmem:[#allocation2 + $0x108] sm:$0xff]
      %v947 = vld [vmem:[#allocation2 + $0x110] sm:$0xff]
      %v948 = vld [vmem:[#allocation2 + $0x118] sm:$0xff]
      %v949 = vld [vmem:[#allocation2 + $0x120] sm:$0xff]
      %v950 = vld [vmem:[#allocation2 + $0x128] sm:$0xff]
      %v951 = vld [vmem:[#allocation2 + $0x130] sm:$0xff]
      %v952 = vld [vmem:[#allocation2 + $0x138] sm:$0xff]
      %v953 = vld [vmem:[#allocation2 + $0x140] sm:$0xff]
      %v954 = vld [vmem:[#allocation2 + $0x148] sm:$0xff]
      %v955 = vld [vmem:[#allocation2 + $0x150] sm:$0xff]
      %v956 = vld [vmem:[#allocation2 + $0x158] sm:$0xff]
      %v957 = vld [vmem:[#allocation2 + $0x160] sm:$0xff]
      %v958 = vld [vmem:[#allocation2 + $0x168] sm:$0xff]
      %v959 = vld [vmem:[#allocation2 + $0x170] sm:$0xff]
      %v960 = vld [vmem:[#allocation2 + $0x178] sm:$0xff]
      %v961 = vld [vmem:[#allocation2 + $0x180] sm:$0xff]
      %v962 = vld [vmem:[#allocation2 + $0x188] sm:$0xff]
      %v963 = vld [vmem:[#allocation2 + $0x190] sm:$0xff]
      %v964 = vld [vmem:[#allocation2 + $0x198] sm:$0xff]
      %v965 = vld [vmem:[#allocation2 + $0x1a0] sm:$0xff]
      %v966 = vld [vmem:[#allocation2 + $0x1a8] sm:$0xff]
      %v967 = vld [vmem:[#allocation2 + $0x1b0] sm:$0xff]
      %v968 = vld [vmem:[#allocation2 + $0x1b8] sm:$0xff]
      %v969 = vld [vmem:[#allocation2 + $0x1c0] sm:$0xff]
      %v970 = vld [vmem:[#allocation2 + $0x1c8] sm:$0xff]
      %v971 = vld [vmem:[#allocation2 + $0x1d0] sm:$0xff]
      %v972 = vld [vmem:[#allocation2 + $0x1d8] sm:$0xff]
      %v973 = vld [vmem:[#allocation2 + $0x1e0] sm:$0xff]
      %v974 = vld [vmem:[#allocation2 + $0x1e8] sm:$0xff]
      %v975 = vld [vmem:[#allocation2 + $0x1f0] sm:$0xff]
      %v976 = vld [vmem:[#allocation2 + $0x1f8] sm:$0xff]
      %v977 = vld [vmem:[#allocation5] sm:$0x1]
      %v979 = vlaneseq
      %v980 = vshrl.u32 %v979, 7
      %v981 = vsub.s32 0, %v980
      %v982 = vrot.slane %v977, %v981
      %v984 = vadd.f32 %v913, %v982
      %v985 = vadd.f32 %v914, %v982
      %v986 = vadd.f32 %v915, %v982
      %v987 = vadd.f32 %v916, %v982
      %v988 = vadd.f32 %v917, %v982
      %v989 = vadd.f32 %v918, %v982
      %v990 = vadd.f32 %v919, %v982
      %v991 = vadd.f32 %v920, %v982
      %v992 = vadd.f32 %v921, %v982
      %v993 = vadd.f32 %v922, %v982
      %v994 = vadd.f32 %v923, %v982
      %v995 = vadd.f32 %v924, %v982
      %v996 = vadd.f32 %v925, %v982
      %v997 = vadd.f32 %v926, %v982
      %v998 = vadd.f32 %v927, %v982
      %v999 = vadd.f32 %v928, %v982
      %v1000 = vadd.f32 %v929, %v982
      %v1001 = vadd.f32 %v930, %v982
      %v1002 = vadd.f32 %v931, %v982
      %v1003 = vadd.f32 %v932, %v982
      %v1004 = vadd.f32 %v933, %v982
      %v1005 = vadd.f32 %v934, %v982
      %v1006 = vadd.f32 %v935, %v982
      %v1007 = vadd.f32 %v936, %v982
      %v1008 = vadd.f32 %v937, %v982
      %v1009 = vadd.f32 %v938, %v982
      %v1010 = vadd.f32 %v939, %v982
      %v1011 = vadd.f32 %v940, %v982
      %v1012 = vadd.f32 %v941, %v982
      %v1013 = vadd.f32 %v942, %v982
      %v1014 = vadd.f32 %v943, %v982
      %v1015 = vadd.f32 %v944, %v982
      %v1016 = vadd.f32 %v945, %v982
      %v1017 = vadd.f32 %v946, %v982
      %v1018 = vadd.f32 %v947, %v982
      %v1019 = vadd.f32 %v948, %v982
      %v1020 = vadd.f32 %v949, %v982
      %v1021 = vadd.f32 %v950, %v982
      %v1022 = vadd.f32 %v951, %v982
      %v1023 = vadd.f32 %v952, %v982
      %v1024 = vadd.f32 %v953, %v982
      %v1025 = vadd.f32 %v954, %v982
      %v1026 = vadd.f32 %v955, %v982
      %v1027 = vadd.f32 %v956, %v982
      %v1028 = vadd.f32 %v957, %v982
      %v1029 = vadd.f32 %v958, %v982
      %v1030 = vadd.f32 %v959, %v982
      %v1031 = vadd.f32 %v960, %v982
      %v1032 = vadd.f32 %v961, %v982
      %v1033 = vadd.f32 %v962, %v982
      %v1034 = vadd.f32 %v963, %v982
      %v1035 = vadd.f32 %v964, %v982
      %v1036 = vadd.f32 %v965, %v982
      %v1037 = vadd.f32 %v966, %v982
      %v1038 = vadd.f32 %v967, %v982
      %v1039 = vadd.f32 %v968, %v982
      %v1040 = vadd.f32 %v969, %v982
      %v1041 = vadd.f32 %v970, %v982
      %v1042 = vadd.f32 %v971, %v982
      %v1043 = vadd.f32 %v972, %v982
      %v1044 = vadd.f32 %v973, %v982
      %v1045 = vadd.f32 %v974, %v982
      %v1046 = vadd.f32 %v975, %v982
      %v1047 = vadd.f32 %v976, %v982
      %v1048 = vadd.f32 %v984, %v985
      %v1049 = vadd.f32 %v1048, %v986
      %v1050 = vadd.f32 %v1049, %v987
      %v1051 = vadd.f32 %v1050, %v988
      %v1052 = vadd.f32 %v1051, %v989
      %v1053 = vadd.f32 %v1052, %v990
      %v1054 = vadd.f32 %v1053, %v991
      %v1055 = vadd.f32 %v1054, %v992
      %v1056 = vadd.f32 %v1055, %v993
      %v1057 = vadd.f32 %v1056, %v994
      %v1058 = vadd.f32 %v1057, %v995
      %v1059 = vadd.f32 %v1058, %v996
      %v1060 = vadd.f32 %v1059, %v997
      %v1061 = vadd.f32 %v1060, %v998
      %v1062 = vadd.f32 %v1061, %v999
      %v1063 = vadd.f32 %v1062, %v1000
      %v1064 = vadd.f32 %v1063, %v1001
      %v1065 = vadd.f32 %v1064, %v1002
      %v1066 = vadd.f32 %v1065, %v1003
      %v1067 = vadd.f32 %v1066, %v1004
      %v1068 = vadd.f32 %v1067, %v1005
      %v1069 = vadd.f32 %v1068, %v1006
      %v1070 = vadd.f32 %v1069, %v1007
      %v1071 = vadd.f32 %v1070, %v1008
      %v1072 = vadd.f32 %v1071, %v1009
      %v1073 = vadd.f32 %v1072, %v1010
      %v1074 = vadd.f32 %v1073, %v1011
      %v1075 = vadd.f32 %v1074, %v1012
      %v1076 = vadd.f32 %v1075, %v1013
      %v1077 = vadd.f32 %v1076, %v1014
      %v1078 = vadd.f32 %v1077, %v1015
      %v1079 = vrot.slane %v1078, 4
      %v1080 = vadd.f32 %v1078, %v1079
      %v1081 = vrot.slane %v1080, 2
      %v1082 = vadd.f32 %v1080, %v1081
      %v1083 = vrot.slane %v1082, 1
      %v1084 = vadd.f32 %v1082, %v1083
      %v1085 = vrcp.pop 256.0
      %v1086 = vmul.f32 %v1084, %v1085
      %v1087 = vsub.f32 %v984, %v1086
      %v1088 = vsub.f32 %v985, %v1086
      %v1089 = vsub.f32 %v986, %v1086
      %v1090 = vsub.f32 %v987, %v1086
      %v1091 = vsub.f32 %v988, %v1086
      %v1092 = vsub.f32 %v989, %v1086
      %v1093 = vsub.f32 %v990, %v1086
      %v1094 = vsub.f32 %v991, %v1086
      %v1095 = vsub.f32 %v992, %v1086
      %v1096 = vsub.f32 %v993, %v1086
      %v1097 = vsub.f32 %v994, %v1086
      %v1098 = vsub.f32 %v995, %v1086
      %v1099 = vsub.f32 %v996, %v1086
      %v1100 = vsub.f32 %v997, %v1086
      %v1101 = vsub.f32 %v998, %v1086
      %v1102 = vsub.f32 %v999, %v1086
      %v1103 = vsub.f32 %v1000, %v1086
      %v1104 = vsub.f32 %v1001, %v1086
      %v1105 = vsub.f32 %v1002, %v1086
      %v1106 = vsub.f32 %v1003, %v1086
      %v1107 = vsub.f32 %v1004, %v1086
      %v1108 = vsub.f32 %v1005, %v1086
      %v1109 = vsub.f32 %v1006, %v1086
      %v1110 = vsub.f32 %v1007, %v1086
      %v1111 = vsub.f32 %v1008, %v1086
      %v1112 = vsub.f32 %v1009, %v1086
      %v1113 = vsub.f32 %v1010, %v1086
      %v1114 = vsub.f32 %v1011, %v1086
      %v1115 = vsub.f32 %v1012, %v1086
      %v1116 = vsub.f32 %v1013, %v1086
      %v1117 = vsub.f32 %v1014, %v1086
      %v1118 = vsub.f32 %v1015, %v1086
      %v1119 = vmul.f32 %v1087, %v1087
      %v1120 = vmul.f32 %v1088, %v1088
      %v1121 = vmul.f32 %v1089, %v1089
      %v1122 = vmul.f32 %v1090, %v1090
      %v1123 = vmul.f32 %v1091, %v1091
      %v1124 = vmul.f32 %v1092, %v1092
      %v1125 = vmul.f32 %v1093, %v1093
      %v1126 = vmul.f32 %v1094, %v1094
      %v1127 = vmul.f32 %v1095, %v1095
      %v1128 = vmul.f32 %v1096, %v1096
      %v1129 = vmul.f32 %v1097, %v1097
      %v1130 = vmul.f32 %v1098, %v1098
      %v1131 = vmul.f32 %v1099, %v1099
      %v1132 = vmul.f32 %v1100, %v1100
      %v1133 = vmul.f32 %v1101, %v1101
      %v1134 = vmul.f32 %v1102, %v1102
      %v1135 = vmul.f32 %v1103, %v1103
      %v1136 = vmul.f32 %v1104, %v1104
      %v1137 = vmul.f32 %v1105, %v1105
      %v1138 = vmul.f32 %v1106, %v1106
      %v1139 = vmul.f32 %v1107, %v1107
      %v1140 = vmul.f32 %v1108, %v1108
      %v1141 = vmul.f32 %v1109, %v1109
      %v1142 = vmul.f32 %v1110, %v1110
      %v1143 = vmul.f32 %v1111, %v1111
      %v1144 = vmul.f32 %v1112, %v1112
      %v1145 = vmul.f32 %v1113, %v1113
      %v1146 = vmul.f32 %v1114, %v1114
      %v1147 = vmul.f32 %v1115, %v1115
      %v1148 = vmul.f32 %v1116, %v1116
      %v1149 = vmul.f32 %v1117, %v1117
      %v1150 = vmul.f32 %v1118, %v1118
      %v1151 = vadd.f32 %v1119, %v1120
      %v1152 = vadd.f32 %v1151, %v1121
      %v1153 = vadd.f32 %v1152, %v1122
      %v1154 = vadd.f32 %v1153, %v1123
      %v1155 = vadd.f32 %v1154, %v1124
      %v1156 = vadd.f32 %v1155, %v1125
      %v1157 = vadd.f32 %v1156, %v1126
      %v1158 = vadd.f32 %v1157, %v1127
      %v1159 = vadd.f32 %v1158, %v1128
      %v1160 = vadd.f32 %v1159, %v1129
      %v1161 = vadd.f32 %v1160, %v1130
      %v1162 = vadd.f32 %v1161, %v1131
      %v1163 = vadd.f32 %v1162, %v1132
      %v1164 = vadd.f32 %v1163, %v1133
      %v1165 = vadd.f32 %v1164, %v1134
      %v1166 = vadd.f32 %v1165, %v1135
      %v1167 = vadd.f32 %v1166, %v1136
      %v1168 = vadd.f32 %v1167, %v1137
      %v1169 = vadd.f32 %v1168, %v1138
      %v1170 = vadd.f32 %v1169, %v1139
      %v1171 = vadd.f32 %v1170, %v1140
      %v1172 = vadd.f32 %v1171, %v1141
      %v1173 = vadd.f32 %v1172, %v1142
      %v1174 = vadd.f32 %v1173, %v1143
      %v1175 = vadd.f32 %v1174, %v1144
      %v1176 = vadd.f32 %v1175, %v1145
      %v1177 = vadd.f32 %v1176, %v1146
      %v1178 = vadd.f32 %v1177, %v1147
      %v1179 = vadd.f32 %v1178, %v1148
      %v1180 = vadd.f32 %v1179, %v1149
      %v1181 = vadd.f32 %v1180, %v1150
      %v1182 = vrot.slane %v1181, 4
      %v1183 = vadd.f32 %v1181, %v1182
      %v1184 = vrot.slane %v1183, 2
      %v1185 = vadd.f32 %v1183, %v1184
      %v1186 = vrot.slane %v1185, 1
      %v1187 = vadd.f32 %v1185, %v1186
      %v1188 = vmul.f32 %v1187, %v1085
      %v1189 = vadd.f32 %v1188, 1e-05
      %v1190 = vrsqrt.pop %v1189
      %v1191 = vmul.f32 %v1087, %v1190
      %v1192 = vmul.f32 %v1088, %v1190
      %v1193 = vmul.f32 %v1089, %v1190
      %v1194 = vmul.f32 %v1090, %v1190
      %v1195 = vmul.f32 %v1091, %v1190
      %v1196 = vmul.f32 %v1092, %v1190
      %v1197 = vmul.f32 %v1093, %v1190
      %v1198 = vmul.f32 %v1094, %v1190
      %v1199 = vmul.f32 %v1095, %v1190
      %v1200 = vmul.f32 %v1096, %v1190
      %v1201 = vmul.f32 %v1097, %v1190
      %v1202 = vmul.f32 %v1098, %v1190
      %v1203 = vmul.f32 %v1099, %v1190
      %v1204 = vmul.f32 %v1100, %v1190
      %v1205 = vmul.f32 %v1101, %v1190
      %v1206 = vmul.f32 %v1102, %v1190
      %v1207 = vmul.f32 %v1103, %v1190
      %v1208 = vmul.f32 %v1104, %v1190
      %v1209 = vmul.f32 %v1105, %v1190
      %v1210 = vmul.f32 %v1106, %v1190
      %v1211 = vmul.f32 %v1107, %v1190
      %v1212 = vmul.f32 %v1108, %v1190
      %v1213 = vmul.f32 %v1109, %v1190
      %v1214 = vmul.f32 %v1110, %v1190
      %v1215 = vmul.f32 %v1111, %v1190
      %v1216 = vmul.f32 %v1112, %v1190
      %v1217 = vmul.f32 %v1113, %v1190
      %v1218 = vmul.f32 %v1114, %v1190
      %v1219 = vmul.f32 %v1115, %v1190
      %v1220 = vmul.f32 %v1116, %v1190
      %v1221 = vmul.f32 %v1117, %v1190
      %v1222 = vmul.f32 %v1118, %v1190
      %vm1223 = vcmp.ge.f32.partialorder %v1191, 0.0
      %vm1224 = vcmp.ge.f32.partialorder %v1192, 0.0
      %vm1225 = vcmp.ge.f32.partialorder %v1193, 0.0
      %vm1226 = vcmp.ge.f32.partialorder %v1194, 0.0
      %vm1227 = vcmp.ge.f32.partialorder %v1195, 0.0
      %vm1228 = vcmp.ge.f32.partialorder %v1196, 0.0
      %vm1229 = vcmp.ge.f32.partialorder %v1197, 0.0
      %vm1230 = vcmp.ge.f32.partialorder %v1198, 0.0
      %vm1231 = vcmp.ge.f32.partialorder %v1199, 0.0
      %vm1232 = vcmp.ge.f32.partialorder %v1200, 0.0
      %vm1233 = vcmp.ge.f32.partialorder %v1201, 0.0
      %vm1234 = vcmp.ge.f32.partialorder %v1202, 0.0
      %vm1235 = vcmp.ge.f32.partialorder %v1203, 0.0
      %vm1236 = vcmp.ge.f32.partialorder %v1204, 0.0
      %vm1237 = vcmp.ge.f32.partialorder %v1205, 0.0
      %vm1238 = vcmp.ge.f32.partialorder %v1206, 0.0
      %vm1239 = vcmp.ge.f32.partialorder %v1207, 0.0
      %vm1240 = vcmp.ge.f32.partialorder %v1208, 0.0
      %vm1241 = vcmp.ge.f32.partialorder %v1209, 0.0
      %vm1242 = vcmp.ge.f32.partialorder %v1210, 0.0
      %vm1243 = vcmp.ge.f32.partialorder %v1211, 0.0
      %vm1244 = vcmp.ge.f32.partialorder %v1212, 0.0
      %vm1245 = vcmp.ge.f32.partialorder %v1213, 0.0
      %vm1246 = vcmp.ge.f32.partialorder %v1214, 0.0
      %vm1247 = vcmp.ge.f32.partialorder %v1215, 0.0
      %vm1248 = vcmp.ge.f32.partialorder %v1216, 0.0
      %vm1249 = vcmp.ge.f32.partialorder %v1217, 0.0
      %vm1250 = vcmp.ge.f32.partialorder %v1218, 0.0
      %vm1251 = vcmp.ge.f32.partialorder %v1219, 0.0
      %vm1252 = vcmp.ge.f32.partialorder %v1220, 0.0
      %vm1253 = vcmp.ge.f32.partialorder %v1221, 0.0
      %vm1254 = vcmp.ge.f32.partialorder %v1222, 0.0
      %v1255 = vmul.f32 %v1191, 0.2
      %v1256 = vmul.f32 %v1192, 0.2
      %v1257 = vmul.f32 %v1193, 0.2
      %v1258 = vmul.f32 %v1194, 0.2
      %v1259 = vmul.f32 %v1195, 0.2
      %v1260 = vmul.f32 %v1196, 0.2
      %v1261 = vmul.f32 %v1197, 0.2
      %v1262 = vmul.f32 %v1198, 0.2
      %v1263 = vmul.f32 %v1199, 0.2
      %v1264 = vmul.f32 %v1200, 0.2
      %v1265 = vmul.f32 %v1201, 0.2
      %v1266 = vmul.f32 %v1202, 0.2
      %v1267 = vmul.f32 %v1203, 0.2
      %v1268 = vmul.f32 %v1204, 0.2
      %v1269 = vmul.f32 %v1205, 0.2
      %v1270 = vmul.f32 %v1206, 0.2
      %v1271 = vmul.f32 %v1207, 0.2
      %v1272 = vmul.f32 %v1208, 0.2
      %v1273 = vmul.f32 %v1209, 0.2
      %v1274 = vmul.f32 %v1210, 0.2
      %v1275 = vmul.f32 %v1211, 0.2
      %v1276 = vmul.f32 %v1212, 0.2
      %v1277 = vmul.f32 %v1213, 0.2
      %v1278 = vmul.f32 %v1214, 0.2
      %v1279 = vmul.f32 %v1215, 0.2
      %v1280 = vmul.f32 %v1216, 0.2
      %v1281 = vmul.f32 %v1217, 0.2
      %v1282 = vmul.f32 %v1218, 0.2
      %v1283 = vmul.f32 %v1219, 0.2
      %v1284 = vmul.f32 %v1220, 0.2
      %v1285 = vmul.f32 %v1221, 0.2
      %v1286 = vmul.f32 %v1222, 0.2
      %v1287 = vsel %vm1223, %v1191, %v1255
      %v1288 = vsel %vm1224, %v1192, %v1256
      %v1289 = vsel %vm1225, %v1193, %v1257
      %v1290 = vsel %vm1226, %v1194, %v1258
      %v1291 = vsel %vm1227, %v1195, %v1259
      %v1292 = vsel %vm1228, %v1196, %v1260
      %v1293 = vsel %vm1229, %v1197, %v1261
      %v1294 = vsel %vm1230, %v1198, %v1262
      %v1295 = vsel %vm1231, %v1199, %v1263
      %v1296 = vsel %vm1232, %v1200, %v1264
      %v1297 = vsel %vm1233, %v1201, %v1265
      %v1298 = vsel %vm1234, %v1202, %v1266
      %v1299 = vsel %vm1235, %v1203, %v1267
      %v1300 = vsel %vm1236, %v1204, %v1268
      %v1301 = vsel %vm1237, %v1205, %v1269
      %v1302 = vsel %vm1238, %v1206, %v1270
      %v1303 = vsel %vm1239, %v1207, %v1271
      %v1304 = vsel %vm1240, %v1208, %v1272
      %v1305 = vsel %vm1241, %v1209, %v1273
      %v1306 = vsel %vm1242, %v1210, %v1274
      %v1307 = vsel %vm1243, %v1211, %v1275
      %v1308 = vsel %vm1244, %v1212, %v1276
      %v1309 = vsel %vm1245, %v1213, %v1277
      %v1310 = vsel %vm1246, %v1214, %v1278
      %v1311 = vsel %vm1247, %v1215, %v1279
      %v1312 = vsel %vm1248, %v1216, %v1280
      %v1313 = vsel %vm1249, %v1217, %v1281
      %v1314 = vsel %vm1250, %v1218, %v1282
      %v1315 = vsel %vm1251, %v1219, %v1283
      %v1316 = vsel %vm1252, %v1220, %v1284
      %v1317 = vsel %vm1253, %v1221, %v1285
      %v1318 = vsel %vm1254, %v1222, %v1286
      %1319 = vst [vmem:[%s3] sm:$0xff] %v1287
      %1320 = vst [vmem:[%s3 + $0x8] sm:$0xff] %v1288
      %1321 = vst [vmem:[%s3 + $0x10] sm:$0xff] %v1289
      %1322 = vst [vmem:[%s3 + $0x18] sm:$0xff] %v1290
      %1323 = vst [vmem:[%s3 + $0x20] sm:$0xff] %v1291
      %1324 = vst [vmem:[%s3 + $0x28] sm:$0xff] %v1292
      %1325 = vst [vmem:[%s3 + $0x30] sm:$0xff] %v1293
      %1326 = vst [vmem:[%s3 + $0x38] sm:$0xff] %v1294
      %1327 = vst [vmem:[%s3 + $0x40] sm:$0xff] %v1295
      %1328 = vst [vmem:[%s3 + $0x48] sm:$0xff] %v1296
      %1329 = vst [vmem:[%s3 + $0x50] sm:$0xff] %v1297
      %1330 = vst [vmem:[%s3 + $0x58] sm:$0xff] %v1298
      %1331 = vst [vmem:[%s3 + $0x60] sm:$0xff] %v1299
      %1332 = vst [vmem:[%s3 + $0x68] sm:$0xff] %v1300
      %1333 = vst [vmem:[%s3 + $0x70] sm:$0xff] %v1301
      %1334 = vst [vmem:[%s3 + $0x78] sm:$0xff] %v1302
      %1335 = vst [vmem:[%s3 + $0x80] sm:$0xff] %v1303
      %1336 = vst [vmem:[%s3 + $0x88] sm:$0xff] %v1304
      %1337 = vst [vmem:[%s3 + $0x90] sm:$0xff] %v1305
      %1338 = vst [vmem:[%s3 + $0x98] sm:$0xff] %v1306
      %1339 = vst [vmem:[%s3 + $0xa0] sm:$0xff] %v1307
      %1340 = vst [vmem:[%s3 + $0xa8] sm:$0xff] %v1308
      %1341 = vst [vmem:[%s3 + $0xb0] sm:$0xff] %v1309
      %1342 = vst [vmem:[%s3 + $0xb8] sm:$0xff] %v1310
      %1343 = vst [vmem:[%s3 + $0xc0] sm:$0xff] %v1311
      %1344 = vst [vmem:[%s3 + $0xc8] sm:$0xff] %v1312
      %1345 = vst [vmem:[%s3 + $0xd0] sm:$0xff] %v1313
      %1346 = vst [vmem:[%s3 + $0xd8] sm:$0xff] %v1314
      %1347 = vst [vmem:[%s3 + $0xe0] sm:$0xff] %v1315
      %1348 = vst [vmem:[%s3 + $0xe8] sm:$0xff] %v1316
      %1349 = vst [vmem:[%s3 + $0xf0] sm:$0xff] %v1317
      %1350 = vst [vmem:[%s3 + $0xf8] sm:$0xff] %v1318
      %v1351 = vadd.f32 %v1016, %v1017
      %v1352 = vadd.f32 %v1351, %v1018
      %v1353 = vadd.f32 %v1352, %v1019
      %v1354 = vadd.f32 %v1353, %v1020
      %v1355 = vadd.f32 %v1354, %v1021
      %v1356 = vadd.f32 %v1355, %v1022
      %v1357 = vadd.f32 %v1356, %v1023
      %v1358 = vadd.f32 %v1357, %v1024
      %v1359 = vadd.f32 %v1358, %v1025
      %v1360 = vadd.f32 %v1359, %v1026
      %v1361 = vadd.f32 %v1360, %v1027
      %v1362 = vadd.f32 %v1361, %v1028
      %v1363 = vadd.f32 %v1362, %v1029
      %v1364 = vadd.f32 %v1363, %v1030
      %v1365 = vadd.f32 %v1364, %v1031
      %v1366 = vadd.f32 %v1365, %v1032
      %v1367 = vadd.f32 %v1366, %v1033
      %v1368 = vadd.f32 %v1367, %v1034
      %v1369 = vadd.f32 %v1368, %v1035
      %v1370 = vadd.f32 %v1369, %v1036
      %v1371 = vadd.f32 %v1370, %v1037
      %v1372 = vadd.f32 %v1371, %v1038
      %v1373 = vadd.f32 %v1372, %v1039
      %v1374 = vadd.f32 %v1373, %v1040
      %v1375 = vadd.f32 %v1374, %v1041
      %v1376 = vadd.f32 %v1375, %v1042
      %v1377 = vadd.f32 %v1376, %v1043
      %v1378 = vadd.f32 %v1377, %v1044
      %v1379 = vadd.f32 %v1378, %v1045
      %v1380 = vadd.f32 %v1379, %v1046
      %v1381 = vadd.f32 %v1380, %v1047
      %v1382 = vrot.slane %v1381, 4
      %v1383 = vadd.f32 %v1381, %v1382
      %v1384 = vrot.slane %v1383, 2
      %v1385 = vadd.f32 %v1383, %v1384
      %v1386 = vrot.slane %v1385, 1
      %v1387 = vadd.f32 %v1385, %v1386
      %v1388 = vmul.f32 %v1387, %v1085
      %v1389 = vsub.f32 %v1016, %v1388
      %v1390 = vsub.f32 %v1017, %v1388
      %v1391 = vsub.f32 %v1018, %v1388
      %v1392 = vsub.f32 %v1019, %v1388
      %v1393 = vsub.f32 %v1020, %v1388
      %v1394 = vsub.f32 %v1021, %v1388
      %v1395 = vsub.f32 %v1022, %v1388
      %v1396 = vsub.f32 %v1023, %v1388
      %v1397 = vsub.f32 %v1024, %v1388
      %v1398 = vsub.f32 %v1025, %v1388
      %v1399 = vsub.f32 %v1026, %v1388
      %v1400 = vsub.f32 %v1027, %v1388
      %v1401 = vsub.f32 %v1028, %v1388
      %v1402 = vsub.f32 %v1029, %v1388
      %v1403 = vsub.f32 %v1030, %v1388
      %v1404 = vsub.f32 %v1031, %v1388
      %v1405 = vsub.f32 %v1032, %v1388
      %v1406 = vsub.f32 %v1033, %v1388
      %v1407 = vsub.f32 %v1034, %v1388
      %v1408 = vsub.f32 %v1035, %v1388
      %v1409 = vsub.f32 %v1036, %v1388
      %v1410 = vsub.f32 %v1037, %v1388
      %v1411 = vsub.f32 %v1038, %v1388
      %v1412 = vsub.f32 %v1039, %v1388
      %v1413 = vsub.f32 %v1040, %v1388
      %v1414 = vsub.f32 %v1041, %v1388
      %v1415 = vsub.f32 %v1042, %v1388
      %v1416 = vsub.f32 %v1043, %v1388
      %v1417 = vsub.f32 %v1044, %v1388
      %v1418 = vsub.f32 %v1045, %v1388
      %v1419 = vsub.f32 %v1046, %v1388
      %v1420 = vsub.f32 %v1047, %v1388
      %v1421 = vmul.f32 %v1389, %v1389
      %v1422 = vmul.f32 %v1390, %v1390
      %v1423 = vmul.f32 %v1391, %v1391
      %v1424 = vmul.f32 %v1392, %v1392
      %v1425 = vmul.f32 %v1393, %v1393
      %v1426 = vmul.f32 %v1394, %v1394
      %v1427 = vmul.f32 %v1395, %v1395
      %v1428 = vmul.f32 %v1396, %v1396
      %v1429 = vmul.f32 %v1397, %v1397
      %v1430 = vmul.f32 %v1398, %v1398
      %v1431 = vmul.f32 %v1399, %v1399
      %v1432 = vmul.f32 %v1400, %v1400
      %v1433 = vmul.f32 %v1401, %v1401
      %v1434 = vmul.f32 %v1402, %v1402
      %v1435 = vmul.f32 %v1403, %v1403
      %v1436 = vmul.f32 %v1404, %v1404
      %v1437 = vmul.f32 %v1405, %v1405
      %v1438 = vmul.f32 %v1406, %v1406
      %v1439 = vmul.f32 %v1407, %v1407
      %v1440 = vmul.f32 %v1408, %v1408
      %v1441 = vmul.f32 %v1409, %v1409
      %v1442 = vmul.f32 %v1410, %v1410
      %v1443 = vmul.f32 %v1411, %v1411
      %v1444 = vmul.f32 %v1412, %v1412
      %v1445 = vmul.f32 %v1413, %v1413
      %v1446 = vmul.f32 %v1414, %v1414
      %v1447 = vmul.f32 %v1415, %v1415
      %v1448 = vmul.f32 %v1416, %v1416
      %v1449 = vmul.f32 %v1417, %v1417
      %v1450 = vmul.f32 %v1418, %v1418
      %v1451 = vmul.f32 %v1419, %v1419
      %v1452 = vmul.f32 %v1420, %v1420
      %v1453 = vadd.f32 %v1421, %v1422
      %v1454 = vadd.f32 %v1453, %v1423
      %v1455 = vadd.f32 %v1454, %v1424
      %v1456 = vadd.f32 %v1455, %v1425
      %v1457 = vadd.f32 %v1456, %v1426
      %v1458 = vadd.f32 %v1457, %v1427
      %v1459 = vadd.f32 %v1458, %v1428
      %v1460 = vadd.f32 %v1459, %v1429
      %v1461 = vadd.f32 %v1460, %v1430
      %v1462 = vadd.f32 %v1461, %v1431
      %v1463 = vadd.f32 %v1462, %v1432
      %v1464 = vadd.f32 %v1463, %v1433
      %v1465 = vadd.f32 %v1464, %v1434
      %v1466 = vadd.f32 %v1465, %v1435
      %v1467 = vadd.f32 %v1466, %v1436
      %v1468 = vadd.f32 %v1467, %v1437
      %v1469 = vadd.f32 %v1468, %v1438
      %v1470 = vadd.f32 %v1469, %v1439
      %v1471 = vadd.f32 %v1470, %v1440
      %v1472 = vadd.f32 %v1471, %v1441
      %v1473 = vadd.f32 %v1472, %v1442
      %v1474 = vadd.f32 %v1473, %v1443
      %v1475 = vadd.f32 %v1474, %v1444
      %v1476 = vadd.f32 %v1475, %v1445
      %v1477 = vadd.f32 %v1476, %v1446
      %v1478 = vadd.f32 %v1477, %v1447
      %v1479 = vadd.f32 %v1478, %v1448
      %v1480 = vadd.f32 %v1479, %v1449
      %v1481 = vadd.f32 %v1480, %v1450
      %v1482 = vadd.f32 %v1481, %v1451
      %v1483 = vadd.f32 %v1482, %v1452
      %v1484 = vrot.slane %v1483, 4
      %v1485 = vadd.f32 %v1483, %v1484
      %v1486 = vrot.slane %v1485, 2
      %v1487 = vadd.f32 %v1485, %v1486
      %v1488 = vrot.slane %v1487, 1
      %v1489 = vadd.f32 %v1487, %v1488
      %v1490 = vmul.f32 %v1489, %v1085
      %v1491 = vadd.f32 %v1490, 1e-05
      %v1492 = vrsqrt.pop %v1491
      %v1493 = vmul.f32 %v1389, %v1492
      %v1494 = vmul.f32 %v1390, %v1492
      %v1495 = vmul.f32 %v1391, %v1492
      %v1496 = vmul.f32 %v1392, %v1492
      %v1497 = vmul.f32 %v1393, %v1492
      %v1498 = vmul.f32 %v1394, %v1492
      %v1499 = vmul.f32 %v1395, %v1492
      %v1500 = vmul.f32 %v1396, %v1492
      %v1501 = vmul.f32 %v1397, %v1492
      %v1502 = vmul.f32 %v1398, %v1492
      %v1503 = vmul.f32 %v1399, %v1492
      %v1504 = vmul.f32 %v1400, %v1492
      %v1505 = vmul.f32 %v1401, %v1492
      %v1506 = vmul.f32 %v1402, %v1492
      %v1507 = vmul.f32 %v1403, %v1492
      %v1508 = vmul.f32 %v1404, %v1492
      %v1509 = vmul.f32 %v1405, %v1492
      %v1510 = vmul.f32 %v1406, %v1492
      %v1511 = vmul.f32 %v1407, %v1492
      %v1512 = vmul.f32 %v1408, %v1492
      %v1513 = vmul.f32 %v1409, %v1492
      %v1514 = vmul.f32 %v1410, %v1492
      %v1515 = vmul.f32 %v1411, %v1492
      %v1516 = vmul.f32 %v1412, %v1492
      %v1517 = vmul.f32 %v1413, %v1492
      %v1518 = vmul.f32 %v1414, %v1492
      %v1519 = vmul.f32 %v1415, %v1492
      %v1520 = vmul.f32 %v1416, %v1492
      %v1521 = vmul.f32 %v1417, %v1492
      %v1522 = vmul.f32 %v1418, %v1492
      %v1523 = vmul.f32 %v1419, %v1492
      %v1524 = vmul.f32 %v1420, %v1492
      %vm1525 = vcmp.ge.f32.partialorder %v1493, 0.0
      %vm1526 = vcmp.ge.f32.partialorder %v1494, 0.0
      %vm1527 = vcmp.ge.f32.partialorder %v1495, 0.0
      %vm1528 = vcmp.ge.f32.partialorder %v1496, 0.0
      %vm1529 = vcmp.ge.f32.partialorder %v1497, 0.0
      %vm1530 = vcmp.ge.f32.partialorder %v1498, 0.0
      %vm1531 = vcmp.ge.f32.partialorder %v1499, 0.0
      %vm1532 = vcmp.ge.f32.partialorder %v1500, 0.0
      %vm1533 = vcmp.ge.f32.partialorder %v1501, 0.0
      %vm1534 = vcmp.ge.f32.partialorder %v1502, 0.0
      %vm1535 = vcmp.ge.f32.partialorder %v1503, 0.0
      %vm1536 = vcmp.ge.f32.partialorder %v1504, 0.0
      %vm1537 = vcmp.ge.f32.partialorder %v1505, 0.0
      %vm1538 = vcmp.ge.f32.partialorder %v1506, 0.0
      %vm1539 = vcmp.ge.f32.partialorder %v1507, 0.0
      %vm1540 = vcmp.ge.f32.partialorder %v1508, 0.0
      %vm1541 = vcmp.ge.f32.partialorder %v1509, 0.0
      %vm1542 = vcmp.ge.f32.partialorder %v1510, 0.0
      %vm1543 = vcmp.ge.f32.partialorder %v1511, 0.0
      %vm1544 = vcmp.ge.f32.partialorder %v1512, 0.0
      %vm1545 = vcmp.ge.f32.partialorder %v1513, 0.0
      %vm1546 = vcmp.ge.f32.partialorder %v1514, 0.0
      %vm1547 = vcmp.ge.f32.partialorder %v1515, 0.0
      %vm1548 = vcmp.ge.f32.partialorder %v1516, 0.0
      %vm1549 = vcmp.ge.f32.partialorder %v1517, 0.0
      %vm1550 = vcmp.ge.f32.partialorder %v1518, 0.0
      %vm1551 = vcmp.ge.f32.partialorder %v1519, 0.0
      %vm1552 = vcmp.ge.f32.partialorder %v1520, 0.0
      %vm1553 = vcmp.ge.f32.partialorder %v1521, 0.0
      %vm1554 = vcmp.ge.f32.partialorder %v1522, 0.0
      %vm1555 = vcmp.ge.f32.partialorder %v1523, 0.0
      %vm1556 = vcmp.ge.f32.partialorder %v1524, 0.0
      %v1557 = vmul.f32 %v1493, 0.2
      %v1558 = vmul.f32 %v1494, 0.2
      %v1559 = vmul.f32 %v1495, 0.2
      %v1560 = vmul.f32 %v1496, 0.2
      %v1561 = vmul.f32 %v1497, 0.2
      %v1562 = vmul.f32 %v1498, 0.2
      %v1563 = vmul.f32 %v1499, 0.2
      %v1564 = vmul.f32 %v1500, 0.2
      %v1565 = vmul.f32 %v1501, 0.2
      %v1566 = vmul.f32 %v1502, 0.2
      %v1567 = vmul.f32 %v1503, 0.2
      %v1568 = vmul.f32 %v1504, 0.2
      %v1569 = vmul.f32 %v1505, 0.2
      %v1570 = vmul.f32 %v1506, 0.2
      %v1571 = vmul.f32 %v1507, 0.2
      %v1572 = vmul.f32 %v1508, 0.2
      %v1573 = vmul.f32 %v1509, 0.2
      %v1574 = vmul.f32 %v1510, 0.2
      %v1575 = vmul.f32 %v1511, 0.2
      %v1576 = vmul.f32 %v1512, 0.2
      %v1577 = vmul.f32 %v1513, 0.2
      %v1578 = vmul.f32 %v1514, 0.2
      %v1579 = vmul.f32 %v1515, 0.2
      %v1580 = vmul.f32 %v1516, 0.2
      %v1581 = vmul.f32 %v1517, 0.2
      %v1582 = vmul.f32 %v1518, 0.2
      %v1583 = vmul.f32 %v1519, 0.2
      %v1584 = vmul.f32 %v1520, 0.2
      %v1585 = vmul.f32 %v1521, 0.2
      %v1586 = vmul.f32 %v1522, 0.2
      %v1587 = vmul.f32 %v1523, 0.2
      %v1588 = vmul.f32 %v1524, 0.2
      %v1589 = vsel %vm1525, %v1493, %v1557
      %v1590 = vsel %vm1526, %v1494, %v1558
      %v1591 = vsel %vm1527, %v1495, %v1559
      %v1592 = vsel %vm1528, %v1496, %v1560
      %v1593 = vsel %vm1529, %v1497, %v1561
      %v1594 = vsel %vm1530, %v1498, %v1562
      %v1595 = vsel %vm1531, %v1499, %v1563
      %v1596 = vsel %vm1532, %v1500, %v1564
      %v1597 = vsel %vm1533, %v1501, %v1565
      %v1598 = vsel %vm1534, %v1502, %v1566
      %v1599 = vsel %vm1535, %v1503, %v1567
      %v1600 = vsel %vm1536, %v1504, %v1568
      %v1601 = vsel %vm1537, %v1505, %v1569
      %v1602 = vsel %vm1538, %v1506, %v1570
      %v1603 = vsel %vm1539, %v1507, %v1571
      %v1604 = vsel %vm1540, %v1508, %v1572
      %v1605 = vsel %vm1541, %v1509, %v1573
      %v1606 = vsel %vm1542, %v1510, %v1574
      %v1607 = vsel %vm1543, %v1511, %v1575
      %v1608 = vsel %vm1544, %v1512, %v1576
      %v1609 = vsel %vm1545, %v1513, %v1577
      %v1610 = vsel %vm1546, %v1514, %v1578
      %v1611 = vsel %vm1547, %v1515, %v1579
      %v1612 = vsel %vm1548, %v1516, %v1580
      %v1613 = vsel %vm1549, %v1517, %v1581
      %v1614 = vsel %vm1550, %v1518, %v1582
      %v1615 = vsel %vm1551, %v1519, %v1583
      %v1616 = vsel %vm1552, %v1520, %v1584
      %v1617 = vsel %vm1553, %v1521, %v1585
      %v1618 = vsel %vm1554, %v1522, %v1586
      %v1619 = vsel %vm1555, %v1523, %v1587
      %v1620 = vsel %vm1556, %v1524, %v1588
      %1621 = vst [vmem:[%s3 + $0x100] sm:$0xff] %v1589
      %1622 = vst [vmem:[%s3 + $0x108] sm:$0xff] %v1590
      %1623 = vst [vmem:[%s3 + $0x110] sm:$0xff] %v1591
      %1624 = vst [vmem:[%s3 + $0x118] sm:$0xff] %v1592
      %1625 = vst [vmem:[%s3 + $0x120] sm:$0xff] %v1593
      %1626 = vst [vmem:[%s3 + $0x128] sm:$0xff] %v1594
      %1627 = vst [vmem:[%s3 + $0x130] sm:$0xff] %v1595
      %1628 = vst [vmem:[%s3 + $0x138] sm:$0xff] %v1596
      %1629 = vst [vmem:[%s3 + $0x140] sm:$0xff] %v1597
      %1630 = vst [vmem:[%s3 + $0x148] sm:$0xff] %v1598
      %1631 = vst [vmem:[%s3 + $0x150] sm:$0xff] %v1599
      %1632 = vst [vmem:[%s3 + $0x158] sm:$0xff] %v1600
      %1633 = vst [vmem:[%s3 + $0x160] sm:$0xff] %v1601
      %1634 = vst [vmem:[%s3 + $0x168] sm:$0xff] %v1602
      %1635 = vst [vmem:[%s3 + $0x170] sm:$0xff] %v1603
      %1636 = vst [vmem:[%s3 + $0x178] sm:$0xff] %v1604
      %1637 = vst [vmem:[%s3 + $0x180] sm:$0xff] %v1605
      %1638 = vst [vmem:[%s3 + $0x188] sm:$0xff] %v1606
      %1639 = vst [vmem:[%s3 + $0x190] sm:$0xff] %v1607
      %1640 = vst [vmem:[%s3 + $0x198] sm:$0xff] %v1608
      %1641 = vst [vmem:[%s3 + $0x1a0] sm:$0xff] %v1609
      %1642 = vst [vmem:[%s3 + $0x1a8] sm:$0xff] %v1610
      %1643 = vst [vmem:[%s3 + $0x1b0] sm:$0xff] %v1611
      %1644 = vst [vmem:[%s3 + $0x1b8] sm:$0xff] %v1612
      %1645 = vst [vmem:[%s3 + $0x1c0] sm:$0xff] %v1613
      %1646 = vst [vmem:[%s3 + $0x1c8] sm:$0xff] %v1614
      %1647 = vst [vmem:[%s3 + $0x1d0] sm:$0xff] %v1615
      %1648 = vst [vmem:[%s3 + $0x1d8] sm:$0xff] %v1616
      %1649 = vst [vmem:[%s3 + $0x1e0] sm:$0xff] %v1617
      %1650 = vst [vmem:[%s3 + $0x1e8] sm:$0xff] %v1618
      %1651 = vst [vmem:[%s3 + $0x1f0] sm:$0xff] %v1619
      %1652 = vst [vmem:[%s3 + $0x1f8] sm:$0xff] %v1620
    $region29: #{forward.5} parent=1 // pred_fallthru
      _
    // Predicated region
    $region30: #{forward.5} parent=1 // pred_check
      _
    $region31: #{forward.5} parent=1 // pred_check_branch
      %1654 = sbr.rel (0) target = $region33
    $region32: #{forward.5} parent=1 // pred_region
      _
    $region33: #{forward.5} parent=1 // pred_fallthru
      _
    // Predicated region
    $region34: #{forward.5} parent=1 // pred_check
      _
    $region35: #{forward.5} parent=1 // pred_check_branch
      %1656 = sbr.rel (0) target = $region37
    $region36: #{forward.5} parent=1 // pred_region
      _
    $region37: #{forward.5} parent=1 // pred_fallthru
      _
    %1657 = vsyncpa [#allocation4], 1
    %1658 = vsyncpa [#allocation6], 1

// kernel: forward.6
$region0: #{forward.6}
  #allocation0 [shape = 'u32[]', space=smem, size = 0x4, offset = 0x4, fixed_abs, tag = 'smem constant byte address 0x4 - core index']
  #allocation1 [shape = 'u32[144,128]{1,0:T(1,128)}', space=vmem, size = 0x12000, scoped, tag = 'internal scratch']
  #allocation2 [shape = 'f32[128,128]{1,0:T(8,128)}', space=vmem, size = 0x10000, scoped, tag = 'scratch operand']
  %s0 = inlined_call_operand.vmem [shape: bf16[128,128], index: 0, kind: input, shape index: {}]
  %s1 = inlined_call_operand.hbm [shape: bf16[128,128], index: 1, kind: input, shape index: {}]
  %s2 = inlined_call_operand.hbm [shape: f32[1,128], index: 2, kind: input, shape index: {}]
  %s3 = inlined_call_operand.vmem [shape: f32[128,128], index: 3, kind: output, shape index: {}]
  %s4 = sld [smem:[#allocation0]]
  $region38: #{forward.6} parent=0
    _
  %s6 = ssub.s32 1, %s4
  %s7 = scalar_select 0, %s6, %s4
  $region1: #{forward.6} parent=0
    #allocation3 [shape = 'u8[32768]{0}', space=vmem, size = 0x8000, scoped, tag = 'input window, operand 1, single buffered']
    #allocation4 [shape = 's32[1]{0}', space=sflag, size = 0x4, scoped, tag = 'scoped memory for forward.6']
    #allocation5 [shape = 'u8[512]{0}', space=vmem, size = 0x400, scoped, tag = 'input window, operand 2, single buffered']
    #allocation6 [shape = 's32[1]{0}', space=sflag, size = 0x4, scoped, tag = 'scoped memory for forward.6']
    %8 = vsyncpa [#allocation4], 0
    %9 = vsyncpa [#allocation6], 0
    // Predicated region
    $region2: #{forward.6} parent=1 // pred_check
      _
    $region3: #{forward.6} parent=1 // pred_check_branch
      %11 = sbr.rel (0) target = $region5
    $region4: #{forward.6} parent=1 // pred_region
      _
    $region5: #{forward.6} parent=1 // pred_fallthru
      _
    // Predicated region
    $region6: #{forward.6} parent=1 // pred_check
      _
    $region7: #{forward.6} parent=1 // pred_check_branch
      %13 = sbr.rel (0) target = $region9
    $region8: #{forward.6} parent=1 // pred_region
      %s15 = ssub.s32 1024, 1024
      %16 = vsyncadd [#allocation4], %s15
      %s17 = sshll.u32 [#allocation3], 4
      %s18 = int_to_ptr.vmem [resolvable:$true] %s17
      %23 = dma.hbm_to_vmem [thread:$0]  %s1, 1024, %s18, [#allocation4], 64, 64, 4
    $region9: #{forward.6} parent=1 // pred_fallthru
      _
    // Predicated region
    $region10: #{forward.6} parent=1 // pred_check
      _
    $region11: #{forward.6} parent=1 // pred_check_branch
      %25 = sbr.rel (0) target = $region13
    $region12: #{forward.6} parent=1 // pred_region
      %s27 = ssub.s32 16, 16
      %28 = vsyncadd [#allocation6], %s27
      %s30 = sshll.u32 [#allocation5], 4
      %s31 = int_to_ptr.vmem [resolvable:$true] %s30
      %33 = dma.hbm_to_vmem [thread:$0]  %s2, 16, %s31, [#allocation6]
    $region13: #{forward.6} parent=1 // pred_fallthru
      _
    // Predicated region
    $region14: #{forward.6} parent=1 // pred_check
      _
    $region15: #{forward.6} parent=1 // pred_check_branch
      %35 = sbr.rel (0) target = $region17
    $region16: #{forward.6} parent=1 // pred_region
      %36 = dma.done [#allocation4], 1024
    $region17: #{forward.6} parent=1 // pred_fallthru
      _
    // Predicated region
    $region18: #{forward.6} parent=1 // pred_check
      _
    $region19: #{forward.6} parent=1 // pred_check_branch
      %38 = sbr.rel (0) target = $region21
    $region20: #{forward.6} parent=1 // pred_region
      %39 = dma.done [#allocation6], 16
    $region21: #{forward.6} parent=1 // pred_fallthru
      _
    %p41 = scmp.eq.s32.totalorder 0, 0
    // Predicated region
    $region22: #{forward.6} parent=1 // pred_check
      %p42 = pneg %p41
    $region23: #{forward.6} parent=1 // pred_check_branch
      %44 = sbr.rel (%p42) target = $region25
    $region24: #{forward.6} parent=1 // pred_region
      %45 = vst [vmem:[#allocation2] sm:$0xff] 0.0
      %46 = vst [vmem:[#allocation2 + $0x8] sm:$0xff] 0.0
      %47 = vst [vmem:[#allocation2 + $0x10] sm:$0xff] 0.0
      %48 = vst [vmem:[#allocation2 + $0x18] sm:$0xff] 0.0
      %49 = vst [vmem:[#allocation2 + $0x20] sm:$0xff] 0.0
      %50 = vst [vmem:[#allocation2 + $0x28] sm:$0xff] 0.0
      %51 = vst [vmem:[#allocation2 + $0x30] sm:$0xff] 0.0
      %52 = vst [vmem:[#allocation2 + $0x38] sm:$0xff] 0.0
      %53 = vst [vmem:[#allocation2 + $0x40] sm:$0xff] 0.0
      %54 = vst [vmem:[#allocation2 + $0x48] sm:$0xff] 0.0
      %55 = vst [vmem:[#allocation2 + $0x50] sm:$0xff] 0.0
      %56 = vst [vmem:[#allocation2 + $0x58] sm:$0xff] 0.0
      %57 = vst [vmem:[#allocation2 + $0x60] sm:$0xff] 0.0
      %58 = vst [vmem:[#allocation2 + $0x68] sm:$0xff] 0.0
      %59 = vst [vmem:[#allocation2 + $0x70] sm:$0xff] 0.0
      %60 = vst [vmem:[#allocation2 + $0x78] sm:$0xff] 0.0
    $region25: #{forward.6} parent=1 // pred_fallthru
      _
    %v61 = vld [vmem:[#allocation2] sm:$0xff]
    %v62 = vld [vmem:[#allocation2 + $0x8] sm:$0xff]
    %v63 = vld [vmem:[#allocation2 + $0x10] sm:$0xff]
    %v64 = vld [vmem:[#allocation2 + $0x18] sm:$0xff]
    %v65 = vld [vmem:[#allocation2 + $0x20] sm:$0xff]
    %v66 = vld [vmem:[#allocation2 + $0x28] sm:$0xff]
    %v67 = vld [vmem:[#allocation2 + $0x30] sm:$0xff]
    %v68 = vld [vmem:[#allocation2 + $0x38] sm:$0xff]
    %v69 = vld [vmem:[#allocation2 + $0x40] sm:$0xff]
    %v70 = vld [vmem:[#allocation2 + $0x48] sm:$0xff]
    %v71 = vld [vmem:[#allocation2 + $0x50] sm:$0xff]
    %v72 = vld [vmem:[#allocation2 + $0x58] sm:$0xff]
    %v73 = vld [vmem:[#allocation2 + $0x60] sm:$0xff]
    %v74 = vld [vmem:[#allocation2 + $0x68] sm:$0xff]
    %v75 = vld [vmem:[#allocation2 + $0x70] sm:$0xff]
    %v76 = vld [vmem:[#allocation2 + $0x78] sm:$0xff]
    %v77 = vld [vmem:[%s0] sm:$0xf]
    %v78 = vld [vmem:[%s0 + $0x4] sm:$0xf]
    %v79 = vld [vmem:[%s0 + $0x8] sm:$0xf]
    %v80 = vld [vmem:[%s0 + $0xc] sm:$0xf]
    %v81 = vld [vmem:[%s0 + $0x10] sm:$0xf]
    %v82 = vld [vmem:[%s0 + $0x14] sm:$0xf]
    %v83 = vld [vmem:[%s0 + $0x18] sm:$0xf]
    %v84 = vld [vmem:[%s0 + $0x1c] sm:$0xf]
    %v85 = vld [vmem:[%s0 + $0x20] sm:$0xf]
    %v86 = vld [vmem:[%s0 + $0x24] sm:$0xf]
    %v87 = vld [vmem:[%s0 + $0x28] sm:$0xf]
    %v88 = vld [vmem:[%s0 + $0x2c] sm:$0xf]
    %v89 = vld [vmem:[%s0 + $0x30] sm:$0xf]
    %v90 = vld [vmem:[%s0 + $0x34] sm:$0xf]
    %v91 = vld [vmem:[%s0 + $0x38] sm:$0xf]
    %v92 = vld [vmem:[%s0 + $0x3c] sm:$0xf]
    %v93 = vld [vmem:[#allocation3] sm:$0xf]
    %v94 = vld [vmem:[#allocation3 + $0x4] sm:$0xf]
    %v95 = vld [vmem:[#allocation3 + $0x8] sm:$0xf]
    %v96 = vld [vmem:[#allocation3 + $0xc] sm:$0xf]
    %v97 = vld [vmem:[#allocation3 + $0x10] sm:$0xf]
    %v98 = vld [vmem:[#allocation3 + $0x14] sm:$0xf]
    %v99 = vld [vmem:[#allocation3 + $0x18] sm:$0xf]
    %v100 = vld [vmem:[#allocation3 + $0x1c] sm:$0xf]
    %v101 = vld [vmem:[#allocation3 + $0x20] sm:$0xf]
    %v102 = vld [vmem:[#allocation3 + $0x24] sm:$0xf]
    %v103 = vld [vmem:[#allocation3 + $0x28] sm:$0xf]
    %v104 = vld [vmem:[#allocation3 + $0x2c] sm:$0xf]
    %v105 = vld [vmem:[#allocation3 + $0x30] sm:$0xf]
    %v106 = vld [vmem:[#allocation3 + $0x34] sm:$0xf]
    %v107 = vld [vmem:[#allocation3 + $0x38] sm:$0xf]
    %v108 = vld [vmem:[#allocation3 + $0x3c] sm:$0xf]
    %v125 = vunpack.c.l.b16 %v77
    %v126 = vunpack.c.l.b16 %v78
    %v127 = vunpack.c.l.b16 %v79
    %v128 = vunpack.c.l.b16 %v80
    %v129 = vunpack.c.l.b16 %v81
    %v130 = vunpack.c.l.b16 %v82
    %v131 = vunpack.c.l.b16 %v83
    %v132 = vunpack.c.l.b16 %v84
    %v133 = vunpack.c.l.b16 %v85
    %v134 = vunpack.c.l.b16 %v86
    %v135 = vunpack.c.l.b16 %v87
    %v136 = vunpack.c.l.b16 %v88
    %v137 = vunpack.c.l.b16 %v89
    %v138 = vunpack.c.l.b16 %v90
    %v139 = vunpack.c.l.b16 %v91
    %v140 = vunpack.c.l.b16 %v92
    %v141 = vpack.c.b16 %v126, %v125
    %v142 = vpack.c.b16 %v128, %v127
    %v143 = vpack.c.b16 %v130, %v129
    %v144 = vpack.c.b16 %v132, %v131
    %v145 = vpack.c.b16 %v134, %v133
    %v146 = vpack.c.b16 %v136, %v135
    %v147 = vpack.c.b16 %v138, %v137
    %v148 = vpack.c.b16 %v140, %v139
    %v173 = vunpack.c.l.b16 %v93
    %v174 = vunpack.c.l.b16 %v94
    %v175 = vunpack.c.l.b16 %v95
    %v176 = vunpack.c.l.b16 %v96
    %v177 = vunpack.c.l.b16 %v97
    %v178 = vunpack.c.l.b16 %v98
    %v179 = vunpack.c.l.b16 %v99
    %v180 = vunpack.c.l.b16 %v100
    %v181 = vunpack.c.l.b16 %v101
    %v182 = vunpack.c.l.b16 %v102
    %v183 = vunpack.c.l.b16 %v103
    %v184 = vunpack.c.l.b16 %v104
    %v185 = vunpack.c.l.b16 %v105
    %v186 = vunpack.c.l.b16 %v106
    %v187 = vunpack.c.l.b16 %v107
    %v188 = vunpack.c.l.b16 %v108
    %v189 = vpack.c.b16 %v174, %v173
    %v190 = vpack.c.b16 %v176, %v175
    %v191 = vpack.c.b16 %v178, %v177
    %v192 = vpack.c.b16 %v180, %v179
    %v193 = vpack.c.b16 %v182, %v181
    %v194 = vpack.c.b16 %v184, %v183
    %v195 = vpack.c.b16 %v186, %v185
    %v196 = vpack.c.b16 %v188, %v187
    %205 = vmatprep.subr.bf16.mxu0 0
    %206 = vmatpush1.bf16.msra.mxu0 %v189
    %207 = vmatprep.subr.bf16.mxu0 0
    %208 = vmatpush1.bf16.msra.mxu0 %v190
    %209 = vmatprep.subr.bf16.mxu0 0
    %210 = vmatpush1.bf16.msra.mxu0 %v191
    %211 = vmatprep.subr.bf16.mxu0 0
    %212 = vmatpush1.bf16.msra.mxu0 %v192
    %213 = vmatprep.subr.bf16.mxu0 0
    %214 = vmatpush1.bf16.msra.mxu0 %v193
    %215 = vmatprep.subr.bf16.mxu0 0
    %216 = vmatpush1.bf16.msra.mxu0 %v194
    %217 = vmatprep.subr.bf16.mxu0 0
    %218 = vmatpush1.bf16.msra.mxu0 %v195
    %219 = vmatprep.subr.bf16.mxu0 0
    %220 = vmatpush1.bf16.msra.mxu0 %v196
    %221 = vmatprep.subr.bf16.mxu0 0
    %222 = vmatpush1.bf16.msra.mxu0 0
    %223 = vmatprep.subr.bf16.mxu0 0
    %224 = vmatpush1.bf16.msra.mxu0 0
    %225 = vmatprep.subr.bf16.mxu0 0
    %226 = vmatpush1.bf16.msra.mxu0 0
    %227 = vmatprep.subr.bf16.mxu0 0
    %228 = vmatpush1.bf16.msra.mxu0 0
    %229 = vmatprep.subr.bf16.mxu0 0
    %230 = vmatpush1.bf16.msra.mxu0 0
    %231 = vmatprep.subr.bf16.mxu0 0
    %232 = vmatpush1.bf16.msra.mxu0 0
    %233 = vmatprep.subr.bf16.mxu0 0
    %234 = vmatpush1.bf16.msra.mxu0 0
    %235 = vmatprep.subr.bf16.mxu0 0
    %236 = vmatpush1.bf16.msra.mxu0 0
    %237 = vmatprep.mubr.bf16.mxu0 0
    %238 = vmatmul.mubr.bf16.gmra.mrb[0].mxu0 %v141
    %v239 = vpop.f32.mrb[0].mxu0
    %v240 = vadd.f32 0.0, %v239
    %v241 = vpop.f32.mrb[0].mxu0
    %v242 = vpop.f32.mrb[0].mxu0
    %v243 = vadd.f32 0.0, %v242
    %v244 = vpop.f32.mrb[0].mxu0
    %245 = vmatprep.mubr.bf16.mxu0 0
    %246 = vmatmul.mubr.bf16.gmra.mrb[0].mxu0 %v142
    %v247 = vpop.f32.mrb[0].mxu0
    %v248 = vadd.f32 0.0, %v247
    %v249 = vpop.f32.mrb[0].mxu0
    %v250 = vpop.f32.mrb[0].mxu0
    %v251 = vadd.f32 0.0, %v250
    %v252 = vpop.f32.mrb[0].mxu0
    %253 = vmatprep.mubr.bf16.mxu0 0
    %254 = vmatmul.mubr.bf16.gmra.mrb[0].mxu0 %v143
    %v255 = vpop.f32.mrb[0].mxu0
    %v256 = vadd.f32 0.0, %v255
    %v257 = vpop.f32.mrb[0].mxu0
    %v258 = vpop.f32.mrb[0].mxu0
    %v259 = vadd.f32 0.0, %v258
    %v260 = vpop.f32.mrb[0].mxu0
    %261 = vmatprep.mubr.bf16.mxu0 0
    %262 = vmatmul.mubr.bf16.gmra.mrb[0].mxu0 %v144
    %v263 = vpop.f32.mrb[0].mxu0
    %v264 = vadd.f32 0.0, %v263
    %v265 = vpop.f32.mrb[0].mxu0
    %v266 = vpop.f32.mrb[0].mxu0
    %v267 = vadd.f32 0.0, %v266
    %v268 = vpop.f32.mrb[0].mxu0
    %269 = vmatprep.mubr.bf16.mxu0 0
    %270 = vmatmul.mubr.bf16.gmra.mrb[0].mxu0 %v145
    %v271 = vpop.f32.mrb[0].mxu0
    %v272 = vadd.f32 0.0, %v271
    %v273 = vpop.f32.mrb[0].mxu0
    %v274 = vpop.f32.mrb[0].mxu0
    %v275 = vadd.f32 0.0, %v274
    %v276 = vpop.f32.mrb[0].mxu0
    %277 = vmatprep.mubr.bf16.mxu0 0
    %278 = vmatmul.mubr.bf16.gmra.mrb[0].mxu0 %v146
    %v279 = vpop.f32.mrb[0].mxu0
    %v280 = vadd.f32 0.0, %v279
    %v281 = vpop.f32.mrb[0].mxu0
    %v282 = vpop.f32.mrb[0].mxu0
    %v283 = vadd.f32 0.0, %v282
    %v284 = vpop.f32.mrb[0].mxu0
    %285 = vmatprep.mubr.bf16.mxu0 0
    %286 = vmatmul.mubr.bf16.gmra.mrb[0].mxu0 %v147
    %v287 = vpop.f32.mrb[0].mxu0
    %v288 = vadd.f32 0.0, %v287
    %v289 = vpop.f32.mrb[0].mxu0
    %v290 = vpop.f32.mrb[0].mxu0
    %v291 = vadd.f32 0.0, %v290
    %v292 = vpop.f32.mrb[0].mxu0
    %293 = vmatprep.mubr.bf16.mxu0 0
    %294 = vmatmul.mubr.bf16.gmra.mrb[0].mxu0 %v148
    %v295 = vpop.f32.mrb[0].mxu0
    %v296 = vadd.f32 0.0, %v295
    %v297 = vpop.f32.mrb[0].mxu0
    %v298 = vpop.f32.mrb[0].mxu0
    %v299 = vadd.f32 0.0, %v298
    %v300 = vpop.f32.mrb[0].mxu0
    %301 = vdwg.mxu0
    %v302 = vadd.f32 %v61, %v240
    %v303 = vadd.f32 %v62, %v243
    %v304 = vadd.f32 %v63, %v248
    %v305 = vadd.f32 %v64, %v251
    %v306 = vadd.f32 %v65, %v256
    %v307 = vadd.f32 %v66, %v259
    %v308 = vadd.f32 %v67, %v264
    %v309 = vadd.f32 %v68, %v267
    %v310 = vadd.f32 %v69, %v272
    %v311 = vadd.f32 %v70, %v275
    %v312 = vadd.f32 %v71, %v280
    %v313 = vadd.f32 %v72, %v283
    %v314 = vadd.f32 %v73, %v288
    %v315 = vadd.f32 %v74, %v291
    %v316 = vadd.f32 %v75, %v296
    %v317 = vadd.f32 %v76, %v299
    %318 = vst [vmem:[#allocation2] sm:$0xff] %v302
    %319 = vst [vmem:[#allocation2 + $0x8] sm:$0xff] %v303
    %320 = vst [vmem:[#allocation2 + $0x10] sm:$0xff] %v304
    %321 = vst [vmem:[#allocation2 + $0x18] sm:$0xff] %v305
    %322 = vst [vmem:[#allocation2 + $0x20] sm:$0xff] %v306
    %323 = vst [vmem:[#allocation2 + $0x28] sm:$0xff] %v307
    %324 = vst [vmem:[#allocation2 + $0x30] sm:$0xff] %v308
    %325 = vst [vmem:[#allocation2 + $0x38] sm:$0xff] %v309
    %326 = vst [vmem:[#allocation2 + $0x40] sm:$0xff] %v310
    %327 = vst [vmem:[#allocation2 + $0x48] sm:$0xff] %v311
    %328 = vst [vmem:[#allocation2 + $0x50] sm:$0xff] %v312
    %329 = vst [vmem:[#allocation2 + $0x58] sm:$0xff] %v313
    %330 = vst [vmem:[#allocation2 + $0x60] sm:$0xff] %v314
    %331 = vst [vmem:[#allocation2 + $0x68] sm:$0xff] %v315
    %332 = vst [vmem:[#allocation2 + $0x70] sm:$0xff] %v316
    %333 = vst [vmem:[#allocation2 + $0x78] sm:$0xff] %v317
    // Predicated region
    $region26: #{forward.6} parent=1 // pred_check
      %p334 = pneg %p41
    $region27: #{forward.6} parent=1 // pred_check_branch
      %336 = sbr.rel (%p334) target = $region29
    $region28: #{forward.6} parent=1 // pred_region
      %v337 = vld [vmem:[#allocation2] sm:$0xff]
      %v338 = vld [vmem:[#allocation2 + $0x8] sm:$0xff]
      %v339 = vld [vmem:[#allocation2 + $0x10] sm:$0xff]
      %v340 = vld [vmem:[#allocation2 + $0x18] sm:$0xff]
      %v341 = vld [vmem:[#allocation2 + $0x20] sm:$0xff]
      %v342 = vld [vmem:[#allocation2 + $0x28] sm:$0xff]
      %v343 = vld [vmem:[#allocation2 + $0x30] sm:$0xff]
      %v344 = vld [vmem:[#allocation2 + $0x38] sm:$0xff]
      %v345 = vld [vmem:[#allocation2 + $0x40] sm:$0xff]
      %v346 = vld [vmem:[#allocation2 + $0x48] sm:$0xff]
      %v347 = vld [vmem:[#allocation2 + $0x50] sm:$0xff]
      %v348 = vld [vmem:[#allocation2 + $0x58] sm:$0xff]
      %v349 = vld [vmem:[#allocation2 + $0x60] sm:$0xff]
      %v350 = vld [vmem:[#allocation2 + $0x68] sm:$0xff]
      %v351 = vld [vmem:[#allocation2 + $0x70] sm:$0xff]
      %v352 = vld [vmem:[#allocation2 + $0x78] sm:$0xff]
      %v353 = vld [vmem:[#allocation5] sm:$0x1]
      %v355 = vlaneseq
      %v356 = vshrl.u32 %v355, 7
      %v357 = vsub.s32 0, %v356
      %v358 = vrot.slane %v353, %v357
      %v360 = vadd.f32 %v337, %v358
      %v361 = vadd.f32 %v338, %v358
      %v362 = vadd.f32 %v339, %v358
      %v363 = vadd.f32 %v340, %v358
      %v364 = vadd.f32 %v341, %v358
      %v365 = vadd.f32 %v342, %v358
      %v366 = vadd.f32 %v343, %v358
      %v367 = vadd.f32 %v344, %v358
      %v368 = vadd.f32 %v345, %v358
      %v369 = vadd.f32 %v346, %v358
      %v370 = vadd.f32 %v347, %v358
      %v371 = vadd.f32 %v348, %v358
      %v372 = vadd.f32 %v349, %v358
      %v373 = vadd.f32 %v350, %v358
      %v374 = vadd.f32 %v351, %v358
      %v375 = vadd.f32 %v352, %v358
      %v376 = vadd.f32 %v360, %v361
      %v377 = vadd.f32 %v376, %v362
      %v378 = vadd.f32 %v377, %v363
      %v379 = vadd.f32 %v378, %v364
      %v380 = vadd.f32 %v379, %v365
      %v381 = vadd.f32 %v380, %v366
      %v382 = vadd.f32 %v381, %v367
      %v383 = vrot.slane %v382, 4
      %v384 = vadd.f32 %v382, %v383
      %v385 = vrot.slane %v384, 2
      %v386 = vadd.f32 %v384, %v385
      %v387 = vrot.slane %v386, 1
      %v388 = vadd.f32 %v386, %v387
      %v389 = vrcp.pop 64.0
      %v390 = vmul.f32 %v388, %v389
      %v391 = vsub.f32 %v360, %v390
      %v392 = vsub.f32 %v361, %v390
      %v393 = vsub.f32 %v362, %v390
      %v394 = vsub.f32 %v363, %v390
      %v395 = vsub.f32 %v364, %v390
      %v396 = vsub.f32 %v365, %v390
      %v397 = vsub.f32 %v366, %v390
      %v398 = vsub.f32 %v367, %v390
      %v399 = vmul.f32 %v391, %v391
      %v400 = vmul.f32 %v392, %v392
      %v401 = vmul.f32 %v393, %v393
      %v402 = vmul.f32 %v394, %v394
      %v403 = vmul.f32 %v395, %v395
      %v404 = vmul.f32 %v396, %v396
      %v405 = vmul.f32 %v397, %v397
      %v406 = vmul.f32 %v398, %v398
      %v407 = vadd.f32 %v399, %v400
      %v408 = vadd.f32 %v407, %v401
      %v409 = vadd.f32 %v408, %v402
      %v410 = vadd.f32 %v409, %v403
      %v411 = vadd.f32 %v410, %v404
      %v412 = vadd.f32 %v411, %v405
      %v413 = vadd.f32 %v412, %v406
      %v414 = vrot.slane %v413, 4
      %v415 = vadd.f32 %v413, %v414
      %v416 = vrot.slane %v415, 2
      %v417 = vadd.f32 %v415, %v416
      %v418 = vrot.slane %v417, 1
      %v419 = vadd.f32 %v417, %v418
      %v420 = vmul.f32 %v419, %v389
      %v421 = vadd.f32 %v420, 1e-05
      %v422 = vrsqrt.pop %v421
      %v423 = vmul.f32 %v391, %v422
      %v424 = vmul.f32 %v392, %v422
      %v425 = vmul.f32 %v393, %v422
      %v426 = vmul.f32 %v394, %v422
      %v427 = vmul.f32 %v395, %v422
      %v428 = vmul.f32 %v396, %v422
      %v429 = vmul.f32 %v397, %v422
      %v430 = vmul.f32 %v398, %v422
      %vm431 = vcmp.ge.f32.partialorder %v423, 0.0
      %vm432 = vcmp.ge.f32.partialorder %v424, 0.0
      %vm433 = vcmp.ge.f32.partialorder %v425, 0.0
      %vm434 = vcmp.ge.f32.partialorder %v426, 0.0
      %vm435 = vcmp.ge.f32.partialorder %v427, 0.0
      %vm436 = vcmp.ge.f32.partialorder %v428, 0.0
      %vm437 = vcmp.ge.f32.partialorder %v429, 0.0
      %vm438 = vcmp.ge.f32.partialorder %v430, 0.0
      %v439 = vmul.f32 %v423, 0.2
      %v440 = vmul.f32 %v424, 0.2
      %v441 = vmul.f32 %v425, 0.2
      %v442 = vmul.f32 %v426, 0.2
      %v443 = vmul.f32 %v427, 0.2
      %v444 = vmul.f32 %v428, 0.2
      %v445 = vmul.f32 %v429, 0.2
      %v446 = vmul.f32 %v430, 0.2
      %v447 = vsel %vm431, %v423, %v439
      %v448 = vsel %vm432, %v424, %v440
      %v449 = vsel %vm433, %v425, %v441
      %v450 = vsel %vm434, %v426, %v442
      %v451 = vsel %vm435, %v427, %v443
      %v452 = vsel %vm436, %v428, %v444
      %v453 = vsel %vm437, %v429, %v445
      %v454 = vsel %vm438, %v430, %v446
      %455 = vst [vmem:[%s3] sm:$0xff] %v447
      %456 = vst [vmem:[%s3 + $0x8] sm:$0xff] %v448
      %457 = vst [vmem:[%s3 + $0x10] sm:$0xff] %v449
      %458 = vst [vmem:[%s3 + $0x18] sm:$0xff] %v450
      %459 = vst [vmem:[%s3 + $0x20] sm:$0xff] %v451
      %460 = vst [vmem:[%s3 + $0x28] sm:$0xff] %v452
      %461 = vst [vmem:[%s3 + $0x30] sm:$0xff] %v453
      %462 = vst [vmem:[%s3 + $0x38] sm:$0xff] %v454
      %v463 = vadd.f32 %v368, %v369
      %v464 = vadd.f32 %v463, %v370
      %v465 = vadd.f32 %v464, %v371
      %v466 = vadd.f32 %v465, %v372
      %v467 = vadd.f32 %v466, %v373
      %v468 = vadd.f32 %v467, %v374
      %v469 = vadd.f32 %v468, %v375
      %v470 = vrot.slane %v469, 4
      %v471 = vadd.f32 %v469, %v470
      %v472 = vrot.slane %v471, 2
      %v473 = vadd.f32 %v471, %v472
      %v474 = vrot.slane %v473, 1
      %v475 = vadd.f32 %v473, %v474
      %v476 = vmul.f32 %v475, %v389
      %v477 = vsub.f32 %v368, %v476
      %v478 = vsub.f32 %v369, %v476
      %v479 = vsub.f32 %v370, %v476
      %v480 = vsub.f32 %v371, %v476
      %v481 = vsub.f32 %v372, %v476
      %v482 = vsub.f32 %v373, %v476
      %v483 = vsub.f32 %v374, %v476
      %v484 = vsub.f32 %v375, %v476
      %v485 = vmul.f32 %v477, %v477
      %v486 = vmul.f32 %v478, %v478
      %v487 = vmul.f32 %v479, %v479
      %v488 = vmul.f32 %v480, %v480
      %v489 = vmul.f32 %v481, %v481
      %v490 = vmul.f32 %v482, %v482
      %v491 = vmul.f32 %v483, %v483
      %v492 = vmul.f32 %v484, %v484
      %v493 = vadd.f32 %v485, %v486
      %v494 = vadd.f32 %v493, %v487
      %v495 = vadd.f32 %v494, %v488
      %v496 = vadd.f32 %v495, %v489
      %v497 = vadd.f32 %v496, %v490
      %v498 = vadd.f32 %v497, %v491
      %v499 = vadd.f32 %v498, %v492
      %v500 = vrot.slane %v499, 4
      %v501 = vadd.f32 %v499, %v500
      %v502 = vrot.slane %v501, 2
      %v503 = vadd.f32 %v501, %v502
      %v504 = vrot.slane %v503, 1
      %v505 = vadd.f32 %v503, %v504
      %v506 = vmul.f32 %v505, %v389
      %v507 = vadd.f32 %v506, 1e-05
      %v508 = vrsqrt.pop %v507
      %v509 = vmul.f32 %v477, %v508
      %v510 = vmul.f32 %v478, %v508
      %v511 = vmul.f32 %v479, %v508
      %v512 = vmul.f32 %v480, %v508
      %v513 = vmul.f32 %v481, %v508
      %v514 = vmul.f32 %v482, %v508
      %v515 = vmul.f32 %v483, %v508
      %v516 = vmul.f32 %v484, %v508
      %vm517 = vcmp.ge.f32.partialorder %v509, 0.0
      %vm518 = vcmp.ge.f32.partialorder %v510, 0.0
      %vm519 = vcmp.ge.f32.partialorder %v511, 0.0
      %vm520 = vcmp.ge.f32.partialorder %v512, 0.0
      %vm521 = vcmp.ge.f32.partialorder %v513, 0.0
      %vm522 = vcmp.ge.f32.partialorder %v514, 0.0
      %vm523 = vcmp.ge.f32.partialorder %v515, 0.0
      %vm524 = vcmp.ge.f32.partialorder %v516, 0.0
      %v525 = vmul.f32 %v509, 0.2
      %v526 = vmul.f32 %v510, 0.2
      %v527 = vmul.f32 %v511, 0.2
      %v528 = vmul.f32 %v512, 0.2
      %v529 = vmul.f32 %v513, 0.2
      %v530 = vmul.f32 %v514, 0.2
      %v531 = vmul.f32 %v515, 0.2
      %v532 = vmul.f32 %v516, 0.2
      %v533 = vsel %vm517, %v509, %v525
      %v534 = vsel %vm518, %v510, %v526
      %v535 = vsel %vm519, %v511, %v527
      %v536 = vsel %vm520, %v512, %v528
      %v537 = vsel %vm521, %v513, %v529
      %v538 = vsel %vm522, %v514, %v530
      %v539 = vsel %vm523, %v515, %v531
      %v540 = vsel %vm524, %v516, %v532
      %541 = vst [vmem:[%s3 + $0x40] sm:$0xff] %v533
      %542 = vst [vmem:[%s3 + $0x48] sm:$0xff] %v534
      %543 = vst [vmem:[%s3 + $0x50] sm:$0xff] %v535
      %544 = vst [vmem:[%s3 + $0x58] sm:$0xff] %v536
      %545 = vst [vmem:[%s3 + $0x60] sm:$0xff] %v537
      %546 = vst [vmem:[%s3 + $0x68] sm:$0xff] %v538
      %547 = vst [vmem:[%s3 + $0x70] sm:$0xff] %v539
      %548 = vst [vmem:[%s3 + $0x78] sm:$0xff] %v540
    $region29: #{forward.6} parent=1 // pred_fallthru
      _
    // Predicated region
    $region30: #{forward.6} parent=1 // pred_check
      _
    $region31: #{forward.6} parent=1 // pred_check_branch
      %550 = sbr.rel (0) target = $region33
    $region32: #{forward.6} parent=1 // pred_region
      _
    $region33: #{forward.6} parent=1 // pred_fallthru
      _
    // Predicated region
    $region34: #{forward.6} parent=1 // pred_check
      _
    $region35: #{forward.6} parent=1 // pred_check_branch
      %552 = sbr.rel (0) target = $region37
    $region36: #{forward.6} parent=1 // pred_region
      _
    $region37: #{forward.6} parent=1 // pred_fallthru
      _
    %553 = vsyncpa [#allocation4], 1
    %554 = vsyncpa [#allocation6], 1

// kernel: forward.7
$region0: #{forward.7}
  #allocation0 [shape = 'u32[]', space=smem, size = 0x4, offset = 0x4, fixed_abs, tag = 'smem constant byte address 0x4 - core index']
  #allocation1 [shape = 'u32[144,128]{1,0:T(1,128)}', space=vmem, size = 0x12000, scoped, tag = 'internal scratch']
  #allocation2 [shape = 'f32[32,512]{1,0:T(8,128)}', space=vmem, size = 0x10000, scoped, tag = 'scratch operand']
  %s0 = inlined_call_operand.vmem [shape: bf16[32,256], index: 0, kind: input, shape index: {}]
  %s1 = inlined_call_operand.hbm [shape: bf16[256,1024], index: 1, kind: input, shape index: {}]
  %s2 = inlined_call_operand.hbm [shape: f32[1,1024], index: 2, kind: input, shape index: {}]
  %s3 = inlined_call_operand.vmem [shape: f32[32,1024], index: 3, kind: output, shape index: {}]
  %s4 = sld [smem:[#allocation0]]
  $region80: #{forward.7} parent=0
    _
  %s6 = ssub.s32 1, %s4
  %s7 = scalar_select 0, %s6, %s4
  $region1: #{forward.7} parent=0
    #allocation3 [shape = 'u8[524288]{0}', space=vmem, size = 0x80000, scoped, tag = 'input window, operand 1']
    #allocation4 [shape = 's32[2]{0}', space=sflag, size = 0x8, scoped, tag = 'scoped memory for forward.7']
    #allocation5 [shape = 'u8[4096]{0}', space=vmem, size = 0x1000, scoped, tag = 'input window, operand 2']
    #allocation6 [shape = 's32[2]{0}', space=sflag, size = 0x8, scoped, tag = 'scoped memory for forward.7']
    #allocation7 [shape = 'u8[131072]{0}', space=vmem, size = 0x20000, scoped, tag = 'output window, operand 0']
    %8 = vsyncpa [#allocation4], 0
    %s9 = scalar_lea.sflag [#allocation4], 1
    %10 = vsyncpa %s9, 0
    %11 = vsyncpa [#allocation6], 0
    %s12 = scalar_lea.sflag [#allocation6], 1
    %13 = vsyncpa %s12, 0
    loop: start=0, step=1, limit=4
    $region2: #{forward.7} parent=1 // loop_pre_header
      _
    $region3: #{forward.7} parent=1 // loop_header
      %s15 = sphi 0, %s19
      %p16 = scmp.ge.s32.totalorder %s15, 4
      %s22 = sphi 0, %s41
      %s23 = sphi 0, %s37
      %s24 = sphi 0, %s33
      %s25 = sphi 0, %s22
      %s26 = sphi 0, %s23
      %s27 = sphi 0, %s24
      %s28 = sphi 0, %s25
      %s29 = sphi 0, %s26
      %s30 = sphi 0, %s27
      %s46 = sphi 0, %s48
      %s49 = sphi 0, %s46
      %s50 = sphi 0, %s49
      %s66 = sphi 0, %s50
      %s74 = sphi 0, %s76
      %s77 = sphi 0, %s74
      %s78 = sphi 0, %s77
      %s94 = sphi 0, %s78
      %s100 = sphi 0, %s102
      %s103 = sphi 0, %s100
      %s104 = sphi 0, %s103
      %s120 = sphi 0, %s104
      %s128 = sphi 0, %s130
      %s131 = sphi 0, %s128
      %s132 = sphi 0, %s131
      %s148 = sphi 0, %s132
    $region4: #{forward.7} parent=1 // loop_header_branch
      %18 = sbr.rel (%p16) target = $region8
    $region5: #{forward.7} parent=1 // loop_body
      %s20 = ssub.s32 %s15, 1
      %s21 = ssub.s32 %s15, 2
      %s31 = sadd.s32 1, %s24
      %p32 = scmp.ge.s32.totalorder %s31, 1
      %s33 = scalar_select %p32, 0, %s31
      %s34 = sadd.s32 1, %s23
      %s35 = scalar_select %p32, %s34, %s23
      %p36 = scmp.ge.s32.totalorder %s35, 2
      %s37 = scalar_select %p36, 0, %s35
      %s38 = sadd.s32 1, %s22
      %s39 = scalar_select %p36, %s38, %s22
      %p40 = scmp.ge.s32.totalorder %s39, 1
      %s41 = scalar_select %p40, 0, %s39
      %s42 = ssub.s32 %s22, %s41
      %s43 = ssub.s32 %s24, %s33
      %s44 = sor.u32 %s42, %s43
      %p45 = scmp.eq.s32.totalorder %s44, 0
      %s47 = sadd.s32 %s46, 1
      %s48 = scalar_select %p45, %s46, %s47
      %p51 = pneg %p45
      %p52 = scmp.eq.s32.totalorder %s15, 1
      %p53 = por %p51, %p52
      %p54 = scmp.ne.s32.totalorder %s46, %s49
      %p55 = scmp.eq.s32.totalorder %s15, 0
      %p56 = por %p54, %p55
      %p57 = scmp.ne.s32.totalorder %s46, %s49
      %p58 = scmp.eq.s32.totalorder %s20, 1
      %p59 = por %p57, %p58
      %p60 = scmp.ne.s32.totalorder %s49, %s50
      %p61 = scmp.eq.s32.totalorder %s20, 0
      %p62 = por %p60, %p61
      %p63 = scmp.ne.s32.totalorder %s49, %s50
      %p64 = scmp.eq.s32.totalorder %s21, 1
      %p65 = por %p63, %p64
      %p67 = scmp.ne.s32.totalorder %s50, %s66
      %p68 = scmp.eq.s32.totalorder %s21, 0
      %p69 = por %p67, %p68
      %s70 = ssub.s32 %s24, %s33
      %s71 = ssub.s32 %s23, %s37
      %s72 = sor.u32 %s70, %s71
      %p73 = scmp.eq.s32.totalorder %s72, 0
      %s75 = sadd.s32 %s74, 1
      %s76 = scalar_select %p73, %s74, %s75
      %p79 = pneg %p73
      %p80 = scmp.eq.s32.totalorder %s15, 1
      %p81 = por %p79, %p80
      %p82 = scmp.ne.s32.totalorder %s74, %s77
      %p83 = scmp.eq.s32.totalorder %s15, 0
      %p84 = por %p82, %p83
      %p85 = scmp.ne.s32.totalorder %s74, %s77
      %p86 = scmp.eq.s32.totalorder %s20, 1
      %p87 = por %p85, %p86
      %p88 = scmp.ne.s32.totalorder %s77, %s78
      %p89 = scmp.eq.s32.totalorder %s20, 0
      %p90 = por %p88, %p89
      %p91 = scmp.ne.s32.totalorder %s77, %s78
      %p92 = scmp.eq.s32.totalorder %s21, 1
      %p93 = por %p91, %p92
      %p95 = scmp.ne.s32.totalorder %s78, %s94
      %p96 = scmp.eq.s32.totalorder %s21, 0
      %p97 = por %p95, %p96
      %s98 = ssub.s32 %s23, %s37
      %p99 = scmp.eq.s32.totalorder %s98, 0
      %s101 = sadd.s32 %s100, 1
      %s102 = scalar_select %p99, %s100, %s101
      %p105 = pneg %p99
      %p106 = scmp.eq.s32.totalorder %s15, 1
      %p107 = por %p105, %p106
      %p108 = scmp.ne.s32.totalorder %s100, %s103
      %p109 = scmp.eq.s32.totalorder %s15, 0
      %p110 = por %p108, %p109
      %p111 = scmp.ne.s32.totalorder %s100, %s103
      %p112 = scmp.eq.s32.totalorder %s20, 1
      %p113 = por %p111, %p112
      %p114 = scmp.ne.s32.totalorder %s103, %s104
      %p115 = scmp.eq.s32.totalorder %s20, 0
      %p116 = por %p114, %p115
      %p117 = scmp.ne.s32.totalorder %s103, %s104
      %p118 = scmp.eq.s32.totalorder %s21, 1
      %p119 = por %p117, %p118
      %p121 = scmp.ne.s32.totalorder %s104, %s120
      %p122 = scmp.eq.s32.totalorder %s21, 0
      %p123 = por %p121, %p122
      %s124 = ssub.s32 %s22, %s41
      %s125 = ssub.s32 %s23, %s37
      %s126 = sor.u32 %s124, %s125
      %p127 = scmp.eq.s32.totalorder %s126, 0
      %s129 = sadd.s32 %s128, 1
      %s130 = scalar_select %p127, %s128, %s129
      %p133 = pneg %p127
      %p134 = scmp.eq.s32.totalorder %s15, 1
      %p135 = por %p133, %p134
      %p136 = scmp.ne.s32.totalorder %s128, %s131
      %p137 = scmp.eq.s32.totalorder %s15, 0
      %p138 = por %p136, %p137
      %p139 = scmp.ne.s32.totalorder %s128, %s131
      %p140 = scmp.eq.s32.totalorder %s20, 1
      %p141 = por %p139, %p140
      %p142 = scmp.ne.s32.totalorder %s131, %s132
      %p143 = scmp.eq.s32.totalorder %s20, 0
      %p144 = por %p142, %p143
      %p145 = scmp.ne.s32.totalorder %s131, %s132
      %p146 = scmp.eq.s32.totalorder %s21, 1
      %p147 = por %p145, %p146
      %p149 = scmp.ne.s32.totalorder %s132, %s148
      %p150 = scmp.eq.s32.totalorder %s21, 0
      %p151 = por %p149, %p150
      %p152 = scmp.le.s32.totalorder 1, %s15
      %p153 = scmp.lt.s32.totalorder %s15, 3
      %p154 = pnand %p152, %p153
      %p155 = pneg %p154
      // Predicated region
      $region9: #{forward.7} parent=5 // pred_check
        _
      $region10: #{forward.7} parent=5 // pred_check_branch
        %157 = sbr.rel (%p154) target = $region12
      $region11: #{forward.7} parent=5 // pred_region
        %s158 = ssub.s32 %s15, 1
        // Predicated region
        $region13: #{forward.7} parent=11 // pred_check
          %p159 = pneg %p62
        $region14: #{forward.7} parent=11 // pred_check_branch
          %161 = sbr.rel (%p159) target = $region16
        $region15: #{forward.7} parent=11 // pred_region
          %s162 = smul.u32 4, %s25
          %s163 = smul.u32 2, %s27
          %p164 = scmp.lt.s32.totalorder %s162, 3
          %s165 = scalar_select %p164, %s162, 3
          %p166 = scmp.lt.s32.totalorder %s163, 1
          %s167 = scalar_select %p166, %s163, 1
          %s168 = smul.addr %s165, 2
          %s169 = sadd.s32 %s167, %s168
          %s170 = smul.addr %s169, 4
          %s171 = scalar_lea.vmem %s0, %s170
          %s172 = smul.u32 4, %s25
          %s173 = smul.u32 2, %s27
        $region16: #{forward.7} parent=11 // pred_fallthru
          _
      $region12: #{forward.7} parent=5 // pred_fallthru
        _
      %p174 = scmp.lt.s32.totalorder %s15, 2
      // Predicated region
      $region17: #{forward.7} parent=5 // pred_check
        %p175 = pneg %p174
      $region18: #{forward.7} parent=5 // pred_check_branch
        %177 = sbr.rel (%p175) target = $region20
      $region19: #{forward.7} parent=5 // pred_region
        // Predicated region
        $region21: #{forward.7} parent=19 // pred_check
          %p178 = pneg %p84
        $region22: #{forward.7} parent=19 // pred_check_branch
          %180 = sbr.rel (%p178) target = $region24
        $region23: #{forward.7} parent=19 // pred_region
          %s181 = sand.u32 %s74, 1
          %s182 = scalar_lea.sflag [#allocation4], %s181
          %s183 = sand.u32 %s74, 1
          %s184 = smul.addr %s183, 512
          %s185 = scalar_lea.vmem [#allocation3], %s184
          %s186 = smul.u32 32, %s24
          %s187 = smul.u32 4, %s23
          %s189 = ssub.s32 8192, 8192
          %190 = vsyncadd %s182, %s189
          %s191 = smul.addr %s186, 8
          %s192 = sadd.s32 %s187, %s191
          %s193 = smul.addr %s192, 64
          %s194 = scalar_lea.hbm %s1, %s193
          %s195 = sshll.u32 %s185, 4
          %s196 = int_to_ptr.vmem [resolvable:$true] %s195
          %201 = dma.hbm_to_vmem [thread:$0]  %s194, 8192, %s196, %s182, 512, 256, 16
        $region24: #{forward.7} parent=19 // pred_fallthru
          _
        // Predicated region
        $region25: #{forward.7} parent=19 // pred_check
          %p202 = pneg %p110
        $region26: #{forward.7} parent=19 // pred_check_branch
          %204 = sbr.rel (%p202) target = $region28
        $region27: #{forward.7} parent=19 // pred_region
          %s205 = sand.u32 %s100, 1
          %s206 = scalar_lea.sflag [#allocation6], %s205
          %s207 = sand.u32 %s100, 1
          %s208 = smul.addr %s207, 4
          %s209 = scalar_lea.vmem [#allocation5], %s208
          %s210 = smul.u32 4, %s23
          %s212 = ssub.s32 64, 64
          %213 = vsyncadd %s206, %s212
          %s214 = smul.addr %s210, 16
          %s215 = scalar_lea.hbm %s2, %s214
          %s217 = sshll.u32 %s209, 4
          %s218 = int_to_ptr.vmem [resolvable:$true] %s217
          %220 = dma.hbm_to_vmem [thread:$0]  %s215, 64, %s218, %s206
        $region28: #{forward.7} parent=19 // pred_fallthru
          _
      $region20: #{forward.7} parent=5 // pred_fallthru
        _
      %p221 = scmp.le.s32.totalorder 1, %s15
      %p222 = scmp.lt.s32.totalorder %s15, 3
      %p223 = pnand %p221, %p222
      %p224 = pneg %p223
      // Predicated region
      $region29: #{forward.7} parent=5 // pred_check
        _
      $region30: #{forward.7} parent=5 // pred_check_branch
        %226 = sbr.rel (%p223) target = $region32
      $region31: #{forward.7} parent=5 // pred_region
        %s227 = ssub.s32 %s15, 1
        %s228 = sand.u32 %s77, 1
        %s229 = scalar_lea.sflag [#allocation4], %s228
        %s230 = sand.u32 %s77, 1
        %s231 = smul.addr %s230, 512
        %s232 = scalar_lea.vmem [#allocation3], %s231
        // Predicated region
        $region33: #{forward.7} parent=31 // pred_check
          %p233 = pneg %p90
        $region34: #{forward.7} parent=31 // pred_check_branch
          %235 = sbr.rel (%p233) target = $region36
        $region35: #{forward.7} parent=31 // pred_region
          %236 = dma.done %s229, 8192
        $region36: #{forward.7} parent=31 // pred_fallthru
          _
        %s237 = sand.u32 %s103, 1
        %s238 = scalar_lea.sflag [#allocation6], %s237
        %s239 = sand.u32 %s103, 1
        %s240 = smul.addr %s239, 4
        %s241 = scalar_lea.vmem [#allocation5], %s240
        // Predicated region
        $region37: #{forward.7} parent=31 // pred_check
          %p242 = pneg %p116
        $region38: #{forward.7} parent=31 // pred_check_branch
          %244 = sbr.rel (%p242) target = $region40
        $region39: #{forward.7} parent=31 // pred_region
          %245 = dma.done %s238, 64
        $region40: #{forward.7} parent=31 // pred_fallthru
          _
        %s246 = smul.u32 4, %s25
        %s247 = smul.u32 2, %s27
        %p248 = scmp.lt.s32.totalorder %s246, 3
        %s249 = scalar_select %p248, %s246, 3
        %p250 = scmp.lt.s32.totalorder %s247, 1
        %s251 = scalar_select %p250, %s247, 1
        %s252 = smul.addr %s249, 2
        %s253 = sadd.s32 %s251, %s252
        %s254 = smul.addr %s253, 4
        %s255 = scalar_lea.vmem %s0, %s254
        %p256 = pneg %p62
        %p257 = pneg %p59
        %s258 = sand.u32 %s77, 1
        %s259 = scalar_lea.sflag [#allocation4], %s258
        %s260 = sand.u32 %s77, 1
        %s261 = smul.addr %s260, 512
        %s262 = scalar_lea.vmem [#allocation3], %s261
        %p263 = pneg %p90
        %p264 = pneg %p87
        %s265 = sand.u32 %s103, 1
        %s266 = scalar_lea.sflag [#allocation6], %s265
        %s267 = sand.u32 %s103, 1
        %s268 = smul.addr %s267, 4
        %s269 = scalar_lea.vmem [#allocation5], %s268
        %p270 = pneg %p116
        %p271 = pneg %p113
        %p272 = pneg %p144
        %p273 = pneg %p141
        %s274 = sand.u32 %s131, 1
        %s275 = sand.u32 %s131, 1
        %s276 = smul.addr %s275, 128
        %s277 = scalar_lea.vmem [#allocation7], %s276
        %s278 = smul.u32 4, %s25
        %s279 = smul.u32 2, %s27
        %p280 = scmp.lt.s32.totalorder %s278, 3
        %s281 = scalar_select %p280, %s278, 3
        %p282 = scmp.lt.s32.totalorder %s279, 1
        %s283 = scalar_select %p282, %s279, 1
        %s284 = smul.addr %s281, 2
        %s285 = sadd.s32 %s283, %s284
        %s286 = smul.addr %s285, 4
        %s287 = scalar_lea.vmem %s0, %s286
        %s288 = smul.u32 4, %s25
        %s289 = smul.u32 2, %s27
        %s290 = smul.u32 32, %s27
        %s291 = smul.u32 4, %s26
        %s292 = smul.u32 4, %s26
        %s293 = smul.u32 4, %s25
        %s294 = smul.u32 4, %s26
        %p295 = scmp.eq.s32.totalorder %s27, 0
        // Predicated region
        $region41: #{forward.7} parent=31 // pred_check
          %p296 = pneg %p295
        $region42: #{forward.7} parent=31 // pred_check_branch
          %298 = sbr.rel (%p296) target = $region44
        $region43: #{forward.7} parent=31 // pred_region
          %299 = vst [vmem:[#allocation2] sm:$0xff] 0.0
          %300 = vst [vmem:[#allocation2 + $0x8] sm:$0xff] 0.0
          %301 = vst [vmem:[#allocation2 + $0x10] sm:$0xff] 0.0
          %302 = vst [vmem:[#allocation2 + $0x18] sm:$0xff] 0.0
          %303 = vst [vmem:[#allocation2 + $0x20] sm:$0xff] 0.0
          %304 = vst [vmem:[#allocation2 + $0x28] sm:$0xff] 0.0
          %305 = vst [vmem:[#allocation2 + $0x30] sm:$0xff] 0.0
          %306 = vst [vmem:[#allocation2 + $0x38] sm:$0xff] 0.0
          %307 = vst [vmem:[#allocation2 + $0x40] sm:$0xff] 0.0
          %308 = vst [vmem:[#allocation2 + $0x48] sm:$0xff] 0.0
          %309 = vst [vmem:[#allocation2 + $0x50] sm:$0xff] 0.0
          %310 = vst [vmem:[#allocation2 + $0x58] sm:$0xff] 0.0
          %311 = vst [vmem:[#allocation2 + $0x60] sm:$0xff] 0.0
          %312 = vst [vmem:[#allocation2 + $0x68] sm:$0xff] 0.0
          %313 = vst [vmem:[#allocation2 + $0x70] sm:$0xff] 0.0
          %314 = vst [vmem:[#allocation2 + $0x78] sm:$0xff] 0.0
        $region44: #{forward.7} parent=31 // pred_fallthru
          _
        %v315 = vld [vmem:[#allocation2] sm:$0xff]
        %v316 = vld [vmem:[#allocation2 + $0x8] sm:$0xff]
        %v317 = vld [vmem:[#allocation2 + $0x10] sm:$0xff]
        %v318 = vld [vmem:[#allocation2 + $0x18] sm:$0xff]
        %v319 = vld [vmem:[#allocation2 + $0x20] sm:$0xff]
        %v320 = vld [vmem:[#allocation2 + $0x28] sm:$0xff]
        %v321 = vld [vmem:[#allocation2 + $0x30] sm:$0xff]
        %v322 = vld [vmem:[#allocation2 + $0x38] sm:$0xff]
        %v323 = vld [vmem:[#allocation2 + $0x40] sm:$0xff]
        %v324 = vld [vmem:[#allocation2 + $0x48] sm:$0xff]
        %v325 = vld [vmem:[#allocation2 + $0x50] sm:$0xff]
        %v326 = vld [vmem:[#allocation2 + $0x58] sm:$0xff]
        %v327 = vld [vmem:[#allocation2 + $0x60] sm:$0xff]
        %v328 = vld [vmem:[#allocation2 + $0x68] sm:$0xff]
        %v329 = vld [vmem:[#allocation2 + $0x70] sm:$0xff]
        %v330 = vld [vmem:[#allocation2 + $0x78] sm:$0xff]
        %v331 = vld [vmem:[%s287] sm:$0xff]
        %v332 = vld [vmem:[%s287 + $0x8] sm:$0xff]
        %v333 = vld [vmem:[%s287 + $0x10] sm:$0xff]
        %v334 = vld [vmem:[%s287 + $0x18] sm:$0xff]
        %v335 = vld [vmem:[%s232] sm:$0xff]
        %v336 = vld [vmem:[%s232 + $0x8] sm:$0xff]
        %v337 = vld [vmem:[%s232 + $0x10] sm:$0xff]
        %v338 = vld [vmem:[%s232 + $0x18] sm:$0xff]
        %v339 = vld [vmem:[%s232 + $0x20] sm:$0xff]
        %v340 = vld [vmem:[%s232 + $0x28] sm:$0xff]
        %v341 = vld [vmem:[%s232 + $0x30] sm:$0xff]
        %v342 = vld [vmem:[%s232 + $0x38] sm:$0xff]
        %v343 = vld [vmem:[%s232 + $0x40] sm:$0xff]
        %v344 = vld [vmem:[%s232 + $0x48] sm:$0xff]
        %v345 = vld [vmem:[%s232 + $0x50] sm:$0xff]
        %v346 = vld [vmem:[%s232 + $0x58] sm:$0xff]
        %v347 = vld [vmem:[%s232 + $0x60] sm:$0xff]
        %v348 = vld [vmem:[%s232 + $0x68] sm:$0xff]
        %v349 = vld [vmem:[%s232 + $0x70] sm:$0xff]
        %v350 = vld [vmem:[%s232 + $0x78] sm:$0xff]
        %v351 = vld [vmem:[%s232 + $0x80] sm:$0xff]
        %v352 = vld [vmem:[%s232 + $0x88] sm:$0xff]
        %v353 = vld [vmem:[%s232 + $0x90] sm:$0xff]
        %v354 = vld [vmem:[%s232 + $0x98] sm:$0xff]
        %v355 = vld [vmem:[%s232 + $0xa0] sm:$0xff]
        %v356 = vld [vmem:[%s232 + $0xa8] sm:$0xff]
        %v357 = vld [vmem:[%s232 + $0xb0] sm:$0xff]
        %v358 = vld [vmem:[%s232 + $0xb8] sm:$0xff]
        %v359 = vld [vmem:[%s232 + $0xc0] sm:$0xff]
        %v360 = vld [vmem:[%s232 + $0xc8] sm:$0xff]
        %v361 = vld [vmem:[%s232 + $0xd0] sm:$0xff]
        %v362 = vld [vmem:[%s232 + $0xd8] sm:$0xff]
        %v363 = vld [vmem:[%s232 + $0xe0] sm:$0xff]
        %v364 = vld [vmem:[%s232 + $0xe8] sm:$0xff]
        %v365 = vld [vmem:[%s232 + $0xf0] sm:$0xff]
        %v366 = vld [vmem:[%s232 + $0xf8] sm:$0xff]
        %v367 = vld [vmem:[%s232 + $0x100] sm:$0xff]
        %v368 = vld [vmem:[%s232 + $0x108] sm:$0xff]
        %v369 = vld [vmem:[%s232 + $0x110] sm:$0xff]
        %v370 = vld [vmem:[%s232 + $0x118] sm:$0xff]
        %v371 = vld [vmem:[%s232 + $0x120] sm:$0xff]
        %v372 = vld [vmem:[%s232 + $0x128] sm:$0xff]
        %v373 = vld [vmem:[%s232 + $0x130] sm:$0xff]
        %v374 = vld [vmem:[%s232 + $0x138] sm:$0xff]
        %v375 = vld [vmem:[%s232 + $0x140] sm:$0xff]
        %v376 = vld [vmem:[%s232 + $0x148] sm:$0xff]
        %v377 = vld [vmem:[%s232 + $0x150] sm:$0xff]
        %v378 = vld [vmem:[%s232 + $0x158] sm:$0xff]
        %v379 = vld [vmem:[%s232 + $0x160] sm:$0xff]
        %v380 = vld [vmem:[%s232 + $0x168] sm:$0xff]
        %v381 = vld [vmem:[%s232 + $0x170] sm:$0xff]
        %v382 = vld [vmem:[%s232 + $0x178] sm:$0xff]
        %v383 = vld [vmem:[%s232 + $0x180] sm:$0xff]
        %v384 = vld [vmem:[%s232 + $0x188] sm:$0xff]
        %v385 = vld [vmem:[%s232 + $0x190] sm:$0xff]
        %v386 = vld [vmem:[%s232 + $0x198] sm:$0xff]
        %v387 = vld [vmem:[%s232 + $0x1a0] sm:$0xff]
        %v388 = vld [vmem:[%s232 + $0x1a8] sm:$0xff]
        %v389 = vld [vmem:[%s232 + $0x1b0] sm:$0xff]
        %v390 = vld [vmem:[%s232 + $0x1b8] sm:$0xff]
        %v391 = vld [vmem:[%s232 + $0x1c0] sm:$0xff]
        %v392 = vld [vmem:[%s232 + $0x1c8] sm:$0xff]
        %v393 = vld [vmem:[%s232 + $0x1d0] sm:$0xff]
        %v394 = vld [vmem:[%s232 + $0x1d8] sm:$0xff]
        %v395 = vld [vmem:[%s232 + $0x1e0] sm:$0xff]
        %v396 = vld [vmem:[%s232 + $0x1e8] sm:$0xff]
        %v397 = vld [vmem:[%s232 + $0x1f0] sm:$0xff]
        %v398 = vld [vmem:[%s232 + $0x1f8] sm:$0xff]
        %v403 = vunpack.c.l.b16 %v331
        %v404 = vunpack.c.h.b16 %v331
        %v405 = vunpack.c.l.b16 %v332
        %v406 = vunpack.c.h.b16 %v332
        %v407 = vunpack.c.l.b16 %v333
        %v408 = vunpack.c.h.b16 %v333
        %v409 = vunpack.c.l.b16 %v334
        %v410 = vunpack.c.h.b16 %v334
        %v411 = vpack.c.b16 %v405, %v403
        %v412 = vpack.c.b16 %v406, %v404
        %v413 = vpack.c.b16 %v409, %v407
        %v414 = vpack.c.b16 %v410, %v408
        %v483 = vunpack.c.l.b16 %v335
        %v484 = vunpack.c.h.b16 %v335
        %v485 = vunpack.c.l.b16 %v336
        %v486 = vunpack.c.h.b16 %v336
        %v487 = vunpack.c.l.b16 %v337
        %v488 = vunpack.c.h.b16 %v337
        %v489 = vunpack.c.l.b16 %v338
        %v490 = vunpack.c.h.b16 %v338
        %v491 = vunpack.c.l.b16 %v339
        %v492 = vunpack.c.h.b16 %v339
        %v493 = vunpack.c.l.b16 %v340
        %v494 = vunpack.c.h.b16 %v340
        %v495 = vunpack.c.l.b16 %v341
        %v496 = vunpack.c.h.b16 %v341
        %v497 = vunpack.c.l.b16 %v342
        %v498 = vunpack.c.h.b16 %v342
        %v499 = vunpack.c.l.b16 %v343
        %v500 = vunpack.c.h.b16 %v343
        %v501 = vunpack.c.l.b16 %v344
        %v502 = vunpack.c.h.b16 %v344
        %v503 = vunpack.c.l.b16 %v345
        %v504 = vunpack.c.h.b16 %v345
        %v505 = vunpack.c.l.b16 %v346
        %v506 = vunpack.c.h.b16 %v346
        %v507 = vunpack.c.l.b16 %v347
        %v508 = vunpack.c.h.b16 %v347
        %v509 = vunpack.c.l.b16 %v348
        %v510 = vunpack.c.h.b16 %v348
        %v511 = vunpack.c.l.b16 %v349
        %v512 = vunpack.c.h.b16 %v349
        %v513 = vunpack.c.l.b16 %v350
        %v514 = vunpack.c.h.b16 %v350
        %v515 = vunpack.c.l.b16 %v351
        %v516 = vunpack.c.h.b16 %v351
        %v517 = vunpack.c.l.b16 %v352
        %v518 = vunpack.c.h.b16 %v352
        %v519 = vunpack.c.l.b16 %v353
        %v520 = vunpack.c.h.b16 %v353
        %v521 = vunpack.c.l.b16 %v354
        %v522 = vunpack.c.h.b16 %v354
        %v523 = vunpack.c.l.b16 %v355
        %v524 = vunpack.c.h.b16 %v355
        %v525 = vunpack.c.l.b16 %v356
        %v526 = vunpack.c.h.b16 %v356
        %v527 = vunpack.c.l.b16 %v357
        %v528 = vunpack.c.h.b16 %v357
        %v529 = vunpack.c.l.b16 %v358
        %v530 = vunpack.c.h.b16 %v358
        %v531 = vunpack.c.l.b16 %v359
        %v532 = vunpack.c.h.b16 %v359
        %v533 = vunpack.c.l.b16 %v360
        %v534 = vunpack.c.h.b16 %v360
        %v535 = vunpack.c.l.b16 %v361
        %v536 = vunpack.c.h.b16 %v361
        %v537 = vunpack.c.l.b16 %v362
        %v538 = vunpack.c.h.b16 %v362
        %v539 = vunpack.c.l.b16 %v363
        %v540 = vunpack.c.h.b16 %v363
        %v541 = vunpack.c.l.b16 %v364
        %v542 = vunpack.c.h.b16 %v364
        %v543 = vunpack.c.l.b16 %v365
        %v544 = vunpack.c.h.b16 %v365
        %v545 = vunpack.c.l.b16 %v366
        %v546 = vunpack.c.h.b16 %v366
        %v547 = vunpack.c.l.b16 %v367
        %v548 = vunpack.c.h.b16 %v367
        %v549 = vunpack.c.l.b16 %v368
        %v550 = vunpack.c.h.b16 %v368
        %v551 = vunpack.c.l.b16 %v369
        %v552 = vunpack.c.h.b16 %v369
        %v553 = vunpack.c.l.b16 %v370
        %v554 = vunpack.c.h.b16 %v370
        %v555 = vunpack.c.l.b16 %v371
        %v556 = vunpack.c.h.b16 %v371
        %v557 = vunpack.c.l.b16 %v372
        %v558 = vunpack.c.h.b16 %v372
        %v559 = vunpack.c.l.b16 %v373
        %v560 = vunpack.c.h.b16 %v373
        %v561 = vunpack.c.l.b16 %v374
        %v562 = vunpack.c.h.b16 %v374
        %v563 = vunpack.c.l.b16 %v375
        %v564 = vunpack.c.h.b16 %v375
        %v565 = vunpack.c.l.b16 %v376
        %v566 = vunpack.c.h.b16 %v376
        %v567 = vunpack.c.l.b16 %v377
        %v568 = vunpack.c.h.b16 %v377
        %v569 = vunpack.c.l.b16 %v378
        %v570 = vunpack.c.h.b16 %v378
        %v571 = vunpack.c.l.b16 %v379
        %v572 = vunpack.c.h.b16 %v379
        %v573 = vunpack.c.l.b16 %v380
        %v574 = vunpack.c.h.b16 %v380
        %v575 = vunpack.c.l.b16 %v381
        %v576 = vunpack.c.h.b16 %v381
        %v577 = vunpack.c.l.b16 %v382
        %v578 = vunpack.c.h.b16 %v382
        %v579 = vunpack.c.l.b16 %v383
        %v580 = vunpack.c.h.b16 %v383
        %v581 = vunpack.c.l.b16 %v384
        %v582 = vunpack.c.h.b16 %v384
        %v583 = vunpack.c.l.b16 %v385
        %v584 = vunpack.c.h.b16 %v385
        %v585 = vunpack.c.l.b16 %v386
        %v586 = vunpack.c.h.b16 %v386
        %v587 = vunpack.c.l.b16 %v387
        %v588 = vunpack.c.h.b16 %v387
        %v589 = vunpack.c.l.b16 %v388
        %v590 = vunpack.c.h.b16 %v388
        %v591 = vunpack.c.l.b16 %v389
        %v592 = vunpack.c.h.b16 %v389
        %v593 = vunpack.c.l.b16 %v390
        %v594 = vunpack.c.h.b16 %v390
        %v595 = vunpack.c.l.b16 %v391
        %v596 = vunpack.c.h.b16 %v391
        %v597 = vunpack.c.l.b16 %v392
        %v598 = vunpack.c.h.b16 %v392
        %v599 = vunpack.c.l.b16 %v393
        %v600 = vunpack.c.h.b16 %v393
        %v601 = vunpack.c.l.b16 %v394
        %v602 = vunpack.c.h.b16 %v394
        %v603 = vunpack.c.l.b16 %v395
        %v604 = vunpack.c.h.b16 %v395
        %v605 = vunpack.c.l.b16 %v396
        %v606 = vunpack.c.h.b16 %v396
        %v607 = vunpack.c.l.b16 %v397
        %v608 = vunpack.c.h.b16 %v397
        %v609 = vunpack.c.l.b16 %v398
        %v610 = vunpack.c.h.b16 %v398
        %v611 = vpack.c.b16 %v487, %v483
        %v612 = vpack.c.b16 %v488, %v484
        %v613 = vpack.c.b16 %v489, %v485
        %v614 = vpack.c.b16 %v490, %v486
        %v615 = vpack.c.b16 %v495, %v491
        %v616 = vpack.c.b16 %v496, %v492
        %v617 = vpack.c.b16 %v497, %v493
        %v618 = vpack.c.b16 %v498, %v494
        %v619 = vpack.c.b16 %v503, %v499
        %v620 = vpack.c.b16 %v504, %v500
        %v621 = vpack.c.b16 %v505, %v501
        %v622 = vpack.c.b16 %v506, %v502
        %v623 = vpack.c.b16 %v511, %v507
        %v624 = vpack.c.b16 %v512, %v508
        %v625 = vpack.c.b16 %v513, %v509
        %v626 = vpack.c.b16 %v514, %v510
        %v627 = vpack.c.b16 %v519, %v515
        %v628 = vpack.c.b16 %v520, %v516
        %v629 = vpack.c.b16 %v521, %v517
        %v630 = vpack.c.b16 %v522, %v518
        %v631 = vpack.c.b16 %v527, %v523
        %v632 = vpack.c.b16 %v528, %v524
        %v633 = vpack.c.b16 %v529, %v525
        %v634 = vpack.c.b16 %v530, %v526
        %v635 = vpack.c.b16 %v535, %v531
        %v636 = vpack.c.b16 %v536, %v532
        %v637 = vpack.c.b16 %v537, %v533
        %v638 = vpack.c.b16 %v538, %v534
        %v639 = vpack.c.b16 %v543, %v539
        %v640 = vpack.c.b16 %v544, %v540
        %v641 = vpack.c.b16 %v545, %v541
        %v642 = vpack.c.b16 %v546, %v542
        %v643 = vpack.c.b16 %v551, %v547
        %v644 = vpack.c.b16 %v552, %v548
        %v645 = vpack.c.b16 %v553, %v549
        %v646 = vpack.c.b16 %v554, %v550
        %v647 = vpack.c.b16 %v559, %v555
        %v648 = vpack.c.b16 %v560, %v556
        %v649 = vpack.c.b16 %v561, %v557
        %v650 = vpack.c.b16 %v562, %v558
        %v651 = vpack.c.b16 %v567, %v563
        %v652 = vpack.c.b16 %v568, %v564
        %v653 = vpack.c.b16 %v569, %v565
        %v654 = vpack.c.b16 %v570, %v566
        %v655 = vpack.c.b16 %v575, %v571
        %v656 = vpack.c.b16 %v576, %v572
        %v657 = vpack.c.b16 %v577, %v573
        %v658 = vpack.c.b16 %v578, %v574
        %v659 = vpack.c.b16 %v583, %v579
        %v660 = vpack.c.b16 %v584, %v580
        %v661 = vpack.c.b16 %v585, %v581
        %v662 = vpack.c.b16 %v586, %v582
        %v663 = vpack.c.b16 %v591, %v587
        %v664 = vpack.c.b16 %v592, %v588
        %v665 = vpack.c.b16 %v593, %v589
        %v666 = vpack.c.b16 %v594, %v590
        %v667 = vpack.c.b16 %v599, %v595
        %v668 = vpack.c.b16 %v600, %v596
        %v669 = vpack.c.b16 %v601, %v597
        %v670 = vpack.c.b16 %v602, %v598
        %v671 = vpack.c.b16 %v607, %v603
        %v672 = vpack.c.b16 %v608, %v604
        %v673 = vpack.c.b16 %v609, %v605
        %v674 = vpack.c.b16 %v610, %v606
        %739 = vmatprep.subr.bf16.mxu0 %v612
        %740 = vmatpush1.bf16.msra.mxu0 %v611
        %741 = vmatprep.subr.bf16.mxu0 %v616
        %742 = vmatpush1.bf16.msra.mxu0 %v615
        %743 = vmatprep.subr.bf16.mxu0 %v620
        %744 = vmatpush1.bf16.msra.mxu0 %v619
        %745 = vmatprep.subr.bf16.mxu0 %v624
        %746 = vmatpush1.bf16.msra.mxu0 %v623
        %747 = vmatprep.subr.bf16.mxu0 %v628
        %748 = vmatpush1.bf16.msra.mxu0 %v627
        %749 = vmatprep.subr.bf16.mxu0 %v632
        %750 = vmatpush1.bf16.msra.mxu0 %v631
        %751 = vmatprep.subr.bf16.mxu0 %v636
        %752 = vmatpush1.bf16.msra.mxu0 %v635
        %753 = vmatprep.subr.bf16.mxu0 %v640
        %754 = vmatpush1.bf16.msra.mxu0 %v639
        %755 = vmatprep.subr.bf16.mxu0 %v644
        %756 = vmatpush1.bf16.msra.mxu0 %v643
        %757 = vmatprep.subr.bf16.mxu0 %v648
        %758 = vmatpush1.bf16.msra.mxu0 %v647
        %759 = vmatprep.subr.bf16.mxu0 %v652
        %760 = vmatpush1.bf16.msra.mxu0 %v651
        %761 = vmatprep.subr.bf16.mxu0 %v656
        %762 = vmatpush1.bf16.msra.mxu0 %v655
        %763 = vmatprep.subr.bf16.mxu0 %v660
        %764 = vmatpush1.bf16.msra.mxu0 %v659
        %765 = vmatprep.subr.bf16.mxu0 %v664
        %766 = vmatpush1.bf16.msra.mxu0 %v663
        %767 = vmatprep.subr.bf16.mxu0 %v668
        %768 = vmatpush1.bf16.msra.mxu0 %v667
        %769 = vmatprep.subr.bf16.mxu0 %v672
        %770 = vmatpush1.bf16.msra.mxu0 %v671
        %771 = vmatprep.mubr.bf16.mxu0 %v412
        %772 = vmatmul.mubr.bf16.gmra.mrb[0].mxu0 %v411
        %v773 = vpop.f32.mrb[0].mxu0
        %v774 = vadd.f32 0.0, %v773
        %v775 = vpop.f32.mrb[0].mxu0
        %v776 = vadd.f32 0.0, %v775
        %v777 = vpop.f32.mrb[0].mxu0
        %v778 = vadd.f32 0.0, %v777
        %v779 = vpop.f32.mrb[0].mxu0
        %v780 = vadd.f32 0.0, %v779
        %781 = vmatprep.mubr.bf16.mxu0 %v414
        %782 = vmatmul.mubr.bf16.gmra.mrb[0].mxu0 %v413
        %v783 = vpop.f32.mrb[0].mxu0
        %v784 = vadd.f32 0.0, %v783
        %v785 = vpop.f32.mrb[0].mxu0
        %v786 = vadd.f32 0.0, %v785
        %v787 = vpop.f32.mrb[0].mxu0
        %v788 = vadd.f32 0.0, %v787
        %v789 = vpop.f32.mrb[0].mxu0
        %v790 = vadd.f32 0.0, %v789
        %791 = vdwg.mxu0
        %792 = vmatprep.subr.bf16.mxu0 %v614
        %793 = vmatpush1.bf16.msra.mxu0 %v613
        %794 = vmatprep.subr.bf16.mxu0 %v618
        %795 = vmatpush1.bf16.msra.mxu0 %v617
        %796 = vmatprep.subr.bf16.mxu0 %v622
        %797 = vmatpush1.bf16.msra.mxu0 %v621
        %798 = vmatprep.subr.bf16.mxu0 %v626
        %799 = vmatpush1.bf16.msra.mxu0 %v625
        %800 = vmatprep.subr.bf16.mxu0 %v630
        %801 = vmatpush1.bf16.msra.mxu0 %v629
        %802 = vmatprep.subr.bf16.mxu0 %v634
        %803 = vmatpush1.bf16.msra.mxu0 %v633
        %804 = vmatprep.subr.bf16.mxu0 %v638
        %805 = vmatpush1.bf16.msra.mxu0 %v637
        %806 = vmatprep.subr.bf16.mxu0 %v642
        %807 = vmatpush1.bf16.msra.mxu0 %v641
        %808 = vmatprep.subr.bf16.mxu0 %v646
        %809 = vmatpush1.bf16.msra.mxu0 %v645
        %810 = vmatprep.subr.bf16.mxu0 %v650
        %811 = vmatpush1.bf16.msra.mxu0 %v649
        %812 = vmatprep.subr.bf16.mxu0 %v654
        %813 = vmatpush1.bf16.msra.mxu0 %v653
        %814 = vmatprep.subr.bf16.mxu0 %v658
        %815 = vmatpush1.bf16.msra.mxu0 %v657
        %816 = vmatprep.subr.bf16.mxu0 %v662
        %817 = vmatpush1.bf16.msra.mxu0 %v661
        %818 = vmatprep.subr.bf16.mxu0 %v666
        %819 = vmatpush1.bf16.msra.mxu0 %v665
        %820 = vmatprep.subr.bf16.mxu0 %v670
        %821 = vmatpush1.bf16.msra.mxu0 %v669
        %822 = vmatprep.subr.bf16.mxu0 %v674
        %823 = vmatpush1.bf16.msra.mxu0 %v673
        %824 = vmatprep.mubr.bf16.mxu0 %v412
        %825 = vmatmul.mubr.bf16.gmra.mrb[0].mxu0 %v411
        %v826 = vpop.f32.mrb[0].mxu0
        %v827 = vadd.f32 0.0, %v826
        %v828 = vpop.f32.mrb[0].mxu0
        %v829 = vadd.f32 0.0, %v828
        %v830 = vpop.f32.mrb[0].mxu0
        %v831 = vadd.f32 0.0, %v830
        %v832 = vpop.f32.mrb[0].mxu0
        %v833 = vadd.f32 0.0, %v832
        %834 = vmatprep.mubr.bf16.mxu0 %v414
        %835 = vmatmul.mubr.bf16.gmra.mrb[0].mxu0 %v413
        %v836 = vpop.f32.mrb[0].mxu0
        %v837 = vadd.f32 0.0, %v836
        %v838 = vpop.f32.mrb[0].mxu0
        %v839 = vadd.f32 0.0, %v838
        %v840 = vpop.f32.mrb[0].mxu0
        %v841 = vadd.f32 0.0, %v840
        %v842 = vpop.f32.mrb[0].mxu0
        %v843 = vadd.f32 0.0, %v842
        %844 = vdwg.mxu0
        %v845 = vadd.f32 %v315, %v774
        %v846 = vadd.f32 %v316, %v776
        %v847 = vadd.f32 %v317, %v827
        %v848 = vadd.f32 %v318, %v829
        %v849 = vadd.f32 %v319, %v778
        %v850 = vadd.f32 %v320, %v780
        %v851 = vadd.f32 %v321, %v831
        %v852 = vadd.f32 %v322, %v833
        %v853 = vadd.f32 %v323, %v784
        %v854 = vadd.f32 %v324, %v786
        %v855 = vadd.f32 %v325, %v837
        %v856 = vadd.f32 %v326, %v839
        %v857 = vadd.f32 %v327, %v788
        %v858 = vadd.f32 %v328, %v790
        %v859 = vadd.f32 %v329, %v841
        %v860 = vadd.f32 %v330, %v843
        %861 = vst [vmem:[#allocation2] sm:$0xff] %v845
        %862 = vst [vmem:[#allocation2 + $0x8] sm:$0xff] %v846
        %863 = vst [vmem:[#allocation2 + $0x10] sm:$0xff] %v847
        %864 = vst [vmem:[#allocation2 + $0x18] sm:$0xff] %v848
        %865 = vst [vmem:[#allocation2 + $0x20] sm:$0xff] %v849
        %866 = vst [vmem:[#allocation2 + $0x28] sm:$0xff] %v850
        %867 = vst [vmem:[#allocation2 + $0x30] sm:$0xff] %v851
        %868 = vst [vmem:[#allocation2 + $0x38] sm:$0xff] %v852
        %869 = vst [vmem:[#allocation2 + $0x40] sm:$0xff] %v853
        %870 = vst [vmem:[#allocation2 + $0x48] sm:$0xff] %v854
        %871 = vst [vmem:[#allocation2 + $0x50] sm:$0xff] %v855
        %872 = vst [vmem:[#allocation2 + $0x58] sm:$0xff] %v856
        %873 = vst [vmem:[#allocation2 + $0x60] sm:$0xff] %v857
        %874 = vst [vmem:[#allocation2 + $0x68] sm:$0xff] %v858
        %875 = vst [vmem:[#allocation2 + $0x70] sm:$0xff] %v859
        %876 = vst [vmem:[#allocation2 + $0x78] sm:$0xff] %v860
        // Predicated region
        $region45: #{forward.7} parent=31 // pred_check
          %p877 = pneg %p295
        $region46: #{forward.7} parent=31 // pred_check_branch
          %879 = sbr.rel (%p877) target = $region48
        $region47: #{forward.7} parent=31 // pred_region
          %v880 = vld [vmem:[#allocation2] sm:$0xff]
          %v881 = vld [vmem:[#allocation2 + $0x8] sm:$0xff]
          %v882 = vld [vmem:[#allocation2 + $0x10] sm:$0xff]
          %v883 = vld [vmem:[#allocation2 + $0x18] sm:$0xff]
          %v884 = vld [vmem:[#allocation2 + $0x20] sm:$0xff]
          %v885 = vld [vmem:[#allocation2 + $0x28] sm:$0xff]
          %v886 = vld [vmem:[#allocation2 + $0x30] sm:$0xff]
          %v887 = vld [vmem:[#allocation2 + $0x38] sm:$0xff]
          %v888 = vld [vmem:[#allocation2 + $0x40] sm:$0xff]
          %v889 = vld [vmem:[#allocation2 + $0x48] sm:$0xff]
          %v890 = vld [vmem:[#allocation2 + $0x50] sm:$0xff]
          %v891 = vld [vmem:[#allocation2 + $0x58] sm:$0xff]
          %v892 = vld [vmem:[#allocation2 + $0x60] sm:$0xff]
          %v893 = vld [vmem:[#allocation2 + $0x68] sm:$0xff]
          %v894 = vld [vmem:[#allocation2 + $0x70] sm:$0xff]
          %v895 = vld [vmem:[#allocation2 + $0x78] sm:$0xff]
          %v896 = vld [vmem:[%s241] sm:$0xf]
          %v898 = vlaneseq
          %v899 = vshrl.u32 %v898, 7
          %v900 = vsub.s32 0, %v899
          %v901 = vrot.slane %v896, %v900
          %v902 = vlaneseq
          %v903 = vshrl.u32 %v902, 7
          %v904 = vsub.s32 1, %v903
          %v905 = vrot.slane %v896, %v904
          %v906 = vlaneseq
          %v907 = vshrl.u32 %v906, 7
          %v908 = vsub.s32 2, %v907
          %v909 = vrot.slane %v896, %v908
          %v910 = vlaneseq
          %v911 = vshrl.u32 %v910, 7
          %v912 = vsub.s32 3, %v911
          %v913 = vrot.slane %v896, %v912
          %v918 = vadd.f32 %v880, %v901
          %v919 = vadd.f32 %v881, %v905
          %v920 = vadd.f32 %v882, %v909
          %v921 = vadd.f32 %v883, %v913
          %v922 = vadd.f32 %v884, %v901
          %v923 = vadd.f32 %v885, %v905
          %v924 = vadd.f32 %v886, %v909
          %v925 = vadd.f32 %v887, %v913
          %v926 = vadd.f32 %v888, %v901
          %v927 = vadd.f32 %v889, %v905
          %v928 = vadd.f32 %v890, %v909
          %v929 = vadd.f32 %v891, %v913
          %v930 = vadd.f32 %v892, %v901
          %v931 = vadd.f32 %v893, %v905
          %v932 = vadd.f32 %v894, %v909
          %v933 = vadd.f32 %v895, %v913
          %v934 = vadd.f32 %v918, %v922
          %v935 = vrot.slane %v934, 4
          %v936 = vadd.f32 %v934, %v935
          %v937 = vrot.slane %v936, 2
          %v938 = vadd.f32 %v936, %v937
          %v939 = vrot.slane %v938, 1
          %v940 = vadd.f32 %v938, %v939
          %v941 = vadd.f32 %v919, %v923
          %v942 = vrot.slane %v941, 4
          %v943 = vadd.f32 %v941, %v942
          %v944 = vrot.slane %v943, 2
          %v945 = vadd.f32 %v943, %v944
          %v946 = vrot.slane %v945, 1
          %v947 = vadd.f32 %v945, %v946
          %v948 = vadd.f32 %v920, %v924
          %v949 = vrot.slane %v948, 4
          %v950 = vadd.f32 %v948, %v949
          %v951 = vrot.slane %v950, 2
          %v952 = vadd.f32 %v950, %v951
          %v953 = vrot.slane %v952, 1
          %v954 = vadd.f32 %v952, %v953
          %v955 = vadd.f32 %v921, %v925
          %v956 = vrot.slane %v955, 4
          %v957 = vadd.f32 %v955, %v956
          %v958 = vrot.slane %v957, 2
          %v959 = vadd.f32 %v957, %v958
          %v960 = vrot.slane %v959, 1
          %v961 = vadd.f32 %v959, %v960
          %v962 = vrcp.pop 16.0
          %v963 = vmul.f32 %v940, %v962
          %v964 = vmul.f32 %v947, %v962
          %v965 = vmul.f32 %v954, %v962
          %v966 = vmul.f32 %v961, %v962
          %v967 = vsub.f32 %v918, %v963
          %v968 = vsub.f32 %v919, %v964
          %v969 = vsub.f32 %v920, %v965
          %v970 = vsub.f32 %v921, %v966
          %v971 = vsub.f32 %v922, %v963
          %v972 = vsub.f32 %v923, %v964
          %v973 = vsub.f32 %v924, %v965
          %v974 = vsub.f32 %v925, %v966
          %v975 = vmul.f32 %v967, %v967
          %v976 = vmul.f32 %v968, %v968
          %v977 = vmul.f32 %v969, %v969
          %v978 = vmul.f32 %v970, %v970
          %v979 = vmul.f32 %v971, %v971
          %v980 = vmul.f32 %v972, %v972
          %v981 = vmul.f32 %v973, %v973
          %v982 = vmul.f32 %v974, %v974
          %v983 = vadd.f32 %v975, %v979
          %v984 = vrot.slane %v983, 4
          %v985 = vadd.f32 %v983, %v984
          %v986 = vrot.slane %v985, 2
          %v987 = vadd.f32 %v985, %v986
          %v988 = vrot.slane %v987, 1
          %v989 = vadd.f32 %v987, %v988
          %v990 = vadd.f32 %v976, %v980
          %v991 = vrot.slane %v990, 4
          %v992 = vadd.f32 %v990, %v991
          %v993 = vrot.slane %v992, 2
          %v994 = vadd.f32 %v992, %v993
          %v995 = vrot.slane %v994, 1
          %v996 = vadd.f32 %v994, %v995
          %v997 = vadd.f32 %v977, %v981
          %v998 = vrot.slane %v997, 4
          %v999 = vadd.f32 %v997, %v998
          %v1000 = vrot.slane %v999, 2
          %v1001 = vadd.f32 %v999, %v1000
          %v1002 = vrot.slane %v1001, 1
          %v1003 = vadd.f32 %v1001, %v1002
          %v1004 = vadd.f32 %v978, %v982
          %v1005 = vrot.slane %v1004, 4
          %v1006 = vadd.f32 %v1004, %v1005
          %v1007 = vrot.slane %v1006, 2
          %v1008 = vadd.f32 %v1006, %v1007
          %v1009 = vrot.slane %v1008, 1
          %v1010 = vadd.f32 %v1008, %v1009
          %v1011 = vmul.f32 %v989, %v962
          %v1012 = vmul.f32 %v996, %v962
          %v1013 = vmul.f32 %v1003, %v962
          %v1014 = vmul.f32 %v1010, %v962
          %v1015 = vadd.f32 %v1011, 1e-05
          %v1016 = vadd.f32 %v1012, 1e-05
          %v1017 = vadd.f32 %v1013, 1e-05
          %v1018 = vadd.f32 %v1014, 1e-05
          %v1019 = vrsqrt.pop %v1015
          %v1020 = vrsqrt.pop %v1016
          %v1021 = vrsqrt.pop %v1017
          %v1022 = vrsqrt.pop %v1018
          %v1023 = vmul.f32 %v967, %v1019
          %v1024 = vmul.f32 %v968, %v1020
          %v1025 = vmul.f32 %v969, %v1021
          %v1026 = vmul.f32 %v970, %v1022
          %v1027 = vmul.f32 %v971, %v1019
          %v1028 = vmul.f32 %v972, %v1020
          %v1029 = vmul.f32 %v973, %v1021
          %v1030 = vmul.f32 %v974, %v1022
          %vm1031 = vcmp.ge.f32.partialorder %v1023, 0.0
          %vm1032 = vcmp.ge.f32.partialorder %v1024, 0.0
          %vm1033 = vcmp.ge.f32.partialorder %v1025, 0.0
          %vm1034 = vcmp.ge.f32.partialorder %v1026, 0.0
          %vm1035 = vcmp.ge.f32.partialorder %v1027, 0.0
          %vm1036 = vcmp.ge.f32.partialorder %v1028, 0.0
          %vm1037 = vcmp.ge.f32.partialorder %v1029, 0.0
          %vm1038 = vcmp.ge.f32.partialorder %v1030, 0.0
          %v1039 = vmul.f32 %v1023, 0.2
          %v1040 = vmul.f32 %v1024, 0.2
          %v1041 = vmul.f32 %v1025, 0.2
          %v1042 = vmul.f32 %v1026, 0.2
          %v1043 = vmul.f32 %v1027, 0.2
          %v1044 = vmul.f32 %v1028, 0.2
          %v1045 = vmul.f32 %v1029, 0.2
          %v1046 = vmul.f32 %v1030, 0.2
          %v1047 = vsel %vm1031, %v1023, %v1039
          %v1048 = vsel %vm1032, %v1024, %v1040
          %v1049 = vsel %vm1033, %v1025, %v1041
          %v1050 = vsel %vm1034, %v1026, %v1042
          %v1051 = vsel %vm1035, %v1027, %v1043
          %v1052 = vsel %vm1036, %v1028, %v1044
          %v1053 = vsel %vm1037, %v1029, %v1045
          %v1054 = vsel %vm1038, %v1030, %v1046
          %1055 = vst [vmem:[%s277] sm:$0xff] %v1047
          %1056 = vst [vmem:[%s277 + $0x8] sm:$0xff] %v1048
          %1057 = vst [vmem:[%s277 + $0x10] sm:$0xff] %v1049
          %1058 = vst [vmem:[%s277 + $0x18] sm:$0xff] %v1050
          %1059 = vst [vmem:[%s277 + $0x20] sm:$0xff] %v1051
          %1060 = vst [vmem:[%s277 + $0x28] sm:$0xff] %v1052
          %1061 = vst [vmem:[%s277 + $0x30] sm:$0xff] %v1053
          %1062 = vst [vmem:[%s277 + $0x38] sm:$0xff] %v1054
          %v1063 = vadd.f32 %v926, %v930
          %v1064 = vrot.slane %v1063, 4
          %v1065 = vadd.f32 %v1063, %v1064
          %v1066 = vrot.slane %v1065, 2
          %v1067 = vadd.f32 %v1065, %v1066
          %v1068 = vrot.slane %v1067, 1
          %v1069 = vadd.f32 %v1067, %v1068
          %v1070 = vadd.f32 %v927, %v931
          %v1071 = vrot.slane %v1070, 4
          %v1072 = vadd.f32 %v1070, %v1071
          %v1073 = vrot.slane %v1072, 2
          %v1074 = vadd.f32 %v1072, %v1073
          %v1075 = vrot.slane %v1074, 1
          %v1076 = vadd.f32 %v1074, %v1075
          %v1077 = vadd.f32 %v928, %v932
          %v1078 = vrot.slane %v1077, 4
          %v1079 = vadd.f32 %v1077, %v1078
          %v1080 = vrot.slane %v1079, 2
          %v1081 = vadd.f32 %v1079, %v1080
          %v1082 = vrot.slane %v1081, 1
          %v1083 = vadd.f32 %v1081, %v1082
          %v1084 = vadd.f32 %v929, %v933
          %v1085 = vrot.slane %v1084, 4
          %v1086 = vadd.f32 %v1084, %v1085
          %v1087 = vrot.slane %v1086, 2
          %v1088 = vadd.f32 %v1086, %v1087
          %v1089 = vrot.slane %v1088, 1
          %v1090 = vadd.f32 %v1088, %v1089
          %v1091 = vmul.f32 %v1069, %v962
          %v1092 = vmul.f32 %v1076, %v962
          %v1093 = vmul.f32 %v1083, %v962
          %v1094 = vmul.f32 %v1090, %v962
          %v1095 = vsub.f32 %v926, %v1091
          %v1096 = vsub.f32 %v927, %v1092
          %v1097 = vsub.f32 %v928, %v1093
          %v1098 = vsub.f32 %v929, %v1094
          %v1099 = vsub.f32 %v930, %v1091
          %v1100 = vsub.f32 %v931, %v1092
          %v1101 = vsub.f32 %v932, %v1093
          %v1102 = vsub.f32 %v933, %v1094
          %v1103 = vmul.f32 %v1095, %v1095
          %v1104 = vmul.f32 %v1096, %v1096
          %v1105 = vmul.f32 %v1097, %v1097
          %v1106 = vmul.f32 %v1098, %v1098
          %v1107 = vmul.f32 %v1099, %v1099
          %v1108 = vmul.f32 %v1100, %v1100
          %v1109 = vmul.f32 %v1101, %v1101
          %v1110 = vmul.f32 %v1102, %v1102
          %v1111 = vadd.f32 %v1103, %v1107
          %v1112 = vrot.slane %v1111, 4
          %v1113 = vadd.f32 %v1111, %v1112
          %v1114 = vrot.slane %v1113, 2
          %v1115 = vadd.f32 %v1113, %v1114
          %v1116 = vrot.slane %v1115, 1
          %v1117 = vadd.f32 %v1115, %v1116
          %v1118 = vadd.f32 %v1104, %v1108
          %v1119 = vrot.slane %v1118, 4
          %v1120 = vadd.f32 %v1118, %v1119
          %v1121 = vrot.slane %v1120, 2
          %v1122 = vadd.f32 %v1120, %v1121
          %v1123 = vrot.slane %v1122, 1
          %v1124 = vadd.f32 %v1122, %v1123
          %v1125 = vadd.f32 %v1105, %v1109
          %v1126 = vrot.slane %v1125, 4
          %v1127 = vadd.f32 %v1125, %v1126
          %v1128 = vrot.slane %v1127, 2
          %v1129 = vadd.f32 %v1127, %v1128
          %v1130 = vrot.slane %v1129, 1
          %v1131 = vadd.f32 %v1129, %v1130
          %v1132 = vadd.f32 %v1106, %v1110
          %v1133 = vrot.slane %v1132, 4
          %v1134 = vadd.f32 %v1132, %v1133
          %v1135 = vrot.slane %v1134, 2
          %v1136 = vadd.f32 %v1134, %v1135
          %v1137 = vrot.slane %v1136, 1
          %v1138 = vadd.f32 %v1136, %v1137
          %v1139 = vmul.f32 %v1117, %v962
          %v1140 = vmul.f32 %v1124, %v962
          %v1141 = vmul.f32 %v1131, %v962
          %v1142 = vmul.f32 %v1138, %v962
          %v1143 = vadd.f32 %v1139, 1e-05
          %v1144 = vadd.f32 %v1140, 1e-05
          %v1145 = vadd.f32 %v1141, 1e-05
          %v1146 = vadd.f32 %v1142, 1e-05
          %v1147 = vrsqrt.pop %v1143
          %v1148 = vrsqrt.pop %v1144
          %v1149 = vrsqrt.pop %v1145
          %v1150 = vrsqrt.pop %v1146
          %v1151 = vmul.f32 %v1095, %v1147
          %v1152 = vmul.f32 %v1096, %v1148
          %v1153 = vmul.f32 %v1097, %v1149
          %v1154 = vmul.f32 %v1098, %v1150
          %v1155 = vmul.f32 %v1099, %v1147
          %v1156 = vmul.f32 %v1100, %v1148
          %v1157 = vmul.f32 %v1101, %v1149
          %v1158 = vmul.f32 %v1102, %v1150
          %vm1159 = vcmp.ge.f32.partialorder %v1151, 0.0
          %vm1160 = vcmp.ge.f32.partialorder %v1152, 0.0
          %vm1161 = vcmp.ge.f32.partialorder %v1153, 0.0
          %vm1162 = vcmp.ge.f32.partialorder %v1154, 0.0
          %vm1163 = vcmp.ge.f32.partialorder %v1155, 0.0
          %vm1164 = vcmp.ge.f32.partialorder %v1156, 0.0
          %vm1165 = vcmp.ge.f32.partialorder %v1157, 0.0
          %vm1166 = vcmp.ge.f32.partialorder %v1158, 0.0
          %v1167 = vmul.f32 %v1151, 0.2
          %v1168 = vmul.f32 %v1152, 0.2
          %v1169 = vmul.f32 %v1153, 0.2
          %v1170 = vmul.f32 %v1154, 0.2
          %v1171 = vmul.f32 %v1155, 0.2
          %v1172 = vmul.f32 %v1156, 0.2
          %v1173 = vmul.f32 %v1157, 0.2
          %v1174 = vmul.f32 %v1158, 0.2
          %v1175 = vsel %vm1159, %v1151, %v1167
          %v1176 = vsel %vm1160, %v1152, %v1168
          %v1177 = vsel %vm1161, %v1153, %v1169
          %v1178 = vsel %vm1162, %v1154, %v1170
          %v1179 = vsel %vm1163, %v1155, %v1171
          %v1180 = vsel %vm1164, %v1156, %v1172
          %v1181 = vsel %vm1165, %v1157, %v1173
          %v1182 = vsel %vm1166, %v1158, %v1174
          %1183 = vst [vmem:[%s277 + $0x40] sm:$0xff] %v1175
          %1184 = vst [vmem:[%s277 + $0x48] sm:$0xff] %v1176
          %1185 = vst [vmem:[%s277 + $0x50] sm:$0xff] %v1177
          %1186 = vst [vmem:[%s277 + $0x58] sm:$0xff] %v1178
          %1187 = vst [vmem:[%s277 + $0x60] sm:$0xff] %v1179
          %1188 = vst [vmem:[%s277 + $0x68] sm:$0xff] %v1180
          %1189 = vst [vmem:[%s277 + $0x70] sm:$0xff] %v1181
          %1190 = vst [vmem:[%s277 + $0x78] sm:$0xff] %v1182
        $region48: #{forward.7} parent=31 // pred_fallthru
          _
        %s1191 = sand.u32 %s131, 1
        %s1192 = sand.u32 %s131, 1
        %s1193 = smul.addr %s1192, 128
        %s1194 = scalar_lea.vmem [#allocation7], %s1193
        // Predicated region
        $region49: #{forward.7} parent=31 // pred_check
          %p1195 = pneg %p141
        $region50: #{forward.7} parent=31 // pred_check_branch
          %1197 = sbr.rel (%p1195) target = $region52
        $region51: #{forward.7} parent=31 // pred_region
          %s1198 = smul.u32 4, %s25
          %s1199 = smul.u32 4, %s26
          %s1200 = smul.addr %s1198, 8
          %s1201 = sadd.s32 %s1199, %s1200
          %s1202 = smul.addr %s1201, 8
          %s1203 = scalar_lea.vmem %s3, %s1202
          // Predicated region
          $region53: #{forward.7} parent=51 // pred_check
            _
          $region54: #{forward.7} parent=51 // pred_check_branch
            %1205 = sbr.rel (0) target = $region56
          $region55: #{forward.7} parent=51 // pred_region
            // Predicated region
            $region57: #{forward.7} parent=55 // pred_check
              _
            $region58: #{forward.7} parent=55 // pred_check_branch
              %1207 = sbr.rel (0) target = $region60
            $region59: #{forward.7} parent=55 // pred_region
              loop: start=0, step=1, limit=1
              $region61: #{forward.7} parent=59 // loop_pre_header
                _
              $region62: #{forward.7} parent=59 // loop_header
                %s1209 = sphi 0, %s1213
                %p1210 = scmp.ge.s32.totalorder %s1209, 1
                %s1214 = sphi %s1194, %s1194
                %s1215 = sphi %s1203, %s1203
              $region63: #{forward.7} parent=59 // loop_header_branch
                %1212 = sbr.rel (%p1210) target = $region67
              $region64: #{forward.7} parent=59 // loop_body
                %v1216 = vld [vmem:[%s1214] sm:$0xff]
                %1217 = vst [vmem:[%s1215] sm:$0xff] %v1216
                %v1218 = vld [vmem:[%s1214 + $0x8] sm:$0xff]
                %1219 = vst [vmem:[%s1215 + $0x8] sm:$0xff] %v1218
                %v1220 = vld [vmem:[%s1214 + $0x10] sm:$0xff]
                %1221 = vst [vmem:[%s1215 + $0x10] sm:$0xff] %v1220
                %v1222 = vld [vmem:[%s1214 + $0x18] sm:$0xff]
                %1223 = vst [vmem:[%s1215 + $0x18] sm:$0xff] %v1222
                %v1224 = vld [vmem:[%s1214 + $0x20] sm:$0xff]
                %1225 = vst [vmem:[%s1215 + $0x40] sm:$0xff] %v1224
                %v1226 = vld [vmem:[%s1214 + $0x28] sm:$0xff]
                %1227 = vst [vmem:[%s1215 + $0x48] sm:$0xff] %v1226
                %v1228 = vld [vmem:[%s1214 + $0x30] sm:$0xff]
                %1229 = vst [vmem:[%s1215 + $0x50] sm:$0xff] %v1228
                %v1230 = vld [vmem:[%s1214 + $0x38] sm:$0xff]
                %1231 = vst [vmem:[%s1215 + $0x58] sm:$0xff] %v1230
                %v1232 = vld [vmem:[%s1214 + $0x40] sm:$0xff]
                %1233 = vst [vmem:[%s1215 + $0x80] sm:$0xff] %v1232
                %v1234 = vld [vmem:[%s1214 + $0x48] sm:$0xff]
                %1235 = vst [vmem:[%s1215 + $0x88] sm:$0xff] %v1234
                %v1236 = vld [vmem:[%s1214 + $0x50] sm:$0xff]
                %1237 = vst [vmem:[%s1215 + $0x90] sm:$0xff] %v1236
                %v1238 = vld [vmem:[%s1214 + $0x58] sm:$0xff]
                %1239 = vst [vmem:[%s1215 + $0x98] sm:$0xff] %v1238
                %v1240 = vld [vmem:[%s1214 + $0x60] sm:$0xff]
                %1241 = vst [vmem:[%s1215 + $0xc0] sm:$0xff] %v1240
                %v1242 = vld [vmem:[%s1214 + $0x68] sm:$0xff]
                %1243 = vst [vmem:[%s1215 + $0xc8] sm:$0xff] %v1242
                %v1244 = vld [vmem:[%s1214 + $0x70] sm:$0xff]
                %1245 = vst [vmem:[%s1215 + $0xd0] sm:$0xff] %v1244
                %v1246 = vld [vmem:[%s1214 + $0x78] sm:$0xff]
                %1247 = vst [vmem:[%s1215 + $0xd8] sm:$0xff] %v1246
              $region65: #{forward.7} parent=59 // loop_footer
                %s1213 = sadd.s32 1, %s1209
              $region66: #{forward.7} parent=59 // loop_footer_branch
                %1208 = sbr.rel target = $region62
              $region67: #{forward.7} parent=59 // loop_exit
                _
            $region60: #{forward.7} parent=55 // pred_fallthru
              _
            // Predicated region
            $region68: #{forward.7} parent=55 // pred_check
              _
            $region69: #{forward.7} parent=55 // pred_check_branch
              %1249 = sbr.rel target = $region71
            $region70: #{forward.7} parent=55 // pred_region
              _
            $region71: #{forward.7} parent=55 // pred_fallthru
              _
          $region56: #{forward.7} parent=51 // pred_fallthru
            _
          %1250 = vnop
        $region52: #{forward.7} parent=31 // pred_fallthru
          _
      $region32: #{forward.7} parent=5 // pred_fallthru
        _
      %p1251 = scmp.le.s32.totalorder 2, %s15
      // Predicated region
      $region72: #{forward.7} parent=5 // pred_check
        %p1252 = pneg %p1251
      $region73: #{forward.7} parent=5 // pred_check_branch
        %1254 = sbr.rel (%p1252) target = $region75
      $region74: #{forward.7} parent=5 // pred_region
        %s1255 = ssub.s32 %s15, 2
        // Predicated region
        $region76: #{forward.7} parent=74 // pred_check
          %p1256 = pneg %p147
        $region77: #{forward.7} parent=74 // pred_check_branch
          %1258 = sbr.rel (%p1256) target = $region79
        $region78: #{forward.7} parent=74 // pred_region
          %s1259 = sand.u32 %s132, 1
          %s1260 = sand.u32 %s132, 1
          %s1261 = smul.addr %s1260, 128
          %s1262 = scalar_lea.vmem [#allocation7], %s1261
        $region79: #{forward.7} parent=74 // pred_fallthru
          _
      $region75: #{forward.7} parent=5 // pred_fallthru
        _
    $region6: #{forward.7} parent=1 // loop_footer
      %s19 = sadd.s32 1, %s15
    $region7: #{forward.7} parent=1 // loop_footer_branch
      %14 = sbr.rel target = $region3
    $region8: #{forward.7} parent=1 // loop_exit
      _
    %1263 = vsyncpa [#allocation4], 1
    %s1264 = scalar_lea.sflag [#allocation4], 1
    %1265 = vsyncpa %s1264, 1
    %1266 = vsyncpa [#allocation6], 1
    %s1267 = scalar_lea.sflag [#allocation6], 1
    %1268 = vsyncpa %s1267, 1

// kernel: forward.9
$region0: #{forward.9}
  #allocation0 [shape = 'u32[]', space=smem, size = 0x4, offset = 0x4, fixed_abs, tag = 'smem constant byte address 0x4 - core index']
  #allocation1 [shape = 'u32[144,128]{1,0:T(1,128)}', space=vmem, size = 0x12000, scoped, tag = 'internal scratch']
  %s0 = inlined_call_operand.vmem [shape: f32[2,4,1024], index: 0, kind: input, shape index: {}]
  %s1 = inlined_call_operand.vmem [shape: f32[1024,8], index: 1, kind: input, shape index: {}]
  %s2 = inlined_call_operand.vmem [shape: f32[1,8], index: 2, kind: input, shape index: {}]
  %s3 = inlined_call_operand.hbm [shape: f32[2,8], index: 3, kind: output, shape index: {}]
  %s4 = sld [smem:[#allocation0]]
  $region22: #{forward.9} parent=0
    _
  %s6 = ssub.s32 1, %s4
  %s7 = scalar_select 0, %s6, %s4
  $region1: #{forward.9} parent=0
    #allocation2 [shape = 'u8[1024]{0}', space=vmem, size = 0x400, scoped, tag = 'output window, operand 0, single buffered']
    #allocation3 [shape = 's32[1]{0}', space=sflag, size = 0x4, scoped, tag = 'scoped memory for forward.9']
    %8 = vsyncpa [#allocation3], 0
    // Predicated region
    $region2: #{forward.9} parent=1 // pred_check
      _
    $region3: #{forward.9} parent=1 // pred_check_branch
      %10 = sbr.rel (0) target = $region5
    $region4: #{forward.9} parent=1 // pred_region
      _
    $region5: #{forward.9} parent=1 // pred_fallthru
      _
    // Predicated region
    $region6: #{forward.9} parent=1 // pred_check
      _
    $region7: #{forward.9} parent=1 // pred_check_branch
      %12 = sbr.rel (0) target = $region9
    $region8: #{forward.9} parent=1 // pred_region
      _
    $region9: #{forward.9} parent=1 // pred_fallthru
      _
    // Predicated region
    $region10: #{forward.9} parent=1 // pred_check
      _
    $region11: #{forward.9} parent=1 // pred_check_branch
      %14 = sbr.rel (0) target = $region13
    $region12: #{forward.9} parent=1 // pred_region
      _
    $region13: #{forward.9} parent=1 // pred_fallthru
      _
    %v15 = vld [vmem:[%s0] sm:$0xff]
    %v16 = vld [vmem:[%s0 + $0x8] sm:$0xff]
    %v17 = vld [vmem:[%s0 + $0x10] sm:$0xff]
    %v18 = vld [vmem:[%s0 + $0x18] sm:$0xff]
    %v19 = vld [vmem:[%s0 + $0x20] sm:$0xff]
    %v20 = vld [vmem:[%s0 + $0x28] sm:$0xff]
    %v21 = vld [vmem:[%s0 + $0x30] sm:$0xff]
    %v22 = vld [vmem:[%s0 + $0x38] sm:$0xff]
    %v31 = vcombine.high %v15, %v15
    %v32 = vcombine.high %v16, %v16
    %v33 = vcombine.high %v17, %v17
    %v34 = vcombine.high %v18, %v18
    %v35 = vcombine.high %v19, %v19
    %v36 = vcombine.high %v20, %v20
    %v37 = vcombine.high %v21, %v21
    %v38 = vcombine.high %v22, %v22
    %vm47 = vcmask 1043456
    %v48 = vsel %vm47, %v15, 0.0
    %v49 = vrot.slane %v48, 4
    %v50 = vadd.f32 %v48, %v49
    %v51 = vrot.slane %v50, 2
    %v52 = vadd.f32 %v50, %v51
    %v53 = vrot.slane %v52, 1
    %v54 = vadd.f32 %v52, %v53
    %v55 = vsel %vm47, %v31, 0.0
    %v56 = vrot.slane %v55, 4
    %v57 = vadd.f32 %v55, %v56
    %v58 = vrot.slane %v57, 2
    %v59 = vadd.f32 %v57, %v58
    %v60 = vrot.slane %v59, 1
    %v61 = vadd.f32 %v59, %v60
    %v62 = vsel %vm47, %v16, 0.0
    %v63 = vrot.slane %v62, 4
    %v64 = vadd.f32 %v62, %v63
    %v65 = vrot.slane %v64, 2
    %v66 = vadd.f32 %v64, %v65
    %v67 = vrot.slane %v66, 1
    %v68 = vadd.f32 %v66, %v67
    %v69 = vsel %vm47, %v32, 0.0
    %v70 = vrot.slane %v69, 4
    %v71 = vadd.f32 %v69, %v70
    %v72 = vrot.slane %v71, 2
    %v73 = vadd.f32 %v71, %v72
    %v74 = vrot.slane %v73, 1
    %v75 = vadd.f32 %v73, %v74
    %v76 = vsel %vm47, %v17, 0.0
    %v77 = vrot.slane %v76, 4
    %v78 = vadd.f32 %v76, %v77
    %v79 = vrot.slane %v78, 2
    %v80 = vadd.f32 %v78, %v79
    %v81 = vrot.slane %v80, 1
    %v82 = vadd.f32 %v80, %v81
    %v83 = vsel %vm47, %v33, 0.0
    %v84 = vrot.slane %v83, 4
    %v85 = vadd.f32 %v83, %v84
    %v86 = vrot.slane %v85, 2
    %v87 = vadd.f32 %v85, %v86
    %v88 = vrot.slane %v87, 1
    %v89 = vadd.f32 %v87, %v88
    %v90 = vsel %vm47, %v18, 0.0
    %v91 = vrot.slane %v90, 4
    %v92 = vadd.f32 %v90, %v91
    %v93 = vrot.slane %v92, 2
    %v94 = vadd.f32 %v92, %v93
    %v95 = vrot.slane %v94, 1
    %v96 = vadd.f32 %v94, %v95
    %v97 = vsel %vm47, %v34, 0.0
    %v98 = vrot.slane %v97, 4
    %v99 = vadd.f32 %v97, %v98
    %v100 = vrot.slane %v99, 2
    %v101 = vadd.f32 %v99, %v100
    %v102 = vrot.slane %v101, 1
    %v103 = vadd.f32 %v101, %v102
    %v104 = vsel %vm47, %v19, 0.0
    %v105 = vrot.slane %v104, 4
    %v106 = vadd.f32 %v104, %v105
    %v107 = vrot.slane %v106, 2
    %v108 = vadd.f32 %v106, %v107
    %v109 = vrot.slane %v108, 1
    %v110 = vadd.f32 %v108, %v109
    %v111 = vsel %vm47, %v35, 0.0
    %v112 = vrot.slane %v111, 4
    %v113 = vadd.f32 %v111, %v112
    %v114 = vrot.slane %v113, 2
    %v115 = vadd.f32 %v113, %v114
    %v116 = vrot.slane %v115, 1
    %v117 = vadd.f32 %v115, %v116
    %v118 = vsel %vm47, %v20, 0.0
    %v119 = vrot.slane %v118, 4
    %v120 = vadd.f32 %v118, %v119
    %v121 = vrot.slane %v120, 2
    %v122 = vadd.f32 %v120, %v121
    %v123 = vrot.slane %v122, 1
    %v124 = vadd.f32 %v122, %v123
    %v125 = vsel %vm47, %v36, 0.0
    %v126 = vrot.slane %v125, 4
    %v127 = vadd.f32 %v125, %v126
    %v128 = vrot.slane %v127, 2
    %v129 = vadd.f32 %v127, %v128
    %v130 = vrot.slane %v129, 1
    %v131 = vadd.f32 %v129, %v130
    %v132 = vsel %vm47, %v21, 0.0
    %v133 = vrot.slane %v132, 4
    %v134 = vadd.f32 %v132, %v133
    %v135 = vrot.slane %v134, 2
    %v136 = vadd.f32 %v134, %v135
    %v137 = vrot.slane %v136, 1
    %v138 = vadd.f32 %v136, %v137
    %v139 = vsel %vm47, %v37, 0.0
    %v140 = vrot.slane %v139, 4
    %v141 = vadd.f32 %v139, %v140
    %v142 = vrot.slane %v141, 2
    %v143 = vadd.f32 %v141, %v142
    %v144 = vrot.slane %v143, 1
    %v145 = vadd.f32 %v143, %v144
    %v146 = vsel %vm47, %v22, 0.0
    %v147 = vrot.slane %v146, 4
    %v148 = vadd.f32 %v146, %v147
    %v149 = vrot.slane %v148, 2
    %v150 = vadd.f32 %v148, %v149
    %v151 = vrot.slane %v150, 1
    %v152 = vadd.f32 %v150, %v151
    %v153 = vsel %vm47, %v38, 0.0
    %v154 = vrot.slane %v153, 4
    %v155 = vadd.f32 %v153, %v154
    %v156 = vrot.slane %v155, 2
    %v157 = vadd.f32 %v155, %v156
    %v158 = vrot.slane %v157, 1
    %v159 = vadd.f32 %v157, %v158
    %v160 = vrcp.pop 4.0
    %v161 = vmul.f32 %v54, %v160
    %v162 = vmul.f32 %v61, %v160
    %v163 = vmul.f32 %v68, %v160
    %v164 = vmul.f32 %v75, %v160
    %v165 = vmul.f32 %v82, %v160
    %v166 = vmul.f32 %v89, %v160
    %v167 = vmul.f32 %v96, %v160
    %v168 = vmul.f32 %v103, %v160
    %v169 = vmul.f32 %v110, %v160
    %v170 = vmul.f32 %v117, %v160
    %v171 = vmul.f32 %v124, %v160
    %v172 = vmul.f32 %v131, %v160
    %v173 = vmul.f32 %v138, %v160
    %v174 = vmul.f32 %v145, %v160
    %v175 = vmul.f32 %v152, %v160
    %v176 = vmul.f32 %v159, %v160
    %v177 = vld [vmem:[%s1] sm:$0xff]
    %v178 = vld [vmem:[%s1 + $0x8] sm:$0xff]
    %v179 = vld [vmem:[%s1 + $0x10] sm:$0xff]
    %v180 = vld [vmem:[%s1 + $0x18] sm:$0xff]
    %v181 = vld [vmem:[%s1 + $0x20] sm:$0xff]
    %v182 = vld [vmem:[%s1 + $0x28] sm:$0xff]
    %v183 = vld [vmem:[%s1 + $0x30] sm:$0xff]
    %v184 = vld [vmem:[%s1 + $0x38] sm:$0xff]
    %v185 = vld [vmem:[%s1 + $0x40] sm:$0xff]
    %v186 = vld [vmem:[%s1 + $0x48] sm:$0xff]
    %v187 = vld [vmem:[%s1 + $0x50] sm:$0xff]
    %v188 = vld [vmem:[%s1 + $0x58] sm:$0xff]
    %v189 = vld [vmem:[%s1 + $0x60] sm:$0xff]
    %v190 = vld [vmem:[%s1 + $0x68] sm:$0xff]
    %v191 = vld [vmem:[%s1 + $0x70] sm:$0xff]
    %v192 = vld [vmem:[%s1 + $0x78] sm:$0xff]
    %v193 = vld [vmem:[%s1 + $0x80] sm:$0xff]
    %v194 = vld [vmem:[%s1 + $0x88] sm:$0xff]
    %v195 = vld [vmem:[%s1 + $0x90] sm:$0xff]
    %v196 = vld [vmem:[%s1 + $0x98] sm:$0xff]
    %v197 = vld [vmem:[%s1 + $0xa0] sm:$0xff]
    %v198 = vld [vmem:[%s1 + $0xa8] sm:$0xff]
    %v199 = vld [vmem:[%s1 + $0xb0] sm:$0xff]
    %v200 = vld [vmem:[%s1 + $0xb8] sm:$0xff]
    %v201 = vld [vmem:[%s1 + $0xc0] sm:$0xff]
    %v202 = vld [vmem:[%s1 + $0xc8] sm:$0xff]
    %v203 = vld [vmem:[%s1 + $0xd0] sm:$0xff]
    %v204 = vld [vmem:[%s1 + $0xd8] sm:$0xff]
    %v205 = vld [vmem:[%s1 + $0xe0] sm:$0xff]
    %v206 = vld [vmem:[%s1 + $0xe8] sm:$0xff]
    %v207 = vld [vmem:[%s1 + $0xf0] sm:$0xff]
    %v208 = vld [vmem:[%s1 + $0xf8] sm:$0xff]
    %v209 = vld [vmem:[%s1 + $0x100] sm:$0xff]
    %v210 = vld [vmem:[%s1 + $0x108] sm:$0xff]
    %v211 = vld [vmem:[%s1 + $0x110] sm:$0xff]
    %v212 = vld [vmem:[%s1 + $0x118] sm:$0xff]
    %v213 = vld [vmem:[%s1 + $0x120] sm:$0xff]
    %v214 = vld [vmem:[%s1 + $0x128] sm:$0xff]
    %v215 = vld [vmem:[%s1 + $0x130] sm:$0xff]
    %v216 = vld [vmem:[%s1 + $0x138] sm:$0xff]
    %v217 = vld [vmem:[%s1 + $0x140] sm:$0xff]
    %v218 = vld [vmem:[%s1 + $0x148] sm:$0xff]
    %v219 = vld [vmem:[%s1 + $0x150] sm:$0xff]
    %v220 = vld [vmem:[%s1 + $0x158] sm:$0xff]
    %v221 = vld [vmem:[%s1 + $0x160] sm:$0xff]
    %v222 = vld [vmem:[%s1 + $0x168] sm:$0xff]
    %v223 = vld [vmem:[%s1 + $0x170] sm:$0xff]
    %v224 = vld [vmem:[%s1 + $0x178] sm:$0xff]
    %v225 = vld [vmem:[%s1 + $0x180] sm:$0xff]
    %v226 = vld [vmem:[%s1 + $0x188] sm:$0xff]
    %v227 = vld [vmem:[%s1 + $0x190] sm:$0xff]
    %v228 = vld [vmem:[%s1 + $0x198] sm:$0xff]
    %v229 = vld [vmem:[%s1 + $0x1a0] sm:$0xff]
    %v230 = vld [vmem:[%s1 + $0x1a8] sm:$0xff]
    %v231 = vld [vmem:[%s1 + $0x1b0] sm:$0xff]
    %v232 = vld [vmem:[%s1 + $0x1b8] sm:$0xff]
    %v233 = vld [vmem:[%s1 + $0x1c0] sm:$0xff]
    %v234 = vld [vmem:[%s1 + $0x1c8] sm:$0xff]
    %v235 = vld [vmem:[%s1 + $0x1d0] sm:$0xff]
    %v236 = vld [vmem:[%s1 + $0x1d8] sm:$0xff]
    %v237 = vld [vmem:[%s1 + $0x1e0] sm:$0xff]
    %v238 = vld [vmem:[%s1 + $0x1e8] sm:$0xff]
    %v239 = vld [vmem:[%s1 + $0x1f0] sm:$0xff]
    %v240 = vld [vmem:[%s1 + $0x1f8] sm:$0xff]
    %v241 = vld [vmem:[%s1 + $0x200] sm:$0xff]
    %v242 = vld [vmem:[%s1 + $0x208] sm:$0xff]
    %v243 = vld [vmem:[%s1 + $0x210] sm:$0xff]
    %v244 = vld [vmem:[%s1 + $0x218] sm:$0xff]
    %v245 = vld [vmem:[%s1 + $0x220] sm:$0xff]
    %v246 = vld [vmem:[%s1 + $0x228] sm:$0xff]
    %v247 = vld [vmem:[%s1 + $0x230] sm:$0xff]
    %v248 = vld [vmem:[%s1 + $0x238] sm:$0xff]
    %v249 = vld [vmem:[%s1 + $0x240] sm:$0xff]
    %v250 = vld [vmem:[%s1 + $0x248] sm:$0xff]
    %v251 = vld [vmem:[%s1 + $0x250] sm:$0xff]
    %v252 = vld [vmem:[%s1 + $0x258] sm:$0xff]
    %v253 = vld [vmem:[%s1 + $0x260] sm:$0xff]
    %v254 = vld [vmem:[%s1 + $0x268] sm:$0xff]
    %v255 = vld [vmem:[%s1 + $0x270] sm:$0xff]
    %v256 = vld [vmem:[%s1 + $0x278] sm:$0xff]
    %v257 = vld [vmem:[%s1 + $0x280] sm:$0xff]
    %v258 = vld [vmem:[%s1 + $0x288] sm:$0xff]
    %v259 = vld [vmem:[%s1 + $0x290] sm:$0xff]
    %v260 = vld [vmem:[%s1 + $0x298] sm:$0xff]
    %v261 = vld [vmem:[%s1 + $0x2a0] sm:$0xff]
    %v262 = vld [vmem:[%s1 + $0x2a8] sm:$0xff]
    %v263 = vld [vmem:[%s1 + $0x2b0] sm:$0xff]
    %v264 = vld [vmem:[%s1 + $0x2b8] sm:$0xff]
    %v265 = vld [vmem:[%s1 + $0x2c0] sm:$0xff]
    %v266 = vld [vmem:[%s1 + $0x2c8] sm:$0xff]
    %v267 = vld [vmem:[%s1 + $0x2d0] sm:$0xff]
    %v268 = vld [vmem:[%s1 + $0x2d8] sm:$0xff]
    %v269 = vld [vmem:[%s1 + $0x2e0] sm:$0xff]
    %v270 = vld [vmem:[%s1 + $0x2e8] sm:$0xff]
    %v271 = vld [vmem:[%s1 + $0x2f0] sm:$0xff]
    %v272 = vld [vmem:[%s1 + $0x2f8] sm:$0xff]
    %v273 = vld [vmem:[%s1 + $0x300] sm:$0xff]
    %v274 = vld [vmem:[%s1 + $0x308] sm:$0xff]
    %v275 = vld [vmem:[%s1 + $0x310] sm:$0xff]
    %v276 = vld [vmem:[%s1 + $0x318] sm:$0xff]
    %v277 = vld [vmem:[%s1 + $0x320] sm:$0xff]
    %v278 = vld [vmem:[%s1 + $0x328] sm:$0xff]
    %v279 = vld [vmem:[%s1 + $0x330] sm:$0xff]
    %v280 = vld [vmem:[%s1 + $0x338] sm:$0xff]
    %v281 = vld [vmem:[%s1 + $0x340] sm:$0xff]
    %v282 = vld [vmem:[%s1 + $0x348] sm:$0xff]
    %v283 = vld [vmem:[%s1 + $0x350] sm:$0xff]
    %v284 = vld [vmem:[%s1 + $0x358] sm:$0xff]
    %v285 = vld [vmem:[%s1 + $0x360] sm:$0xff]
    %v286 = vld [vmem:[%s1 + $0x368] sm:$0xff]
    %v287 = vld [vmem:[%s1 + $0x370] sm:$0xff]
    %v288 = vld [vmem:[%s1 + $0x378] sm:$0xff]
    %v289 = vld [vmem:[%s1 + $0x380] sm:$0xff]
    %v290 = vld [vmem:[%s1 + $0x388] sm:$0xff]
    %v291 = vld [vmem:[%s1 + $0x390] sm:$0xff]
    %v292 = vld [vmem:[%s1 + $0x398] sm:$0xff]
    %v293 = vld [vmem:[%s1 + $0x3a0] sm:$0xff]
    %v294 = vld [vmem:[%s1 + $0x3a8] sm:$0xff]
    %v295 = vld [vmem:[%s1 + $0x3b0] sm:$0xff]
    %v296 = vld [vmem:[%s1 + $0x3b8] sm:$0xff]
    %v297 = vld [vmem:[%s1 + $0x3c0] sm:$0xff]
    %v298 = vld [vmem:[%s1 + $0x3c8] sm:$0xff]
    %v299 = vld [vmem:[%s1 + $0x3d0] sm:$0xff]
    %v300 = vld [vmem:[%s1 + $0x3d8] sm:$0xff]
    %v301 = vld [vmem:[%s1 + $0x3e0] sm:$0xff]
    %v302 = vld [vmem:[%s1 + $0x3e8] sm:$0xff]
    %v303 = vld [vmem:[%s1 + $0x3f0] sm:$0xff]
    %v304 = vld [vmem:[%s1 + $0x3f8] sm:$0xff]
    %v305 = vld [vmem:[%s2] sm:$0x1]
    %v307 = vlaneseq
    %v308 = vshrl.u32 %v307, 7
    %v309 = vsub.s32 0, %v308
    %v310 = vrot.slane %v305, %v309
    %vm328 = vcmask 1041409
    %v329 = vsel %vm328, %v169, %v161
    %v330 = vsel %vm328, %v170, %v162
    %v331 = vsel %vm328, %v171, %v163
    %v332 = vsel %vm328, %v172, %v164
    %v333 = vsel %vm328, %v173, %v165
    %v334 = vsel %vm328, %v174, %v166
    %v335 = vsel %vm328, %v175, %v167
    %v336 = vsel %vm328, %v176, %v168
    %345 = vmatprep.subr.mxu0 0.0
    %346 = vmatpush1.msra.mxu0 %v177
    %347 = vmatprep.subr.mxu0 0.0
    %348 = vmatpush1.msra.mxu0 %v178
    %349 = vmatprep.subr.mxu0 0.0
    %350 = vmatpush1.msra.mxu0 %v179
    %351 = vmatprep.subr.mxu0 0.0
    %352 = vmatpush1.msra.mxu0 %v180
    %353 = vmatprep.subr.mxu0 0.0
    %354 = vmatpush1.msra.mxu0 %v181
    %355 = vmatprep.subr.mxu0 0.0
    %356 = vmatpush1.msra.mxu0 %v182
    %357 = vmatprep.subr.mxu0 0.0
    %358 = vmatpush1.msra.mxu0 %v183
    %359 = vmatprep.subr.mxu0 0.0
    %360 = vmatpush1.msra.mxu0 %v184
    %361 = vmatprep.subr.mxu0 0.0
    %362 = vmatpush1.msra.mxu0 %v185
    %363 = vmatprep.subr.mxu0 0.0
    %364 = vmatpush1.msra.mxu0 %v186
    %365 = vmatprep.subr.mxu0 0.0
    %366 = vmatpush1.msra.mxu0 %v187
    %367 = vmatprep.subr.mxu0 0.0
    %368 = vmatpush1.msra.mxu0 %v188
    %369 = vmatprep.subr.mxu0 0.0
    %370 = vmatpush1.msra.mxu0 %v189
    %371 = vmatprep.subr.mxu0 0.0
    %372 = vmatpush1.msra.mxu0 %v190
    %373 = vmatprep.subr.mxu0 0.0
    %374 = vmatpush1.msra.mxu0 %v191
    %375 = vmatprep.subr.mxu0 0.0
    %376 = vmatpush1.msra.mxu0 %v192
    %377 = vmatprep.subr.mxu0 0.0
    %378 = vmatpush1.msra.mxu0 %v193
    %379 = vmatprep.subr.mxu0 0.0
    %380 = vmatpush1.msra.mxu0 %v194
    %381 = vmatprep.subr.mxu0 0.0
    %382 = vmatpush1.msra.mxu0 %v195
    %383 = vmatprep.subr.mxu0 0.0
    %384 = vmatpush1.msra.mxu0 %v196
    %385 = vmatprep.subr.mxu0 0.0
    %386 = vmatpush1.msra.mxu0 %v197
    %387 = vmatprep.subr.mxu0 0.0
    %388 = vmatpush1.msra.mxu0 %v198
    %389 = vmatprep.subr.mxu0 0.0
    %390 = vmatpush1.msra.mxu0 %v199
    %391 = vmatprep.subr.mxu0 0.0
    %392 = vmatpush1.msra.mxu0 %v200
    %393 = vmatprep.subr.mxu0 0.0
    %394 = vmatpush1.msra.mxu0 %v201
    %395 = vmatprep.subr.mxu0 0.0
    %396 = vmatpush1.msra.mxu0 %v202
    %397 = vmatprep.subr.mxu0 0.0
    %398 = vmatpush1.msra.mxu0 %v203
    %399 = vmatprep.subr.mxu0 0.0
    %400 = vmatpush1.msra.mxu0 %v204
    %401 = vmatprep.subr.mxu0 0.0
    %402 = vmatpush1.msra.mxu0 %v205
    %403 = vmatprep.subr.mxu0 0.0
    %404 = vmatpush1.msra.mxu0 %v206
    %405 = vmatprep.subr.mxu0 0.0
    %406 = vmatpush1.msra.mxu0 %v207
    %407 = vmatprep.subr.mxu0 0.0
    %408 = vmatpush1.msra.mxu0 %v208
    %409 = vmatprep.mubr.f32.mxu0 %v330
    %410 = vmatmul.mubr.f32.gmra.mrb[0].mxu0 %v329
    %v411 = vpop.f32.mrb[0].mxu0
    %v412 = vadd.f32 %v310, %v411
    %v413 = vpop.f32.mrb[0].mxu0
    %414 = vdwg.mxu0
    %415 = vmatprep.subr.mxu0 0.0
    %416 = vmatpush1.msra.mxu0 %v209
    %417 = vmatprep.subr.mxu0 0.0
    %418 = vmatpush1.msra.mxu0 %v210
    %419 = vmatprep.subr.mxu0 0.0
    %420 = vmatpush1.msra.mxu0 %v211
    %421 = vmatprep.subr.mxu0 0.0
    %422 = vmatpush1.msra.mxu0 %v212
    %423 = vmatprep.subr.mxu0 0.0
    %424 = vmatpush1.msra.mxu0 %v213
    %425 = vmatprep.subr.mxu0 0.0
    %426 = vmatpush1.msra.mxu0 %v214
    %427 = vmatprep.subr.mxu0 0.0
    %428 = vmatpush1.msra.mxu0 %v215
    %429 = vmatprep.subr.mxu0 0.0
    %430 = vmatpush1.msra.mxu0 %v216
    %431 = vmatprep.subr.mxu0 0.0
    %432 = vmatpush1.msra.mxu0 %v217
    %433 = vmatprep.subr.mxu0 0.0
    %434 = vmatpush1.msra.mxu0 %v218
    %435 = vmatprep.subr.mxu0 0.0
    %436 = vmatpush1.msra.mxu0 %v219
    %437 = vmatprep.subr.mxu0 0.0
    %438 = vmatpush1.msra.mxu0 %v220
    %439 = vmatprep.subr.mxu0 0.0
    %440 = vmatpush1.msra.mxu0 %v221
    %441 = vmatprep.subr.mxu0 0.0
    %442 = vmatpush1.msra.mxu0 %v222
    %443 = vmatprep.subr.mxu0 0.0
    %444 = vmatpush1.msra.mxu0 %v223
    %445 = vmatprep.subr.mxu0 0.0
    %446 = vmatpush1.msra.mxu0 %v224
    %447 = vmatprep.subr.mxu0 0.0
    %448 = vmatpush1.msra.mxu0 %v225
    %449 = vmatprep.subr.mxu0 0.0
    %450 = vmatpush1.msra.mxu0 %v226
    %451 = vmatprep.subr.mxu0 0.0
    %452 = vmatpush1.msra.mxu0 %v227
    %453 = vmatprep.subr.mxu0 0.0
    %454 = vmatpush1.msra.mxu0 %v228
    %455 = vmatprep.subr.mxu0 0.0
    %456 = vmatpush1.msra.mxu0 %v229
    %457 = vmatprep.subr.mxu0 0.0
    %458 = vmatpush1.msra.mxu0 %v230
    %459 = vmatprep.subr.mxu0 0.0
    %460 = vmatpush1.msra.mxu0 %v231
    %461 = vmatprep.subr.mxu0 0.0
    %462 = vmatpush1.msra.mxu0 %v232
    %463 = vmatprep.subr.mxu0 0.0
    %464 = vmatpush1.msra.mxu0 %v233
    %465 = vmatprep.subr.mxu0 0.0
    %466 = vmatpush1.msra.mxu0 %v234
    %467 = vmatprep.subr.mxu0 0.0
    %468 = vmatpush1.msra.mxu0 %v235
    %469 = vmatprep.subr.mxu0 0.0
    %470 = vmatpush1.msra.mxu0 %v236
    %471 = vmatprep.subr.mxu0 0.0
    %472 = vmatpush1.msra.mxu0 %v237
    %473 = vmatprep.subr.mxu0 0.0
    %474 = vmatpush1.msra.mxu0 %v238
    %475 = vmatprep.subr.mxu0 0.0
    %476 = vmatpush1.msra.mxu0 %v239
    %477 = vmatprep.subr.mxu0 0.0
    %478 = vmatpush1.msra.mxu0 %v240
    %479 = vmatprep.mubr.f32.mxu0 %v332
    %480 = vmatmul.mubr.f32.gmra.mrb[0].mxu0 %v331
    %v481 = vpop.f32.mrb[0].mxu0
    %v482 = vadd.f32 %v412, %v481
    %v483 = vpop.f32.mrb[0].mxu0
    %484 = vdwg.mxu0
    %485 = vmatprep.subr.mxu0 0.0
    %486 = vmatpush1.msra.mxu0 %v241
    %487 = vmatprep.subr.mxu0 0.0
    %488 = vmatpush1.msra.mxu0 %v242
    %489 = vmatprep.subr.mxu0 0.0
    %490 = vmatpush1.msra.mxu0 %v243
    %491 = vmatprep.subr.mxu0 0.0
    %492 = vmatpush1.msra.mxu0 %v244
    %493 = vmatprep.subr.mxu0 0.0
    %494 = vmatpush1.msra.mxu0 %v245
    %495 = vmatprep.subr.mxu0 0.0
    %496 = vmatpush1.msra.mxu0 %v246
    %497 = vmatprep.subr.mxu0 0.0
    %498 = vmatpush1.msra.mxu0 %v247
    %499 = vmatprep.subr.mxu0 0.0
    %500 = vmatpush1.msra.mxu0 %v248
    %501 = vmatprep.subr.mxu0 0.0
    %502 = vmatpush1.msra.mxu0 %v249
    %503 = vmatprep.subr.mxu0 0.0
    %504 = vmatpush1.msra.mxu0 %v250
    %505 = vmatprep.subr.mxu0 0.0
    %506 = vmatpush1.msra.mxu0 %v251
    %507 = vmatprep.subr.mxu0 0.0
    %508 = vmatpush1.msra.mxu0 %v252
    %509 = vmatprep.subr.mxu0 0.0
    %510 = vmatpush1.msra.mxu0 %v253
    %511 = vmatprep.subr.mxu0 0.0
    %512 = vmatpush1.msra.mxu0 %v254
    %513 = vmatprep.subr.mxu0 0.0
    %514 = vmatpush1.msra.mxu0 %v255
    %515 = vmatprep.subr.mxu0 0.0
    %516 = vmatpush1.msra.mxu0 %v256
    %517 = vmatprep.subr.mxu0 0.0
    %518 = vmatpush1.msra.mxu0 %v257
    %519 = vmatprep.subr.mxu0 0.0
    %520 = vmatpush1.msra.mxu0 %v258
    %521 = vmatprep.subr.mxu0 0.0
    %522 = vmatpush1.msra.mxu0 %v259
    %523 = vmatprep.subr.mxu0 0.0
    %524 = vmatpush1.msra.mxu0 %v260
    %525 = vmatprep.subr.mxu0 0.0
    %526 = vmatpush1.msra.mxu0 %v261
    %527 = vmatprep.subr.mxu0 0.0
    %528 = vmatpush1.msra.mxu0 %v262
    %529 = vmatprep.subr.mxu0 0.0
    %530 = vmatpush1.msra.mxu0 %v263
    %531 = vmatprep.subr.mxu0 0.0
    %532 = vmatpush1.msra.mxu0 %v264
    %533 = vmatprep.subr.mxu0 0.0
    %534 = vmatpush1.msra.mxu0 %v265
    %535 = vmatprep.subr.mxu0 0.0
    %536 = vmatpush1.msra.mxu0 %v266
    %537 = vmatprep.subr.mxu0 0.0
    %538 = vmatpush1.msra.mxu0 %v267
    %539 = vmatprep.subr.mxu0 0.0
    %540 = vmatpush1.msra.mxu0 %v268
    %541 = vmatprep.subr.mxu0 0.0
    %542 = vmatpush1.msra.mxu0 %v269
    %543 = vmatprep.subr.mxu0 0.0
    %544 = vmatpush1.msra.mxu0 %v270
    %545 = vmatprep.subr.mxu0 0.0
    %546 = vmatpush1.msra.mxu0 %v271
    %547 = vmatprep.subr.mxu0 0.0
    %548 = vmatpush1.msra.mxu0 %v272
    %549 = vmatprep.mubr.f32.mxu0 %v334
    %550 = vmatmul.mubr.f32.gmra.mrb[0].mxu0 %v333
    %v551 = vpop.f32.mrb[0].mxu0
    %v552 = vadd.f32 %v482, %v551
    %v553 = vpop.f32.mrb[0].mxu0
    %554 = vdwg.mxu0
    %555 = vmatprep.subr.mxu0 0.0
    %556 = vmatpush1.msra.mxu0 %v273
    %557 = vmatprep.subr.mxu0 0.0
    %558 = vmatpush1.msra.mxu0 %v274
    %559 = vmatprep.subr.mxu0 0.0
    %560 = vmatpush1.msra.mxu0 %v275
    %561 = vmatprep.subr.mxu0 0.0
    %562 = vmatpush1.msra.mxu0 %v276
    %563 = vmatprep.subr.mxu0 0.0
    %564 = vmatpush1.msra.mxu0 %v277
    %565 = vmatprep.subr.mxu0 0.0
    %566 = vmatpush1.msra.mxu0 %v278
    %567 = vmatprep.subr.mxu0 0.0
    %568 = vmatpush1.msra.mxu0 %v279
    %569 = vmatprep.subr.mxu0 0.0
    %570 = vmatpush1.msra.mxu0 %v280
    %571 = vmatprep.subr.mxu0 0.0
    %572 = vmatpush1.msra.mxu0 %v281
    %573 = vmatprep.subr.mxu0 0.0
    %574 = vmatpush1.msra.mxu0 %v282
    %575 = vmatprep.subr.mxu0 0.0
    %576 = vmatpush1.msra.mxu0 %v283
    %577 = vmatprep.subr.mxu0 0.0
    %578 = vmatpush1.msra.mxu0 %v284
    %579 = vmatprep.subr.mxu0 0.0
    %580 = vmatpush1.msra.mxu0 %v285
    %581 = vmatprep.subr.mxu0 0.0
    %582 = vmatpush1.msra.mxu0 %v286
    %583 = vmatprep.subr.mxu0 0.0
    %584 = vmatpush1.msra.mxu0 %v287
    %585 = vmatprep.subr.mxu0 0.0
    %586 = vmatpush1.msra.mxu0 %v288
    %587 = vmatprep.subr.mxu0 0.0
    %588 = vmatpush1.msra.mxu0 %v289
    %589 = vmatprep.subr.mxu0 0.0
    %590 = vmatpush1.msra.mxu0 %v290
    %591 = vmatprep.subr.mxu0 0.0
    %592 = vmatpush1.msra.mxu0 %v291
    %593 = vmatprep.subr.mxu0 0.0
    %594 = vmatpush1.msra.mxu0 %v292
    %595 = vmatprep.subr.mxu0 0.0
    %596 = vmatpush1.msra.mxu0 %v293
    %597 = vmatprep.subr.mxu0 0.0
    %598 = vmatpush1.msra.mxu0 %v294
    %599 = vmatprep.subr.mxu0 0.0
    %600 = vmatpush1.msra.mxu0 %v295
    %601 = vmatprep.subr.mxu0 0.0
    %602 = vmatpush1.msra.mxu0 %v296
    %603 = vmatprep.subr.mxu0 0.0
    %604 = vmatpush1.msra.mxu0 %v297
    %605 = vmatprep.subr.mxu0 0.0
    %606 = vmatpush1.msra.mxu0 %v298
    %607 = vmatprep.subr.mxu0 0.0
    %608 = vmatpush1.msra.mxu0 %v299
    %609 = vmatprep.subr.mxu0 0.0
    %610 = vmatpush1.msra.mxu0 %v300
    %611 = vmatprep.subr.mxu0 0.0
    %612 = vmatpush1.msra.mxu0 %v301
    %613 = vmatprep.subr.mxu0 0.0
    %614 = vmatpush1.msra.mxu0 %v302
    %615 = vmatprep.subr.mxu0 0.0
    %616 = vmatpush1.msra.mxu0 %v303
    %617 = vmatprep.subr.mxu0 0.0
    %618 = vmatpush1.msra.mxu0 %v304
    %619 = vmatprep.mubr.f32.mxu0 %v336
    %620 = vmatmul.mubr.f32.gmra.mrb[0].mxu0 %v335
    %v621 = vpop.f32.mrb[0].mxu0
    %v622 = vadd.f32 %v552, %v621
    %v623 = vpop.f32.mrb[0].mxu0
    %624 = vdwg.mxu0
    %vm625 = vcmask 58368
    %626 = vst.msk [vmem:[#allocation2] sm:$0x3] %vm625, %v622
    // Predicated region
    $region14: #{forward.9} parent=1 // pred_check
      _
    $region15: #{forward.9} parent=1 // pred_check_branch
      %628 = sbr.rel (0) target = $region17
    $region16: #{forward.9} parent=1 // pred_region
      %s630 = ssub.s32 32, 32
      %631 = vsyncadd [#allocation3], %s630
      %s633 = sshll.u32 [#allocation2], 4
      %s634 = int_to_ptr.vmem [resolvable:$true] %s633
      %636 = dma.vmem_to_hbm [thread:$0]  %s634, 32, %s3, [#allocation3]
    $region17: #{forward.9} parent=1 // pred_fallthru
      _
    // Predicated region
    $region18: #{forward.9} parent=1 // pred_check
      _
    $region19: #{forward.9} parent=1 // pred_check_branch
      %638 = sbr.rel (0) target = $region21
    $region20: #{forward.9} parent=1 // pred_region
      %639 = dma.done [#allocation3], 32
    $region21: #{forward.9} parent=1 // pred_fallthru
      _
    %640 = vsyncpa [#allocation3], 1

// kernel: forward.8
$region0: #{forward.8}
  #allocation0 [shape = 'u32[]', space=smem, size = 0x4, offset = 0x4, fixed_abs, tag = 'smem constant byte address 0x4 - core index']
  #allocation1 [shape = 'u32[144,128]{1,0:T(1,128)}', space=vmem, size = 0x12000, scoped, tag = 'internal scratch']
  #allocation2 [shape = 'f32[8,512]{1,0:T(8,128)}', space=vmem, size = 0x4000, scoped, tag = 'scratch operand']
  %s0 = inlined_call_operand.vmem [shape: bf16[8,25600], index: 0, kind: input, shape index: {}]
  %s1 = inlined_call_operand.hbm [shape: bf16[25600,1024], index: 1, kind: input, shape index: {}]
  %s2 = inlined_call_operand.hbm [shape: f32[1,1024], index: 2, kind: input, shape index: {}]
  %s3 = inlined_call_operand.vmem [shape: f32[8,1024], index: 3, kind: output, shape index: {}]
  %s4 = sld [smem:[#allocation0]]
  $region61: #{forward.8} parent=0
    _
  %s6 = ssub.s32 1, %s4
  %s7 = scalar_select 0, %s6, %s4
  $region1: #{forward.8} parent=0
    #allocation3 [shape = 'u8[6553600]{0}', space=vmem, size = 0x640000, scoped, tag = 'input window, operand 1']
    #allocation4 [shape = 's32[2]{0}', space=sflag, size = 0x8, scoped, tag = 'scoped memory for forward.8']
    #allocation5 [shape = 'u8[4096]{0}', space=vmem, size = 0x1000, scoped, tag = 'input window, operand 2']
    #allocation6 [shape = 's32[2]{0}', space=sflag, size = 0x8, scoped, tag = 'scoped memory for forward.8']
    %8 = vsyncpa [#allocation4], 0
    %s9 = scalar_lea.sflag [#allocation4], 1
    %10 = vsyncpa %s9, 0
    %11 = vsyncpa [#allocation6], 0
    %s12 = scalar_lea.sflag [#allocation6], 1
    %13 = vsyncpa %s12, 0
    loop: start=0, step=1, limit=18
    $region2: #{forward.8} parent=1 // loop_pre_header
      _
    $region3: #{forward.8} parent=1 // loop_header
      %s15 = sphi 0, %s19
      %p16 = scmp.ge.s32.totalorder %s15, 18
      %s22 = sphi 0, %s41
      %s23 = sphi 0, %s37
      %s24 = sphi 0, %s33
      %s25 = sphi 0, %s22
      %s26 = sphi 0, %s23
      %s27 = sphi 0, %s24
      %s28 = sphi 0, %s25
      %s29 = sphi 0, %s26
      %s30 = sphi 0, %s27
      %s46 = sphi 0, %s48
      %s49 = sphi 0, %s46
      %s50 = sphi 0, %s49
      %s66 = sphi 0, %s50
      %s74 = sphi 0, %s76
      %s77 = sphi 0, %s74
      %s78 = sphi 0, %s77
      %s94 = sphi 0, %s78
      %s100 = sphi 0, %s102
      %s103 = sphi 0, %s100
      %s104 = sphi 0, %s103
      %s120 = sphi 0, %s104
      %s128 = sphi 0, %s130
      %s131 = sphi 0, %s128
      %s132 = sphi 0, %s131
      %s148 = sphi 0, %s132
    $region4: #{forward.8} parent=1 // loop_header_branch
      %18 = sbr.rel (%p16) target = $region8
    $region5: #{forward.8} parent=1 // loop_body
      %s20 = ssub.s32 %s15, 1
      %s21 = ssub.s32 %s15, 2
      %s31 = sadd.s32 1, %s24
      %p32 = scmp.ge.s32.totalorder %s31, 8
      %s33 = scalar_select %p32, 0, %s31
      %s34 = sadd.s32 1, %s23
      %s35 = scalar_select %p32, %s34, %s23
      %p36 = scmp.ge.s32.totalorder %s35, 2
      %s37 = scalar_select %p36, 0, %s35
      %s38 = sadd.s32 1, %s22
      %s39 = scalar_select %p36, %s38, %s22
      %p40 = scmp.ge.s32.totalorder %s39, 1
      %s41 = scalar_select %p40, 0, %s39
      %s42 = ssub.s32 %s22, %s41
      %s43 = ssub.s32 %s24, %s33
      %s44 = sor.u32 %s42, %s43
      %p45 = scmp.eq.s32.totalorder %s44, 0
      %s47 = sadd.s32 %s46, 1
      %s48 = scalar_select %p45, %s46, %s47
      %p51 = pneg %p45
      %p52 = scmp.eq.s32.totalorder %s15, 15
      %p53 = por %p51, %p52
      %p54 = scmp.ne.s32.totalorder %s46, %s49
      %p55 = scmp.eq.s32.totalorder %s15, 0
      %p56 = por %p54, %p55
      %p57 = scmp.ne.s32.totalorder %s46, %s49
      %p58 = scmp.eq.s32.totalorder %s20, 15
      %p59 = por %p57, %p58
      %p60 = scmp.ne.s32.totalorder %s49, %s50
      %p61 = scmp.eq.s32.totalorder %s20, 0
      %p62 = por %p60, %p61
      %p63 = scmp.ne.s32.totalorder %s49, %s50
      %p64 = scmp.eq.s32.totalorder %s21, 15
      %p65 = por %p63, %p64
      %p67 = scmp.ne.s32.totalorder %s50, %s66
      %p68 = scmp.eq.s32.totalorder %s21, 0
      %p69 = por %p67, %p68
      %s70 = ssub.s32 %s24, %s33
      %s71 = ssub.s32 %s23, %s37
      %s72 = sor.u32 %s70, %s71
      %p73 = scmp.eq.s32.totalorder %s72, 0
      %s75 = sadd.s32 %s74, 1
      %s76 = scalar_select %p73, %s74, %s75
      %p79 = pneg %p73
      %p80 = scmp.eq.s32.totalorder %s15, 15
      %p81 = por %p79, %p80
      %p82 = scmp.ne.s32.totalorder %s74, %s77
      %p83 = scmp.eq.s32.totalorder %s15, 0
      %p84 = por %p82, %p83
      %p85 = scmp.ne.s32.totalorder %s74, %s77
      %p86 = scmp.eq.s32.totalorder %s20, 15
      %p87 = por %p85, %p86
      %p88 = scmp.ne.s32.totalorder %s77, %s78
      %p89 = scmp.eq.s32.totalorder %s20, 0
      %p90 = por %p88, %p89
      %p91 = scmp.ne.s32.totalorder %s77, %s78
      %p92 = scmp.eq.s32.totalorder %s21, 15
      %p93 = por %p91, %p92
      %p95 = scmp.ne.s32.totalorder %s78, %s94
      %p96 = scmp.eq.s32.totalorder %s21, 0
      %p97 = por %p95, %p96
      %s98 = ssub.s32 %s23, %s37
      %p99 = scmp.eq.s32.totalorder %s98, 0
      %s101 = sadd.s32 %s100, 1
      %s102 = scalar_select %p99, %s100, %s101
      %p105 = pneg %p99
      %p106 = scmp.eq.s32.totalorder %s15, 15
      %p107 = por %p105, %p106
      %p108 = scmp.ne.s32.totalorder %s100, %s103
      %p109 = scmp.eq.s32.totalorder %s15, 0
      %p110 = por %p108, %p109
      %p111 = scmp.ne.s32.totalorder %s100, %s103
      %p112 = scmp.eq.s32.totalorder %s20, 15
      %p113 = por %p111, %p112
      %p114 = scmp.ne.s32.totalorder %s103, %s104
      %p115 = scmp.eq.s32.totalorder %s20, 0
      %p116 = por %p114, %p115
      %p117 = scmp.ne.s32.totalorder %s103, %s104
      %p118 = scmp.eq.s32.totalorder %s21, 15
      %p119 = por %p117, %p118
      %p121 = scmp.ne.s32.totalorder %s104, %s120
      %p122 = scmp.eq.s32.totalorder %s21, 0
      %p123 = por %p121, %p122
      %s124 = ssub.s32 %s22, %s41
      %s125 = ssub.s32 %s23, %s37
      %s126 = sor.u32 %s124, %s125
      %p127 = scmp.eq.s32.totalorder %s126, 0
      %s129 = sadd.s32 %s128, 1
      %s130 = scalar_select %p127, %s128, %s129
      %p133 = pneg %p127
      %p134 = scmp.eq.s32.totalorder %s15, 15
      %p135 = por %p133, %p134
      %p136 = scmp.ne.s32.totalorder %s128, %s131
      %p137 = scmp.eq.s32.totalorder %s15, 0
      %p138 = por %p136, %p137
      %p139 = scmp.ne.s32.totalorder %s128, %s131
      %p140 = scmp.eq.s32.totalorder %s20, 15
      %p141 = por %p139, %p140
      %p142 = scmp.ne.s32.totalorder %s131, %s132
      %p143 = scmp.eq.s32.totalorder %s20, 0
      %p144 = por %p142, %p143
      %p145 = scmp.ne.s32.totalorder %s131, %s132
      %p146 = scmp.eq.s32.totalorder %s21, 15
      %p147 = por %p145, %p146
      %p149 = scmp.ne.s32.totalorder %s132, %s148
      %p150 = scmp.eq.s32.totalorder %s21, 0
      %p151 = por %p149, %p150
      %p152 = scmp.le.s32.totalorder 1, %s15
      %p153 = scmp.lt.s32.totalorder %s15, 17
      %p154 = pnand %p152, %p153
      %p155 = pneg %p154
      // Predicated region
      $region9: #{forward.8} parent=5 // pred_check
        _
      $region10: #{forward.8} parent=5 // pred_check_branch
        %157 = sbr.rel (%p154) target = $region12
      $region11: #{forward.8} parent=5 // pred_region
        %s158 = ssub.s32 %s15, 1
      $region12: #{forward.8} parent=5 // pred_fallthru
        _
      %p159 = scmp.lt.s32.totalorder %s15, 16
      // Predicated region
      $region13: #{forward.8} parent=5 // pred_check
        %p160 = pneg %p159
      $region14: #{forward.8} parent=5 // pred_check_branch
        %162 = sbr.rel (%p160) target = $region16
      $region15: #{forward.8} parent=5 // pred_region
        // Predicated region
        $region17: #{forward.8} parent=15 // pred_check
          %p163 = pneg %p56
        $region18: #{forward.8} parent=15 // pred_check_branch
          %165 = sbr.rel (%p163) target = $region20
        $region19: #{forward.8} parent=15 // pred_region
          %s166 = smul.u32 25, %s24
          %p167 = scmp.lt.s32.totalorder %s22, 0
          %s168 = scalar_select %p167, %s22, 0
          %p169 = scmp.lt.s32.totalorder %s166, 199
          %s170 = scalar_select %p169, %s166, 199
          %s171 = smul.addr %s168, 200
          %s172 = sadd.s32 %s170, %s171
          %s173 = smul.addr %s172, 4
          %s174 = scalar_lea.vmem %s0, %s173
          %s175 = smul.u32 25, %s24
        $region20: #{forward.8} parent=15 // pred_fallthru
          _
        // Predicated region
        $region21: #{forward.8} parent=15 // pred_check
          %p176 = pneg %p84
        $region22: #{forward.8} parent=15 // pred_check_branch
          %178 = sbr.rel (%p176) target = $region24
        $region23: #{forward.8} parent=15 // pred_region
          %s179 = sand.u32 %s74, 1
          %s180 = scalar_lea.sflag [#allocation4], %s179
          %s181 = sand.u32 %s74, 1
          %s182 = smul.addr %s181, 6400
          %s183 = scalar_lea.vmem [#allocation3], %s182
          %s184 = smul.u32 400, %s24
          %s185 = smul.u32 4, %s23
          %s187 = ssub.s32 102400, 102400
          %188 = vsyncadd %s180, %s187
          %s189 = smul.addr %s184, 8
          %s190 = sadd.s32 %s185, %s189
          %s191 = smul.addr %s190, 64
          %s192 = scalar_lea.hbm %s1, %s191
          %s193 = sshll.u32 %s183, 4
          %s194 = int_to_ptr.vmem [resolvable:$true] %s193
          %199 = dma.hbm_to_vmem [thread:$0]  %s192, 102400, %s194, %s180, 512, 256, 16
        $region24: #{forward.8} parent=15 // pred_fallthru
          _
        // Predicated region
        $region25: #{forward.8} parent=15 // pred_check
          %p200 = pneg %p110
        $region26: #{forward.8} parent=15 // pred_check_branch
          %202 = sbr.rel (%p200) target = $region28
        $region27: #{forward.8} parent=15 // pred_region
          %s203 = sand.u32 %s100, 1
          %s204 = scalar_lea.sflag [#allocation6], %s203
          %s205 = sand.u32 %s100, 1
          %s206 = smul.addr %s205, 4
          %s207 = scalar_lea.vmem [#allocation5], %s206
          %s208 = smul.u32 4, %s23
          %s210 = ssub.s32 64, 64
          %211 = vsyncadd %s204, %s210
          %s212 = smul.addr %s208, 16
          %s213 = scalar_lea.hbm %s2, %s212
          %s215 = sshll.u32 %s207, 4
          %s216 = int_to_ptr.vmem [resolvable:$true] %s215
          %218 = dma.hbm_to_vmem [thread:$0]  %s213, 64, %s216, %s204
        $region28: #{forward.8} parent=15 // pred_fallthru
          _
      $region16: #{forward.8} parent=5 // pred_fallthru
        _
      %p219 = scmp.le.s32.totalorder 1, %s15
      %p220 = scmp.lt.s32.totalorder %s15, 17
      %p221 = pnand %p219, %p220
      %p222 = pneg %p221
      // Predicated region
      $region29: #{forward.8} parent=5 // pred_check
        _
      $region30: #{forward.8} parent=5 // pred_check_branch
        %224 = sbr.rel (%p221) target = $region32
      $region31: #{forward.8} parent=5 // pred_region
        %s225 = ssub.s32 %s15, 1
        %s226 = sand.u32 %s77, 1
        %s227 = scalar_lea.sflag [#allocation4], %s226
        %s228 = sand.u32 %s77, 1
        %s229 = smul.addr %s228, 6400
        %s230 = scalar_lea.vmem [#allocation3], %s229
        // Predicated region
        $region33: #{forward.8} parent=31 // pred_check
          %p231 = pneg %p90
        $region34: #{forward.8} parent=31 // pred_check_branch
          %233 = sbr.rel (%p231) target = $region36
        $region35: #{forward.8} parent=31 // pred_region
          %234 = dma.done %s227, 102400
        $region36: #{forward.8} parent=31 // pred_fallthru
          _
        %s235 = sand.u32 %s103, 1
        %s236 = scalar_lea.sflag [#allocation6], %s235
        %s237 = sand.u32 %s103, 1
        %s238 = smul.addr %s237, 4
        %s239 = scalar_lea.vmem [#allocation5], %s238
        // Predicated region
        $region37: #{forward.8} parent=31 // pred_check
          %p240 = pneg %p116
        $region38: #{forward.8} parent=31 // pred_check_branch
          %242 = sbr.rel (%p240) target = $region40
        $region39: #{forward.8} parent=31 // pred_region
          %243 = dma.done %s236, 64
        $region40: #{forward.8} parent=31 // pred_fallthru
          _
        %s244 = smul.u32 25, %s27
        %p245 = scmp.lt.s32.totalorder %s25, 0
        %s246 = scalar_select %p245, %s25, 0
        %p247 = scmp.lt.s32.totalorder %s244, 199
        %s248 = scalar_select %p247, %s244, 199
        %s249 = smul.addr %s246, 200
        %s250 = sadd.s32 %s248, %s249
        %s251 = smul.addr %s250, 4
        %s252 = scalar_lea.vmem %s0, %s251
        %p253 = pneg %p62
        %p254 = pneg %p59
        %s255 = sand.u32 %s77, 1
        %s256 = scalar_lea.sflag [#allocation4], %s255
        %s257 = sand.u32 %s77, 1
        %s258 = smul.addr %s257, 6400
        %s259 = scalar_lea.vmem [#allocation3], %s258
        %p260 = pneg %p90
        %p261 = pneg %p87
        %s262 = sand.u32 %s103, 1
        %s263 = scalar_lea.sflag [#allocation6], %s262
        %s264 = sand.u32 %s103, 1
        %s265 = smul.addr %s264, 4
        %s266 = scalar_lea.vmem [#allocation5], %s265
        %p267 = pneg %p116
        %p268 = pneg %p113
        %p269 = pneg %p144
        %p270 = pneg %p141
        %s271 = smul.u32 4, %s26
        %p272 = scmp.lt.s32.totalorder %s25, 0
        %s273 = scalar_select %p272, %s25, 0
        %p274 = scmp.lt.s32.totalorder %s271, 7
        %s275 = scalar_select %p274, %s271, 7
        %s276 = smul.addr %s273, 8
        %s277 = sadd.s32 %s275, %s276
        %s278 = smul.addr %s277, 8
        %s279 = scalar_lea.vmem %s3, %s278
        %s280 = smul.u32 25, %s27
        %p281 = scmp.lt.s32.totalorder %s25, 0
        %s282 = scalar_select %p281, %s25, 0
        %p283 = scmp.lt.s32.totalorder %s280, 199
        %s284 = scalar_select %p283, %s280, 199
        %s285 = smul.addr %s282, 200
        %s286 = sadd.s32 %s284, %s285
        %s287 = smul.addr %s286, 4
        %s288 = scalar_lea.vmem %s0, %s287
        %s289 = smul.u32 25, %s27
        %s290 = smul.u32 400, %s27
        %s291 = smul.u32 4, %s26
        %s292 = smul.u32 4, %s26
        %s293 = smul.u32 4, %s26
        %p294 = scmp.lt.s32.totalorder %s25, 0
        %s295 = scalar_select %p294, %s25, 0
        %p296 = scmp.lt.s32.totalorder %s293, 7
        %s297 = scalar_select %p296, %s293, 7
        %s298 = smul.addr %s295, 8
        %s299 = sadd.s32 %s297, %s298
        %s300 = smul.addr %s299, 8
        %s301 = scalar_lea.vmem %s3, %s300
        %s302 = smul.u32 4, %s26
        %p304 = scmp.eq.s32.totalorder %s27, 0
        // Predicated region
        $region41: #{forward.8} parent=31 // pred_check
          %p305 = pneg %p304
        $region42: #{forward.8} parent=31 // pred_check_branch
          %307 = sbr.rel (%p305) target = $region44
        $region43: #{forward.8} parent=31 // pred_region
          %308 = vst [vmem:[#allocation2] sm:$0xff] 0.0
          %309 = vst [vmem:[#allocation2 + $0x8] sm:$0xff] 0.0
          %310 = vst [vmem:[#allocation2 + $0x10] sm:$0xff] 0.0
          %311 = vst [vmem:[#allocation2 + $0x18] sm:$0xff] 0.0
        $region44: #{forward.8} parent=31 // pred_fallthru
          _
        %v312 = vld [vmem:[#allocation2] sm:$0xff]
        %v313 = vld [vmem:[#allocation2 + $0x8] sm:$0xff]
        %v314 = vld [vmem:[#allocation2 + $0x10] sm:$0xff]
        %v315 = vld [vmem:[#allocation2 + $0x18] sm:$0xff]
        %v316 = vld [vmem:[%s288] sm:$0xff]
        %v317 = vld [vmem:[%s288 + $0x8] sm:$0xff]
        %v318 = vld [vmem:[%s288 + $0x10] sm:$0xff]
        %v319 = vld [vmem:[%s288 + $0x18] sm:$0xff]
        %v320 = vld [vmem:[%s288 + $0x20] sm:$0xff]
        %v321 = vld [vmem:[%s288 + $0x28] sm:$0xff]
        %v322 = vld [vmem:[%s288 + $0x30] sm:$0xff]
        %v323 = vld [vmem:[%s288 + $0x38] sm:$0xff]
        %v324 = vld [vmem:[%s288 + $0x40] sm:$0xff]
        %v325 = vld [vmem:[%s288 + $0x48] sm:$0xff]
        %v326 = vld [vmem:[%s288 + $0x50] sm:$0xff]
        %v327 = vld [vmem:[%s288 + $0x58] sm:$0xff]
        %v328 = vld [vmem:[%s288 + $0x60] sm:$0xf]
        %v329 = vld [vmem:[%s230] sm:$0xff]
        %v330 = vld [vmem:[%s230 + $0x8] sm:$0xff]
        %v331 = vld [vmem:[%s230 + $0x10] sm:$0xff]
        %v332 = vld [vmem:[%s230 + $0x18] sm:$0xff]
        %v333 = vld [vmem:[%s230 + $0x20] sm:$0xff]
        %v334 = vld [vmem:[%s230 + $0x28] sm:$0xff]
        %v335 = vld [vmem:[%s230 + $0x30] sm:$0xff]
        %v336 = vld [vmem:[%s230 + $0x38] sm:$0xff]
        %v337 = vld [vmem:[%s230 + $0x40] sm:$0xff]
        %v338 = vld [vmem:[%s230 + $0x48] sm:$0xff]
        %v339 = vld [vmem:[%s230 + $0x50] sm:$0xff]
        %v340 = vld [vmem:[%s230 + $0x58] sm:$0xff]
        %v341 = vld [vmem:[%s230 + $0x60] sm:$0xff]
        %v342 = vld [vmem:[%s230 + $0x68] sm:$0xff]
        %v343 = vld [vmem:[%s230 + $0x70] sm:$0xff]
        %v344 = vld [vmem:[%s230 + $0x78] sm:$0xff]
        %v345 = vld [vmem:[%s230 + $0x80] sm:$0xff]
        %v346 = vld [vmem:[%s230 + $0x88] sm:$0xff]
        %v347 = vld [vmem:[%s230 + $0x90] sm:$0xff]
        %v348 = vld [vmem:[%s230 + $0x98] sm:$0xff]
        %v349 = vld [vmem:[%s230 + $0xa0] sm:$0xff]
        %v350 = vld [vmem:[%s230 + $0xa8] sm:$0xff]
        %v351 = vld [vmem:[%s230 + $0xb0] sm:$0xff]
        %v352 = vld [vmem:[%s230 + $0xb8] sm:$0xff]
        %v353 = vld [vmem:[%s230 + $0xc0] sm:$0xff]
        %v354 = vld [vmem:[%s230 + $0xc8] sm:$0xff]
        %v355 = vld [vmem:[%s230 + $0xd0] sm:$0xff]
        %v356 = vld [vmem:[%s230 + $0xd8] sm:$0xff]
        %v357 = vld [vmem:[%s230 + $0xe0] sm:$0xff]
        %v358 = vld [vmem:[%s230 + $0xe8] sm:$0xff]
        %v359 = vld [vmem:[%s230 + $0xf0] sm:$0xff]
        %v360 = vld [vmem:[%s230 + $0xf8] sm:$0xff]
        %v361 = vld [vmem:[%s230 + $0x100] sm:$0xff]
        %v362 = vld [vmem:[%s230 + $0x108] sm:$0xff]
        %v363 = vld [vmem:[%s230 + $0x110] sm:$0xff]
        %v364 = vld [vmem:[%s230 + $0x118] sm:$0xff]
        %v365 = vld [vmem:[%s230 + $0x120] sm:$0xff]
        %v366 = vld [vmem:[%s230 + $0x128] sm:$0xff]
        %v367 = vld [vmem:[%s230 + $0x130] sm:$0xff]
        %v368 = vld [vmem:[%s230 + $0x138] sm:$0xff]
        %v369 = vld [vmem:[%s230 + $0x140] sm:$0xff]
        %v370 = vld [vmem:[%s230 + $0x148] sm:$0xff]
        %v371 = vld [vmem:[%s230 + $0x150] sm:$0xff]
        %v372 = vld [vmem:[%s230 + $0x158] sm:$0xff]
        %v373 = vld [vmem:[%s230 + $0x160] sm:$0xff]
        %v374 = vld [vmem:[%s230 + $0x168] sm:$0xff]
        %v375 = vld [vmem:[%s230 + $0x170] sm:$0xff]
        %v376 = vld [vmem:[%s230 + $0x178] sm:$0xff]
        %v377 = vld [vmem:[%s230 + $0x180] sm:$0xff]
        %v378 = vld [vmem:[%s230 + $0x188] sm:$0xff]
        %v379 = vld [vmem:[%s230 + $0x190] sm:$0xff]
        %v380 = vld [vmem:[%s230 + $0x198] sm:$0xff]
        %v381 = vld [vmem:[%s230 + $0x1a0] sm:$0xff]
        %v382 = vld [vmem:[%s230 + $0x1a8] sm:$0xff]
        %v383 = vld [vmem:[%s230 + $0x1b0] sm:$0xff]
        %v384 = vld [vmem:[%s230 + $0x1b8] sm:$0xff]
        %v385 = vld [vmem:[%s230 + $0x1c0] sm:$0xff]
        %v386 = vld [vmem:[%s230 + $0x1c8] sm:$0xff]
        %v387 = vld [vmem:[%s230 + $0x1d0] sm:$0xff]
        %v388 = vld [vmem:[%s230 + $0x1d8] sm:$0xff]
        %v389 = vld [vmem:[%s230 + $0x1e0] sm:$0xff]
        %v390 = vld [vmem:[%s230 + $0x1e8] sm:$0xff]
        %v391 = vld [vmem:[%s230 + $0x1f0] sm:$0xff]
        %v392 = vld [vmem:[%s230 + $0x1f8] sm:$0xff]
        %v393 = vld [vmem:[%s230 + $0x200] sm:$0xff]
        %v394 = vld [vmem:[%s230 + $0x208] sm:$0xff]
        %v395 = vld [vmem:[%s230 + $0x210] sm:$0xff]
        %v396 = vld [vmem:[%s230 + $0x218] sm:$0xff]
        %v397 = vld [vmem:[%s230 + $0x220] sm:$0xff]
        %v398 = vld [vmem:[%s230 + $0x228] sm:$0xff]
        %v399 = vld [vmem:[%s230 + $0x230] sm:$0xff]
        %v400 = vld [vmem:[%s230 + $0x238] sm:$0xff]
        %v401 = vld [vmem:[%s230 + $0x240] sm:$0xff]
        %v402 = vld [vmem:[%s230 + $0x248] sm:$0xff]
        %v403 = vld [vmem:[%s230 + $0x250] sm:$0xff]
        %v404 = vld [vmem:[%s230 + $0x258] sm:$0xff]
        %v405 = vld [vmem:[%s230 + $0x260] sm:$0xff]
        %v406 = vld [vmem:[%s230 + $0x268] sm:$0xff]
        %v407 = vld [vmem:[%s230 + $0x270] sm:$0xff]
        %v408 = vld [vmem:[%s230 + $0x278] sm:$0xff]
        %v409 = vld [vmem:[%s230 + $0x280] sm:$0xff]
        %v410 = vld [vmem:[%s230 + $0x288] sm:$0xff]
        %v411 = vld [vmem:[%s230 + $0x290] sm:$0xff]
        %v412 = vld [vmem:[%s230 + $0x298] sm:$0xff]
        %v413 = vld [vmem:[%s230 + $0x2a0] sm:$0xff]
        %v414 = vld [vmem:[%s230 + $0x2a8] sm:$0xff]
        %v415 = vld [vmem:[%s230 + $0x2b0] sm:$0xff]
        %v416 = vld [vmem:[%s230 + $0x2b8] sm:$0xff]
        %v417 = vld [vmem:[%s230 + $0x2c0] sm:$0xff]
        %v418 = vld [vmem:[%s230 + $0x2c8] sm:$0xff]
        %v419 = vld [vmem:[%s230 + $0x2d0] sm:$0xff]
        %v420 = vld [vmem:[%s230 + $0x2d8] sm:$0xff]
        %v421 = vld [vmem:[%s230 + $0x2e0] sm:$0xff]
        %v422 = vld [vmem:[%s230 + $0x2e8] sm:$0xff]
        %v423 = vld [vmem:[%s230 + $0x2f0] sm:$0xff]
        %v424 = vld [vmem:[%s230 + $0x2f8] sm:$0xff]
        %v425 = vld [vmem:[%s230 + $0x300] sm:$0xff]
        %v426 = vld [vmem:[%s230 + $0x308] sm:$0xff]
        %v427 = vld [vmem:[%s230 + $0x310] sm:$0xff]
        %v428 = vld [vmem:[%s230 + $0x318] sm:$0xff]
        %v429 = vld [vmem:[%s230 + $0x320] sm:$0xff]
        %v430 = vld [vmem:[%s230 + $0x328] sm:$0xff]
        %v431 = vld [vmem:[%s230 + $0x330] sm:$0xff]
        %v432 = vld [vmem:[%s230 + $0x338] sm:$0xff]
        %v433 = vld [vmem:[%s230 + $0x340] sm:$0xff]
        %v434 = vld [vmem:[%s230 + $0x348] sm:$0xff]
        %v435 = vld [vmem:[%s230 + $0x350] sm:$0xff]
        %v436 = vld [vmem:[%s230 + $0x358] sm:$0xff]
        %v437 = vld [vmem:[%s230 + $0x360] sm:$0xff]
        %v438 = vld [vmem:[%s230 + $0x368] sm:$0xff]
        %v439 = vld [vmem:[%s230 + $0x370] sm:$0xff]
        %v440 = vld [vmem:[%s230 + $0x378] sm:$0xff]
        %v441 = vld [vmem:[%s230 + $0x380] sm:$0xff]
        %v442 = vld [vmem:[%s230 + $0x388] sm:$0xff]
        %v443 = vld [vmem:[%s230 + $0x390] sm:$0xff]
        %v444 = vld [vmem:[%s230 + $0x398] sm:$0xff]
        %v445 = vld [vmem:[%s230 + $0x3a0] sm:$0xff]
        %v446 = vld [vmem:[%s230 + $0x3a8] sm:$0xff]
        %v447 = vld [vmem:[%s230 + $0x3b0] sm:$0xff]
        %v448 = vld [vmem:[%s230 + $0x3b8] sm:$0xff]
        %v449 = vld [vmem:[%s230 + $0x3c0] sm:$0xff]
        %v450 = vld [vmem:[%s230 + $0x3c8] sm:$0xff]
        %v451 = vld [vmem:[%s230 + $0x3d0] sm:$0xff]
        %v452 = vld [vmem:[%s230 + $0x3d8] sm:$0xff]
        %v453 = vld [vmem:[%s230 + $0x3e0] sm:$0xff]
        %v454 = vld [vmem:[%s230 + $0x3e8] sm:$0xff]
        %v455 = vld [vmem:[%s230 + $0x3f0] sm:$0xff]
        %v456 = vld [vmem:[%s230 + $0x3f8] sm:$0xff]
        %v457 = vld [vmem:[%s230 + $0x400] sm:$0xff]
        %v458 = vld [vmem:[%s230 + $0x408] sm:$0xff]
        %v459 = vld [vmem:[%s230 + $0x410] sm:$0xff]
        %v460 = vld [vmem:[%s230 + $0x418] sm:$0xff]
        %v461 = vld [vmem:[%s230 + $0x420] sm:$0xff]
        %v462 = vld [vmem:[%s230 + $0x428] sm:$0xff]
        %v463 = vld [vmem:[%s230 + $0x430] sm:$0xff]
        %v464 = vld [vmem:[%s230 + $0x438] sm:$0xff]
        %v465 = vld [vmem:[%s230 + $0x440] sm:$0xff]
        %v466 = vld [vmem:[%s230 + $0x448] sm:$0xff]
        %v467 = vld [vmem:[%s230 + $0x450] sm:$0xff]
        %v468 = vld [vmem:[%s230 + $0x458] sm:$0xff]
        %v469 = vld [vmem:[%s230 + $0x460] sm:$0xff]
        %v470 = vld [vmem:[%s230 + $0x468] sm:$0xff]
        %v471 = vld [vmem:[%s230 + $0x470] sm:$0xff]
        %v472 = vld [vmem:[%s230 + $0x478] sm:$0xff]
        %v473 = vld [vmem:[%s230 + $0x480] sm:$0xff]
        %v474 = vld [vmem:[%s230 + $0x488] sm:$0xff]
        %v475 = vld [vmem:[%s230 + $0x490] sm:$0xff]
        %v476 = vld [vmem:[%s230 + $0x498] sm:$0xff]
        %v477 = vld [vmem:[%s230 + $0x4a0] sm:$0xff]
        %v478 = vld [vmem:[%s230 + $0x4a8] sm:$0xff]
        %v479 = vld [vmem:[%s230 + $0x4b0] sm:$0xff]
        %v480 = vld [vmem:[%s230 + $0x4b8] sm:$0xff]
        %v481 = vld [vmem:[%s230 + $0x4c0] sm:$0xff]
        %v482 = vld [vmem:[%s230 + $0x4c8] sm:$0xff]
        %v483 = vld [vmem:[%s230 + $0x4d0] sm:$0xff]
        %v484 = vld [vmem:[%s230 + $0x4d8] sm:$0xff]
        %v485 = vld [vmem:[%s230 + $0x4e0] sm:$0xff]
        %v486 = vld [vmem:[%s230 + $0x4e8] sm:$0xff]
        %v487 = vld [vmem:[%s230 + $0x4f0] sm:$0xff]
        %v488 = vld [vmem:[%s230 + $0x4f8] sm:$0xff]
        %v489 = vld [vmem:[%s230 + $0x500] sm:$0xff]
        %v490 = vld [vmem:[%s230 + $0x508] sm:$0xff]
        %v491 = vld [vmem:[%s230 + $0x510] sm:$0xff]
        %v492 = vld [vmem:[%s230 + $0x518] sm:$0xff]
        %v493 = vld [vmem:[%s230 + $0x520] sm:$0xff]
        %v494 = vld [vmem:[%s230 + $0x528] sm:$0xff]
        %v495 = vld [vmem:[%s230 + $0x530] sm:$0xff]
        %v496 = vld [vmem:[%s230 + $0x538] sm:$0xff]
        %v497 = vld [vmem:[%s230 + $0x540] sm:$0xff]
        %v498 = vld [vmem:[%s230 + $0x548] sm:$0xff]
        %v499 = vld [vmem:[%s230 + $0x550] sm:$0xff]
        %v500 = vld [vmem:[%s230 + $0x558] sm:$0xff]
        %v501 = vld [vmem:[%s230 + $0x560] sm:$0xff]
        %v502 = vld [vmem:[%s230 + $0x568] sm:$0xff]
        %v503 = vld [vmem:[%s230 + $0x570] sm:$0xff]
        %v504 = vld [vmem:[%s230 + $0x578] sm:$0xff]
        %v505 = vld [vmem:[%s230 + $0x580] sm:$0xff]
        %v506 = vld [vmem:[%s230 + $0x588] sm:$0xff]
        %v507 = vld [vmem:[%s230 + $0x590] sm:$0xff]
        %v508 = vld [vmem:[%s230 + $0x598] sm:$0xff]
        %v509 = vld [vmem:[%s230 + $0x5a0] sm:$0xff]
        %v510 = vld [vmem:[%s230 + $0x5a8] sm:$0xff]
        %v511 = vld [vmem:[%s230 + $0x5b0] sm:$0xff]
        %v512 = vld [vmem:[%s230 + $0x5b8] sm:$0xff]
        %v513 = vld [vmem:[%s230 + $0x5c0] sm:$0xff]
        %v514 = vld [vmem:[%s230 + $0x5c8] sm:$0xff]
        %v515 = vld [vmem:[%s230 + $0x5d0] sm:$0xff]
        %v516 = vld [vmem:[%s230 + $0x5d8] sm:$0xff]
        %v517 = vld [vmem:[%s230 + $0x5e0] sm:$0xff]
        %v518 = vld [vmem:[%s230 + $0x5e8] sm:$0xff]
        %v519 = vld [vmem:[%s230 + $0x5f0] sm:$0xff]
        %v520 = vld [vmem:[%s230 + $0x5f8] sm:$0xff]
        %v521 = vld [vmem:[%s230 + $0x600] sm:$0xff]
        %v522 = vld [vmem:[%s230 + $0x608] sm:$0xff]
        %v523 = vld [vmem:[%s230 + $0x610] sm:$0xff]
        %v524 = vld [vmem:[%s230 + $0x618] sm:$0xff]
        %v525 = vld [vmem:[%s230 + $0x620] sm:$0xff]
        %v526 = vld [vmem:[%s230 + $0x628] sm:$0xff]
        %v527 = vld [vmem:[%s230 + $0x630] sm:$0xff]
        %v528 = vld [vmem:[%s230 + $0x638] sm:$0xff]
        %v529 = vld [vmem:[%s230 + $0x640] sm:$0xff]
        %v530 = vld [vmem:[%s230 + $0x648] sm:$0xff]
        %v531 = vld [vmem:[%s230 + $0x650] sm:$0xff]
        %v532 = vld [vmem:[%s230 + $0x658] sm:$0xff]
        %v533 = vld [vmem:[%s230 + $0x660] sm:$0xff]
        %v534 = vld [vmem:[%s230 + $0x668] sm:$0xff]
        %v535 = vld [vmem:[%s230 + $0x670] sm:$0xff]
        %v536 = vld [vmem:[%s230 + $0x678] sm:$0xff]
        %v537 = vld [vmem:[%s230 + $0x680] sm:$0xff]
        %v538 = vld [vmem:[%s230 + $0x688] sm:$0xff]
        %v539 = vld [vmem:[%s230 + $0x690] sm:$0xff]
        %v540 = vld [vmem:[%s230 + $0x698] sm:$0xff]
        %v541 = vld [vmem:[%s230 + $0x6a0] sm:$0xff]
        %v542 = vld [vmem:[%s230 + $0x6a8] sm:$0xff]
        %v543 = vld [vmem:[%s230 + $0x6b0] sm:$0xff]
        %v544 = vld [vmem:[%s230 + $0x6b8] sm:$0xff]
        %v545 = vld [vmem:[%s230 + $0x6c0] sm:$0xff]
        %v546 = vld [vmem:[%s230 + $0x6c8] sm:$0xff]
        %v547 = vld [vmem:[%s230 + $0x6d0] sm:$0xff]
        %v548 = vld [vmem:[%s230 + $0x6d8] sm:$0xff]
        %v549 = vld [vmem:[%s230 + $0x6e0] sm:$0xff]
        %v550 = vld [vmem:[%s230 + $0x6e8] sm:$0xff]
        %v551 = vld [vmem:[%s230 + $0x6f0] sm:$0xff]
        %v552 = vld [vmem:[%s230 + $0x6f8] sm:$0xff]
        %v553 = vld [vmem:[%s230 + $0x700] sm:$0xff]
        %v554 = vld [vmem:[%s230 + $0x708] sm:$0xff]
        %v555 = vld [vmem:[%s230 + $0x710] sm:$0xff]
        %v556 = vld [vmem:[%s230 + $0x718] sm:$0xff]
        %v557 = vld [vmem:[%s230 + $0x720] sm:$0xff]
        %v558 = vld [vmem:[%s230 + $0x728] sm:$0xff]
        %v559 = vld [vmem:[%s230 + $0x730] sm:$0xff]
        %v560 = vld [vmem:[%s230 + $0x738] sm:$0xff]
        %v561 = vld [vmem:[%s230 + $0x740] sm:$0xff]
        %v562 = vld [vmem:[%s230 + $0x748] sm:$0xff]
        %v563 = vld [vmem:[%s230 + $0x750] sm:$0xff]
        %v564 = vld [vmem:[%s230 + $0x758] sm:$0xff]
        %v565 = vld [vmem:[%s230 + $0x760] sm:$0xff]
        %v566 = vld [vmem:[%s230 + $0x768] sm:$0xff]
        %v567 = vld [vmem:[%s230 + $0x770] sm:$0xff]
        %v568 = vld [vmem:[%s230 + $0x778] sm:$0xff]
        %v569 = vld [vmem:[%s230 + $0x780] sm:$0xff]
        %v570 = vld [vmem:[%s230 + $0x788] sm:$0xff]
        %v571 = vld [vmem:[%s230 + $0x790] sm:$0xff]
        %v572 = vld [vmem:[%s230 + $0x798] sm:$0xff]
        %v573 = vld [vmem:[%s230 + $0x7a0] sm:$0xff]
        %v574 = vld [vmem:[%s230 + $0x7a8] sm:$0xff]
        %v575 = vld [vmem:[%s230 + $0x7b0] sm:$0xff]
        %v576 = vld [vmem:[%s230 + $0x7b8] sm:$0xff]
        %v577 = vld [vmem:[%s230 + $0x7c0] sm:$0xff]
        %v578 = vld [vmem:[%s230 + $0x7c8] sm:$0xff]
        %v579 = vld [vmem:[%s230 + $0x7d0] sm:$0xff]
        %v580 = vld [vmem:[%s230 + $0x7d8] sm:$0xff]
        %v581 = vld [vmem:[%s230 + $0x7e0] sm:$0xff]
        %v582 = vld [vmem:[%s230 + $0x7e8] sm:$0xff]
        %v583 = vld [vmem:[%s230 + $0x7f0] sm:$0xff]
        %v584 = vld [vmem:[%s230 + $0x7f8] sm:$0xff]
        %v585 = vld [vmem:[%s230 + $0x800] sm:$0xff]
        %v586 = vld [vmem:[%s230 + $0x808] sm:$0xff]
        %v587 = vld [vmem:[%s230 + $0x810] sm:$0xff]
        %v588 = vld [vmem:[%s230 + $0x818] sm:$0xff]
        %v589 = vld [vmem:[%s230 + $0x820] sm:$0xff]
        %v590 = vld [vmem:[%s230 + $0x828] sm:$0xff]
        %v591 = vld [vmem:[%s230 + $0x830] sm:$0xff]
        %v592 = vld [vmem:[%s230 + $0x838] sm:$0xff]
        %v593 = vld [vmem:[%s230 + $0x840] sm:$0xff]
        %v594 = vld [vmem:[%s230 + $0x848] sm:$0xff]
        %v595 = vld [vmem:[%s230 + $0x850] sm:$0xff]
        %v596 = vld [vmem:[%s230 + $0x858] sm:$0xff]
        %v597 = vld [vmem:[%s230 + $0x860] sm:$0xff]
        %v598 = vld [vmem:[%s230 + $0x868] sm:$0xff]
        %v599 = vld [vmem:[%s230 + $0x870] sm:$0xff]
        %v600 = vld [vmem:[%s230 + $0x878] sm:$0xff]
        %v601 = vld [vmem:[%s230 + $0x880] sm:$0xff]
        %v602 = vld [vmem:[%s230 + $0x888] sm:$0xff]
        %v603 = vld [vmem:[%s230 + $0x890] sm:$0xff]
        %v604 = vld [vmem:[%s230 + $0x898] sm:$0xff]
        %v605 = vld [vmem:[%s230 + $0x8a0] sm:$0xff]
        %v606 = vld [vmem:[%s230 + $0x8a8] sm:$0xff]
        %v607 = vld [vmem:[%s230 + $0x8b0] sm:$0xff]
        %v608 = vld [vmem:[%s230 + $0x8b8] sm:$0xff]
        %v609 = vld [vmem:[%s230 + $0x8c0] sm:$0xff]
        %v610 = vld [vmem:[%s230 + $0x8c8] sm:$0xff]
        %v611 = vld [vmem:[%s230 + $0x8d0] sm:$0xff]
        %v612 = vld [vmem:[%s230 + $0x8d8] sm:$0xff]
        %v613 = vld [vmem:[%s230 + $0x8e0] sm:$0xff]
        %v614 = vld [vmem:[%s230 + $0x8e8] sm:$0xff]
        %v615 = vld [vmem:[%s230 + $0x8f0] sm:$0xff]
        %v616 = vld [vmem:[%s230 + $0x8f8] sm:$0xff]
        %v617 = vld [vmem:[%s230 + $0x900] sm:$0xff]
        %v618 = vld [vmem:[%s230 + $0x908] sm:$0xff]
        %v619 = vld [vmem:[%s230 + $0x910] sm:$0xff]
        %v620 = vld [vmem:[%s230 + $0x918] sm:$0xff]
        %v621 = vld [vmem:[%s230 + $0x920] sm:$0xff]
        %v622 = vld [vmem:[%s230 + $0x928] sm:$0xff]
        %v623 = vld [vmem:[%s230 + $0x930] sm:$0xff]
        %v624 = vld [vmem:[%s230 + $0x938] sm:$0xff]
        %v625 = vld [vmem:[%s230 + $0x940] sm:$0xff]
        %v626 = vld [vmem:[%s230 + $0x948] sm:$0xff]
        %v627 = vld [vmem:[%s230 + $0x950] sm:$0xff]
        %v628 = vld [vmem:[%s230 + $0x958] sm:$0xff]
        %v629 = vld [vmem:[%s230 + $0x960] sm:$0xff]
        %v630 = vld [vmem:[%s230 + $0x968] sm:$0xff]
        %v631 = vld [vmem:[%s230 + $0x970] sm:$0xff]
        %v632 = vld [vmem:[%s230 + $0x978] sm:$0xff]
        %v633 = vld [vmem:[%s230 + $0x980] sm:$0xff]
        %v634 = vld [vmem:[%s230 + $0x988] sm:$0xff]
        %v635 = vld [vmem:[%s230 + $0x990] sm:$0xff]
        %v636 = vld [vmem:[%s230 + $0x998] sm:$0xff]
        %v637 = vld [vmem:[%s230 + $0x9a0] sm:$0xff]
        %v638 = vld [vmem:[%s230 + $0x9a8] sm:$0xff]
        %v639 = vld [vmem:[%s230 + $0x9b0] sm:$0xff]
        %v640 = vld [vmem:[%s230 + $0x9b8] sm:$0xff]
        %v641 = vld [vmem:[%s230 + $0x9c0] sm:$0xff]
        %v642 = vld [vmem:[%s230 + $0x9c8] sm:$0xff]
        %v643 = vld [vmem:[%s230 + $0x9d0] sm:$0xff]
        %v644 = vld [vmem:[%s230 + $0x9d8] sm:$0xff]
        %v645 = vld [vmem:[%s230 + $0x9e0] sm:$0xff]
        %v646 = vld [vmem:[%s230 + $0x9e8] sm:$0xff]
        %v647 = vld [vmem:[%s230 + $0x9f0] sm:$0xff]
        %v648 = vld [vmem:[%s230 + $0x9f8] sm:$0xff]
        %v649 = vld [vmem:[%s230 + $0xa00] sm:$0xff]
        %v650 = vld [vmem:[%s230 + $0xa08] sm:$0xff]
        %v651 = vld [vmem:[%s230 + $0xa10] sm:$0xff]
        %v652 = vld [vmem:[%s230 + $0xa18] sm:$0xff]
        %v653 = vld [vmem:[%s230 + $0xa20] sm:$0xff]
        %v654 = vld [vmem:[%s230 + $0xa28] sm:$0xff]
        %v655 = vld [vmem:[%s230 + $0xa30] sm:$0xff]
        %v656 = vld [vmem:[%s230 + $0xa38] sm:$0xff]
        %v657 = vld [vmem:[%s230 + $0xa40] sm:$0xff]
        %v658 = vld [vmem:[%s230 + $0xa48] sm:$0xff]
        %v659 = vld [vmem:[%s230 + $0xa50] sm:$0xff]
        %v660 = vld [vmem:[%s230 + $0xa58] sm:$0xff]
        %v661 = vld [vmem:[%s230 + $0xa60] sm:$0xff]
        %v662 = vld [vmem:[%s230 + $0xa68] sm:$0xff]
        %v663 = vld [vmem:[%s230 + $0xa70] sm:$0xff]
        %v664 = vld [vmem:[%s230 + $0xa78] sm:$0xff]
        %v665 = vld [vmem:[%s230 + $0xa80] sm:$0xff]
        %v666 = vld [vmem:[%s230 + $0xa88] sm:$0xff]
        %v667 = vld [vmem:[%s230 + $0xa90] sm:$0xff]
        %v668 = vld [vmem:[%s230 + $0xa98] sm:$0xff]
        %v669 = vld [vmem:[%s230 + $0xaa0] sm:$0xff]
        %v670 = vld [vmem:[%s230 + $0xaa8] sm:$0xff]
        %v671 = vld [vmem:[%s230 + $0xab0] sm:$0xff]
        %v672 = vld [vmem:[%s230 + $0xab8] sm:$0xff]
        %v673 = vld [vmem:[%s230 + $0xac0] sm:$0xff]
        %v674 = vld [vmem:[%s230 + $0xac8] sm:$0xff]
        %v675 = vld [vmem:[%s230 + $0xad0] sm:$0xff]
        %v676 = vld [vmem:[%s230 + $0xad8] sm:$0xff]
        %v677 = vld [vmem:[%s230 + $0xae0] sm:$0xff]
        %v678 = vld [vmem:[%s230 + $0xae8] sm:$0xff]
        %v679 = vld [vmem:[%s230 + $0xaf0] sm:$0xff]
        %v680 = vld [vmem:[%s230 + $0xaf8] sm:$0xff]
        %v681 = vld [vmem:[%s230 + $0xb00] sm:$0xff]
        %v682 = vld [vmem:[%s230 + $0xb08] sm:$0xff]
        %v683 = vld [vmem:[%s230 + $0xb10] sm:$0xff]
        %v684 = vld [vmem:[%s230 + $0xb18] sm:$0xff]
        %v685 = vld [vmem:[%s230 + $0xb20] sm:$0xff]
        %v686 = vld [vmem:[%s230 + $0xb28] sm:$0xff]
        %v687 = vld [vmem:[%s230 + $0xb30] sm:$0xff]
        %v688 = vld [vmem:[%s230 + $0xb38] sm:$0xff]
        %v689 = vld [vmem:[%s230 + $0xb40] sm:$0xff]
        %v690 = vld [vmem:[%s230 + $0xb48] sm:$0xff]
        %v691 = vld [vmem:[%s230 + $0xb50] sm:$0xff]
        %v692 = vld [vmem:[%s230 + $0xb58] sm:$0xff]
        %v693 = vld [vmem:[%s230 + $0xb60] sm:$0xff]
        %v694 = vld [vmem:[%s230 + $0xb68] sm:$0xff]
        %v695 = vld [vmem:[%s230 + $0xb70] sm:$0xff]
        %v696 = vld [vmem:[%s230 + $0xb78] sm:$0xff]
        %v697 = vld [vmem:[%s230 + $0xb80] sm:$0xff]
        %v698 = vld [vmem:[%s230 + $0xb88] sm:$0xff]
        %v699 = vld [vmem:[%s230 + $0xb90] sm:$0xff]
        %v700 = vld [vmem:[%s230 + $0xb98] sm:$0xff]
        %v701 = vld [vmem:[%s230 + $0xba0] sm:$0xff]
        %v702 = vld [vmem:[%s230 + $0xba8] sm:$0xff]
        %v703 = vld [vmem:[%s230 + $0xbb0] sm:$0xff]
        %v704 = vld [vmem:[%s230 + $0xbb8] sm:$0xff]
        %v705 = vld [vmem:[%s230 + $0xbc0] sm:$0xff]
        %v706 = vld [vmem:[%s230 + $0xbc8] sm:$0xff]
        %v707 = vld [vmem:[%s230 + $0xbd0] sm:$0xff]
        %v708 = vld [vmem:[%s230 + $0xbd8] sm:$0xff]
        %v709 = vld [vmem:[%s230 + $0xbe0] sm:$0xff]
        %v710 = vld [vmem:[%s230 + $0xbe8] sm:$0xff]
        %v711 = vld [vmem:[%s230 + $0xbf0] sm:$0xff]
        %v712 = vld [vmem:[%s230 + $0xbf8] sm:$0xff]
        %v713 = vld [vmem:[%s230 + $0xc00] sm:$0xff]
        %v714 = vld [vmem:[%s230 + $0xc08] sm:$0xff]
        %v715 = vld [vmem:[%s230 + $0xc10] sm:$0xff]
        %v716 = vld [vmem:[%s230 + $0xc18] sm:$0xff]
        %v717 = vld [vmem:[%s230 + $0xc20] sm:$0xff]
        %v718 = vld [vmem:[%s230 + $0xc28] sm:$0xff]
        %v719 = vld [vmem:[%s230 + $0xc30] sm:$0xff]
        %v720 = vld [vmem:[%s230 + $0xc38] sm:$0xff]
        %v721 = vld [vmem:[%s230 + $0xc40] sm:$0xff]
        %v722 = vld [vmem:[%s230 + $0xc48] sm:$0xff]
        %v723 = vld [vmem:[%s230 + $0xc50] sm:$0xff]
        %v724 = vld [vmem:[%s230 + $0xc58] sm:$0xff]
        %v725 = vld [vmem:[%s230 + $0xc60] sm:$0xff]
        %v726 = vld [vmem:[%s230 + $0xc68] sm:$0xff]
        %v727 = vld [vmem:[%s230 + $0xc70] sm:$0xff]
        %v728 = vld [vmem:[%s230 + $0xc78] sm:$0xff]
        %v729 = vld [vmem:[%s230 + $0xc80] sm:$0xff]
        %v730 = vld [vmem:[%s230 + $0xc88] sm:$0xff]
        %v731 = vld [vmem:[%s230 + $0xc90] sm:$0xff]
        %v732 = vld [vmem:[%s230 + $0xc98] sm:$0xff]
        %v733 = vld [vmem:[%s230 + $0xca0] sm:$0xff]
        %v734 = vld [vmem:[%s230 + $0xca8] sm:$0xff]
        %v735 = vld [vmem:[%s230 + $0xcb0] sm:$0xff]
        %v736 = vld [vmem:[%s230 + $0xcb8] sm:$0xff]
        %v737 = vld [vmem:[%s230 + $0xcc0] sm:$0xff]
        %v738 = vld [vmem:[%s230 + $0xcc8] sm:$0xff]
        %v739 = vld [vmem:[%s230 + $0xcd0] sm:$0xff]
        %v740 = vld [vmem:[%s230 + $0xcd8] sm:$0xff]
        %v741 = vld [vmem:[%s230 + $0xce0] sm:$0xff]
        %v742 = vld [vmem:[%s230 + $0xce8] sm:$0xff]
        %v743 = vld [vmem:[%s230 + $0xcf0] sm:$0xff]
        %v744 = vld [vmem:[%s230 + $0xcf8] sm:$0xff]
        %v745 = vld [vmem:[%s230 + $0xd00] sm:$0xff]
        %v746 = vld [vmem:[%s230 + $0xd08] sm:$0xff]
        %v747 = vld [vmem:[%s230 + $0xd10] sm:$0xff]
        %v748 = vld [vmem:[%s230 + $0xd18] sm:$0xff]
        %v749 = vld [vmem:[%s230 + $0xd20] sm:$0xff]
        %v750 = vld [vmem:[%s230 + $0xd28] sm:$0xff]
        %v751 = vld [vmem:[%s230 + $0xd30] sm:$0xff]
        %v752 = vld [vmem:[%s230 + $0xd38] sm:$0xff]
        %v753 = vld [vmem:[%s230 + $0xd40] sm:$0xff]
        %v754 = vld [vmem:[%s230 + $0xd48] sm:$0xff]
        %v755 = vld [vmem:[%s230 + $0xd50] sm:$0xff]
        %v756 = vld [vmem:[%s230 + $0xd58] sm:$0xff]
        %v757 = vld [vmem:[%s230 + $0xd60] sm:$0xff]
        %v758 = vld [vmem:[%s230 + $0xd68] sm:$0xff]
        %v759 = vld [vmem:[%s230 + $0xd70] sm:$0xff]
        %v760 = vld [vmem:[%s230 + $0xd78] sm:$0xff]
        %v761 = vld [vmem:[%s230 + $0xd80] sm:$0xff]
        %v762 = vld [vmem:[%s230 + $0xd88] sm:$0xff]
        %v763 = vld [vmem:[%s230 + $0xd90] sm:$0xff]
        %v764 = vld [vmem:[%s230 + $0xd98] sm:$0xff]
        %v765 = vld [vmem:[%s230 + $0xda0] sm:$0xff]
        %v766 = vld [vmem:[%s230 + $0xda8] sm:$0xff]
        %v767 = vld [vmem:[%s230 + $0xdb0] sm:$0xff]
        %v768 = vld [vmem:[%s230 + $0xdb8] sm:$0xff]
        %v769 = vld [vmem:[%s230 + $0xdc0] sm:$0xff]
        %v770 = vld [vmem:[%s230 + $0xdc8] sm:$0xff]
        %v771 = vld [vmem:[%s230 + $0xdd0] sm:$0xff]
        %v772 = vld [vmem:[%s230 + $0xdd8] sm:$0xff]
        %v773 = vld [vmem:[%s230 + $0xde0] sm:$0xff]
        %v774 = vld [vmem:[%s230 + $0xde8] sm:$0xff]
        %v775 = vld [vmem:[%s230 + $0xdf0] sm:$0xff]
        %v776 = vld [vmem:[%s230 + $0xdf8] sm:$0xff]
        %v777 = vld [vmem:[%s230 + $0xe00] sm:$0xff]
        %v778 = vld [vmem:[%s230 + $0xe08] sm:$0xff]
        %v779 = vld [vmem:[%s230 + $0xe10] sm:$0xff]
        %v780 = vld [vmem:[%s230 + $0xe18] sm:$0xff]
        %v781 = vld [vmem:[%s230 + $0xe20] sm:$0xff]
        %v782 = vld [vmem:[%s230 + $0xe28] sm:$0xff]
        %v783 = vld [vmem:[%s230 + $0xe30] sm:$0xff]
        %v784 = vld [vmem:[%s230 + $0xe38] sm:$0xff]
        %v785 = vld [vmem:[%s230 + $0xe40] sm:$0xff]
        %v786 = vld [vmem:[%s230 + $0xe48] sm:$0xff]
        %v787 = vld [vmem:[%s230 + $0xe50] sm:$0xff]
        %v788 = vld [vmem:[%s230 + $0xe58] sm:$0xff]
        %v789 = vld [vmem:[%s230 + $0xe60] sm:$0xff]
        %v790 = vld [vmem:[%s230 + $0xe68] sm:$0xff]
        %v791 = vld [vmem:[%s230 + $0xe70] sm:$0xff]
        %v792 = vld [vmem:[%s230 + $0xe78] sm:$0xff]
        %v793 = vld [vmem:[%s230 + $0xe80] sm:$0xff]
        %v794 = vld [vmem:[%s230 + $0xe88] sm:$0xff]
        %v795 = vld [vmem:[%s230 + $0xe90] sm:$0xff]
        %v796 = vld [vmem:[%s230 + $0xe98] sm:$0xff]
        %v797 = vld [vmem:[%s230 + $0xea0] sm:$0xff]
        %v798 = vld [vmem:[%s230 + $0xea8] sm:$0xff]
        %v799 = vld [vmem:[%s230 + $0xeb0] sm:$0xff]
        %v800 = vld [vmem:[%s230 + $0xeb8] sm:$0xff]
        %v801 = vld [vmem:[%s230 + $0xec0] sm:$0xff]
        %v802 = vld [vmem:[%s230 + $0xec8] sm:$0xff]
        %v803 = vld [vmem:[%s230 + $0xed0] sm:$0xff]
        %v804 = vld [vmem:[%s230 + $0xed8] sm:$0xff]
        %v805 = vld [vmem:[%s230 + $0xee0] sm:$0xff]
        %v806 = vld [vmem:[%s230 + $0xee8] sm:$0xff]
        %v807 = vld [vmem:[%s230 + $0xef0] sm:$0xff]
        %v808 = vld [vmem:[%s230 + $0xef8] sm:$0xff]
        %v809 = vld [vmem:[%s230 + $0xf00] sm:$0xff]
        %v810 = vld [vmem:[%s230 + $0xf08] sm:$0xff]
        %v811 = vld [vmem:[%s230 + $0xf10] sm:$0xff]
        %v812 = vld [vmem:[%s230 + $0xf18] sm:$0xff]
        %v813 = vld [vmem:[%s230 + $0xf20] sm:$0xff]
        %v814 = vld [vmem:[%s230 + $0xf28] sm:$0xff]
        %v815 = vld [vmem:[%s230 + $0xf30] sm:$0xff]
        %v816 = vld [vmem:[%s230 + $0xf38] sm:$0xff]
        %v817 = vld [vmem:[%s230 + $0xf40] sm:$0xff]
        %v818 = vld [vmem:[%s230 + $0xf48] sm:$0xff]
        %v819 = vld [vmem:[%s230 + $0xf50] sm:$0xff]
        %v820 = vld [vmem:[%s230 + $0xf58] sm:$0xff]
        %v821 = vld [vmem:[%s230 + $0xf60] sm:$0xff]
        %v822 = vld [vmem:[%s230 + $0xf68] sm:$0xff]
        %v823 = vld [vmem:[%s230 + $0xf70] sm:$0xff]
        %v824 = vld [vmem:[%s230 + $0xf78] sm:$0xff]
        %v825 = vld [vmem:[%s230 + $0xf80] sm:$0xff]
        %v826 = vld [vmem:[%s230 + $0xf88] sm:$0xff]
        %v827 = vld [vmem:[%s230 + $0xf90] sm:$0xff]
        %v828 = vld [vmem:[%s230 + $0xf98] sm:$0xff]
        %v829 = vld [vmem:[%s230 + $0xfa0] sm:$0xff]
        %v830 = vld [vmem:[%s230 + $0xfa8] sm:$0xff]
        %v831 = vld [vmem:[%s230 + $0xfb0] sm:$0xff]
        %v832 = vld [vmem:[%s230 + $0xfb8] sm:$0xff]
        %v833 = vld [vmem:[%s230 + $0xfc0] sm:$0xff]
        %v834 = vld [vmem:[%s230 + $0xfc8] sm:$0xff]
        %v835 = vld [vmem:[%s230 + $0xfd0] sm:$0xff]
        %v836 = vld [vmem:[%s230 + $0xfd8] sm:$0xff]
        %v837 = vld [vmem:[%s230 + $0xfe0] sm:$0xff]
        %v838 = vld [vmem:[%s230 + $0xfe8] sm:$0xff]
        %v839 = vld [vmem:[%s230 + $0xff0] sm:$0xff]
        %v840 = vld [vmem:[%s230 + $0xff8] sm:$0xff]
        %v841 = vld [vmem:[%s230 + $0x1000] sm:$0xff]
        %v842 = vld [vmem:[%s230 + $0x1008] sm:$0xff]
        %v843 = vld [vmem:[%s230 + $0x1010] sm:$0xff]
        %v844 = vld [vmem:[%s230 + $0x1018] sm:$0xff]
        %v845 = vld [vmem:[%s230 + $0x1020] sm:$0xff]
        %v846 = vld [vmem:[%s230 + $0x1028] sm:$0xff]
        %v847 = vld [vmem:[%s230 + $0x1030] sm:$0xff]
        %v848 = vld [vmem:[%s230 + $0x1038] sm:$0xff]
        %v849 = vld [vmem:[%s230 + $0x1040] sm:$0xff]
        %v850 = vld [vmem:[%s230 + $0x1048] sm:$0xff]
        %v851 = vld [vmem:[%s230 + $0x1050] sm:$0xff]
        %v852 = vld [vmem:[%s230 + $0x1058] sm:$0xff]
        %v853 = vld [vmem:[%s230 + $0x1060] sm:$0xff]
        %v854 = vld [vmem:[%s230 + $0x1068] sm:$0xff]
        %v855 = vld [vmem:[%s230 + $0x1070] sm:$0xff]
        %v856 = vld [vmem:[%s230 + $0x1078] sm:$0xff]
        %v857 = vld [vmem:[%s230 + $0x1080] sm:$0xff]
        %v858 = vld [vmem:[%s230 + $0x1088] sm:$0xff]
        %v859 = vld [vmem:[%s230 + $0x1090] sm:$0xff]
        %v860 = vld [vmem:[%s230 + $0x1098] sm:$0xff]
        %v861 = vld [vmem:[%s230 + $0x10a0] sm:$0xff]
        %v862 = vld [vmem:[%s230 + $0x10a8] sm:$0xff]
        %v863 = vld [vmem:[%s230 + $0x10b0] sm:$0xff]
        %v864 = vld [vmem:[%s230 + $0x10b8] sm:$0xff]
        %v865 = vld [vmem:[%s230 + $0x10c0] sm:$0xff]
        %v866 = vld [vmem:[%s230 + $0x10c8] sm:$0xff]
        %v867 = vld [vmem:[%s230 + $0x10d0] sm:$0xff]
        %v868 = vld [vmem:[%s230 + $0x10d8] sm:$0xff]
        %v869 = vld [vmem:[%s230 + $0x10e0] sm:$0xff]
        %v870 = vld [vmem:[%s230 + $0x10e8] sm:$0xff]
        %v871 = vld [vmem:[%s230 + $0x10f0] sm:$0xff]
        %v872 = vld [vmem:[%s230 + $0x10f8] sm:$0xff]
        %v873 = vld [vmem:[%s230 + $0x1100] sm:$0xff]
        %v874 = vld [vmem:[%s230 + $0x1108] sm:$0xff]
        %v875 = vld [vmem:[%s230 + $0x1110] sm:$0xff]
        %v876 = vld [vmem:[%s230 + $0x1118] sm:$0xff]
        %v877 = vld [vmem:[%s230 + $0x1120] sm:$0xff]
        %v878 = vld [vmem:[%s230 + $0x1128] sm:$0xff]
        %v879 = vld [vmem:[%s230 + $0x1130] sm:$0xff]
        %v880 = vld [vmem:[%s230 + $0x1138] sm:$0xff]
        %v881 = vld [vmem:[%s230 + $0x1140] sm:$0xff]
        %v882 = vld [vmem:[%s230 + $0x1148] sm:$0xff]
        %v883 = vld [vmem:[%s230 + $0x1150] sm:$0xff]
        %v884 = vld [vmem:[%s230 + $0x1158] sm:$0xff]
        %v885 = vld [vmem:[%s230 + $0x1160] sm:$0xff]
        %v886 = vld [vmem:[%s230 + $0x1168] sm:$0xff]
        %v887 = vld [vmem:[%s230 + $0x1170] sm:$0xff]
        %v888 = vld [vmem:[%s230 + $0x1178] sm:$0xff]
        %v889 = vld [vmem:[%s230 + $0x1180] sm:$0xff]
        %v890 = vld [vmem:[%s230 + $0x1188] sm:$0xff]
        %v891 = vld [vmem:[%s230 + $0x1190] sm:$0xff]
        %v892 = vld [vmem:[%s230 + $0x1198] sm:$0xff]
        %v893 = vld [vmem:[%s230 + $0x11a0] sm:$0xff]
        %v894 = vld [vmem:[%s230 + $0x11a8] sm:$0xff]
        %v895 = vld [vmem:[%s230 + $0x11b0] sm:$0xff]
        %v896 = vld [vmem:[%s230 + $0x11b8] sm:$0xff]
        %v897 = vld [vmem:[%s230 + $0x11c0] sm:$0xff]
        %v898 = vld [vmem:[%s230 + $0x11c8] sm:$0xff]
        %v899 = vld [vmem:[%s230 + $0x11d0] sm:$0xff]
        %v900 = vld [vmem:[%s230 + $0x11d8] sm:$0xff]
        %v901 = vld [vmem:[%s230 + $0x11e0] sm:$0xff]
        %v902 = vld [vmem:[%s230 + $0x11e8] sm:$0xff]
        %v903 = vld [vmem:[%s230 + $0x11f0] sm:$0xff]
        %v904 = vld [vmem:[%s230 + $0x11f8] sm:$0xff]
        %v905 = vld [vmem:[%s230 + $0x1200] sm:$0xff]
        %v906 = vld [vmem:[%s230 + $0x1208] sm:$0xff]
        %v907 = vld [vmem:[%s230 + $0x1210] sm:$0xff]
        %v908 = vld [vmem:[%s230 + $0x1218] sm:$0xff]
        %v909 = vld [vmem:[%s230 + $0x1220] sm:$0xff]
        %v910 = vld [vmem:[%s230 + $0x1228] sm:$0xff]
        %v911 = vld [vmem:[%s230 + $0x1230] sm:$0xff]
        %v912 = vld [vmem:[%s230 + $0x1238] sm:$0xff]
        %v913 = vld [vmem:[%s230 + $0x1240] sm:$0xff]
        %v914 = vld [vmem:[%s230 + $0x1248] sm:$0xff]
        %v915 = vld [vmem:[%s230 + $0x1250] sm:$0xff]
        %v916 = vld [vmem:[%s230 + $0x1258] sm:$0xff]
        %v917 = vld [vmem:[%s230 + $0x1260] sm:$0xff]
        %v918 = vld [vmem:[%s230 + $0x1268] sm:$0xff]
        %v919 = vld [vmem:[%s230 + $0x1270] sm:$0xff]
        %v920 = vld [vmem:[%s230 + $0x1278] sm:$0xff]
        %v921 = vld [vmem:[%s230 + $0x1280] sm:$0xff]
        %v922 = vld [vmem:[%s230 + $0x1288] sm:$0xff]
        %v923 = vld [vmem:[%s230 + $0x1290] sm:$0xff]
        %v924 = vld [vmem:[%s230 + $0x1298] sm:$0xff]
        %v925 = vld [vmem:[%s230 + $0x12a0] sm:$0xff]
        %v926 = vld [vmem:[%s230 + $0x12a8] sm:$0xff]
        %v927 = vld [vmem:[%s230 + $0x12b0] sm:$0xff]
        %v928 = vld [vmem:[%s230 + $0x12b8] sm:$0xff]
        %v929 = vld [vmem:[%s230 + $0x12c0] sm:$0xff]
        %v930 = vld [vmem:[%s230 + $0x12c8] sm:$0xff]
        %v931 = vld [vmem:[%s230 + $0x12d0] sm:$0xff]
        %v932 = vld [vmem:[%s230 + $0x12d8] sm:$0xff]
        %v933 = vld [vmem:[%s230 + $0x12e0] sm:$0xff]
        %v934 = vld [vmem:[%s230 + $0x12e8] sm:$0xff]
        %v935 = vld [vmem:[%s230 + $0x12f0] sm:$0xff]
        %v936 = vld [vmem:[%s230 + $0x12f8] sm:$0xff]
        %v937 = vld [vmem:[%s230 + $0x1300] sm:$0xff]
        %v938 = vld [vmem:[%s230 + $0x1308] sm:$0xff]
        %v939 = vld [vmem:[%s230 + $0x1310] sm:$0xff]
        %v940 = vld [vmem:[%s230 + $0x1318] sm:$0xff]
        %v941 = vld [vmem:[%s230 + $0x1320] sm:$0xff]
        %v942 = vld [vmem:[%s230 + $0x1328] sm:$0xff]
        %v943 = vld [vmem:[%s230 + $0x1330] sm:$0xff]
        %v944 = vld [vmem:[%s230 + $0x1338] sm:$0xff]
        %v945 = vld [vmem:[%s230 + $0x1340] sm:$0xff]
        %v946 = vld [vmem:[%s230 + $0x1348] sm:$0xff]
        %v947 = vld [vmem:[%s230 + $0x1350] sm:$0xff]
        %v948 = vld [vmem:[%s230 + $0x1358] sm:$0xff]
        %v949 = vld [vmem:[%s230 + $0x1360] sm:$0xff]
        %v950 = vld [vmem:[%s230 + $0x1368] sm:$0xff]
        %v951 = vld [vmem:[%s230 + $0x1370] sm:$0xff]
        %v952 = vld [vmem:[%s230 + $0x1378] sm:$0xff]
        %v953 = vld [vmem:[%s230 + $0x1380] sm:$0xff]
        %v954 = vld [vmem:[%s230 + $0x1388] sm:$0xff]
        %v955 = vld [vmem:[%s230 + $0x1390] sm:$0xff]
        %v956 = vld [vmem:[%s230 + $0x1398] sm:$0xff]
        %v957 = vld [vmem:[%s230 + $0x13a0] sm:$0xff]
        %v958 = vld [vmem:[%s230 + $0x13a8] sm:$0xff]
        %v959 = vld [vmem:[%s230 + $0x13b0] sm:$0xff]
        %v960 = vld [vmem:[%s230 + $0x13b8] sm:$0xff]
        %v961 = vld [vmem:[%s230 + $0x13c0] sm:$0xff]
        %v962 = vld [vmem:[%s230 + $0x13c8] sm:$0xff]
        %v963 = vld [vmem:[%s230 + $0x13d0] sm:$0xff]
        %v964 = vld [vmem:[%s230 + $0x13d8] sm:$0xff]
        %v965 = vld [vmem:[%s230 + $0x13e0] sm:$0xff]
        %v966 = vld [vmem:[%s230 + $0x13e8] sm:$0xff]
        %v967 = vld [vmem:[%s230 + $0x13f0] sm:$0xff]
        %v968 = vld [vmem:[%s230 + $0x13f8] sm:$0xff]
        %v969 = vld [vmem:[%s230 + $0x1400] sm:$0xff]
        %v970 = vld [vmem:[%s230 + $0x1408] sm:$0xff]
        %v971 = vld [vmem:[%s230 + $0x1410] sm:$0xff]
        %v972 = vld [vmem:[%s230 + $0x1418] sm:$0xff]
        %v973 = vld [vmem:[%s230 + $0x1420] sm:$0xff]
        %v974 = vld [vmem:[%s230 + $0x1428] sm:$0xff]
        %v975 = vld [vmem:[%s230 + $0x1430] sm:$0xff]
        %v976 = vld [vmem:[%s230 + $0x1438] sm:$0xff]
        %v977 = vld [vmem:[%s230 + $0x1440] sm:$0xff]
        %v978 = vld [vmem:[%s230 + $0x1448] sm:$0xff]
        %v979 = vld [vmem:[%s230 + $0x1450] sm:$0xff]
        %v980 = vld [vmem:[%s230 + $0x1458] sm:$0xff]
        %v981 = vld [vmem:[%s230 + $0x1460] sm:$0xff]
        %v982 = vld [vmem:[%s230 + $0x1468] sm:$0xff]
        %v983 = vld [vmem:[%s230 + $0x1470] sm:$0xff]
        %v984 = vld [vmem:[%s230 + $0x1478] sm:$0xff]
        %v985 = vld [vmem:[%s230 + $0x1480] sm:$0xff]
        %v986 = vld [vmem:[%s230 + $0x1488] sm:$0xff]
        %v987 = vld [vmem:[%s230 + $0x1490] sm:$0xff]
        %v988 = vld [vmem:[%s230 + $0x1498] sm:$0xff]
        %v989 = vld [vmem:[%s230 + $0x14a0] sm:$0xff]
        %v990 = vld [vmem:[%s230 + $0x14a8] sm:$0xff]
        %v991 = vld [vmem:[%s230 + $0x14b0] sm:$0xff]
        %v992 = vld [vmem:[%s230 + $0x14b8] sm:$0xff]
        %v993 = vld [vmem:[%s230 + $0x14c0] sm:$0xff]
        %v994 = vld [vmem:[%s230 + $0x14c8] sm:$0xff]
        %v995 = vld [vmem:[%s230 + $0x14d0] sm:$0xff]
        %v996 = vld [vmem:[%s230 + $0x14d8] sm:$0xff]
        %v997 = vld [vmem:[%s230 + $0x14e0] sm:$0xff]
        %v998 = vld [vmem:[%s230 + $0x14e8] sm:$0xff]
        %v999 = vld [vmem:[%s230 + $0x14f0] sm:$0xff]
        %v1000 = vld [vmem:[%s230 + $0x14f8] sm:$0xff]
        %v1001 = vld [vmem:[%s230 + $0x1500] sm:$0xff]
        %v1002 = vld [vmem:[%s230 + $0x1508] sm:$0xff]
        %v1003 = vld [vmem:[%s230 + $0x1510] sm:$0xff]
        %v1004 = vld [vmem:[%s230 + $0x1518] sm:$0xff]
        %v1005 = vld [vmem:[%s230 + $0x1520] sm:$0xff]
        %v1006 = vld [vmem:[%s230 + $0x1528] sm:$0xff]
        %v1007 = vld [vmem:[%s230 + $0x1530] sm:$0xff]
        %v1008 = vld [vmem:[%s230 + $0x1538] sm:$0xff]
        %v1009 = vld [vmem:[%s230 + $0x1540] sm:$0xff]
        %v1010 = vld [vmem:[%s230 + $0x1548] sm:$0xff]
        %v1011 = vld [vmem:[%s230 + $0x1550] sm:$0xff]
        %v1012 = vld [vmem:[%s230 + $0x1558] sm:$0xff]
        %v1013 = vld [vmem:[%s230 + $0x1560] sm:$0xff]
        %v1014 = vld [vmem:[%s230 + $0x1568] sm:$0xff]
        %v1015 = vld [vmem:[%s230 + $0x1570] sm:$0xff]
        %v1016 = vld [vmem:[%s230 + $0x1578] sm:$0xff]
        %v1017 = vld [vmem:[%s230 + $0x1580] sm:$0xff]
        %v1018 = vld [vmem:[%s230 + $0x1588] sm:$0xff]
        %v1019 = vld [vmem:[%s230 + $0x1590] sm:$0xff]
        %v1020 = vld [vmem:[%s230 + $0x1598] sm:$0xff]
        %v1021 = vld [vmem:[%s230 + $0x15a0] sm:$0xff]
        %v1022 = vld [vmem:[%s230 + $0x15a8] sm:$0xff]
        %v1023 = vld [vmem:[%s230 + $0x15b0] sm:$0xff]
        %v1024 = vld [vmem:[%s230 + $0x15b8] sm:$0xff]
        %v1025 = vld [vmem:[%s230 + $0x15c0] sm:$0xff]
        %v1026 = vld [vmem:[%s230 + $0x15c8] sm:$0xff]
        %v1027 = vld [vmem:[%s230 + $0x15d0] sm:$0xff]
        %v1028 = vld [vmem:[%s230 + $0x15d8] sm:$0xff]
        %v1029 = vld [vmem:[%s230 + $0x15e0] sm:$0xff]
        %v1030 = vld [vmem:[%s230 + $0x15e8] sm:$0xff]
        %v1031 = vld [vmem:[%s230 + $0x15f0] sm:$0xff]
        %v1032 = vld [vmem:[%s230 + $0x15f8] sm:$0xff]
        %v1033 = vld [vmem:[%s230 + $0x1600] sm:$0xff]
        %v1034 = vld [vmem:[%s230 + $0x1608] sm:$0xff]
        %v1035 = vld [vmem:[%s230 + $0x1610] sm:$0xff]
        %v1036 = vld [vmem:[%s230 + $0x1618] sm:$0xff]
        %v1037 = vld [vmem:[%s230 + $0x1620] sm:$0xff]
        %v1038 = vld [vmem:[%s230 + $0x1628] sm:$0xff]
        %v1039 = vld [vmem:[%s230 + $0x1630] sm:$0xff]
        %v1040 = vld [vmem:[%s230 + $0x1638] sm:$0xff]
        %v1041 = vld [vmem:[%s230 + $0x1640] sm:$0xff]
        %v1042 = vld [vmem:[%s230 + $0x1648] sm:$0xff]
        %v1043 = vld [vmem:[%s230 + $0x1650] sm:$0xff]
        %v1044 = vld [vmem:[%s230 + $0x1658] sm:$0xff]
        %v1045 = vld [vmem:[%s230 + $0x1660] sm:$0xff]
        %v1046 = vld [vmem:[%s230 + $0x1668] sm:$0xff]
        %v1047 = vld [vmem:[%s230 + $0x1670] sm:$0xff]
        %v1048 = vld [vmem:[%s230 + $0x1678] sm:$0xff]
        %v1049 = vld [vmem:[%s230 + $0x1680] sm:$0xff]
        %v1050 = vld [vmem:[%s230 + $0x1688] sm:$0xff]
        %v1051 = vld [vmem:[%s230 + $0x1690] sm:$0xff]
        %v1052 = vld [vmem:[%s230 + $0x1698] sm:$0xff]
        %v1053 = vld [vmem:[%s230 + $0x16a0] sm:$0xff]
        %v1054 = vld [vmem:[%s230 + $0x16a8] sm:$0xff]
        %v1055 = vld [vmem:[%s230 + $0x16b0] sm:$0xff]
        %v1056 = vld [vmem:[%s230 + $0x16b8] sm:$0xff]
        %v1057 = vld [vmem:[%s230 + $0x16c0] sm:$0xff]
        %v1058 = vld [vmem:[%s230 + $0x16c8] sm:$0xff]
        %v1059 = vld [vmem:[%s230 + $0x16d0] sm:$0xff]
        %v1060 = vld [vmem:[%s230 + $0x16d8] sm:$0xff]
        %v1061 = vld [vmem:[%s230 + $0x16e0] sm:$0xff]
        %v1062 = vld [vmem:[%s230 + $0x16e8] sm:$0xff]
        %v1063 = vld [vmem:[%s230 + $0x16f0] sm:$0xff]
        %v1064 = vld [vmem:[%s230 + $0x16f8] sm:$0xff]
        %v1065 = vld [vmem:[%s230 + $0x1700] sm:$0xff]
        %v1066 = vld [vmem:[%s230 + $0x1708] sm:$0xff]
        %v1067 = vld [vmem:[%s230 + $0x1710] sm:$0xff]
        %v1068 = vld [vmem:[%s230 + $0x1718] sm:$0xff]
        %v1069 = vld [vmem:[%s230 + $0x1720] sm:$0xff]
        %v1070 = vld [vmem:[%s230 + $0x1728] sm:$0xff]
        %v1071 = vld [vmem:[%s230 + $0x1730] sm:$0xff]
        %v1072 = vld [vmem:[%s230 + $0x1738] sm:$0xff]
        %v1073 = vld [vmem:[%s230 + $0x1740] sm:$0xff]
        %v1074 = vld [vmem:[%s230 + $0x1748] sm:$0xff]
        %v1075 = vld [vmem:[%s230 + $0x1750] sm:$0xff]
        %v1076 = vld [vmem:[%s230 + $0x1758] sm:$0xff]
        %v1077 = vld [vmem:[%s230 + $0x1760] sm:$0xff]
        %v1078 = vld [vmem:[%s230 + $0x1768] sm:$0xff]
        %v1079 = vld [vmem:[%s230 + $0x1770] sm:$0xff]
        %v1080 = vld [vmem:[%s230 + $0x1778] sm:$0xff]
        %v1081 = vld [vmem:[%s230 + $0x1780] sm:$0xff]
        %v1082 = vld [vmem:[%s230 + $0x1788] sm:$0xff]
        %v1083 = vld [vmem:[%s230 + $0x1790] sm:$0xff]
        %v1084 = vld [vmem:[%s230 + $0x1798] sm:$0xff]
        %v1085 = vld [vmem:[%s230 + $0x17a0] sm:$0xff]
        %v1086 = vld [vmem:[%s230 + $0x17a8] sm:$0xff]
        %v1087 = vld [vmem:[%s230 + $0x17b0] sm:$0xff]
        %v1088 = vld [vmem:[%s230 + $0x17b8] sm:$0xff]
        %v1089 = vld [vmem:[%s230 + $0x17c0] sm:$0xff]
        %v1090 = vld [vmem:[%s230 + $0x17c8] sm:$0xff]
        %v1091 = vld [vmem:[%s230 + $0x17d0] sm:$0xff]
        %v1092 = vld [vmem:[%s230 + $0x17d8] sm:$0xff]
        %v1093 = vld [vmem:[%s230 + $0x17e0] sm:$0xff]
        %v1094 = vld [vmem:[%s230 + $0x17e8] sm:$0xff]
        %v1095 = vld [vmem:[%s230 + $0x17f0] sm:$0xff]
        %v1096 = vld [vmem:[%s230 + $0x17f8] sm:$0xff]
        %v1097 = vld [vmem:[%s230 + $0x1800] sm:$0xff]
        %v1098 = vld [vmem:[%s230 + $0x1808] sm:$0xff]
        %v1099 = vld [vmem:[%s230 + $0x1810] sm:$0xff]
        %v1100 = vld [vmem:[%s230 + $0x1818] sm:$0xff]
        %v1101 = vld [vmem:[%s230 + $0x1820] sm:$0xff]
        %v1102 = vld [vmem:[%s230 + $0x1828] sm:$0xff]
        %v1103 = vld [vmem:[%s230 + $0x1830] sm:$0xff]
        %v1104 = vld [vmem:[%s230 + $0x1838] sm:$0xff]
        %v1105 = vld [vmem:[%s230 + $0x1840] sm:$0xff]
        %v1106 = vld [vmem:[%s230 + $0x1848] sm:$0xff]
        %v1107 = vld [vmem:[%s230 + $0x1850] sm:$0xff]
        %v1108 = vld [vmem:[%s230 + $0x1858] sm:$0xff]
        %v1109 = vld [vmem:[%s230 + $0x1860] sm:$0xff]
        %v1110 = vld [vmem:[%s230 + $0x1868] sm:$0xff]
        %v1111 = vld [vmem:[%s230 + $0x1870] sm:$0xff]
        %v1112 = vld [vmem:[%s230 + $0x1878] sm:$0xff]
        %v1113 = vld [vmem:[%s230 + $0x1880] sm:$0xff]
        %v1114 = vld [vmem:[%s230 + $0x1888] sm:$0xff]
        %v1115 = vld [vmem:[%s230 + $0x1890] sm:$0xff]
        %v1116 = vld [vmem:[%s230 + $0x1898] sm:$0xff]
        %v1117 = vld [vmem:[%s230 + $0x18a0] sm:$0xff]
        %v1118 = vld [vmem:[%s230 + $0x18a8] sm:$0xff]
        %v1119 = vld [vmem:[%s230 + $0x18b0] sm:$0xff]
        %v1120 = vld [vmem:[%s230 + $0x18b8] sm:$0xff]
        %v1121 = vld [vmem:[%s230 + $0x18c0] sm:$0xff]
        %v1122 = vld [vmem:[%s230 + $0x18c8] sm:$0xff]
        %v1123 = vld [vmem:[%s230 + $0x18d0] sm:$0xff]
        %v1124 = vld [vmem:[%s230 + $0x18d8] sm:$0xff]
        %v1125 = vld [vmem:[%s230 + $0x18e0] sm:$0xff]
        %v1126 = vld [vmem:[%s230 + $0x18e8] sm:$0xff]
        %v1127 = vld [vmem:[%s230 + $0x18f0] sm:$0xff]
        %v1128 = vld [vmem:[%s230 + $0x18f8] sm:$0xff]
        %v1142 = vunpack.c.l.b16 %v316
        %v1143 = vunpack.c.h.b16 %v316
        %v1144 = vunpack.c.l.b16 %v317
        %v1145 = vunpack.c.h.b16 %v317
        %v1146 = vunpack.c.l.b16 %v318
        %v1147 = vunpack.c.h.b16 %v318
        %v1148 = vunpack.c.l.b16 %v319
        %v1149 = vunpack.c.h.b16 %v319
        %v1150 = vunpack.c.l.b16 %v320
        %v1151 = vunpack.c.h.b16 %v320
        %v1152 = vunpack.c.l.b16 %v321
        %v1153 = vunpack.c.h.b16 %v321
        %v1154 = vunpack.c.l.b16 %v322
        %v1155 = vunpack.c.h.b16 %v322
        %v1156 = vunpack.c.l.b16 %v323
        %v1157 = vunpack.c.h.b16 %v323
        %v1158 = vunpack.c.l.b16 %v324
        %v1159 = vunpack.c.h.b16 %v324
        %v1160 = vunpack.c.l.b16 %v325
        %v1161 = vunpack.c.h.b16 %v325
        %v1162 = vunpack.c.l.b16 %v326
        %v1163 = vunpack.c.h.b16 %v326
        %v1164 = vunpack.c.l.b16 %v327
        %v1165 = vunpack.c.h.b16 %v327
        %v1166 = vunpack.c.l.b16 %v328
        %v1167 = vpack.c.b16 %v1142, %v1142
        %v1168 = vpack.c.b16 %v1143, %v1143
        %v1169 = vpack.c.b16 %v1144, %v1144
        %v1170 = vpack.c.b16 %v1145, %v1145
        %v1171 = vpack.c.b16 %v1146, %v1146
        %v1172 = vpack.c.b16 %v1147, %v1147
        %v1173 = vpack.c.b16 %v1148, %v1148
        %v1174 = vpack.c.b16 %v1149, %v1149
        %v1175 = vpack.c.b16 %v1150, %v1150
        %v1176 = vpack.c.b16 %v1151, %v1151
        %v1177 = vpack.c.b16 %v1152, %v1152
        %v1178 = vpack.c.b16 %v1153, %v1153
        %v1179 = vpack.c.b16 %v1154, %v1154
        %v1180 = vpack.c.b16 %v1155, %v1155
        %v1181 = vpack.c.b16 %v1156, %v1156
        %v1182 = vpack.c.b16 %v1157, %v1157
        %v1183 = vpack.c.b16 %v1158, %v1158
        %v1184 = vpack.c.b16 %v1159, %v1159
        %v1185 = vpack.c.b16 %v1160, %v1160
        %v1186 = vpack.c.b16 %v1161, %v1161
        %v1187 = vpack.c.b16 %v1162, %v1162
        %v1188 = vpack.c.b16 %v1163, %v1163
        %v1189 = vpack.c.b16 %v1164, %v1164
        %v1190 = vpack.c.b16 %v1165, %v1165
        %v1191 = vpack.c.b16 %v1166, %v1166
        %v2017 = vunpack.c.l.b16 %v329
        %v2018 = vunpack.c.h.b16 %v329
        %v2019 = vunpack.c.l.b16 %v330
        %v2020 = vunpack.c.h.b16 %v330
        %v2021 = vunpack.c.l.b16 %v331
        %v2022 = vunpack.c.h.b16 %v331
        %v2023 = vunpack.c.l.b16 %v332
        %v2024 = vunpack.c.h.b16 %v332
        %v2025 = vunpack.c.l.b16 %v333
        %v2026 = vunpack.c.h.b16 %v333
        %v2027 = vunpack.c.l.b16 %v334
        %v2028 = vunpack.c.h.b16 %v334
        %v2029 = vunpack.c.l.b16 %v335
        %v2030 = vunpack.c.h.b16 %v335
        %v2031 = vunpack.c.l.b16 %v336
        %v2032 = vunpack.c.h.b16 %v336
        %v2033 = vunpack.c.l.b16 %v337
        %v2034 = vunpack.c.h.b16 %v337
        %v2035 = vunpack.c.l.b16 %v338
        %v2036 = vunpack.c.h.b16 %v338
        %v2037 = vunpack.c.l.b16 %v339
        %v2038 = vunpack.c.h.b16 %v339
        %v2039 = vunpack.c.l.b16 %v340
        %v2040 = vunpack.c.h.b16 %v340
        %v2041 = vunpack.c.l.b16 %v341
        %v2042 = vunpack.c.h.b16 %v341
        %v2043 = vunpack.c.l.b16 %v342
        %v2044 = vunpack.c.h.b16 %v342
        %v2045 = vunpack.c.l.b16 %v343
        %v2046 = vunpack.c.h.b16 %v343
        %v2047 = vunpack.c.l.b16 %v344
        %v2048 = vunpack.c.h.b16 %v344
        %v2049 = vunpack.c.l.b16 %v345
        %v2050 = vunpack.c.h.b16 %v345
        %v2051 = vunpack.c.l.b16 %v346
        %v2052 = vunpack.c.h.b16 %v346
        %v2053 = vunpack.c.l.b16 %v347
        %v2054 = vunpack.c.h.b16 %v347
        %v2055 = vunpack.c.l.b16 %v348
        %v2056 = vunpack.c.h.b16 %v348
        %v2057 = vunpack.c.l.b16 %v349
        %v2058 = vunpack.c.h.b16 %v349
        %v2059 = vunpack.c.l.b16 %v350
        %v2060 = vunpack.c.h.b16 %v350
        %v2061 = vunpack.c.l.b16 %v351
        %v2062 = vunpack.c.h.b16 %v351
        %v2063 = vunpack.c.l.b16 %v352
        %v2064 = vunpack.c.h.b16 %v352
        %v2065 = vunpack.c.l.b16 %v353
        %v2066 = vunpack.c.h.b16 %v353
        %v2067 = vunpack.c.l.b16 %v354
        %v2068 = vunpack.c.h.b16 %v354
        %v2069 = vunpack.c.l.b16 %v355
        %v2070 = vunpack.c.h.b16 %v355
        %v2071 = vunpack.c.l.b16 %v356
        %v2072 = vunpack.c.h.b16 %v356
        %v2073 = vunpack.c.l.b16 %v357
        %v2074 = vunpack.c.h.b16 %v357
        %v2075 = vunpack.c.l.b16 %v358
        %v2076 = vunpack.c.h.b16 %v358
        %v2077 = vunpack.c.l.b16 %v359
        %v2078 = vunpack.c.h.b16 %v359
        %v2079 = vunpack.c.l.b16 %v360
        %v2080 = vunpack.c.h.b16 %v360
        %v2081 = vunpack.c.l.b16 %v361
        %v2082 = vunpack.c.h.b16 %v361
        %v2083 = vunpack.c.l.b16 %v362
        %v2084 = vunpack.c.h.b16 %v362
        %v2085 = vunpack.c.l.b16 %v363
        %v2086 = vunpack.c.h.b16 %v363
        %v2087 = vunpack.c.l.b16 %v364
        %v2088 = vunpack.c.h.b16 %v364
        %v2089 = vunpack.c.l.b16 %v365
        %v2090 = vunpack.c.h.b16 %v365
        %v2091 = vunpack.c.l.b16 %v366
        %v2092 = vunpack.c.h.b16 %v366
        %v2093 = vunpack.c.l.b16 %v367
        %v2094 = vunpack.c.h.b16 %v367
        %v2095 = vunpack.c.l.b16 %v368
        %v2096 = vunpack.c.h.b16 %v368
        %v2097 = vunpack.c.l.b16 %v369
        %v2098 = vunpack.c.h.b16 %v369
        %v2099 = vunpack.c.l.b16 %v370
        %v2100 = vunpack.c.h.b16 %v370
        %v2101 = vunpack.c.l.b16 %v371
        %v2102 = vunpack.c.h.b16 %v371
        %v2103 = vunpack.c.l.b16 %v372
        %v2104 = vunpack.c.h.b16 %v372
        %v2105 = vunpack.c.l.b16 %v373
        %v2106 = vunpack.c.h.b16 %v373
        %v2107 = vunpack.c.l.b16 %v374
        %v2108 = vunpack.c.h.b16 %v374
        %v2109 = vunpack.c.l.b16 %v375
        %v2110 = vunpack.c.h.b16 %v375
        %v2111 = vunpack.c.l.b16 %v376
        %v2112 = vunpack.c.h.b16 %v376
        %v2113 = vunpack.c.l.b16 %v377
        %v2114 = vunpack.c.h.b16 %v377
        %v2115 = vunpack.c.l.b16 %v378
        %v2116 = vunpack.c.h.b16 %v378
        %v2117 = vunpack.c.l.b16 %v379
        %v2118 = vunpack.c.h.b16 %v379
        %v2119 = vunpack.c.l.b16 %v380
        %v2120 = vunpack.c.h.b16 %v380
        %v2121 = vunpack.c.l.b16 %v381
        %v2122 = vunpack.c.h.b16 %v381
        %v2123 = vunpack.c.l.b16 %v382
        %v2124 = vunpack.c.h.b16 %v382
        %v2125 = vunpack.c.l.b16 %v383
        %v2126 = vunpack.c.h.b16 %v383
        %v2127 = vunpack.c.l.b16 %v384
        %v2128 = vunpack.c.h.b16 %v384
        %v2129 = vunpack.c.l.b16 %v385
        %v2130 = vunpack.c.h.b16 %v385
        %v2131 = vunpack.c.l.b16 %v386
        %v2132 = vunpack.c.h.b16 %v386
        %v2133 = vunpack.c.l.b16 %v387
        %v2134 = vunpack.c.h.b16 %v387
        %v2135 = vunpack.c.l.b16 %v388
        %v2136 = vunpack.c.h.b16 %v388
        %v2137 = vunpack.c.l.b16 %v389
        %v2138 = vunpack.c.h.b16 %v389
        %v2139 = vunpack.c.l.b16 %v390
        %v2140 = vunpack.c.h.b16 %v390
        %v2141 = vunpack.c.l.b16 %v391
        %v2142 = vunpack.c.h.b16 %v391
        %v2143 = vunpack.c.l.b16 %v392
        %v2144 = vunpack.c.h.b16 %v392
        %v2145 = vunpack.c.l.b16 %v393
        %v2146 = vunpack.c.h.b16 %v393
        %v2147 = vunpack.c.l.b16 %v394
        %v2148 = vunpack.c.h.b16 %v394
        %v2149 = vunpack.c.l.b16 %v395
        %v2150 = vunpack.c.h.b16 %v395
        %v2151 = vunpack.c.l.b16 %v396
        %v2152 = vunpack.c.h.b16 %v396
        %v2153 = vunpack.c.l.b16 %v397
        %v2154 = vunpack.c.h.b16 %v397
        %v2155 = vunpack.c.l.b16 %v398
        %v2156 = vunpack.c.h.b16 %v398
        %v2157 = vunpack.c.l.b16 %v399
        %v2158 = vunpack.c.h.b16 %v399
        %v2159 = vunpack.c.l.b16 %v400
        %v2160 = vunpack.c.h.b16 %v400
        %v2161 = vunpack.c.l.b16 %v401
        %v2162 = vunpack.c.h.b16 %v401
        %v2163 = vunpack.c.l.b16 %v402
        %v2164 = vunpack.c.h.b16 %v402
        %v2165 = vunpack.c.l.b16 %v403
        %v2166 = vunpack.c.h.b16 %v403
        %v2167 = vunpack.c.l.b16 %v404
        %v2168 = vunpack.c.h.b16 %v404
        %v2169 = vunpack.c.l.b16 %v405
        %v2170 = vunpack.c.h.b16 %v405
        %v2171 = vunpack.c.l.b16 %v406
        %v2172 = vunpack.c.h.b16 %v406
        %v2173 = vunpack.c.l.b16 %v407
        %v2174 = vunpack.c.h.b16 %v407
        %v2175 = vunpack.c.l.b16 %v408
        %v2176 = vunpack.c.h.b16 %v408
        %v2177 = vunpack.c.l.b16 %v409
        %v2178 = vunpack.c.h.b16 %v409
        %v2179 = vunpack.c.l.b16 %v410
        %v2180 = vunpack.c.h.b16 %v410
        %v2181 = vunpack.c.l.b16 %v411
        %v2182 = vunpack.c.h.b16 %v411
        %v2183 = vunpack.c.l.b16 %v412
        %v2184 = vunpack.c.h.b16 %v412
        %v2185 = vunpack.c.l.b16 %v413
        %v2186 = vunpack.c.h.b16 %v413
        %v2187 = vunpack.c.l.b16 %v414
        %v2188 = vunpack.c.h.b16 %v414
        %v2189 = vunpack.c.l.b16 %v415
        %v2190 = vunpack.c.h.b16 %v415
        %v2191 = vunpack.c.l.b16 %v416
        %v2192 = vunpack.c.h.b16 %v416
        %v2193 = vunpack.c.l.b16 %v417
        %v2194 = vunpack.c.h.b16 %v417
        %v2195 = vunpack.c.l.b16 %v418
        %v2196 = vunpack.c.h.b16 %v418
        %v2197 = vunpack.c.l.b16 %v419
        %v2198 = vunpack.c.h.b16 %v419
        %v2199 = vunpack.c.l.b16 %v420
        %v2200 = vunpack.c.h.b16 %v420
        %v2201 = vunpack.c.l.b16 %v421
        %v2202 = vunpack.c.h.b16 %v421
        %v2203 = vunpack.c.l.b16 %v422
        %v2204 = vunpack.c.h.b16 %v422
        %v2205 = vunpack.c.l.b16 %v423
        %v2206 = vunpack.c.h.b16 %v423
        %v2207 = vunpack.c.l.b16 %v424
        %v2208 = vunpack.c.h.b16 %v424
        %v2209 = vunpack.c.l.b16 %v425
        %v2210 = vunpack.c.h.b16 %v425
        %v2211 = vunpack.c.l.b16 %v426
        %v2212 = vunpack.c.h.b16 %v426
        %v2213 = vunpack.c.l.b16 %v427
        %v2214 = vunpack.c.h.b16 %v427
        %v2215 = vunpack.c.l.b16 %v428
        %v2216 = vunpack.c.h.b16 %v428
        %v2217 = vunpack.c.l.b16 %v429
        %v2218 = vunpack.c.h.b16 %v429
        %v2219 = vunpack.c.l.b16 %v430
        %v2220 = vunpack.c.h.b16 %v430
        %v2221 = vunpack.c.l.b16 %v431
        %v2222 = vunpack.c.h.b16 %v431
        %v2223 = vunpack.c.l.b16 %v432
        %v2224 = vunpack.c.h.b16 %v432
        %v2225 = vunpack.c.l.b16 %v433
        %v2226 = vunpack.c.h.b16 %v433
        %v2227 = vunpack.c.l.b16 %v434
        %v2228 = vunpack.c.h.b16 %v434
        %v2229 = vunpack.c.l.b16 %v435
        %v2230 = vunpack.c.h.b16 %v435
        %v2231 = vunpack.c.l.b16 %v436
        %v2232 = vunpack.c.h.b16 %v436
        %v2233 = vunpack.c.l.b16 %v437
        %v2234 = vunpack.c.h.b16 %v437
        %v2235 = vunpack.c.l.b16 %v438
        %v2236 = vunpack.c.h.b16 %v438
        %v2237 = vunpack.c.l.b16 %v439
        %v2238 = vunpack.c.h.b16 %v439
        %v2239 = vunpack.c.l.b16 %v440
        %v2240 = vunpack.c.h.b16 %v440
        %v2241 = vunpack.c.l.b16 %v441
        %v2242 = vunpack.c.h.b16 %v441
        %v2243 = vunpack.c.l.b16 %v442
        %v2244 = vunpack.c.h.b16 %v442
        %v2245 = vunpack.c.l.b16 %v443
        %v2246 = vunpack.c.h.b16 %v443
        %v2247 = vunpack.c.l.b16 %v444
        %v2248 = vunpack.c.h.b16 %v444
        %v2249 = vunpack.c.l.b16 %v445
        %v2250 = vunpack.c.h.b16 %v445
        %v2251 = vunpack.c.l.b16 %v446
        %v2252 = vunpack.c.h.b16 %v446
        %v2253 = vunpack.c.l.b16 %v447
        %v2254 = vunpack.c.h.b16 %v447
        %v2255 = vunpack.c.l.b16 %v448
        %v2256 = vunpack.c.h.b16 %v448
        %v2257 = vunpack.c.l.b16 %v449
        %v2258 = vunpack.c.h.b16 %v449
        %v2259 = vunpack.c.l.b16 %v450
        %v2260 = vunpack.c.h.b16 %v450
        %v2261 = vunpack.c.l.b16 %v451
        %v2262 = vunpack.c.h.b16 %v451
        %v2263 = vunpack.c.l.b16 %v452
        %v2264 = vunpack.c.h.b16 %v452
        %v2265 = vunpack.c.l.b16 %v453
        %v2266 = vunpack.c.h.b16 %v453
        %v2267 = vunpack.c.l.b16 %v454
        %v2268 = vunpack.c.h.b16 %v454
        %v2269 = vunpack.c.l.b16 %v455
        %v2270 = vunpack.c.h.b16 %v455
        %v2271 = vunpack.c.l.b16 %v456
        %v2272 = vunpack.c.h.b16 %v456
        %v2273 = vunpack.c.l.b16 %v457
        %v2274 = vunpack.c.h.b16 %v457
        %v2275 = vunpack.c.l.b16 %v458
        %v2276 = vunpack.c.h.b16 %v458
        %v2277 = vunpack.c.l.b16 %v459
        %v2278 = vunpack.c.h.b16 %v459
        %v2279 = vunpack.c.l.b16 %v460
        %v2280 = vunpack.c.h.b16 %v460
        %v2281 = vunpack.c.l.b16 %v461
        %v2282 = vunpack.c.h.b16 %v461
        %v2283 = vunpack.c.l.b16 %v462
        %v2284 = vunpack.c.h.b16 %v462
        %v2285 = vunpack.c.l.b16 %v463
        %v2286 = vunpack.c.h.b16 %v463
        %v2287 = vunpack.c.l.b16 %v464
        %v2288 = vunpack.c.h.b16 %v464
        %v2289 = vunpack.c.l.b16 %v465
        %v2290 = vunpack.c.h.b16 %v465
        %v2291 = vunpack.c.l.b16 %v466
        %v2292 = vunpack.c.h.b16 %v466
        %v2293 = vunpack.c.l.b16 %v467
        %v2294 = vunpack.c.h.b16 %v467
        %v2295 = vunpack.c.l.b16 %v468
        %v2296 = vunpack.c.h.b16 %v468
        %v2297 = vunpack.c.l.b16 %v469
        %v2298 = vunpack.c.h.b16 %v469
        %v2299 = vunpack.c.l.b16 %v470
        %v2300 = vunpack.c.h.b16 %v470
        %v2301 = vunpack.c.l.b16 %v471
        %v2302 = vunpack.c.h.b16 %v471
        %v2303 = vunpack.c.l.b16 %v472
        %v2304 = vunpack.c.h.b16 %v472
        %v2305 = vunpack.c.l.b16 %v473
        %v2306 = vunpack.c.h.b16 %v473
        %v2307 = vunpack.c.l.b16 %v474
        %v2308 = vunpack.c.h.b16 %v474
        %v2309 = vunpack.c.l.b16 %v475
        %v2310 = vunpack.c.h.b16 %v475
        %v2311 = vunpack.c.l.b16 %v476
        %v2312 = vunpack.c.h.b16 %v476
        %v2313 = vunpack.c.l.b16 %v477
        %v2314 = vunpack.c.h.b16 %v477
        %v2315 = vunpack.c.l.b16 %v478
        %v2316 = vunpack.c.h.b16 %v478
        %v2317 = vunpack.c.l.b16 %v479
        %v2318 = vunpack.c.h.b16 %v479
        %v2319 = vunpack.c.l.b16 %v480
        %v2320 = vunpack.c.h.b16 %v480
        %v2321 = vunpack.c.l.b16 %v481
        %v2322 = vunpack.c.h.b16 %v481
        %v2323 = vunpack.c.l.b16 %v482
        %v2324 = vunpack.c.h.b16 %v482
        %v2325 = vunpack.c.l.b16 %v483
        %v2326 = vunpack.c.h.b16 %v483
        %v2327 = vunpack.c.l.b16 %v484
        %v2328 = vunpack.c.h.b16 %v484
        %v2329 = vunpack.c.l.b16 %v485
        %v2330 = vunpack.c.h.b16 %v485
        %v2331 = vunpack.c.l.b16 %v486
        %v2332 = vunpack.c.h.b16 %v486
        %v2333 = vunpack.c.l.b16 %v487
        %v2334 = vunpack.c.h.b16 %v487
        %v2335 = vunpack.c.l.b16 %v488
        %v2336 = vunpack.c.h.b16 %v488
        %v2337 = vunpack.c.l.b16 %v489
        %v2338 = vunpack.c.h.b16 %v489
        %v2339 = vunpack.c.l.b16 %v490
        %v2340 = vunpack.c.h.b16 %v490
        %v2341 = vunpack.c.l.b16 %v491
        %v2342 = vunpack.c.h.b16 %v491
        %v2343 = vunpack.c.l.b16 %v492
        %v2344 = vunpack.c.h.b16 %v492
        %v2345 = vunpack.c.l.b16 %v493
        %v2346 = vunpack.c.h.b16 %v493
        %v2347 = vunpack.c.l.b16 %v494
        %v2348 = vunpack.c.h.b16 %v494
        %v2349 = vunpack.c.l.b16 %v495
        %v2350 = vunpack.c.h.b16 %v495
        %v2351 = vunpack.c.l.b16 %v496
        %v2352 = vunpack.c.h.b16 %v496
        %v2353 = vunpack.c.l.b16 %v497
        %v2354 = vunpack.c.h.b16 %v497
        %v2355 = vunpack.c.l.b16 %v498
        %v2356 = vunpack.c.h.b16 %v498
        %v2357 = vunpack.c.l.b16 %v499
        %v2358 = vunpack.c.h.b16 %v499
        %v2359 = vunpack.c.l.b16 %v500
        %v2360 = vunpack.c.h.b16 %v500
        %v2361 = vunpack.c.l.b16 %v501
        %v2362 = vunpack.c.h.b16 %v501
        %v2363 = vunpack.c.l.b16 %v502
        %v2364 = vunpack.c.h.b16 %v502
        %v2365 = vunpack.c.l.b16 %v503
        %v2366 = vunpack.c.h.b16 %v503
        %v2367 = vunpack.c.l.b16 %v504
        %v2368 = vunpack.c.h.b16 %v504
        %v2369 = vunpack.c.l.b16 %v505
        %v2370 = vunpack.c.h.b16 %v505
        %v2371 = vunpack.c.l.b16 %v506
        %v2372 = vunpack.c.h.b16 %v506
        %v2373 = vunpack.c.l.b16 %v507
        %v2374 = vunpack.c.h.b16 %v507
        %v2375 = vunpack.c.l.b16 %v508
        %v2376 = vunpack.c.h.b16 %v508
        %v2377 = vunpack.c.l.b16 %v509
        %v2378 = vunpack.c.h.b16 %v509
        %v2379 = vunpack.c.l.b16 %v510
        %v2380 = vunpack.c.h.b16 %v510
        %v2381 = vunpack.c.l.b16 %v511
        %v2382 = vunpack.c.h.b16 %v511
        %v2383 = vunpack.c.l.b16 %v512
        %v2384 = vunpack.c.h.b16 %v512
        %v2385 = vunpack.c.l.b16 %v513
        %v2386 = vunpack.c.h.b16 %v513
        %v2387 = vunpack.c.l.b16 %v514
        %v2388 = vunpack.c.h.b16 %v514
        %v2389 = vunpack.c.l.b16 %v515
        %v2390 = vunpack.c.h.b16 %v515
        %v2391 = vunpack.c.l.b16 %v516
        %v2392 = vunpack.c.h.b16 %v516
        %v2393 = vunpack.c.l.b16 %v517
        %v2394 = vunpack.c.h.b16 %v517
        %v2395 = vunpack.c.l.b16 %v518
        %v2396 = vunpack.c.h.b16 %v518
        %v2397 = vunpack.c.l.b16 %v519
        %v2398 = vunpack.c.h.b16 %v519
        %v2399 = vunpack.c.l.b16 %v520
        %v2400 = vunpack.c.h.b16 %v520
        %v2401 = vunpack.c.l.b16 %v521
        %v2402 = vunpack.c.h.b16 %v521
        %v2403 = vunpack.c.l.b16 %v522
        %v2404 = vunpack.c.h.b16 %v522
        %v2405 = vunpack.c.l.b16 %v523
        %v2406 = vunpack.c.h.b16 %v523
        %v2407 = vunpack.c.l.b16 %v524
        %v2408 = vunpack.c.h.b16 %v524
        %v2409 = vunpack.c.l.b16 %v525
        %v2410 = vunpack.c.h.b16 %v525
        %v2411 = vunpack.c.l.b16 %v526
        %v2412 = vunpack.c.h.b16 %v526
        %v2413 = vunpack.c.l.b16 %v527
        %v2414 = vunpack.c.h.b16 %v527
        %v2415 = vunpack.c.l.b16 %v528
        %v2416 = vunpack.c.h.b16 %v528
        %v2417 = vunpack.c.l.b16 %v529
        %v2418 = vunpack.c.h.b16 %v529
        %v2419 = vunpack.c.l.b16 %v530
        %v2420 = vunpack.c.h.b16 %v530
        %v2421 = vunpack.c.l.b16 %v531
        %v2422 = vunpack.c.h.b16 %v531
        %v2423 = vunpack.c.l.b16 %v532
        %v2424 = vunpack.c.h.b16 %v532
        %v2425 = vunpack.c.l.b16 %v533
        %v2426 = vunpack.c.h.b16 %v533
        %v2427 = vunpack.c.l.b16 %v534
        %v2428 = vunpack.c.h.b16 %v534
        %v2429 = vunpack.c.l.b16 %v535
        %v2430 = vunpack.c.h.b16 %v535
        %v2431 = vunpack.c.l.b16 %v536
        %v2432 = vunpack.c.h.b16 %v536
        %v2433 = vunpack.c.l.b16 %v537
        %v2434 = vunpack.c.h.b16 %v537
        %v2435 = vunpack.c.l.b16 %v538
        %v2436 = vunpack.c.h.b16 %v538
        %v2437 = vunpack.c.l.b16 %v539
        %v2438 = vunpack.c.h.b16 %v539
        %v2439 = vunpack.c.l.b16 %v540
        %v2440 = vunpack.c.h.b16 %v540
        %v2441 = vunpack.c.l.b16 %v541
        %v2442 = vunpack.c.h.b16 %v541
        %v2443 = vunpack.c.l.b16 %v542
        %v2444 = vunpack.c.h.b16 %v542
        %v2445 = vunpack.c.l.b16 %v543
        %v2446 = vunpack.c.h.b16 %v543
        %v2447 = vunpack.c.l.b16 %v544
        %v2448 = vunpack.c.h.b16 %v544
        %v2449 = vunpack.c.l.b16 %v545
        %v2450 = vunpack.c.h.b16 %v545
        %v2451 = vunpack.c.l.b16 %v546
        %v2452 = vunpack.c.h.b16 %v546
        %v2453 = vunpack.c.l.b16 %v547
        %v2454 = vunpack.c.h.b16 %v547
        %v2455 = vunpack.c.l.b16 %v548
        %v2456 = vunpack.c.h.b16 %v548
        %v2457 = vunpack.c.l.b16 %v549
        %v2458 = vunpack.c.h.b16 %v549
        %v2459 = vunpack.c.l.b16 %v550
        %v2460 = vunpack.c.h.b16 %v550
        %v2461 = vunpack.c.l.b16 %v551
        %v2462 = vunpack.c.h.b16 %v551
        %v2463 = vunpack.c.l.b16 %v552
        %v2464 = vunpack.c.h.b16 %v552
        %v2465 = vunpack.c.l.b16 %v553
        %v2466 = vunpack.c.h.b16 %v553
        %v2467 = vunpack.c.l.b16 %v554
        %v2468 = vunpack.c.h.b16 %v554
        %v2469 = vunpack.c.l.b16 %v555
        %v2470 = vunpack.c.h.b16 %v555
        %v2471 = vunpack.c.l.b16 %v556
        %v2472 = vunpack.c.h.b16 %v556
        %v2473 = vunpack.c.l.b16 %v557
        %v2474 = vunpack.c.h.b16 %v557
        %v2475 = vunpack.c.l.b16 %v558
        %v2476 = vunpack.c.h.b16 %v558
        %v2477 = vunpack.c.l.b16 %v559
        %v2478 = vunpack.c.h.b16 %v559
        %v2479 = vunpack.c.l.b16 %v560
        %v2480 = vunpack.c.h.b16 %v560
        %v2481 = vunpack.c.l.b16 %v561
        %v2482 = vunpack.c.h.b16 %v561
        %v2483 = vunpack.c.l.b16 %v562
        %v2484 = vunpack.c.h.b16 %v562
        %v2485 = vunpack.c.l.b16 %v563
        %v2486 = vunpack.c.h.b16 %v563
        %v2487 = vunpack.c.l.b16 %v564
        %v2488 = vunpack.c.h.b16 %v564
        %v2489 = vunpack.c.l.b16 %v565
        %v2490 = vunpack.c.h.b16 %v565
        %v2491 = vunpack.c.l.b16 %v566
        %v2492 = vunpack.c.h.b16 %v566
        %v2493 = vunpack.c.l.b16 %v567
        %v2494 = vunpack.c.h.b16 %v567
        %v2495 = vunpack.c.l.b16 %v568
        %v2496 = vunpack.c.h.b16 %v568
        %v2497 = vunpack.c.l.b16 %v569
        %v2498 = vunpack.c.h.b16 %v569
        %v2499 = vunpack.c.l.b16 %v570
        %v2500 = vunpack.c.h.b16 %v570
        %v2501 = vunpack.c.l.b16 %v571
        %v2502 = vunpack.c.h.b16 %v571
        %v2503 = vunpack.c.l.b16 %v572
        %v2504 = vunpack.c.h.b16 %v572
        %v2505 = vunpack.c.l.b16 %v573
        %v2506 = vunpack.c.h.b16 %v573
        %v2507 = vunpack.c.l.b16 %v574
        %v2508 = vunpack.c.h.b16 %v574
        %v2509 = vunpack.c.l.b16 %v575
        %v2510 = vunpack.c.h.b16 %v575
        %v2511 = vunpack.c.l.b16 %v576
        %v2512 = vunpack.c.h.b16 %v576
        %v2513 = vunpack.c.l.b16 %v577
        %v2514 = vunpack.c.h.b16 %v577
        %v2515 = vunpack.c.l.b16 %v578
        %v2516 = vunpack.c.h.b16 %v578
        %v2517 = vunpack.c.l.b16 %v579
        %v2518 = vunpack.c.h.b16 %v579
        %v2519 = vunpack.c.l.b16 %v580
        %v2520 = vunpack.c.h.b16 %v580
        %v2521 = vunpack.c.l.b16 %v581
        %v2522 = vunpack.c.h.b16 %v581
        %v2523 = vunpack.c.l.b16 %v582
        %v2524 = vunpack.c.h.b16 %v582
        %v2525 = vunpack.c.l.b16 %v583
        %v2526 = vunpack.c.h.b16 %v583
        %v2527 = vunpack.c.l.b16 %v584
        %v2528 = vunpack.c.h.b16 %v584
        %v2529 = vunpack.c.l.b16 %v585
        %v2530 = vunpack.c.h.b16 %v585
        %v2531 = vunpack.c.l.b16 %v586
        %v2532 = vunpack.c.h.b16 %v586
        %v2533 = vunpack.c.l.b16 %v587
        %v2534 = vunpack.c.h.b16 %v587
        %v2535 = vunpack.c.l.b16 %v588
        %v2536 = vunpack.c.h.b16 %v588
        %v2537 = vunpack.c.l.b16 %v589
        %v2538 = vunpack.c.h.b16 %v589
        %v2539 = vunpack.c.l.b16 %v590
        %v2540 = vunpack.c.h.b16 %v590
        %v2541 = vunpack.c.l.b16 %v591
        %v2542 = vunpack.c.h.b16 %v591
        %v2543 = vunpack.c.l.b16 %v592
        %v2544 = vunpack.c.h.b16 %v592
        %v2545 = vunpack.c.l.b16 %v593
        %v2546 = vunpack.c.h.b16 %v593
        %v2547 = vunpack.c.l.b16 %v594
        %v2548 = vunpack.c.h.b16 %v594
        %v2549 = vunpack.c.l.b16 %v595
        %v2550 = vunpack.c.h.b16 %v595
        %v2551 = vunpack.c.l.b16 %v596
        %v2552 = vunpack.c.h.b16 %v596
        %v2553 = vunpack.c.l.b16 %v597
        %v2554 = vunpack.c.h.b16 %v597
        %v2555 = vunpack.c.l.b16 %v598
        %v2556 = vunpack.c.h.b16 %v598
        %v2557 = vunpack.c.l.b16 %v599
        %v2558 = vunpack.c.h.b16 %v599
        %v2559 = vunpack.c.l.b16 %v600
        %v2560 = vunpack.c.h.b16 %v600
        %v2561 = vunpack.c.l.b16 %v601
        %v2562 = vunpack.c.h.b16 %v601
        %v2563 = vunpack.c.l.b16 %v602
        %v2564 = vunpack.c.h.b16 %v602
        %v2565 = vunpack.c.l.b16 %v603
        %v2566 = vunpack.c.h.b16 %v603
        %v2567 = vunpack.c.l.b16 %v604
        %v2568 = vunpack.c.h.b16 %v604
        %v2569 = vunpack.c.l.b16 %v605
        %v2570 = vunpack.c.h.b16 %v605
        %v2571 = vunpack.c.l.b16 %v606
        %v2572 = vunpack.c.h.b16 %v606
        %v2573 = vunpack.c.l.b16 %v607
        %v2574 = vunpack.c.h.b16 %v607
        %v2575 = vunpack.c.l.b16 %v608
        %v2576 = vunpack.c.h.b16 %v608
        %v2577 = vunpack.c.l.b16 %v609
        %v2578 = vunpack.c.h.b16 %v609
        %v2579 = vunpack.c.l.b16 %v610
        %v2580 = vunpack.c.h.b16 %v610
        %v2581 = vunpack.c.l.b16 %v611
        %v2582 = vunpack.c.h.b16 %v611
        %v2583 = vunpack.c.l.b16 %v612
        %v2584 = vunpack.c.h.b16 %v612
        %v2585 = vunpack.c.l.b16 %v613
        %v2586 = vunpack.c.h.b16 %v613
        %v2587 = vunpack.c.l.b16 %v614
        %v2588 = vunpack.c.h.b16 %v614
        %v2589 = vunpack.c.l.b16 %v615
        %v2590 = vunpack.c.h.b16 %v615
        %v2591 = vunpack.c.l.b16 %v616
        %v2592 = vunpack.c.h.b16 %v616
        %v2593 = vunpack.c.l.b16 %v617
        %v2594 = vunpack.c.h.b16 %v617
        %v2595 = vunpack.c.l.b16 %v618
        %v2596 = vunpack.c.h.b16 %v618
        %v2597 = vunpack.c.l.b16 %v619
        %v2598 = vunpack.c.h.b16 %v619
        %v2599 = vunpack.c.l.b16 %v620
        %v2600 = vunpack.c.h.b16 %v620
        %v2601 = vunpack.c.l.b16 %v621
        %v2602 = vunpack.c.h.b16 %v621
        %v2603 = vunpack.c.l.b16 %v622
        %v2604 = vunpack.c.h.b16 %v622
        %v2605 = vunpack.c.l.b16 %v623
        %v2606 = vunpack.c.h.b16 %v623
        %v2607 = vunpack.c.l.b16 %v624
        %v2608 = vunpack.c.h.b16 %v624
        %v2609 = vunpack.c.l.b16 %v625
        %v2610 = vunpack.c.h.b16 %v625
        %v2611 = vunpack.c.l.b16 %v626
        %v2612 = vunpack.c.h.b16 %v626
        %v2613 = vunpack.c.l.b16 %v627
        %v2614 = vunpack.c.h.b16 %v627
        %v2615 = vunpack.c.l.b16 %v628
        %v2616 = vunpack.c.h.b16 %v628
        %v2617 = vunpack.c.l.b16 %v629
        %v2618 = vunpack.c.h.b16 %v629
        %v2619 = vunpack.c.l.b16 %v630
        %v2620 = vunpack.c.h.b16 %v630
        %v2621 = vunpack.c.l.b16 %v631
        %v2622 = vunpack.c.h.b16 %v631
        %v2623 = vunpack.c.l.b16 %v632
        %v2624 = vunpack.c.h.b16 %v632
        %v2625 = vunpack.c.l.b16 %v633
        %v2626 = vunpack.c.h.b16 %v633
        %v2627 = vunpack.c.l.b16 %v634
        %v2628 = vunpack.c.h.b16 %v634
        %v2629 = vunpack.c.l.b16 %v635
        %v2630 = vunpack.c.h.b16 %v635
        %v2631 = vunpack.c.l.b16 %v636
        %v2632 = vunpack.c.h.b16 %v636
        %v2633 = vunpack.c.l.b16 %v637
        %v2634 = vunpack.c.h.b16 %v637
        %v2635 = vunpack.c.l.b16 %v638
        %v2636 = vunpack.c.h.b16 %v638
        %v2637 = vunpack.c.l.b16 %v639
        %v2638 = vunpack.c.h.b16 %v639
        %v2639 = vunpack.c.l.b16 %v640
        %v2640 = vunpack.c.h.b16 %v640
        %v2641 = vunpack.c.l.b16 %v641
        %v2642 = vunpack.c.h.b16 %v641
        %v2643 = vunpack.c.l.b16 %v642
        %v2644 = vunpack.c.h.b16 %v642
        %v2645 = vunpack.c.l.b16 %v643
        %v2646 = vunpack.c.h.b16 %v643
        %v2647 = vunpack.c.l.b16 %v644
        %v2648 = vunpack.c.h.b16 %v644
        %v2649 = vunpack.c.l.b16 %v645
        %v2650 = vunpack.c.h.b16 %v645
        %v2651 = vunpack.c.l.b16 %v646
        %v2652 = vunpack.c.h.b16 %v646
        %v2653 = vunpack.c.l.b16 %v647
        %v2654 = vunpack.c.h.b16 %v647
        %v2655 = vunpack.c.l.b16 %v648
        %v2656 = vunpack.c.h.b16 %v648
        %v2657 = vunpack.c.l.b16 %v649
        %v2658 = vunpack.c.h.b16 %v649
        %v2659 = vunpack.c.l.b16 %v650
        %v2660 = vunpack.c.h.b16 %v650
        %v2661 = vunpack.c.l.b16 %v651
        %v2662 = vunpack.c.h.b16 %v651
        %v2663 = vunpack.c.l.b16 %v652
        %v2664 = vunpack.c.h.b16 %v652
        %v2665 = vunpack.c.l.b16 %v653
        %v2666 = vunpack.c.h.b16 %v653
        %v2667 = vunpack.c.l.b16 %v654
        %v2668 = vunpack.c.h.b16 %v654
        %v2669 = vunpack.c.l.b16 %v655
        %v2670 = vunpack.c.h.b16 %v655
        %v2671 = vunpack.c.l.b16 %v656
        %v2672 = vunpack.c.h.b16 %v656
        %v2673 = vunpack.c.l.b16 %v657
        %v2674 = vunpack.c.h.b16 %v657
        %v2675 = vunpack.c.l.b16 %v658
        %v2676 = vunpack.c.h.b16 %v658
        %v2677 = vunpack.c.l.b16 %v659
        %v2678 = vunpack.c.h.b16 %v659
        %v2679 = vunpack.c.l.b16 %v660
        %v2680 = vunpack.c.h.b16 %v660
        %v2681 = vunpack.c.l.b16 %v661
        %v2682 = vunpack.c.h.b16 %v661
        %v2683 = vunpack.c.l.b16 %v662
        %v2684 = vunpack.c.h.b16 %v662
        %v2685 = vunpack.c.l.b16 %v663
        %v2686 = vunpack.c.h.b16 %v663
        %v2687 = vunpack.c.l.b16 %v664
        %v2688 = vunpack.c.h.b16 %v664
        %v2689 = vunpack.c.l.b16 %v665
        %v2690 = vunpack.c.h.b16 %v665
        %v2691 = vunpack.c.l.b16 %v666
        %v2692 = vunpack.c.h.b16 %v666
        %v2693 = vunpack.c.l.b16 %v667
        %v2694 = vunpack.c.h.b16 %v667
        %v2695 = vunpack.c.l.b16 %v668
        %v2696 = vunpack.c.h.b16 %v668
        %v2697 = vunpack.c.l.b16 %v669
        %v2698 = vunpack.c.h.b16 %v669
        %v2699 = vunpack.c.l.b16 %v670
        %v2700 = vunpack.c.h.b16 %v670
        %v2701 = vunpack.c.l.b16 %v671
        %v2702 = vunpack.c.h.b16 %v671
        %v2703 = vunpack.c.l.b16 %v672
        %v2704 = vunpack.c.h.b16 %v672
        %v2705 = vunpack.c.l.b16 %v673
        %v2706 = vunpack.c.h.b16 %v673
        %v2707 = vunpack.c.l.b16 %v674
        %v2708 = vunpack.c.h.b16 %v674
        %v2709 = vunpack.c.l.b16 %v675
        %v2710 = vunpack.c.h.b16 %v675
        %v2711 = vunpack.c.l.b16 %v676
        %v2712 = vunpack.c.h.b16 %v676
        %v2713 = vunpack.c.l.b16 %v677
        %v2714 = vunpack.c.h.b16 %v677
        %v2715 = vunpack.c.l.b16 %v678
        %v2716 = vunpack.c.h.b16 %v678
        %v2717 = vunpack.c.l.b16 %v679
        %v2718 = vunpack.c.h.b16 %v679
        %v2719 = vunpack.c.l.b16 %v680
        %v2720 = vunpack.c.h.b16 %v680
        %v2721 = vunpack.c.l.b16 %v681
        %v2722 = vunpack.c.h.b16 %v681
        %v2723 = vunpack.c.l.b16 %v682
        %v2724 = vunpack.c.h.b16 %v682
        %v2725 = vunpack.c.l.b16 %v683
        %v2726 = vunpack.c.h.b16 %v683
        %v2727 = vunpack.c.l.b16 %v684
        %v2728 = vunpack.c.h.b16 %v684
        %v2729 = vunpack.c.l.b16 %v685
        %v2730 = vunpack.c.h.b16 %v685
        %v2731 = vunpack.c.l.b16 %v686
        %v2732 = vunpack.c.h.b16 %v686
        %v2733 = vunpack.c.l.b16 %v687
        %v2734 = vunpack.c.h.b16 %v687
        %v2735 = vunpack.c.l.b16 %v688
        %v2736 = vunpack.c.h.b16 %v688
        %v2737 = vunpack.c.l.b16 %v689
        %v2738 = vunpack.c.h.b16 %v689
        %v2739 = vunpack.c.l.b16 %v690
        %v2740 = vunpack.c.h.b16 %v690
        %v2741 = vunpack.c.l.b16 %v691
        %v2742 = vunpack.c.h.b16 %v691
        %v2743 = vunpack.c.l.b16 %v692
        %v2744 = vunpack.c.h.b16 %v692
        %v2745 = vunpack.c.l.b16 %v693
        %v2746 = vunpack.c.h.b16 %v693
        %v2747 = vunpack.c.l.b16 %v694
        %v2748 = vunpack.c.h.b16 %v694
        %v2749 = vunpack.c.l.b16 %v695
        %v2750 = vunpack.c.h.b16 %v695
        %v2751 = vunpack.c.l.b16 %v696
        %v2752 = vunpack.c.h.b16 %v696
        %v2753 = vunpack.c.l.b16 %v697
        %v2754 = vunpack.c.h.b16 %v697
        %v2755 = vunpack.c.l.b16 %v698
        %v2756 = vunpack.c.h.b16 %v698
        %v2757 = vunpack.c.l.b16 %v699
        %v2758 = vunpack.c.h.b16 %v699
        %v2759 = vunpack.c.l.b16 %v700
        %v2760 = vunpack.c.h.b16 %v700
        %v2761 = vunpack.c.l.b16 %v701
        %v2762 = vunpack.c.h.b16 %v701
        %v2763 = vunpack.c.l.b16 %v702
        %v2764 = vunpack.c.h.b16 %v702
        %v2765 = vunpack.c.l.b16 %v703
        %v2766 = vunpack.c.h.b16 %v703
        %v2767 = vunpack.c.l.b16 %v704
        %v2768 = vunpack.c.h.b16 %v704
        %v2769 = vunpack.c.l.b16 %v705
        %v2770 = vunpack.c.h.b16 %v705
        %v2771 = vunpack.c.l.b16 %v706
        %v2772 = vunpack.c.h.b16 %v706
        %v2773 = vunpack.c.l.b16 %v707
        %v2774 = vunpack.c.h.b16 %v707
        %v2775 = vunpack.c.l.b16 %v708
        %v2776 = vunpack.c.h.b16 %v708
        %v2777 = vunpack.c.l.b16 %v709
        %v2778 = vunpack.c.h.b16 %v709
        %v2779 = vunpack.c.l.b16 %v710
        %v2780 = vunpack.c.h.b16 %v710
        %v2781 = vunpack.c.l.b16 %v711
        %v2782 = vunpack.c.h.b16 %v711
        %v2783 = vunpack.c.l.b16 %v712
        %v2784 = vunpack.c.h.b16 %v712
        %v2785 = vunpack.c.l.b16 %v713
        %v2786 = vunpack.c.h.b16 %v713
        %v2787 = vunpack.c.l.b16 %v714
        %v2788 = vunpack.c.h.b16 %v714
        %v2789 = vunpack.c.l.b16 %v715
        %v2790 = vunpack.c.h.b16 %v715
        %v2791 = vunpack.c.l.b16 %v716
        %v2792 = vunpack.c.h.b16 %v716
        %v2793 = vunpack.c.l.b16 %v717
        %v2794 = vunpack.c.h.b16 %v717
        %v2795 = vunpack.c.l.b16 %v718
        %v2796 = vunpack.c.h.b16 %v718
        %v2797 = vunpack.c.l.b16 %v719
        %v2798 = vunpack.c.h.b16 %v719
        %v2799 = vunpack.c.l.b16 %v720
        %v2800 = vunpack.c.h.b16 %v720
        %v2801 = vunpack.c.l.b16 %v721
        %v2802 = vunpack.c.h.b16 %v721
        %v2803 = vunpack.c.l.b16 %v722
        %v2804 = vunpack.c.h.b16 %v722
        %v2805 = vunpack.c.l.b16 %v723
        %v2806 = vunpack.c.h.b16 %v723
        %v2807 = vunpack.c.l.b16 %v724
        %v2808 = vunpack.c.h.b16 %v724
        %v2809 = vunpack.c.l.b16 %v725
        %v2810 = vunpack.c.h.b16 %v725
        %v2811 = vunpack.c.l.b16 %v726
        %v2812 = vunpack.c.h.b16 %v726
        %v2813 = vunpack.c.l.b16 %v727
        %v2814 = vunpack.c.h.b16 %v727
        %v2815 = vunpack.c.l.b16 %v728
        %v2816 = vunpack.c.h.b16 %v728
        %v2817 = vunpack.c.l.b16 %v729
        %v2818 = vunpack.c.h.b16 %v729
        %v2819 = vunpack.c.l.b16 %v730
        %v2820 = vunpack.c.h.b16 %v730
        %v2821 = vunpack.c.l.b16 %v731
        %v2822 = vunpack.c.h.b16 %v731
        %v2823 = vunpack.c.l.b16 %v732
        %v2824 = vunpack.c.h.b16 %v732
        %v2825 = vunpack.c.l.b16 %v733
        %v2826 = vunpack.c.h.b16 %v733
        %v2827 = vunpack.c.l.b16 %v734
        %v2828 = vunpack.c.h.b16 %v734
        %v2829 = vunpack.c.l.b16 %v735
        %v2830 = vunpack.c.h.b16 %v735
        %v2831 = vunpack.c.l.b16 %v736
        %v2832 = vunpack.c.h.b16 %v736
        %v2833 = vunpack.c.l.b16 %v737
        %v2834 = vunpack.c.h.b16 %v737
        %v2835 = vunpack.c.l.b16 %v738
        %v2836 = vunpack.c.h.b16 %v738
        %v2837 = vunpack.c.l.b16 %v739
        %v2838 = vunpack.c.h.b16 %v739
        %v2839 = vunpack.c.l.b16 %v740
        %v2840 = vunpack.c.h.b16 %v740
        %v2841 = vunpack.c.l.b16 %v741
        %v2842 = vunpack.c.h.b16 %v741
        %v2843 = vunpack.c.l.b16 %v742
        %v2844 = vunpack.c.h.b16 %v742
        %v2845 = vunpack.c.l.b16 %v743
        %v2846 = vunpack.c.h.b16 %v743
        %v2847 = vunpack.c.l.b16 %v744
        %v2848 = vunpack.c.h.b16 %v744
        %v2849 = vunpack.c.l.b16 %v745
        %v2850 = vunpack.c.h.b16 %v745
        %v2851 = vunpack.c.l.b16 %v746
        %v2852 = vunpack.c.h.b16 %v746
        %v2853 = vunpack.c.l.b16 %v747
        %v2854 = vunpack.c.h.b16 %v747
        %v2855 = vunpack.c.l.b16 %v748
        %v2856 = vunpack.c.h.b16 %v748
        %v2857 = vunpack.c.l.b16 %v749
        %v2858 = vunpack.c.h.b16 %v749
        %v2859 = vunpack.c.l.b16 %v750
        %v2860 = vunpack.c.h.b16 %v750
        %v2861 = vunpack.c.l.b16 %v751
        %v2862 = vunpack.c.h.b16 %v751
        %v2863 = vunpack.c.l.b16 %v752
        %v2864 = vunpack.c.h.b16 %v752
        %v2865 = vunpack.c.l.b16 %v753
        %v2866 = vunpack.c.h.b16 %v753
        %v2867 = vunpack.c.l.b16 %v754
        %v2868 = vunpack.c.h.b16 %v754
        %v2869 = vunpack.c.l.b16 %v755
        %v2870 = vunpack.c.h.b16 %v755
        %v2871 = vunpack.c.l.b16 %v756
        %v2872 = vunpack.c.h.b16 %v756
        %v2873 = vunpack.c.l.b16 %v757
        %v2874 = vunpack.c.h.b16 %v757
        %v2875 = vunpack.c.l.b16 %v758
        %v2876 = vunpack.c.h.b16 %v758
        %v2877 = vunpack.c.l.b16 %v759
        %v2878 = vunpack.c.h.b16 %v759
        %v2879 = vunpack.c.l.b16 %v760
        %v2880 = vunpack.c.h.b16 %v760
        %v2881 = vunpack.c.l.b16 %v761
        %v2882 = vunpack.c.h.b16 %v761
        %v2883 = vunpack.c.l.b16 %v762
        %v2884 = vunpack.c.h.b16 %v762
        %v2885 = vunpack.c.l.b16 %v763
        %v2886 = vunpack.c.h.b16 %v763
        %v2887 = vunpack.c.l.b16 %v764
        %v2888 = vunpack.c.h.b16 %v764
        %v2889 = vunpack.c.l.b16 %v765
        %v2890 = vunpack.c.h.b16 %v765
        %v2891 = vunpack.c.l.b16 %v766
        %v2892 = vunpack.c.h.b16 %v766
        %v2893 = vunpack.c.l.b16 %v767
        %v2894 = vunpack.c.h.b16 %v767
        %v2895 = vunpack.c.l.b16 %v768
        %v2896 = vunpack.c.h.b16 %v768
        %v2897 = vunpack.c.l.b16 %v769
        %v2898 = vunpack.c.h.b16 %v769
        %v2899 = vunpack.c.l.b16 %v770
        %v2900 = vunpack.c.h.b16 %v770
        %v2901 = vunpack.c.l.b16 %v771
        %v2902 = vunpack.c.h.b16 %v771
        %v2903 = vunpack.c.l.b16 %v772
        %v2904 = vunpack.c.h.b16 %v772
        %v2905 = vunpack.c.l.b16 %v773
        %v2906 = vunpack.c.h.b16 %v773
        %v2907 = vunpack.c.l.b16 %v774
        %v2908 = vunpack.c.h.b16 %v774
        %v2909 = vunpack.c.l.b16 %v775
        %v2910 = vunpack.c.h.b16 %v775
        %v2911 = vunpack.c.l.b16 %v776
        %v2912 = vunpack.c.h.b16 %v776
        %v2913 = vunpack.c.l.b16 %v777
        %v2914 = vunpack.c.h.b16 %v777
        %v2915 = vunpack.c.l.b16 %v778
        %v2916 = vunpack.c.h.b16 %v778
        %v2917 = vunpack.c.l.b16 %v779
        %v2918 = vunpack.c.h.b16 %v779
        %v2919 = vunpack.c.l.b16 %v780
        %v2920 = vunpack.c.h.b16 %v780
        %v2921 = vunpack.c.l.b16 %v781
        %v2922 = vunpack.c.h.b16 %v781
        %v2923 = vunpack.c.l.b16 %v782
        %v2924 = vunpack.c.h.b16 %v782
        %v2925 = vunpack.c.l.b16 %v783
        %v2926 = vunpack.c.h.b16 %v783
        %v2927 = vunpack.c.l.b16 %v784
        %v2928 = vunpack.c.h.b16 %v784
        %v2929 = vunpack.c.l.b16 %v785
        %v2930 = vunpack.c.h.b16 %v785
        %v2931 = vunpack.c.l.b16 %v786
        %v2932 = vunpack.c.h.b16 %v786
        %v2933 = vunpack.c.l.b16 %v787
        %v2934 = vunpack.c.h.b16 %v787
        %v2935 = vunpack.c.l.b16 %v788
        %v2936 = vunpack.c.h.b16 %v788
        %v2937 = vunpack.c.l.b16 %v789
        %v2938 = vunpack.c.h.b16 %v789
        %v2939 = vunpack.c.l.b16 %v790
        %v2940 = vunpack.c.h.b16 %v790
        %v2941 = vunpack.c.l.b16 %v791
        %v2942 = vunpack.c.h.b16 %v791
        %v2943 = vunpack.c.l.b16 %v792
        %v2944 = vunpack.c.h.b16 %v792
        %v2945 = vunpack.c.l.b16 %v793
        %v2946 = vunpack.c.h.b16 %v793
        %v2947 = vunpack.c.l.b16 %v794
        %v2948 = vunpack.c.h.b16 %v794
        %v2949 = vunpack.c.l.b16 %v795
        %v2950 = vunpack.c.h.b16 %v795
        %v2951 = vunpack.c.l.b16 %v796
        %v2952 = vunpack.c.h.b16 %v796
        %v2953 = vunpack.c.l.b16 %v797
        %v2954 = vunpack.c.h.b16 %v797
        %v2955 = vunpack.c.l.b16 %v798
        %v2956 = vunpack.c.h.b16 %v798
        %v2957 = vunpack.c.l.b16 %v799
        %v2958 = vunpack.c.h.b16 %v799
        %v2959 = vunpack.c.l.b16 %v800
        %v2960 = vunpack.c.h.b16 %v800
        %v2961 = vunpack.c.l.b16 %v801
        %v2962 = vunpack.c.h.b16 %v801
        %v2963 = vunpack.c.l.b16 %v802
        %v2964 = vunpack.c.h.b16 %v802
        %v2965 = vunpack.c.l.b16 %v803
        %v2966 = vunpack.c.h.b16 %v803
        %v2967 = vunpack.c.l.b16 %v804
        %v2968 = vunpack.c.h.b16 %v804
        %v2969 = vunpack.c.l.b16 %v805
        %v2970 = vunpack.c.h.b16 %v805
        %v2971 = vunpack.c.l.b16 %v806
        %v2972 = vunpack.c.h.b16 %v806
        %v2973 = vunpack.c.l.b16 %v807
        %v2974 = vunpack.c.h.b16 %v807
        %v2975 = vunpack.c.l.b16 %v808
        %v2976 = vunpack.c.h.b16 %v808
        %v2977 = vunpack.c.l.b16 %v809
        %v2978 = vunpack.c.h.b16 %v809
        %v2979 = vunpack.c.l.b16 %v810
        %v2980 = vunpack.c.h.b16 %v810
        %v2981 = vunpack.c.l.b16 %v811
        %v2982 = vunpack.c.h.b16 %v811
        %v2983 = vunpack.c.l.b16 %v812
        %v2984 = vunpack.c.h.b16 %v812
        %v2985 = vunpack.c.l.b16 %v813
        %v2986 = vunpack.c.h.b16 %v813
        %v2987 = vunpack.c.l.b16 %v814
        %v2988 = vunpack.c.h.b16 %v814
        %v2989 = vunpack.c.l.b16 %v815
        %v2990 = vunpack.c.h.b16 %v815
        %v2991 = vunpack.c.l.b16 %v816
        %v2992 = vunpack.c.h.b16 %v816
        %v2993 = vunpack.c.l.b16 %v817
        %v2994 = vunpack.c.h.b16 %v817
        %v2995 = vunpack.c.l.b16 %v818
        %v2996 = vunpack.c.h.b16 %v818
        %v2997 = vunpack.c.l.b16 %v819
        %v2998 = vunpack.c.h.b16 %v819
        %v2999 = vunpack.c.l.b16 %v820
        %v3000 = vunpack.c.h.b16 %v820
        %v3001 = vunpack.c.l.b16 %v821
        %v3002 = vunpack.c.h.b16 %v821
        %v3003 = vunpack.c.l.b16 %v822
        %v3004 = vunpack.c.h.b16 %v822
        %v3005 = vunpack.c.l.b16 %v823
        %v3006 = vunpack.c.h.b16 %v823
        %v3007 = vunpack.c.l.b16 %v824
        %v3008 = vunpack.c.h.b16 %v824
        %v3009 = vunpack.c.l.b16 %v825
        %v3010 = vunpack.c.h.b16 %v825
        %v3011 = vunpack.c.l.b16 %v826
        %v3012 = vunpack.c.h.b16 %v826
        %v3013 = vunpack.c.l.b16 %v827
        %v3014 = vunpack.c.h.b16 %v827
        %v3015 = vunpack.c.l.b16 %v828
        %v3016 = vunpack.c.h.b16 %v828
        %v3017 = vunpack.c.l.b16 %v829
        %v3018 = vunpack.c.h.b16 %v829
        %v3019 = vunpack.c.l.b16 %v830
        %v3020 = vunpack.c.h.b16 %v830
        %v3021 = vunpack.c.l.b16 %v831
        %v3022 = vunpack.c.h.b16 %v831
        %v3023 = vunpack.c.l.b16 %v832
        %v3024 = vunpack.c.h.b16 %v832
        %v3025 = vunpack.c.l.b16 %v833
        %v3026 = vunpack.c.h.b16 %v833
        %v3027 = vunpack.c.l.b16 %v834
        %v3028 = vunpack.c.h.b16 %v834
        %v3029 = vunpack.c.l.b16 %v835
        %v3030 = vunpack.c.h.b16 %v835
        %v3031 = vunpack.c.l.b16 %v836
        %v3032 = vunpack.c.h.b16 %v836
        %v3033 = vunpack.c.l.b16 %v837
        %v3034 = vunpack.c.h.b16 %v837
        %v3035 = vunpack.c.l.b16 %v838
        %v3036 = vunpack.c.h.b16 %v838
        %v3037 = vunpack.c.l.b16 %v839
        %v3038 = vunpack.c.h.b16 %v839
        %v3039 = vunpack.c.l.b16 %v840
        %v3040 = vunpack.c.h.b16 %v840
        %v3041 = vunpack.c.l.b16 %v841
        %v3042 = vunpack.c.h.b16 %v841
        %v3043 = vunpack.c.l.b16 %v842
        %v3044 = vunpack.c.h.b16 %v842
        %v3045 = vunpack.c.l.b16 %v843
        %v3046 = vunpack.c.h.b16 %v843
        %v3047 = vunpack.c.l.b16 %v844
        %v3048 = vunpack.c.h.b16 %v844
        %v3049 = vunpack.c.l.b16 %v845
        %v3050 = vunpack.c.h.b16 %v845
        %v3051 = vunpack.c.l.b16 %v846
        %v3052 = vunpack.c.h.b16 %v846
        %v3053 = vunpack.c.l.b16 %v847
        %v3054 = vunpack.c.h.b16 %v847
        %v3055 = vunpack.c.l.b16 %v848
        %v3056 = vunpack.c.h.b16 %v848
        %v3057 = vunpack.c.l.b16 %v849
        %v3058 = vunpack.c.h.b16 %v849
        %v3059 = vunpack.c.l.b16 %v850
        %v3060 = vunpack.c.h.b16 %v850
        %v3061 = vunpack.c.l.b16 %v851
        %v3062 = vunpack.c.h.b16 %v851
        %v3063 = vunpack.c.l.b16 %v852
        %v3064 = vunpack.c.h.b16 %v852
        %v3065 = vunpack.c.l.b16 %v853
        %v3066 = vunpack.c.h.b16 %v853
        %v3067 = vunpack.c.l.b16 %v854
        %v3068 = vunpack.c.h.b16 %v854
        %v3069 = vunpack.c.l.b16 %v855
        %v3070 = vunpack.c.h.b16 %v855
        %v3071 = vunpack.c.l.b16 %v856
        %v3072 = vunpack.c.h.b16 %v856
        %v3073 = vunpack.c.l.b16 %v857
        %v3074 = vunpack.c.h.b16 %v857
        %v3075 = vunpack.c.l.b16 %v858
        %v3076 = vunpack.c.h.b16 %v858
        %v3077 = vunpack.c.l.b16 %v859
        %v3078 = vunpack.c.h.b16 %v859
        %v3079 = vunpack.c.l.b16 %v860
        %v3080 = vunpack.c.h.b16 %v860
        %v3081 = vunpack.c.l.b16 %v861
        %v3082 = vunpack.c.h.b16 %v861
        %v3083 = vunpack.c.l.b16 %v862
        %v3084 = vunpack.c.h.b16 %v862
        %v3085 = vunpack.c.l.b16 %v863
        %v3086 = vunpack.c.h.b16 %v863
        %v3087 = vunpack.c.l.b16 %v864
        %v3088 = vunpack.c.h.b16 %v864
        %v3089 = vunpack.c.l.b16 %v865
        %v3090 = vunpack.c.h.b16 %v865
        %v3091 = vunpack.c.l.b16 %v866
        %v3092 = vunpack.c.h.b16 %v866
        %v3093 = vunpack.c.l.b16 %v867
        %v3094 = vunpack.c.h.b16 %v867
        %v3095 = vunpack.c.l.b16 %v868
        %v3096 = vunpack.c.h.b16 %v868
        %v3097 = vunpack.c.l.b16 %v869
        %v3098 = vunpack.c.h.b16 %v869
        %v3099 = vunpack.c.l.b16 %v870
        %v3100 = vunpack.c.h.b16 %v870
        %v3101 = vunpack.c.l.b16 %v871
        %v3102 = vunpack.c.h.b16 %v871
        %v3103 = vunpack.c.l.b16 %v872
        %v3104 = vunpack.c.h.b16 %v872
        %v3105 = vunpack.c.l.b16 %v873
        %v3106 = vunpack.c.h.b16 %v873
        %v3107 = vunpack.c.l.b16 %v874
        %v3108 = vunpack.c.h.b16 %v874
        %v3109 = vunpack.c.l.b16 %v875
        %v3110 = vunpack.c.h.b16 %v875
        %v3111 = vunpack.c.l.b16 %v876
        %v3112 = vunpack.c.h.b16 %v876
        %v3113 = vunpack.c.l.b16 %v877
        %v3114 = vunpack.c.h.b16 %v877
        %v3115 = vunpack.c.l.b16 %v878
        %v3116 = vunpack.c.h.b16 %v878
        %v3117 = vunpack.c.l.b16 %v879
        %v3118 = vunpack.c.h.b16 %v879
        %v3119 = vunpack.c.l.b16 %v880
        %v3120 = vunpack.c.h.b16 %v880
        %v3121 = vunpack.c.l.b16 %v881
        %v3122 = vunpack.c.h.b16 %v881
        %v3123 = vunpack.c.l.b16 %v882
        %v3124 = vunpack.c.h.b16 %v882
        %v3125 = vunpack.c.l.b16 %v883
        %v3126 = vunpack.c.h.b16 %v883
        %v3127 = vunpack.c.l.b16 %v884
        %v3128 = vunpack.c.h.b16 %v884
        %v3129 = vunpack.c.l.b16 %v885
        %v3130 = vunpack.c.h.b16 %v885
        %v3131 = vunpack.c.l.b16 %v886
        %v3132 = vunpack.c.h.b16 %v886
        %v3133 = vunpack.c.l.b16 %v887
        %v3134 = vunpack.c.h.b16 %v887
        %v3135 = vunpack.c.l.b16 %v888
        %v3136 = vunpack.c.h.b16 %v888
        %v3137 = vunpack.c.l.b16 %v889
        %v3138 = vunpack.c.h.b16 %v889
        %v3139 = vunpack.c.l.b16 %v890
        %v3140 = vunpack.c.h.b16 %v890
        %v3141 = vunpack.c.l.b16 %v891
        %v3142 = vunpack.c.h.b16 %v891
        %v3143 = vunpack.c.l.b16 %v892
        %v3144 = vunpack.c.h.b16 %v892
        %v3145 = vunpack.c.l.b16 %v893
        %v3146 = vunpack.c.h.b16 %v893
        %v3147 = vunpack.c.l.b16 %v894
        %v3148 = vunpack.c.h.b16 %v894
        %v3149 = vunpack.c.l.b16 %v895
        %v3150 = vunpack.c.h.b16 %v895
        %v3151 = vunpack.c.l.b16 %v896
        %v3152 = vunpack.c.h.b16 %v896
        %v3153 = vunpack.c.l.b16 %v897
        %v3154 = vunpack.c.h.b16 %v897
        %v3155 = vunpack.c.l.b16 %v898
        %v3156 = vunpack.c.h.b16 %v898
        %v3157 = vunpack.c.l.b16 %v899
        %v3158 = vunpack.c.h.b16 %v899
        %v3159 = vunpack.c.l.b16 %v900
        %v3160 = vunpack.c.h.b16 %v900
        %v3161 = vunpack.c.l.b16 %v901
        %v3162 = vunpack.c.h.b16 %v901
        %v3163 = vunpack.c.l.b16 %v902
        %v3164 = vunpack.c.h.b16 %v902
        %v3165 = vunpack.c.l.b16 %v903
        %v3166 = vunpack.c.h.b16 %v903
        %v3167 = vunpack.c.l.b16 %v904
        %v3168 = vunpack.c.h.b16 %v904
        %v3169 = vunpack.c.l.b16 %v905
        %v3170 = vunpack.c.h.b16 %v905
        %v3171 = vunpack.c.l.b16 %v906
        %v3172 = vunpack.c.h.b16 %v906
        %v3173 = vunpack.c.l.b16 %v907
        %v3174 = vunpack.c.h.b16 %v907
        %v3175 = vunpack.c.l.b16 %v908
        %v3176 = vunpack.c.h.b16 %v908
        %v3177 = vunpack.c.l.b16 %v909
        %v3178 = vunpack.c.h.b16 %v909
        %v3179 = vunpack.c.l.b16 %v910
        %v3180 = vunpack.c.h.b16 %v910
        %v3181 = vunpack.c.l.b16 %v911
        %v3182 = vunpack.c.h.b16 %v911
        %v3183 = vunpack.c.l.b16 %v912
        %v3184 = vunpack.c.h.b16 %v912
        %v3185 = vunpack.c.l.b16 %v913
        %v3186 = vunpack.c.h.b16 %v913
        %v3187 = vunpack.c.l.b16 %v914
        %v3188 = vunpack.c.h.b16 %v914
        %v3189 = vunpack.c.l.b16 %v915
        %v3190 = vunpack.c.h.b16 %v915
        %v3191 = vunpack.c.l.b16 %v916
        %v3192 = vunpack.c.h.b16 %v916
        %v3193 = vunpack.c.l.b16 %v917
        %v3194 = vunpack.c.h.b16 %v917
        %v3195 = vunpack.c.l.b16 %v918
        %v3196 = vunpack.c.h.b16 %v918
        %v3197 = vunpack.c.l.b16 %v919
        %v3198 = vunpack.c.h.b16 %v919
        %v3199 = vunpack.c.l.b16 %v920
        %v3200 = vunpack.c.h.b16 %v920
        %v3201 = vunpack.c.l.b16 %v921
        %v3202 = vunpack.c.h.b16 %v921
        %v3203 = vunpack.c.l.b16 %v922
        %v3204 = vunpack.c.h.b16 %v922
        %v3205 = vunpack.c.l.b16 %v923
        %v3206 = vunpack.c.h.b16 %v923
        %v3207 = vunpack.c.l.b16 %v924
        %v3208 = vunpack.c.h.b16 %v924
        %v3209 = vunpack.c.l.b16 %v925
        %v3210 = vunpack.c.h.b16 %v925
        %v3211 = vunpack.c.l.b16 %v926
        %v3212 = vunpack.c.h.b16 %v926
        %v3213 = vunpack.c.l.b16 %v927
        %v3214 = vunpack.c.h.b16 %v927
        %v3215 = vunpack.c.l.b16 %v928
        %v3216 = vunpack.c.h.b16 %v928
        %v3217 = vunpack.c.l.b16 %v929
        %v3218 = vunpack.c.h.b16 %v929
        %v3219 = vunpack.c.l.b16 %v930
        %v3220 = vunpack.c.h.b16 %v930
        %v3221 = vunpack.c.l.b16 %v931
        %v3222 = vunpack.c.h.b16 %v931
        %v3223 = vunpack.c.l.b16 %v932
        %v3224 = vunpack.c.h.b16 %v932
        %v3225 = vunpack.c.l.b16 %v933
        %v3226 = vunpack.c.h.b16 %v933
        %v3227 = vunpack.c.l.b16 %v934
        %v3228 = vunpack.c.h.b16 %v934
        %v3229 = vunpack.c.l.b16 %v935
        %v3230 = vunpack.c.h.b16 %v935
        %v3231 = vunpack.c.l.b16 %v936
        %v3232 = vunpack.c.h.b16 %v936
        %v3233 = vunpack.c.l.b16 %v937
        %v3234 = vunpack.c.h.b16 %v937
        %v3235 = vunpack.c.l.b16 %v938
        %v3236 = vunpack.c.h.b16 %v938
        %v3237 = vunpack.c.l.b16 %v939
        %v3238 = vunpack.c.h.b16 %v939
        %v3239 = vunpack.c.l.b16 %v940
        %v3240 = vunpack.c.h.b16 %v940
        %v3241 = vunpack.c.l.b16 %v941
        %v3242 = vunpack.c.h.b16 %v941
        %v3243 = vunpack.c.l.b16 %v942
        %v3244 = vunpack.c.h.b16 %v942
        %v3245 = vunpack.c.l.b16 %v943
        %v3246 = vunpack.c.h.b16 %v943
        %v3247 = vunpack.c.l.b16 %v944
        %v3248 = vunpack.c.h.b16 %v944
        %v3249 = vunpack.c.l.b16 %v945
        %v3250 = vunpack.c.h.b16 %v945
        %v3251 = vunpack.c.l.b16 %v946
        %v3252 = vunpack.c.h.b16 %v946
        %v3253 = vunpack.c.l.b16 %v947
        %v3254 = vunpack.c.h.b16 %v947
        %v3255 = vunpack.c.l.b16 %v948
        %v3256 = vunpack.c.h.b16 %v948
        %v3257 = vunpack.c.l.b16 %v949
        %v3258 = vunpack.c.h.b16 %v949
        %v3259 = vunpack.c.l.b16 %v950
        %v3260 = vunpack.c.h.b16 %v950
        %v3261 = vunpack.c.l.b16 %v951
        %v3262 = vunpack.c.h.b16 %v951
        %v3263 = vunpack.c.l.b16 %v952
        %v3264 = vunpack.c.h.b16 %v952
        %v3265 = vunpack.c.l.b16 %v953
        %v3266 = vunpack.c.h.b16 %v953
        %v3267 = vunpack.c.l.b16 %v954
        %v3268 = vunpack.c.h.b16 %v954
        %v3269 = vunpack.c.l.b16 %v955
        %v3270 = vunpack.c.h.b16 %v955
        %v3271 = vunpack.c.l.b16 %v956
        %v3272 = vunpack.c.h.b16 %v956
        %v3273 = vunpack.c.l.b16 %v957
        %v3274 = vunpack.c.h.b16 %v957
        %v3275 = vunpack.c.l.b16 %v958
        %v3276 = vunpack.c.h.b16 %v958
        %v3277 = vunpack.c.l.b16 %v959
        %v3278 = vunpack.c.h.b16 %v959
        %v3279 = vunpack.c.l.b16 %v960
        %v3280 = vunpack.c.h.b16 %v960
        %v3281 = vunpack.c.l.b16 %v961
        %v3282 = vunpack.c.h.b16 %v961
        %v3283 = vunpack.c.l.b16 %v962
        %v3284 = vunpack.c.h.b16 %v962
        %v3285 = vunpack.c.l.b16 %v963
        %v3286 = vunpack.c.h.b16 %v963
        %v3287 = vunpack.c.l.b16 %v964
        %v3288 = vunpack.c.h.b16 %v964
        %v3289 = vunpack.c.l.b16 %v965
        %v3290 = vunpack.c.h.b16 %v965
        %v3291 = vunpack.c.l.b16 %v966
        %v3292 = vunpack.c.h.b16 %v966
        %v3293 = vunpack.c.l.b16 %v967
        %v3294 = vunpack.c.h.b16 %v967
        %v3295 = vunpack.c.l.b16 %v968
        %v3296 = vunpack.c.h.b16 %v968
        %v3297 = vunpack.c.l.b16 %v969
        %v3298 = vunpack.c.h.b16 %v969
        %v3299 = vunpack.c.l.b16 %v970
        %v3300 = vunpack.c.h.b16 %v970
        %v3301 = vunpack.c.l.b16 %v971
        %v3302 = vunpack.c.h.b16 %v971
        %v3303 = vunpack.c.l.b16 %v972
        %v3304 = vunpack.c.h.b16 %v972
        %v3305 = vunpack.c.l.b16 %v973
        %v3306 = vunpack.c.h.b16 %v973
        %v3307 = vunpack.c.l.b16 %v974
        %v3308 = vunpack.c.h.b16 %v974
        %v3309 = vunpack.c.l.b16 %v975
        %v3310 = vunpack.c.h.b16 %v975
        %v3311 = vunpack.c.l.b16 %v976
        %v3312 = vunpack.c.h.b16 %v976
        %v3313 = vunpack.c.l.b16 %v977
        %v3314 = vunpack.c.h.b16 %v977
        %v3315 = vunpack.c.l.b16 %v978
        %v3316 = vunpack.c.h.b16 %v978
        %v3317 = vunpack.c.l.b16 %v979
        %v3318 = vunpack.c.h.b16 %v979
        %v3319 = vunpack.c.l.b16 %v980
        %v3320 = vunpack.c.h.b16 %v980
        %v3321 = vunpack.c.l.b16 %v981
        %v3322 = vunpack.c.h.b16 %v981
        %v3323 = vunpack.c.l.b16 %v982
        %v3324 = vunpack.c.h.b16 %v982
        %v3325 = vunpack.c.l.b16 %v983
        %v3326 = vunpack.c.h.b16 %v983
        %v3327 = vunpack.c.l.b16 %v984
        %v3328 = vunpack.c.h.b16 %v984
        %v3329 = vunpack.c.l.b16 %v985
        %v3330 = vunpack.c.h.b16 %v985
        %v3331 = vunpack.c.l.b16 %v986
        %v3332 = vunpack.c.h.b16 %v986
        %v3333 = vunpack.c.l.b16 %v987
        %v3334 = vunpack.c.h.b16 %v987
        %v3335 = vunpack.c.l.b16 %v988
        %v3336 = vunpack.c.h.b16 %v988
        %v3337 = vunpack.c.l.b16 %v989
        %v3338 = vunpack.c.h.b16 %v989
        %v3339 = vunpack.c.l.b16 %v990
        %v3340 = vunpack.c.h.b16 %v990
        %v3341 = vunpack.c.l.b16 %v991
        %v3342 = vunpack.c.h.b16 %v991
        %v3343 = vunpack.c.l.b16 %v992
        %v3344 = vunpack.c.h.b16 %v992
        %v3345 = vunpack.c.l.b16 %v993
        %v3346 = vunpack.c.h.b16 %v993
        %v3347 = vunpack.c.l.b16 %v994
        %v3348 = vunpack.c.h.b16 %v994
        %v3349 = vunpack.c.l.b16 %v995
        %v3350 = vunpack.c.h.b16 %v995
        %v3351 = vunpack.c.l.b16 %v996
        %v3352 = vunpack.c.h.b16 %v996
        %v3353 = vunpack.c.l.b16 %v997
        %v3354 = vunpack.c.h.b16 %v997
        %v3355 = vunpack.c.l.b16 %v998
        %v3356 = vunpack.c.h.b16 %v998
        %v3357 = vunpack.c.l.b16 %v999
        %v3358 = vunpack.c.h.b16 %v999
        %v3359 = vunpack.c.l.b16 %v1000
        %v3360 = vunpack.c.h.b16 %v1000
        %v3361 = vunpack.c.l.b16 %v1001
        %v3362 = vunpack.c.h.b16 %v1001
        %v3363 = vunpack.c.l.b16 %v1002
        %v3364 = vunpack.c.h.b16 %v1002
        %v3365 = vunpack.c.l.b16 %v1003
        %v3366 = vunpack.c.h.b16 %v1003
        %v3367 = vunpack.c.l.b16 %v1004
        %v3368 = vunpack.c.h.b16 %v1004
        %v3369 = vunpack.c.l.b16 %v1005
        %v3370 = vunpack.c.h.b16 %v1005
        %v3371 = vunpack.c.l.b16 %v1006
        %v3372 = vunpack.c.h.b16 %v1006
        %v3373 = vunpack.c.l.b16 %v1007
        %v3374 = vunpack.c.h.b16 %v1007
        %v3375 = vunpack.c.l.b16 %v1008
        %v3376 = vunpack.c.h.b16 %v1008
        %v3377 = vunpack.c.l.b16 %v1009
        %v3378 = vunpack.c.h.b16 %v1009
        %v3379 = vunpack.c.l.b16 %v1010
        %v3380 = vunpack.c.h.b16 %v1010
        %v3381 = vunpack.c.l.b16 %v1011
        %v3382 = vunpack.c.h.b16 %v1011
        %v3383 = vunpack.c.l.b16 %v1012
        %v3384 = vunpack.c.h.b16 %v1012
        %v3385 = vunpack.c.l.b16 %v1013
        %v3386 = vunpack.c.h.b16 %v1013
        %v3387 = vunpack.c.l.b16 %v1014
        %v3388 = vunpack.c.h.b16 %v1014
        %v3389 = vunpack.c.l.b16 %v1015
        %v3390 = vunpack.c.h.b16 %v1015
        %v3391 = vunpack.c.l.b16 %v1016
        %v3392 = vunpack.c.h.b16 %v1016
        %v3393 = vunpack.c.l.b16 %v1017
        %v3394 = vunpack.c.h.b16 %v1017
        %v3395 = vunpack.c.l.b16 %v1018
        %v3396 = vunpack.c.h.b16 %v1018
        %v3397 = vunpack.c.l.b16 %v1019
        %v3398 = vunpack.c.h.b16 %v1019
        %v3399 = vunpack.c.l.b16 %v1020
        %v3400 = vunpack.c.h.b16 %v1020
        %v3401 = vunpack.c.l.b16 %v1021
        %v3402 = vunpack.c.h.b16 %v1021
        %v3403 = vunpack.c.l.b16 %v1022
        %v3404 = vunpack.c.h.b16 %v1022
        %v3405 = vunpack.c.l.b16 %v1023
        %v3406 = vunpack.c.h.b16 %v1023
        %v3407 = vunpack.c.l.b16 %v1024
        %v3408 = vunpack.c.h.b16 %v1024
        %v3409 = vunpack.c.l.b16 %v1025
        %v3410 = vunpack.c.h.b16 %v1025
        %v3411 = vunpack.c.l.b16 %v1026
        %v3412 = vunpack.c.h.b16 %v1026
        %v3413 = vunpack.c.l.b16 %v1027
        %v3414 = vunpack.c.h.b16 %v1027
        %v3415 = vunpack.c.l.b16 %v1028
        %v3416 = vunpack.c.h.b16 %v1028
        %v3417 = vunpack.c.l.b16 %v1029
        %v3418 = vunpack.c.h.b16 %v1029
        %v3419 = vunpack.c.l.b16 %v1030
        %v3420 = vunpack.c.h.b16 %v1030
        %v3421 = vunpack.c.l.b16 %v1031
        %v3422 = vunpack.c.h.b16 %v1031
        %v3423 = vunpack.c.l.b16 %v1032
        %v3424 = vunpack.c.h.b16 %v1032
        %v3425 = vunpack.c.l.b16 %v1033
        %v3426 = vunpack.c.h.b16 %v1033
        %v3427 = vunpack.c.l.b16 %v1034
        %v3428 = vunpack.c.h.b16 %v1034
        %v3429 = vunpack.c.l.b16 %v1035
        %v3430 = vunpack.c.h.b16 %v1035
        %v3431 = vunpack.c.l.b16 %v1036
        %v3432 = vunpack.c.h.b16 %v1036
        %v3433 = vunpack.c.l.b16 %v1037
        %v3434 = vunpack.c.h.b16 %v1037
        %v3435 = vunpack.c.l.b16 %v1038
        %v3436 = vunpack.c.h.b16 %v1038
        %v3437 = vunpack.c.l.b16 %v1039
        %v3438 = vunpack.c.h.b16 %v1039
        %v3439 = vunpack.c.l.b16 %v1040
        %v3440 = vunpack.c.h.b16 %v1040
        %v3441 = vunpack.c.l.b16 %v1041
        %v3442 = vunpack.c.h.b16 %v1041
        %v3443 = vunpack.c.l.b16 %v1042
        %v3444 = vunpack.c.h.b16 %v1042
        %v3445 = vunpack.c.l.b16 %v1043
        %v3446 = vunpack.c.h.b16 %v1043
        %v3447 = vunpack.c.l.b16 %v1044
        %v3448 = vunpack.c.h.b16 %v1044
        %v3449 = vunpack.c.l.b16 %v1045
        %v3450 = vunpack.c.h.b16 %v1045
        %v3451 = vunpack.c.l.b16 %v1046
        %v3452 = vunpack.c.h.b16 %v1046
        %v3453 = vunpack.c.l.b16 %v1047
        %v3454 = vunpack.c.h.b16 %v1047
        %v3455 = vunpack.c.l.b16 %v1048
        %v3456 = vunpack.c.h.b16 %v1048
        %v3457 = vunpack.c.l.b16 %v1049
        %v3458 = vunpack.c.h.b16 %v1049
        %v3459 = vunpack.c.l.b16 %v1050
        %v3460 = vunpack.c.h.b16 %v1050
        %v3461 = vunpack.c.l.b16 %v1051
        %v3462 = vunpack.c.h.b16 %v1051
        %v3463 = vunpack.c.l.b16 %v1052
        %v3464 = vunpack.c.h.b16 %v1052
        %v3465 = vunpack.c.l.b16 %v1053
        %v3466 = vunpack.c.h.b16 %v1053
        %v3467 = vunpack.c.l.b16 %v1054
        %v3468 = vunpack.c.h.b16 %v1054
        %v3469 = vunpack.c.l.b16 %v1055
        %v3470 = vunpack.c.h.b16 %v1055
        %v3471 = vunpack.c.l.b16 %v1056
        %v3472 = vunpack.c.h.b16 %v1056
        %v3473 = vunpack.c.l.b16 %v1057
        %v3474 = vunpack.c.h.b16 %v1057
        %v3475 = vunpack.c.l.b16 %v1058
        %v3476 = vunpack.c.h.b16 %v1058
        %v3477 = vunpack.c.l.b16 %v1059
        %v3478 = vunpack.c.h.b16 %v1059
        %v3479 = vunpack.c.l.b16 %v1060
        %v3480 = vunpack.c.h.b16 %v1060
        %v3481 = vunpack.c.l.b16 %v1061
        %v3482 = vunpack.c.h.b16 %v1061
        %v3483 = vunpack.c.l.b16 %v1062
        %v3484 = vunpack.c.h.b16 %v1062
        %v3485 = vunpack.c.l.b16 %v1063
        %v3486 = vunpack.c.h.b16 %v1063
        %v3487 = vunpack.c.l.b16 %v1064
        %v3488 = vunpack.c.h.b16 %v1064
        %v3489 = vunpack.c.l.b16 %v1065
        %v3490 = vunpack.c.h.b16 %v1065
        %v3491 = vunpack.c.l.b16 %v1066
        %v3492 = vunpack.c.h.b16 %v1066
        %v3493 = vunpack.c.l.b16 %v1067
        %v3494 = vunpack.c.h.b16 %v1067
        %v3495 = vunpack.c.l.b16 %v1068
        %v3496 = vunpack.c.h.b16 %v1068
        %v3497 = vunpack.c.l.b16 %v1069
        %v3498 = vunpack.c.h.b16 %v1069
        %v3499 = vunpack.c.l.b16 %v1070
        %v3500 = vunpack.c.h.b16 %v1070
        %v3501 = vunpack.c.l.b16 %v1071
        %v3502 = vunpack.c.h.b16 %v1071
        %v3503 = vunpack.c.l.b16 %v1072
        %v3504 = vunpack.c.h.b16 %v1072
        %v3505 = vunpack.c.l.b16 %v1073
        %v3506 = vunpack.c.h.b16 %v1073
        %v3507 = vunpack.c.l.b16 %v1074
        %v3508 = vunpack.c.h.b16 %v1074
        %v3509 = vunpack.c.l.b16 %v1075
        %v3510 = vunpack.c.h.b16 %v1075
        %v3511 = vunpack.c.l.b16 %v1076
        %v3512 = vunpack.c.h.b16 %v1076
        %v3513 = vunpack.c.l.b16 %v1077
        %v3514 = vunpack.c.h.b16 %v1077
        %v3515 = vunpack.c.l.b16 %v1078
        %v3516 = vunpack.c.h.b16 %v1078
        %v3517 = vunpack.c.l.b16 %v1079
        %v3518 = vunpack.c.h.b16 %v1079
        %v3519 = vunpack.c.l.b16 %v1080
        %v3520 = vunpack.c.h.b16 %v1080
        %v3521 = vunpack.c.l.b16 %v1081
        %v3522 = vunpack.c.h.b16 %v1081
        %v3523 = vunpack.c.l.b16 %v1082
        %v3524 = vunpack.c.h.b16 %v1082
        %v3525 = vunpack.c.l.b16 %v1083
        %v3526 = vunpack.c.h.b16 %v1083
        %v3527 = vunpack.c.l.b16 %v1084
        %v3528 = vunpack.c.h.b16 %v1084
        %v3529 = vunpack.c.l.b16 %v1085
        %v3530 = vunpack.c.h.b16 %v1085
        %v3531 = vunpack.c.l.b16 %v1086
        %v3532 = vunpack.c.h.b16 %v1086
        %v3533 = vunpack.c.l.b16 %v1087
        %v3534 = vunpack.c.h.b16 %v1087
        %v3535 = vunpack.c.l.b16 %v1088
        %v3536 = vunpack.c.h.b16 %v1088
        %v3537 = vunpack.c.l.b16 %v1089
        %v3538 = vunpack.c.h.b16 %v1089
        %v3539 = vunpack.c.l.b16 %v1090
        %v3540 = vunpack.c.h.b16 %v1090
        %v3541 = vunpack.c.l.b16 %v1091
        %v3542 = vunpack.c.h.b16 %v1091
        %v3543 = vunpack.c.l.b16 %v1092
        %v3544 = vunpack.c.h.b16 %v1092
        %v3545 = vunpack.c.l.b16 %v1093
        %v3546 = vunpack.c.h.b16 %v1093
        %v3547 = vunpack.c.l.b16 %v1094
        %v3548 = vunpack.c.h.b16 %v1094
        %v3549 = vunpack.c.l.b16 %v1095
        %v3550 = vunpack.c.h.b16 %v1095
        %v3551 = vunpack.c.l.b16 %v1096
        %v3552 = vunpack.c.h.b16 %v1096
        %v3553 = vunpack.c.l.b16 %v1097
        %v3554 = vunpack.c.h.b16 %v1097
        %v3555 = vunpack.c.l.b16 %v1098
        %v3556 = vunpack.c.h.b16 %v1098
        %v3557 = vunpack.c.l.b16 %v1099
        %v3558 = vunpack.c.h.b16 %v1099
        %v3559 = vunpack.c.l.b16 %v1100
        %v3560 = vunpack.c.h.b16 %v1100
        %v3561 = vunpack.c.l.b16 %v1101
        %v3562 = vunpack.c.h.b16 %v1101
        %v3563 = vunpack.c.l.b16 %v1102
        %v3564 = vunpack.c.h.b16 %v1102
        %v3565 = vunpack.c.l.b16 %v1103
        %v3566 = vunpack.c.h.b16 %v1103
        %v3567 = vunpack.c.l.b16 %v1104
        %v3568 = vunpack.c.h.b16 %v1104
        %v3569 = vunpack.c.l.b16 %v1105
        %v3570 = vunpack.c.h.b16 %v1105
        %v3571 = vunpack.c.l.b16 %v1106
        %v3572 = vunpack.c.h.b16 %v1106
        %v3573 = vunpack.c.l.b16 %v1107
        %v3574 = vunpack.c.h.b16 %v1107
        %v3575 = vunpack.c.l.b16 %v1108
        %v3576 = vunpack.c.h.b16 %v1108
        %v3577 = vunpack.c.l.b16 %v1109
        %v3578 = vunpack.c.h.b16 %v1109
        %v3579 = vunpack.c.l.b16 %v1110
        %v3580 = vunpack.c.h.b16 %v1110
        %v3581 = vunpack.c.l.b16 %v1111
        %v3582 = vunpack.c.h.b16 %v1111
        %v3583 = vunpack.c.l.b16 %v1112
        %v3584 = vunpack.c.h.b16 %v1112
        %v3585 = vunpack.c.l.b16 %v1113
        %v3586 = vunpack.c.h.b16 %v1113
        %v3587 = vunpack.c.l.b16 %v1114
        %v3588 = vunpack.c.h.b16 %v1114
        %v3589 = vunpack.c.l.b16 %v1115
        %v3590 = vunpack.c.h.b16 %v1115
        %v3591 = vunpack.c.l.b16 %v1116
        %v3592 = vunpack.c.h.b16 %v1116
        %v3593 = vunpack.c.l.b16 %v1117
        %v3594 = vunpack.c.h.b16 %v1117
        %v3595 = vunpack.c.l.b16 %v1118
        %v3596 = vunpack.c.h.b16 %v1118
        %v3597 = vunpack.c.l.b16 %v1119
        %v3598 = vunpack.c.h.b16 %v1119
        %v3599 = vunpack.c.l.b16 %v1120
        %v3600 = vunpack.c.h.b16 %v1120
        %v3601 = vunpack.c.l.b16 %v1121
        %v3602 = vunpack.c.h.b16 %v1121
        %v3603 = vunpack.c.l.b16 %v1122
        %v3604 = vunpack.c.h.b16 %v1122
        %v3605 = vunpack.c.l.b16 %v1123
        %v3606 = vunpack.c.h.b16 %v1123
        %v3607 = vunpack.c.l.b16 %v1124
        %v3608 = vunpack.c.h.b16 %v1124
        %v3609 = vunpack.c.l.b16 %v1125
        %v3610 = vunpack.c.h.b16 %v1125
        %v3611 = vunpack.c.l.b16 %v1126
        %v3612 = vunpack.c.h.b16 %v1126
        %v3613 = vunpack.c.l.b16 %v1127
        %v3614 = vunpack.c.h.b16 %v1127
        %v3615 = vunpack.c.l.b16 %v1128
        %v3616 = vunpack.c.h.b16 %v1128
        %v3617 = vpack.c.b16 %v2021, %v2017
        %v3618 = vpack.c.b16 %v2022, %v2018
        %v3619 = vpack.c.b16 %v2023, %v2019
        %v3620 = vpack.c.b16 %v2024, %v2020
        %v3621 = vpack.c.b16 %v2029, %v2025
        %v3622 = vpack.c.b16 %v2030, %v2026
        %v3623 = vpack.c.b16 %v2031, %v2027
        %v3624 = vpack.c.b16 %v2032, %v2028
        %v3625 = vpack.c.b16 %v2037, %v2033
        %v3626 = vpack.c.b16 %v2038, %v2034
        %v3627 = vpack.c.b16 %v2039, %v2035
        %v3628 = vpack.c.b16 %v2040, %v2036
        %v3629 = vpack.c.b16 %v2045, %v2041
        %v3630 = vpack.c.b16 %v2046, %v2042
        %v3631 = vpack.c.b16 %v2047, %v2043
        %v3632 = vpack.c.b16 %v2048, %v2044
        %v3633 = vpack.c.b16 %v2053, %v2049
        %v3634 = vpack.c.b16 %v2054, %v2050
        %v3635 = vpack.c.b16 %v2055, %v2051
        %v3636 = vpack.c.b16 %v2056, %v2052
        %v3637 = vpack.c.b16 %v2061, %v2057
        %v3638 = vpack.c.b16 %v2062, %v2058
        %v3639 = vpack.c.b16 %v2063, %v2059
        %v3640 = vpack.c.b16 %v2064, %v2060
        %v3641 = vpack.c.b16 %v2069, %v2065
        %v3642 = vpack.c.b16 %v2070, %v2066
        %v3643 = vpack.c.b16 %v2071, %v2067
        %v3644 = vpack.c.b16 %v2072, %v2068
        %v3645 = vpack.c.b16 %v2077, %v2073
        %v3646 = vpack.c.b16 %v2078, %v2074
        %v3647 = vpack.c.b16 %v2079, %v2075
        %v3648 = vpack.c.b16 %v2080, %v2076
        %v3649 = vpack.c.b16 %v2085, %v2081
        %v3650 = vpack.c.b16 %v2086, %v2082
        %v3651 = vpack.c.b16 %v2087, %v2083
        %v3652 = vpack.c.b16 %v2088, %v2084
        %v3653 = vpack.c.b16 %v2093, %v2089
        %v3654 = vpack.c.b16 %v2094, %v2090
        %v3655 = vpack.c.b16 %v2095, %v2091
        %v3656 = vpack.c.b16 %v2096, %v2092
        %v3657 = vpack.c.b16 %v2101, %v2097
        %v3658 = vpack.c.b16 %v2102, %v2098
        %v3659 = vpack.c.b16 %v2103, %v2099
        %v3660 = vpack.c.b16 %v2104, %v2100
        %v3661 = vpack.c.b16 %v2109, %v2105
        %v3662 = vpack.c.b16 %v2110, %v2106
        %v3663 = vpack.c.b16 %v2111, %v2107
        %v3664 = vpack.c.b16 %v2112, %v2108
        %v3665 = vpack.c.b16 %v2117, %v2113
        %v3666 = vpack.c.b16 %v2118, %v2114
        %v3667 = vpack.c.b16 %v2119, %v2115
        %v3668 = vpack.c.b16 %v2120, %v2116
        %v3669 = vpack.c.b16 %v2125, %v2121
        %v3670 = vpack.c.b16 %v2126, %v2122
        %v3671 = vpack.c.b16 %v2127, %v2123
        %v3672 = vpack.c.b16 %v2128, %v2124
        %v3673 = vpack.c.b16 %v2133, %v2129
        %v3674 = vpack.c.b16 %v2134, %v2130
        %v3675 = vpack.c.b16 %v2135, %v2131
        %v3676 = vpack.c.b16 %v2136, %v2132
        %v3677 = vpack.c.b16 %v2141, %v2137
        %v3678 = vpack.c.b16 %v2142, %v2138
        %v3679 = vpack.c.b16 %v2143, %v2139
        %v3680 = vpack.c.b16 %v2144, %v2140
        %v3681 = vpack.c.b16 %v2149, %v2145
        %v3682 = vpack.c.b16 %v2150, %v2146
        %v3683 = vpack.c.b16 %v2151, %v2147
        %v3684 = vpack.c.b16 %v2152, %v2148
        %v3685 = vpack.c.b16 %v2157, %v2153
        %v3686 = vpack.c.b16 %v2158, %v2154
        %v3687 = vpack.c.b16 %v2159, %v2155
        %v3688 = vpack.c.b16 %v2160, %v2156
        %v3689 = vpack.c.b16 %v2165, %v2161
        %v3690 = vpack.c.b16 %v2166, %v2162
        %v3691 = vpack.c.b16 %v2167, %v2163
        %v3692 = vpack.c.b16 %v2168, %v2164
        %v3693 = vpack.c.b16 %v2173, %v2169
        %v3694 = vpack.c.b16 %v2174, %v2170
        %v3695 = vpack.c.b16 %v2175, %v2171
        %v3696 = vpack.c.b16 %v2176, %v2172
        %v3697 = vpack.c.b16 %v2181, %v2177
        %v3698 = vpack.c.b16 %v2182, %v2178
        %v3699 = vpack.c.b16 %v2183, %v2179
        %v3700 = vpack.c.b16 %v2184, %v2180
        %v3701 = vpack.c.b16 %v2189, %v2185
        %v3702 = vpack.c.b16 %v2190, %v2186
        %v3703 = vpack.c.b16 %v2191, %v2187
        %v3704 = vpack.c.b16 %v2192, %v2188
        %v3705 = vpack.c.b16 %v2197, %v2193
        %v3706 = vpack.c.b16 %v2198, %v2194
        %v3707 = vpack.c.b16 %v2199, %v2195
        %v3708 = vpack.c.b16 %v2200, %v2196
        %v3709 = vpack.c.b16 %v2205, %v2201
        %v3710 = vpack.c.b16 %v2206, %v2202
        %v3711 = vpack.c.b16 %v2207, %v2203
        %v3712 = vpack.c.b16 %v2208, %v2204
        %v3713 = vpack.c.b16 %v2213, %v2209
        %v3714 = vpack.c.b16 %v2214, %v2210
        %v3715 = vpack.c.b16 %v2215, %v2211
        %v3716 = vpack.c.b16 %v2216, %v2212
        %v3717 = vpack.c.b16 %v2221, %v2217
        %v3718 = vpack.c.b16 %v2222, %v2218
        %v3719 = vpack.c.b16 %v2223, %v2219
        %v3720 = vpack.c.b16 %v2224, %v2220
        %v3721 = vpack.c.b16 %v2229, %v2225
        %v3722 = vpack.c.b16 %v2230, %v2226
        %v3723 = vpack.c.b16 %v2231, %v2227
        %v3724 = vpack.c.b16 %v2232, %v2228
        %v3725 = vpack.c.b16 %v2237, %v2233
        %v3726 = vpack.c.b16 %v2238, %v2234
        %v3727 = vpack.c.b16 %v2239, %v2235
        %v3728 = vpack.c.b16 %v2240, %v2236
        %v3729 = vpack.c.b16 %v2245, %v2241
        %v3730 = vpack.c.b16 %v2246, %v2242
        %v3731 = vpack.c.b16 %v2247, %v2243
        %v3732 = vpack.c.b16 %v2248, %v2244
        %v3733 = vpack.c.b16 %v2253, %v2249
        %v3734 = vpack.c.b16 %v2254, %v2250
        %v3735 = vpack.c.b16 %v2255, %v2251
        %v3736 = vpack.c.b16 %v2256, %v2252
        %v3737 = vpack.c.b16 %v2261, %v2257
        %v3738 = vpack.c.b16 %v2262, %v2258
        %v3739 = vpack.c.b16 %v2263, %v2259
        %v3740 = vpack.c.b16 %v2264, %v2260
        %v3741 = vpack.c.b16 %v2269, %v2265
        %v3742 = vpack.c.b16 %v2270, %v2266
        %v3743 = vpack.c.b16 %v2271, %v2267
        %v3744 = vpack.c.b16 %v2272, %v2268
        %v3745 = vpack.c.b16 %v2277, %v2273
        %v3746 = vpack.c.b16 %v2278, %v2274
        %v3747 = vpack.c.b16 %v2279, %v2275
        %v3748 = vpack.c.b16 %v2280, %v2276
        %v3749 = vpack.c.b16 %v2285, %v2281
        %v3750 = vpack.c.b16 %v2286, %v2282
        %v3751 = vpack.c.b16 %v2287, %v2283
        %v3752 = vpack.c.b16 %v2288, %v2284
        %v3753 = vpack.c.b16 %v2293, %v2289
        %v3754 = vpack.c.b16 %v2294, %v2290
        %v3755 = vpack.c.b16 %v2295, %v2291
        %v3756 = vpack.c.b16 %v2296, %v2292
        %v3757 = vpack.c.b16 %v2301, %v2297
        %v3758 = vpack.c.b16 %v2302, %v2298
        %v3759 = vpack.c.b16 %v2303, %v2299
        %v3760 = vpack.c.b16 %v2304, %v2300
        %v3761 = vpack.c.b16 %v2309, %v2305
        %v3762 = vpack.c.b16 %v2310, %v2306
        %v3763 = vpack.c.b16 %v2311, %v2307
        %v3764 = vpack.c.b16 %v2312, %v2308
        %v3765 = vpack.c.b16 %v2317, %v2313
        %v3766 = vpack.c.b16 %v2318, %v2314
        %v3767 = vpack.c.b16 %v2319, %v2315
        %v3768 = vpack.c.b16 %v2320, %v2316
        %v3769 = vpack.c.b16 %v2325, %v2321
        %v3770 = vpack.c.b16 %v2326, %v2322
        %v3771 = vpack.c.b16 %v2327, %v2323
        %v3772 = vpack.c.b16 %v2328, %v2324
        %v3773 = vpack.c.b16 %v2333, %v2329
        %v3774 = vpack.c.b16 %v2334, %v2330
        %v3775 = vpack.c.b16 %v2335, %v2331
        %v3776 = vpack.c.b16 %v2336, %v2332
        %v3777 = vpack.c.b16 %v2341, %v2337
        %v3778 = vpack.c.b16 %v2342, %v2338
        %v3779 = vpack.c.b16 %v2343, %v2339
        %v3780 = vpack.c.b16 %v2344, %v2340
        %v3781 = vpack.c.b16 %v2349, %v2345
        %v3782 = vpack.c.b16 %v2350, %v2346
        %v3783 = vpack.c.b16 %v2351, %v2347
        %v3784 = vpack.c.b16 %v2352, %v2348
        %v3785 = vpack.c.b16 %v2357, %v2353
        %v3786 = vpack.c.b16 %v2358, %v2354
        %v3787 = vpack.c.b16 %v2359, %v2355
        %v3788 = vpack.c.b16 %v2360, %v2356
        %v3789 = vpack.c.b16 %v2365, %v2361
        %v3790 = vpack.c.b16 %v2366, %v2362
        %v3791 = vpack.c.b16 %v2367, %v2363
        %v3792 = vpack.c.b16 %v2368, %v2364
        %v3793 = vpack.c.b16 %v2373, %v2369
        %v3794 = vpack.c.b16 %v2374, %v2370
        %v3795 = vpack.c.b16 %v2375, %v2371
        %v3796 = vpack.c.b16 %v2376, %v2372
        %v3797 = vpack.c.b16 %v2381, %v2377
        %v3798 = vpack.c.b16 %v2382, %v2378
        %v3799 = vpack.c.b16 %v2383, %v2379
        %v3800 = vpack.c.b16 %v2384, %v2380
        %v3801 = vpack.c.b16 %v2389, %v2385
        %v3802 = vpack.c.b16 %v2390, %v2386
        %v3803 = vpack.c.b16 %v2391, %v2387
        %v3804 = vpack.c.b16 %v2392, %v2388
        %v3805 = vpack.c.b16 %v2397, %v2393
        %v3806 = vpack.c.b16 %v2398, %v2394
        %v3807 = vpack.c.b16 %v2399, %v2395
        %v3808 = vpack.c.b16 %v2400, %v2396
        %v3809 = vpack.c.b16 %v2405, %v2401
        %v3810 = vpack.c.b16 %v2406, %v2402
        %v3811 = vpack.c.b16 %v2407, %v2403
        %v3812 = vpack.c.b16 %v2408, %v2404
        %v3813 = vpack.c.b16 %v2413, %v2409
        %v3814 = vpack.c.b16 %v2414, %v2410
        %v3815 = vpack.c.b16 %v2415, %v2411
        %v3816 = vpack.c.b16 %v2416, %v2412
        %v3817 = vpack.c.b16 %v2421, %v2417
        %v3818 = vpack.c.b16 %v2422, %v2418
        %v3819 = vpack.c.b16 %v2423, %v2419
        %v3820 = vpack.c.b16 %v2424, %v2420
        %v3821 = vpack.c.b16 %v2429, %v2425
        %v3822 = vpack.c.b16 %v2430, %v2426
        %v3823 = vpack.c.b16 %v2431, %v2427
        %v3824 = vpack.c.b16 %v2432, %v2428
        %v3825 = vpack.c.b16 %v2437, %v2433
        %v3826 = vpack.c.b16 %v2438, %v2434
        %v3827 = vpack.c.b16 %v2439, %v2435
        %v3828 = vpack.c.b16 %v2440, %v2436
        %v3829 = vpack.c.b16 %v2445, %v2441
        %v3830 = vpack.c.b16 %v2446, %v2442
        %v3831 = vpack.c.b16 %v2447, %v2443
        %v3832 = vpack.c.b16 %v2448, %v2444
        %v3833 = vpack.c.b16 %v2453, %v2449
        %v3834 = vpack.c.b16 %v2454, %v2450
        %v3835 = vpack.c.b16 %v2455, %v2451
        %v3836 = vpack.c.b16 %v2456, %v2452
        %v3837 = vpack.c.b16 %v2461, %v2457
        %v3838 = vpack.c.b16 %v2462, %v2458
        %v3839 = vpack.c.b16 %v2463, %v2459
        %v3840 = vpack.c.b16 %v2464, %v2460
        %v3841 = vpack.c.b16 %v2469, %v2465
        %v3842 = vpack.c.b16 %v2470, %v2466
        %v3843 = vpack.c.b16 %v2471, %v2467
        %v3844 = vpack.c.b16 %v2472, %v2468
        %v3845 = vpack.c.b16 %v2477, %v2473
        %v3846 = vpack.c.b16 %v2478, %v2474
        %v3847 = vpack.c.b16 %v2479, %v2475
        %v3848 = vpack.c.b16 %v2480, %v2476
        %v3849 = vpack.c.b16 %v2485, %v2481
        %v3850 = vpack.c.b16 %v2486, %v2482
        %v3851 = vpack.c.b16 %v2487, %v2483
        %v3852 = vpack.c.b16 %v2488, %v2484
        %v3853 = vpack.c.b16 %v2493, %v2489
        %v3854 = vpack.c.b16 %v2494, %v2490
        %v3855 = vpack.c.b16 %v2495, %v2491
        %v3856 = vpack.c.b16 %v2496, %v2492
        %v3857 = vpack.c.b16 %v2501, %v2497
        %v3858 = vpack.c.b16 %v2502, %v2498
        %v3859 = vpack.c.b16 %v2503, %v2499
        %v3860 = vpack.c.b16 %v2504, %v2500
        %v3861 = vpack.c.b16 %v2509, %v2505
        %v3862 = vpack.c.b16 %v2510, %v2506
        %v3863 = vpack.c.b16 %v2511, %v2507
        %v3864 = vpack.c.b16 %v2512, %v2508
        %v3865 = vpack.c.b16 %v2517, %v2513
        %v3866 = vpack.c.b16 %v2518, %v2514
        %v3867 = vpack.c.b16 %v2519, %v2515
        %v3868 = vpack.c.b16 %v2520, %v2516
        %v3869 = vpack.c.b16 %v2525, %v2521
        %v3870 = vpack.c.b16 %v2526, %v2522
        %v3871 = vpack.c.b16 %v2527, %v2523
        %v3872 = vpack.c.b16 %v2528, %v2524
        %v3873 = vpack.c.b16 %v2533, %v2529
        %v3874 = vpack.c.b16 %v2534, %v2530
        %v3875 = vpack.c.b16 %v2535, %v2531
        %v3876 = vpack.c.b16 %v2536, %v2532
        %v3877 = vpack.c.b16 %v2541, %v2537
        %v3878 = vpack.c.b16 %v2542, %v2538
        %v3879 = vpack.c.b16 %v2543, %v2539
        %v3880 = vpack.c.b16 %v2544, %v2540
        %v3881 = vpack.c.b16 %v2549, %v2545
        %v3882 = vpack.c.b16 %v2550, %v2546
        %v3883 = vpack.c.b16 %v2551, %v2547
        %v3884 = vpack.c.b16 %v2552, %v2548
        %v3885 = vpack.c.b16 %v2557, %v2553
        %v3886 = vpack.c.b16 %v2558, %v2554
        %v3887 = vpack.c.b16 %v2559, %v2555
        %v3888 = vpack.c.b16 %v2560, %v2556
        %v3889 = vpack.c.b16 %v2565, %v2561
        %v3890 = vpack.c.b16 %v2566, %v2562
        %v3891 = vpack.c.b16 %v2567, %v2563
        %v3892 = vpack.c.b16 %v2568, %v2564
        %v3893 = vpack.c.b16 %v2573, %v2569
        %v3894 = vpack.c.b16 %v2574, %v2570
        %v3895 = vpack.c.b16 %v2575, %v2571
        %v3896 = vpack.c.b16 %v2576, %v2572
        %v3897 = vpack.c.b16 %v2581, %v2577
        %v3898 = vpack.c.b16 %v2582, %v2578
        %v3899 = vpack.c.b16 %v2583, %v2579
        %v3900 = vpack.c.b16 %v2584, %v2580
        %v3901 = vpack.c.b16 %v2589, %v2585
        %v3902 = vpack.c.b16 %v2590, %v2586
        %v3903 = vpack.c.b16 %v2591, %v2587
        %v3904 = vpack.c.b16 %v2592, %v2588
        %v3905 = vpack.c.b16 %v2597, %v2593
        %v3906 = vpack.c.b16 %v2598, %v2594
        %v3907 = vpack.c.b16 %v2599, %v2595
        %v3908 = vpack.c.b16 %v2600, %v2596
        %v3909 = vpack.c.b16 %v2605, %v2601
        %v3910 = vpack.c.b16 %v2606, %v2602
        %v3911 = vpack.c.b16 %v2607, %v2603
        %v3912 = vpack.c.b16 %v2608, %v2604
        %v3913 = vpack.c.b16 %v2613, %v2609
        %v3914 = vpack.c.b16 %v2614, %v2610
        %v3915 = vpack.c.b16 %v2615, %v2611
        %v3916 = vpack.c.b16 %v2616, %v2612
        %v3917 = vpack.c.b16 %v2621, %v2617
        %v3918 = vpack.c.b16 %v2622, %v2618
        %v3919 = vpack.c.b16 %v2623, %v2619
        %v3920 = vpack.c.b16 %v2624, %v2620
        %v3921 = vpack.c.b16 %v2629, %v2625
        %v3922 = vpack.c.b16 %v2630, %v2626
        %v3923 = vpack.c.b16 %v2631, %v2627
        %v3924 = vpack.c.b16 %v2632, %v2628
        %v3925 = vpack.c.b16 %v2637, %v2633
        %v3926 = vpack.c.b16 %v2638, %v2634
        %v3927 = vpack.c.b16 %v2639, %v2635
        %v3928 = vpack.c.b16 %v2640, %v2636
        %v3929 = vpack.c.b16 %v2645, %v2641
        %v3930 = vpack.c.b16 %v2646, %v2642
        %v3931 = vpack.c.b16 %v2647, %v2643
        %v3932 = vpack.c.b16 %v2648, %v2644
        %v3933 = vpack.c.b16 %v2653, %v2649
        %v3934 = vpack.c.b16 %v2654, %v2650
        %v3935 = vpack.c.b16 %v2655, %v2651
        %v3936 = vpack.c.b16 %v2656, %v2652
        %v3937 = vpack.c.b16 %v2661, %v2657
        %v3938 = vpack.c.b16 %v2662, %v2658
        %v3939 = vpack.c.b16 %v2663, %v2659
        %v3940 = vpack.c.b16 %v2664, %v2660
        %v3941 = vpack.c.b16 %v2669, %v2665
        %v3942 = vpack.c.b16 %v2670, %v2666
        %v3943 = vpack.c.b16 %v2671, %v2667
        %v3944 = vpack.c.b16 %v2672, %v2668
        %v3945 = vpack.c.b16 %v2677, %v2673
        %v3946 = vpack.c.b16 %v2678, %v2674
        %v3947 = vpack.c.b16 %v2679, %v2675
        %v3948 = vpack.c.b16 %v2680, %v2676
        %v3949 = vpack.c.b16 %v2685, %v2681
        %v3950 = vpack.c.b16 %v2686, %v2682
        %v3951 = vpack.c.b16 %v2687, %v2683
        %v3952 = vpack.c.b16 %v2688, %v2684
        %v3953 = vpack.c.b16 %v2693, %v2689
        %v3954 = vpack.c.b16 %v2694, %v2690
        %v3955 = vpack.c.b16 %v2695, %v2691
        %v3956 = vpack.c.b16 %v2696, %v2692
        %v3957 = vpack.c.b16 %v2701, %v2697
        %v3958 = vpack.c.b16 %v2702, %v2698
        %v3959 = vpack.c.b16 %v2703, %v2699
        %v3960 = vpack.c.b16 %v2704, %v2700
        %v3961 = vpack.c.b16 %v2709, %v2705
        %v3962 = vpack.c.b16 %v2710, %v2706
        %v3963 = vpack.c.b16 %v2711, %v2707
        %v3964 = vpack.c.b16 %v2712, %v2708
        %v3965 = vpack.c.b16 %v2717, %v2713
        %v3966 = vpack.c.b16 %v2718, %v2714
        %v3967 = vpack.c.b16 %v2719, %v2715
        %v3968 = vpack.c.b16 %v2720, %v2716
        %v3969 = vpack.c.b16 %v2725, %v2721
        %v3970 = vpack.c.b16 %v2726, %v2722
        %v3971 = vpack.c.b16 %v2727, %v2723
        %v3972 = vpack.c.b16 %v2728, %v2724
        %v3973 = vpack.c.b16 %v2733, %v2729
        %v3974 = vpack.c.b16 %v2734, %v2730
        %v3975 = vpack.c.b16 %v2735, %v2731
        %v3976 = vpack.c.b16 %v2736, %v2732
        %v3977 = vpack.c.b16 %v2741, %v2737
        %v3978 = vpack.c.b16 %v2742, %v2738
        %v3979 = vpack.c.b16 %v2743, %v2739
        %v3980 = vpack.c.b16 %v2744, %v2740
        %v3981 = vpack.c.b16 %v2749, %v2745
        %v3982 = vpack.c.b16 %v2750, %v2746
        %v3983 = vpack.c.b16 %v2751, %v2747
        %v3984 = vpack.c.b16 %v2752, %v2748
        %v3985 = vpack.c.b16 %v2757, %v2753
        %v3986 = vpack.c.b16 %v2758, %v2754
        %v3987 = vpack.c.b16 %v2759, %v2755
        %v3988 = vpack.c.b16 %v2760, %v2756
        %v3989 = vpack.c.b16 %v2765, %v2761
        %v3990 = vpack.c.b16 %v2766, %v2762
        %v3991 = vpack.c.b16 %v2767, %v2763
        %v3992 = vpack.c.b16 %v2768, %v2764
        %v3993 = vpack.c.b16 %v2773, %v2769
        %v3994 = vpack.c.b16 %v2774, %v2770
        %v3995 = vpack.c.b16 %v2775, %v2771
        %v3996 = vpack.c.b16 %v2776, %v2772
        %v3997 = vpack.c.b16 %v2781, %v2777
        %v3998 = vpack.c.b16 %v2782, %v2778
        %v3999 = vpack.c.b16 %v2783, %v2779
        %v4000 = vpack.c.b16 %v2784, %v2780
        %v4001 = vpack.c.b16 %v2789, %v2785
        %v4002 = vpack.c.b16 %v2790, %v2786
        %v4003 = vpack.c.b16 %v2791, %v2787
        %v4004 = vpack.c.b16 %v2792, %v2788
        %v4005 = vpack.c.b16 %v2797, %v2793
        %v4006 = vpack.c.b16 %v2798, %v2794
        %v4007 = vpack.c.b16 %v2799, %v2795
        %v4008 = vpack.c.b16 %v2800, %v2796
        %v4009 = vpack.c.b16 %v2805, %v2801
        %v4010 = vpack.c.b16 %v2806, %v2802
        %v4011 = vpack.c.b16 %v2807, %v2803
        %v4012 = vpack.c.b16 %v2808, %v2804
        %v4013 = vpack.c.b16 %v2813, %v2809
        %v4014 = vpack.c.b16 %v2814, %v2810
        %v4015 = vpack.c.b16 %v2815, %v2811
        %v4016 = vpack.c.b16 %v2816, %v2812
        %v4017 = vpack.c.b16 %v2821, %v2817
        %v4018 = vpack.c.b16 %v2822, %v2818
        %v4019 = vpack.c.b16 %v2823, %v2819
        %v4020 = vpack.c.b16 %v2824, %v2820
        %v4021 = vpack.c.b16 %v2829, %v2825
        %v4022 = vpack.c.b16 %v2830, %v2826
        %v4023 = vpack.c.b16 %v2831, %v2827
        %v4024 = vpack.c.b16 %v2832, %v2828
        %v4025 = vpack.c.b16 %v2837, %v2833
        %v4026 = vpack.c.b16 %v2838, %v2834
        %v4027 = vpack.c.b16 %v2839, %v2835
        %v4028 = vpack.c.b16 %v2840, %v2836
        %v4029 = vpack.c.b16 %v2845, %v2841
        %v4030 = vpack.c.b16 %v2846, %v2842
        %v4031 = vpack.c.b16 %v2847, %v2843
        %v4032 = vpack.c.b16 %v2848, %v2844
        %v4033 = vpack.c.b16 %v2853, %v2849
        %v4034 = vpack.c.b16 %v2854, %v2850
        %v4035 = vpack.c.b16 %v2855, %v2851
        %v4036 = vpack.c.b16 %v2856, %v2852
        %v4037 = vpack.c.b16 %v2861, %v2857
        %v4038 = vpack.c.b16 %v2862, %v2858
        %v4039 = vpack.c.b16 %v2863, %v2859
        %v4040 = vpack.c.b16 %v2864, %v2860
        %v4041 = vpack.c.b16 %v2869, %v2865
        %v4042 = vpack.c.b16 %v2870, %v2866
        %v4043 = vpack.c.b16 %v2871, %v2867
        %v4044 = vpack.c.b16 %v2872, %v2868
        %v4045 = vpack.c.b16 %v2877, %v2873
        %v4046 = vpack.c.b16 %v2878, %v2874
        %v4047 = vpack.c.b16 %v2879, %v2875
        %v4048 = vpack.c.b16 %v2880, %v2876
        %v4049 = vpack.c.b16 %v2885, %v2881
        %v4050 = vpack.c.b16 %v2886, %v2882
        %v4051 = vpack.c.b16 %v2887, %v2883
        %v4052 = vpack.c.b16 %v2888, %v2884
        %v4053 = vpack.c.b16 %v2893, %v2889
        %v4054 = vpack.c.b16 %v2894, %v2890
        %v4055 = vpack.c.b16 %v2895, %v2891
        %v4056 = vpack.c.b16 %v2896, %v2892
        %v4057 = vpack.c.b16 %v2901, %v2897
        %v4058 = vpack.c.b16 %v2902, %v2898
        %v4059 = vpack.c.b16 %v2903, %v2899
        %v4060 = vpack.c.b16 %v2904, %v2900
        %v4061 = vpack.c.b16 %v2909, %v2905
        %v4062 = vpack.c.b16 %v2910, %v2906
        %v4063 = vpack.c.b16 %v2911, %v2907
        %v4064 = vpack.c.b16 %v2912, %v2908
        %v4065 = vpack.c.b16 %v2917, %v2913
        %v4066 = vpack.c.b16 %v2918, %v2914
        %v4067 = vpack.c.b16 %v2919, %v2915
        %v4068 = vpack.c.b16 %v2920, %v2916
        %v4069 = vpack.c.b16 %v2925, %v2921
        %v4070 = vpack.c.b16 %v2926, %v2922
        %v4071 = vpack.c.b16 %v2927, %v2923
        %v4072 = vpack.c.b16 %v2928, %v2924
        %v4073 = vpack.c.b16 %v2933, %v2929
        %v4074 = vpack.c.b16 %v2934, %v2930
        %v4075 = vpack.c.b16 %v2935, %v2931
        %v4076 = vpack.c.b16 %v2936, %v2932
        %v4077 = vpack.c.b16 %v2941, %v2937
        %v4078 = vpack.c.b16 %v2942, %v2938
        %v4079 = vpack.c.b16 %v2943, %v2939
        %v4080 = vpack.c.b16 %v2944, %v2940
        %v4081 = vpack.c.b16 %v2949, %v2945
        %v4082 = vpack.c.b16 %v2950, %v2946
        %v4083 = vpack.c.b16 %v2951, %v2947
        %v4084 = vpack.c.b16 %v2952, %v2948
        %v4085 = vpack.c.b16 %v2957, %v2953
        %v4086 = vpack.c.b16 %v2958, %v2954
        %v4087 = vpack.c.b16 %v2959, %v2955
        %v4088 = vpack.c.b16 %v2960, %v2956
        %v4089 = vpack.c.b16 %v2965, %v2961
        %v4090 = vpack.c.b16 %v2966, %v2962
        %v4091 = vpack.c.b16 %v2967, %v2963
        %v4092 = vpack.c.b16 %v2968, %v2964
        %v4093 = vpack.c.b16 %v2973, %v2969
        %v4094 = vpack.c.b16 %v2974, %v2970
        %v4095 = vpack.c.b16 %v2975, %v2971
        %v4096 = vpack.c.b16 %v2976, %v2972
        %v4097 = vpack.c.b16 %v2981, %v2977
        %v4098 = vpack.c.b16 %v2982, %v2978
        %v4099 = vpack.c.b16 %v2983, %v2979
        %v4100 = vpack.c.b16 %v2984, %v2980
        %v4101 = vpack.c.b16 %v2989, %v2985
        %v4102 = vpack.c.b16 %v2990, %v2986
        %v4103 = vpack.c.b16 %v2991, %v2987
        %v4104 = vpack.c.b16 %v2992, %v2988
        %v4105 = vpack.c.b16 %v2997, %v2993
        %v4106 = vpack.c.b16 %v2998, %v2994
        %v4107 = vpack.c.b16 %v2999, %v2995
        %v4108 = vpack.c.b16 %v3000, %v2996
        %v4109 = vpack.c.b16 %v3005, %v3001
        %v4110 = vpack.c.b16 %v3006, %v3002
        %v4111 = vpack.c.b16 %v3007, %v3003
        %v4112 = vpack.c.b16 %v3008, %v3004
        %v4113 = vpack.c.b16 %v3013, %v3009
        %v4114 = vpack.c.b16 %v3014, %v3010
        %v4115 = vpack.c.b16 %v3015, %v3011
        %v4116 = vpack.c.b16 %v3016, %v3012
        %v4117 = vpack.c.b16 %v3021, %v3017
        %v4118 = vpack.c.b16 %v3022, %v3018
        %v4119 = vpack.c.b16 %v3023, %v3019
        %v4120 = vpack.c.b16 %v3024, %v3020
        %v4121 = vpack.c.b16 %v3029, %v3025
        %v4122 = vpack.c.b16 %v3030, %v3026
        %v4123 = vpack.c.b16 %v3031, %v3027
        %v4124 = vpack.c.b16 %v3032, %v3028
        %v4125 = vpack.c.b16 %v3037, %v3033
        %v4126 = vpack.c.b16 %v3038, %v3034
        %v4127 = vpack.c.b16 %v3039, %v3035
        %v4128 = vpack.c.b16 %v3040, %v3036
        %v4129 = vpack.c.b16 %v3045, %v3041
        %v4130 = vpack.c.b16 %v3046, %v3042
        %v4131 = vpack.c.b16 %v3047, %v3043
        %v4132 = vpack.c.b16 %v3048, %v3044
        %v4133 = vpack.c.b16 %v3053, %v3049
        %v4134 = vpack.c.b16 %v3054, %v3050
        %v4135 = vpack.c.b16 %v3055, %v3051
        %v4136 = vpack.c.b16 %v3056, %v3052
        %v4137 = vpack.c.b16 %v3061, %v3057
        %v4138 = vpack.c.b16 %v3062, %v3058
        %v4139 = vpack.c.b16 %v3063, %v3059
        %v4140 = vpack.c.b16 %v3064, %v3060
        %v4141 = vpack.c.b16 %v3069, %v3065
        %v4142 = vpack.c.b16 %v3070, %v3066
        %v4143 = vpack.c.b16 %v3071, %v3067
        %v4144 = vpack.c.b16 %v3072, %v3068
        %v4145 = vpack.c.b16 %v3077, %v3073
        %v4146 = vpack.c.b16 %v3078, %v3074
        %v4147 = vpack.c.b16 %v3079, %v3075
        %v4148 = vpack.c.b16 %v3080, %v3076
        %v4149 = vpack.c.b16 %v3085, %v3081
        %v4150 = vpack.c.b16 %v3086, %v3082
        %v4151 = vpack.c.b16 %v3087, %v3083
        %v4152 = vpack.c.b16 %v3088, %v3084
        %v4153 = vpack.c.b16 %v3093, %v3089
        %v4154 = vpack.c.b16 %v3094, %v3090
        %v4155 = vpack.c.b16 %v3095, %v3091
        %v4156 = vpack.c.b16 %v3096, %v3092
        %v4157 = vpack.c.b16 %v3101, %v3097
        %v4158 = vpack.c.b16 %v3102, %v3098
        %v4159 = vpack.c.b16 %v3103, %v3099
        %v4160 = vpack.c.b16 %v3104, %v3100
        %v4161 = vpack.c.b16 %v3109, %v3105
        %v4162 = vpack.c.b16 %v3110, %v3106
        %v4163 = vpack.c.b16 %v3111, %v3107
        %v4164 = vpack.c.b16 %v3112, %v3108
        %v4165 = vpack.c.b16 %v3117, %v3113
        %v4166 = vpack.c.b16 %v3118, %v3114
        %v4167 = vpack.c.b16 %v3119, %v3115
        %v4168 = vpack.c.b16 %v3120, %v3116
        %v4169 = vpack.c.b16 %v3125, %v3121
        %v4170 = vpack.c.b16 %v3126, %v3122
        %v4171 = vpack.c.b16 %v3127, %v3123
        %v4172 = vpack.c.b16 %v3128, %v3124
        %v4173 = vpack.c.b16 %v3133, %v3129
        %v4174 = vpack.c.b16 %v3134, %v3130
        %v4175 = vpack.c.b16 %v3135, %v3131
        %v4176 = vpack.c.b16 %v3136, %v3132
        %v4177 = vpack.c.b16 %v3141, %v3137
        %v4178 = vpack.c.b16 %v3142, %v3138
        %v4179 = vpack.c.b16 %v3143, %v3139
        %v4180 = vpack.c.b16 %v3144, %v3140
        %v4181 = vpack.c.b16 %v3149, %v3145
        %v4182 = vpack.c.b16 %v3150, %v3146
        %v4183 = vpack.c.b16 %v3151, %v3147
        %v4184 = vpack.c.b16 %v3152, %v3148
        %v4185 = vpack.c.b16 %v3157, %v3153
        %v4186 = vpack.c.b16 %v3158, %v3154
        %v4187 = vpack.c.b16 %v3159, %v3155
        %v4188 = vpack.c.b16 %v3160, %v3156
        %v4189 = vpack.c.b16 %v3165, %v3161
        %v4190 = vpack.c.b16 %v3166, %v3162
        %v4191 = vpack.c.b16 %v3167, %v3163
        %v4192 = vpack.c.b16 %v3168, %v3164
        %v4193 = vpack.c.b16 %v3173, %v3169
        %v4194 = vpack.c.b16 %v3174, %v3170
        %v4195 = vpack.c.b16 %v3175, %v3171
        %v4196 = vpack.c.b16 %v3176, %v3172
        %v4197 = vpack.c.b16 %v3181, %v3177
        %v4198 = vpack.c.b16 %v3182, %v3178
        %v4199 = vpack.c.b16 %v3183, %v3179
        %v4200 = vpack.c.b16 %v3184, %v3180
        %v4201 = vpack.c.b16 %v3189, %v3185
        %v4202 = vpack.c.b16 %v3190, %v3186
        %v4203 = vpack.c.b16 %v3191, %v3187
        %v4204 = vpack.c.b16 %v3192, %v3188
        %v4205 = vpack.c.b16 %v3197, %v3193
        %v4206 = vpack.c.b16 %v3198, %v3194
        %v4207 = vpack.c.b16 %v3199, %v3195
        %v4208 = vpack.c.b16 %v3200, %v3196
        %v4209 = vpack.c.b16 %v3205, %v3201
        %v4210 = vpack.c.b16 %v3206, %v3202
        %v4211 = vpack.c.b16 %v3207, %v3203
        %v4212 = vpack.c.b16 %v3208, %v3204
        %v4213 = vpack.c.b16 %v3213, %v3209
        %v4214 = vpack.c.b16 %v3214, %v3210
        %v4215 = vpack.c.b16 %v3215, %v3211
        %v4216 = vpack.c.b16 %v3216, %v3212
        %v4217 = vpack.c.b16 %v3221, %v3217
        %v4218 = vpack.c.b16 %v3222, %v3218
        %v4219 = vpack.c.b16 %v3223, %v3219
        %v4220 = vpack.c.b16 %v3224, %v3220
        %v4221 = vpack.c.b16 %v3229, %v3225
        %v4222 = vpack.c.b16 %v3230, %v3226
        %v4223 = vpack.c.b16 %v3231, %v3227
        %v4224 = vpack.c.b16 %v3232, %v3228
        %v4225 = vpack.c.b16 %v3237, %v3233
        %v4226 = vpack.c.b16 %v3238, %v3234
        %v4227 = vpack.c.b16 %v3239, %v3235
        %v4228 = vpack.c.b16 %v3240, %v3236
        %v4229 = vpack.c.b16 %v3245, %v3241
        %v4230 = vpack.c.b16 %v3246, %v3242
        %v4231 = vpack.c.b16 %v3247, %v3243
        %v4232 = vpack.c.b16 %v3248, %v3244
        %v4233 = vpack.c.b16 %v3253, %v3249
        %v4234 = vpack.c.b16 %v3254, %v3250
        %v4235 = vpack.c.b16 %v3255, %v3251
        %v4236 = vpack.c.b16 %v3256, %v3252
        %v4237 = vpack.c.b16 %v3261, %v3257
        %v4238 = vpack.c.b16 %v3262, %v3258
        %v4239 = vpack.c.b16 %v3263, %v3259
        %v4240 = vpack.c.b16 %v3264, %v3260
        %v4241 = vpack.c.b16 %v3269, %v3265
        %v4242 = vpack.c.b16 %v3270, %v3266
        %v4243 = vpack.c.b16 %v3271, %v3267
        %v4244 = vpack.c.b16 %v3272, %v3268
        %v4245 = vpack.c.b16 %v3277, %v3273
        %v4246 = vpack.c.b16 %v3278, %v3274
        %v4247 = vpack.c.b16 %v3279, %v3275
        %v4248 = vpack.c.b16 %v3280, %v3276
        %v4249 = vpack.c.b16 %v3285, %v3281
        %v4250 = vpack.c.b16 %v3286, %v3282
        %v4251 = vpack.c.b16 %v3287, %v3283
        %v4252 = vpack.c.b16 %v3288, %v3284
        %v4253 = vpack.c.b16 %v3293, %v3289
        %v4254 = vpack.c.b16 %v3294, %v3290
        %v4255 = vpack.c.b16 %v3295, %v3291
        %v4256 = vpack.c.b16 %v3296, %v3292
        %v4257 = vpack.c.b16 %v3301, %v3297
        %v4258 = vpack.c.b16 %v3302, %v3298
        %v4259 = vpack.c.b16 %v3303, %v3299
        %v4260 = vpack.c.b16 %v3304, %v3300
        %v4261 = vpack.c.b16 %v3309, %v3305
        %v4262 = vpack.c.b16 %v3310, %v3306
        %v4263 = vpack.c.b16 %v3311, %v3307
        %v4264 = vpack.c.b16 %v3312, %v3308
        %v4265 = vpack.c.b16 %v3317, %v3313
        %v4266 = vpack.c.b16 %v3318, %v3314
        %v4267 = vpack.c.b16 %v3319, %v3315
        %v4268 = vpack.c.b16 %v3320, %v3316
        %v4269 = vpack.c.b16 %v3325, %v3321
        %v4270 = vpack.c.b16 %v3326, %v3322
        %v4271 = vpack.c.b16 %v3327, %v3323
        %v4272 = vpack.c.b16 %v3328, %v3324
        %v4273 = vpack.c.b16 %v3333, %v3329
        %v4274 = vpack.c.b16 %v3334, %v3330
        %v4275 = vpack.c.b16 %v3335, %v3331
        %v4276 = vpack.c.b16 %v3336, %v3332
        %v4277 = vpack.c.b16 %v3341, %v3337
        %v4278 = vpack.c.b16 %v3342, %v3338
        %v4279 = vpack.c.b16 %v3343, %v3339
        %v4280 = vpack.c.b16 %v3344, %v3340
        %v4281 = vpack.c.b16 %v3349, %v3345
        %v4282 = vpack.c.b16 %v3350, %v3346
        %v4283 = vpack.c.b16 %v3351, %v3347
        %v4284 = vpack.c.b16 %v3352, %v3348
        %v4285 = vpack.c.b16 %v3357, %v3353
        %v4286 = vpack.c.b16 %v3358, %v3354
        %v4287 = vpack.c.b16 %v3359, %v3355
        %v4288 = vpack.c.b16 %v3360, %v3356
        %v4289 = vpack.c.b16 %v3365, %v3361
        %v4290 = vpack.c.b16 %v3366, %v3362
        %v4291 = vpack.c.b16 %v3367, %v3363
        %v4292 = vpack.c.b16 %v3368, %v3364
        %v4293 = vpack.c.b16 %v3373, %v3369
        %v4294 = vpack.c.b16 %v3374, %v3370
        %v4295 = vpack.c.b16 %v3375, %v3371
        %v4296 = vpack.c.b16 %v3376, %v3372
        %v4297 = vpack.c.b16 %v3381, %v3377
        %v4298 = vpack.c.b16 %v3382, %v3378
        %v4299 = vpack.c.b16 %v3383, %v3379
        %v4300 = vpack.c.b16 %v3384, %v3380
        %v4301 = vpack.c.b16 %v3389, %v3385
        %v4302 = vpack.c.b16 %v3390, %v3386
        %v4303 = vpack.c.b16 %v3391, %v3387
        %v4304 = vpack.c.b16 %v3392, %v3388
        %v4305 = vpack.c.b16 %v3397, %v3393
        %v4306 = vpack.c.b16 %v3398, %v3394
        %v4307 = vpack.c.b16 %v3399, %v3395
        %v4308 = vpack.c.b16 %v3400, %v3396
        %v4309 = vpack.c.b16 %v3405, %v3401
        %v4310 = vpack.c.b16 %v3406, %v3402
        %v4311 = vpack.c.b16 %v3407, %v3403
        %v4312 = vpack.c.b16 %v3408, %v3404
        %v4313 = vpack.c.b16 %v3413, %v3409
        %v4314 = vpack.c.b16 %v3414, %v3410
        %v4315 = vpack.c.b16 %v3415, %v3411
        %v4316 = vpack.c.b16 %v3416, %v3412
        %v4317 = vpack.c.b16 %v3421, %v3417
        %v4318 = vpack.c.b16 %v3422, %v3418
        %v4319 = vpack.c.b16 %v3423, %v3419
        %v4320 = vpack.c.b16 %v3424, %v3420
        %v4321 = vpack.c.b16 %v3429, %v3425
        %v4322 = vpack.c.b16 %v3430, %v3426
        %v4323 = vpack.c.b16 %v3431, %v3427
        %v4324 = vpack.c.b16 %v3432, %v3428
        %v4325 = vpack.c.b16 %v3437, %v3433
        %v4326 = vpack.c.b16 %v3438, %v3434
        %v4327 = vpack.c.b16 %v3439, %v3435
        %v4328 = vpack.c.b16 %v3440, %v3436
        %v4329 = vpack.c.b16 %v3445, %v3441
        %v4330 = vpack.c.b16 %v3446, %v3442
        %v4331 = vpack.c.b16 %v3447, %v3443
        %v4332 = vpack.c.b16 %v3448, %v3444
        %v4333 = vpack.c.b16 %v3453, %v3449
        %v4334 = vpack.c.b16 %v3454, %v3450
        %v4335 = vpack.c.b16 %v3455, %v3451
        %v4336 = vpack.c.b16 %v3456, %v3452
        %v4337 = vpack.c.b16 %v3461, %v3457
        %v4338 = vpack.c.b16 %v3462, %v3458
        %v4339 = vpack.c.b16 %v3463, %v3459
        %v4340 = vpack.c.b16 %v3464, %v3460
        %v4341 = vpack.c.b16 %v3469, %v3465
        %v4342 = vpack.c.b16 %v3470, %v3466
        %v4343 = vpack.c.b16 %v3471, %v3467
        %v4344 = vpack.c.b16 %v3472, %v3468
        %v4345 = vpack.c.b16 %v3477, %v3473
        %v4346 = vpack.c.b16 %v3478, %v3474
        %v4347 = vpack.c.b16 %v3479, %v3475
        %v4348 = vpack.c.b16 %v3480, %v3476
        %v4349 = vpack.c.b16 %v3485, %v3481
        %v4350 = vpack.c.b16 %v3486, %v3482
        %v4351 = vpack.c.b16 %v3487, %v3483
        %v4352 = vpack.c.b16 %v3488, %v3484
        %v4353 = vpack.c.b16 %v3493, %v3489
        %v4354 = vpack.c.b16 %v3494, %v3490
        %v4355 = vpack.c.b16 %v3495, %v3491
        %v4356 = vpack.c.b16 %v3496, %v3492
        %v4357 = vpack.c.b16 %v3501, %v3497
        %v4358 = vpack.c.b16 %v3502, %v3498
        %v4359 = vpack.c.b16 %v3503, %v3499
        %v4360 = vpack.c.b16 %v3504, %v3500
        %v4361 = vpack.c.b16 %v3509, %v3505
        %v4362 = vpack.c.b16 %v3510, %v3506
        %v4363 = vpack.c.b16 %v3511, %v3507
        %v4364 = vpack.c.b16 %v3512, %v3508
        %v4365 = vpack.c.b16 %v3517, %v3513
        %v4366 = vpack.c.b16 %v3518, %v3514
        %v4367 = vpack.c.b16 %v3519, %v3515
        %v4368 = vpack.c.b16 %v3520, %v3516
        %v4369 = vpack.c.b16 %v3525, %v3521
        %v4370 = vpack.c.b16 %v3526, %v3522
        %v4371 = vpack.c.b16 %v3527, %v3523
        %v4372 = vpack.c.b16 %v3528, %v3524
        %v4373 = vpack.c.b16 %v3533, %v3529
        %v4374 = vpack.c.b16 %v3534, %v3530
        %v4375 = vpack.c.b16 %v3535, %v3531
        %v4376 = vpack.c.b16 %v3536, %v3532
        %v4377 = vpack.c.b16 %v3541, %v3537
        %v4378 = vpack.c.b16 %v3542, %v3538
        %v4379 = vpack.c.b16 %v3543, %v3539
        %v4380 = vpack.c.b16 %v3544, %v3540
        %v4381 = vpack.c.b16 %v3549, %v3545
        %v4382 = vpack.c.b16 %v3550, %v3546
        %v4383 = vpack.c.b16 %v3551, %v3547
        %v4384 = vpack.c.b16 %v3552, %v3548
        %v4385 = vpack.c.b16 %v3557, %v3553
        %v4386 = vpack.c.b16 %v3558, %v3554
        %v4387 = vpack.c.b16 %v3559, %v3555
        %v4388 = vpack.c.b16 %v3560, %v3556
        %v4389 = vpack.c.b16 %v3565, %v3561
        %v4390 = vpack.c.b16 %v3566, %v3562
        %v4391 = vpack.c.b16 %v3567, %v3563
        %v4392 = vpack.c.b16 %v3568, %v3564
        %v4393 = vpack.c.b16 %v3573, %v3569
        %v4394 = vpack.c.b16 %v3574, %v3570
        %v4395 = vpack.c.b16 %v3575, %v3571
        %v4396 = vpack.c.b16 %v3576, %v3572
        %v4397 = vpack.c.b16 %v3581, %v3577
        %v4398 = vpack.c.b16 %v3582, %v3578
        %v4399 = vpack.c.b16 %v3583, %v3579
        %v4400 = vpack.c.b16 %v3584, %v3580
        %v4401 = vpack.c.b16 %v3589, %v3585
        %v4402 = vpack.c.b16 %v3590, %v3586
        %v4403 = vpack.c.b16 %v3591, %v3587
        %v4404 = vpack.c.b16 %v3592, %v3588
        %v4405 = vpack.c.b16 %v3597, %v3593
        %v4406 = vpack.c.b16 %v3598, %v3594
        %v4407 = vpack.c.b16 %v3599, %v3595
        %v4408 = vpack.c.b16 %v3600, %v3596
        %v4409 = vpack.c.b16 %v3605, %v3601
        %v4410 = vpack.c.b16 %v3606, %v3602
        %v4411 = vpack.c.b16 %v3607, %v3603
        %v4412 = vpack.c.b16 %v3608, %v3604
        %v4413 = vpack.c.b16 %v3613, %v3609
        %v4414 = vpack.c.b16 %v3614, %v3610
        %v4415 = vpack.c.b16 %v3615, %v3611
        %v4416 = vpack.c.b16 %v3616, %v3612
        %5217 = vmatprep.subr.bf16.mxu0 %v3618
        %5218 = vmatpush1.bf16.msra.mxu0 %v3617
        %5219 = vmatprep.subr.bf16.mxu0 %v3622
        %5220 = vmatpush1.bf16.msra.mxu0 %v3621
        %5221 = vmatprep.subr.bf16.mxu0 %v3626
        %5222 = vmatpush1.bf16.msra.mxu0 %v3625
        %5223 = vmatprep.subr.bf16.mxu0 %v3630
        %5224 = vmatpush1.bf16.msra.mxu0 %v3629
        %5225 = vmatprep.subr.bf16.mxu0 %v3634
        %5226 = vmatpush1.bf16.msra.mxu0 %v3633
        %5227 = vmatprep.subr.bf16.mxu0 %v3638
        %5228 = vmatpush1.bf16.msra.mxu0 %v3637
        %5229 = vmatprep.subr.bf16.mxu0 %v3642
        %5230 = vmatpush1.bf16.msra.mxu0 %v3641
        %5231 = vmatprep.subr.bf16.mxu0 %v3646
        %5232 = vmatpush1.bf16.msra.mxu0 %v3645
        %5233 = vmatprep.subr.bf16.mxu0 %v3650
        %5234 = vmatpush1.bf16.msra.mxu0 %v3649
        %5235 = vmatprep.subr.bf16.mxu0 %v3654
        %5236 = vmatpush1.bf16.msra.mxu0 %v3653
        %5237 = vmatprep.subr.bf16.mxu0 %v3658
        %5238 = vmatpush1.bf16.msra.mxu0 %v3657
        %5239 = vmatprep.subr.bf16.mxu0 %v3662
        %5240 = vmatpush1.bf16.msra.mxu0 %v3661
        %5241 = vmatprep.subr.bf16.mxu0 %v3666
        %5242 = vmatpush1.bf16.msra.mxu0 %v3665
        %5243 = vmatprep.subr.bf16.mxu0 %v3670
        %5244 = vmatpush1.bf16.msra.mxu0 %v3669
        %5245 = vmatprep.subr.bf16.mxu0 %v3674
        %5246 = vmatpush1.bf16.msra.mxu0 %v3673
        %5247 = vmatprep.subr.bf16.mxu0 %v3678
        %5248 = vmatpush1.bf16.msra.mxu0 %v3677
        %5249 = vmatprep.mubr.bf16.mxu0 %v1168
        %5250 = vmatmul.mubr.bf16.gmra.mrb[0].mxu0 %v1167
        %v5251 = vpop.f32.mrb[0].mxu0
        %v5252 = vadd.f32 0.0, %v5251
        %v5253 = vpop.f32.mrb[0].mxu0
        %v5254 = vadd.f32 0.0, %v5253
        %v5255 = vpop.f32.mrb[0].mxu0
        %v5256 = vpop.f32.mrb[0].mxu0
        %5257 = vdwg.mxu0
        %5258 = vmatprep.subr.bf16.mxu0 %v3682
        %5259 = vmatpush1.bf16.msra.mxu0 %v3681
        %5260 = vmatprep.subr.bf16.mxu0 %v3686
        %5261 = vmatpush1.bf16.msra.mxu0 %v3685
        %5262 = vmatprep.subr.bf16.mxu0 %v3690
        %5263 = vmatpush1.bf16.msra.mxu0 %v3689
        %5264 = vmatprep.subr.bf16.mxu0 %v3694
        %5265 = vmatpush1.bf16.msra.mxu0 %v3693
        %5266 = vmatprep.subr.bf16.mxu0 %v3698
        %5267 = vmatpush1.bf16.msra.mxu0 %v3697
        %5268 = vmatprep.subr.bf16.mxu0 %v3702
        %5269 = vmatpush1.bf16.msra.mxu0 %v3701
        %5270 = vmatprep.subr.bf16.mxu0 %v3706
        %5271 = vmatpush1.bf16.msra.mxu0 %v3705
        %5272 = vmatprep.subr.bf16.mxu0 %v3710
        %5273 = vmatpush1.bf16.msra.mxu0 %v3709
        %5274 = vmatprep.subr.bf16.mxu0 %v3714
        %5275 = vmatpush1.bf16.msra.mxu0 %v3713
        %5276 = vmatprep.subr.bf16.mxu0 %v3718
        %5277 = vmatpush1.bf16.msra.mxu0 %v3717
        %5278 = vmatprep.subr.bf16.mxu0 %v3722
        %5279 = vmatpush1.bf16.msra.mxu0 %v3721
        %5280 = vmatprep.subr.bf16.mxu0 %v3726
        %5281 = vmatpush1.bf16.msra.mxu0 %v3725
        %5282 = vmatprep.subr.bf16.mxu0 %v3730
        %5283 = vmatpush1.bf16.msra.mxu0 %v3729
        %5284 = vmatprep.subr.bf16.mxu0 %v3734
        %5285 = vmatpush1.bf16.msra.mxu0 %v3733
        %5286 = vmatprep.subr.bf16.mxu0 %v3738
        %5287 = vmatpush1.bf16.msra.mxu0 %v3737
        %5288 = vmatprep.subr.bf16.mxu0 %v3742
        %5289 = vmatpush1.bf16.msra.mxu0 %v3741
        %5290 = vmatprep.mubr.bf16.mxu0 %v1170
        %5291 = vmatmul.mubr.bf16.gmra.mrb[0].mxu0 %v1169
        %v5292 = vpop.f32.mrb[0].mxu0
        %v5293 = vadd.f32 %v5252, %v5292
        %v5294 = vpop.f32.mrb[0].mxu0
        %v5295 = vadd.f32 %v5254, %v5294
        %v5296 = vpop.f32.mrb[0].mxu0
        %v5297 = vpop.f32.mrb[0].mxu0
        %5298 = vdwg.mxu0
        %5299 = vmatprep.subr.bf16.mxu0 %v3746
        %5300 = vmatpush1.bf16.msra.mxu0 %v3745
        %5301 = vmatprep.subr.bf16.mxu0 %v3750
        %5302 = vmatpush1.bf16.msra.mxu0 %v3749
        %5303 = vmatprep.subr.bf16.mxu0 %v3754
        %5304 = vmatpush1.bf16.msra.mxu0 %v3753
        %5305 = vmatprep.subr.bf16.mxu0 %v3758
        %5306 = vmatpush1.bf16.msra.mxu0 %v3757
        %5307 = vmatprep.subr.bf16.mxu0 %v3762
        %5308 = vmatpush1.bf16.msra.mxu0 %v3761
        %5309 = vmatprep.subr.bf16.mxu0 %v3766
        %5310 = vmatpush1.bf16.msra.mxu0 %v3765
        %5311 = vmatprep.subr.bf16.mxu0 %v3770
        %5312 = vmatpush1.bf16.msra.mxu0 %v3769
        %5313 = vmatprep.subr.bf16.mxu0 %v3774
        %5314 = vmatpush1.bf16.msra.mxu0 %v3773
        %5315 = vmatprep.subr.bf16.mxu0 %v3778
        %5316 = vmatpush1.bf16.msra.mxu0 %v3777
        %5317 = vmatprep.subr.bf16.mxu0 %v3782
        %5318 = vmatpush1.bf16.msra.mxu0 %v3781
        %5319 = vmatprep.subr.bf16.mxu0 %v3786
        %5320 = vmatpush1.bf16.msra.mxu0 %v3785
        %5321 = vmatprep.subr.bf16.mxu0 %v3790
        %5322 = vmatpush1.bf16.msra.mxu0 %v3789
        %5323 = vmatprep.subr.bf16.mxu0 %v3794
        %5324 = vmatpush1.bf16.msra.mxu0 %v3793
        %5325 = vmatprep.subr.bf16.mxu0 %v3798
        %5326 = vmatpush1.bf16.msra.mxu0 %v3797
        %5327 = vmatprep.subr.bf16.mxu0 %v3802
        %5328 = vmatpush1.bf16.msra.mxu0 %v3801
        %5329 = vmatprep.subr.bf16.mxu0 %v3806
        %5330 = vmatpush1.bf16.msra.mxu0 %v3805
        %5331 = vmatprep.mubr.bf16.mxu0 %v1172
        %5332 = vmatmul.mubr.bf16.gmra.mrb[0].mxu0 %v1171
        %v5333 = vpop.f32.mrb[0].mxu0
        %v5334 = vadd.f32 %v5293, %v5333
        %v5335 = vpop.f32.mrb[0].mxu0
        %v5336 = vadd.f32 %v5295, %v5335
        %v5337 = vpop.f32.mrb[0].mxu0
        %v5338 = vpop.f32.mrb[0].mxu0
        %5339 = vdwg.mxu0
        %5340 = vmatprep.subr.bf16.mxu0 %v3810
        %5341 = vmatpush1.bf16.msra.mxu0 %v3809
        %5342 = vmatprep.subr.bf16.mxu0 %v3814
        %5343 = vmatpush1.bf16.msra.mxu0 %v3813
        %5344 = vmatprep.subr.bf16.mxu0 %v3818
        %5345 = vmatpush1.bf16.msra.mxu0 %v3817
        %5346 = vmatprep.subr.bf16.mxu0 %v3822
        %5347 = vmatpush1.bf16.msra.mxu0 %v3821
        %5348 = vmatprep.subr.bf16.mxu0 %v3826
        %5349 = vmatpush1.bf16.msra.mxu0 %v3825
        %5350 = vmatprep.subr.bf16.mxu0 %v3830
        %5351 = vmatpush1.bf16.msra.mxu0 %v3829
        %5352 = vmatprep.subr.bf16.mxu0 %v3834
        %5353 = vmatpush1.bf16.msra.mxu0 %v3833
        %5354 = vmatprep.subr.bf16.mxu0 %v3838
        %5355 = vmatpush1.bf16.msra.mxu0 %v3837
        %5356 = vmatprep.subr.bf16.mxu0 %v3842
        %5357 = vmatpush1.bf16.msra.mxu0 %v3841
        %5358 = vmatprep.subr.bf16.mxu0 %v3846
        %5359 = vmatpush1.bf16.msra.mxu0 %v3845
        %5360 = vmatprep.subr.bf16.mxu0 %v3850
        %5361 = vmatpush1.bf16.msra.mxu0 %v3849
        %5362 = vmatprep.subr.bf16.mxu0 %v3854
        %5363 = vmatpush1.bf16.msra.mxu0 %v3853
        %5364 = vmatprep.subr.bf16.mxu0 %v3858
        %5365 = vmatpush1.bf16.msra.mxu0 %v3857
        %5366 = vmatprep.subr.bf16.mxu0 %v3862
        %5367 = vmatpush1.bf16.msra.mxu0 %v3861
        %5368 = vmatprep.subr.bf16.mxu0 %v3866
        %5369 = vmatpush1.bf16.msra.mxu0 %v3865
        %5370 = vmatprep.subr.bf16.mxu0 %v3870
        %5371 = vmatpush1.bf16.msra.mxu0 %v3869
        %5372 = vmatprep.mubr.bf16.mxu0 %v1174
        %5373 = vmatmul.mubr.bf16.gmra.mrb[0].mxu0 %v1173
        %v5374 = vpop.f32.mrb[0].mxu0
        %v5375 = vadd.f32 %v5334, %v5374
        %v5376 = vpop.f32.mrb[0].mxu0
        %v5377 = vadd.f32 %v5336, %v5376
        %v5378 = vpop.f32.mrb[0].mxu0
        %v5379 = vpop.f32.mrb[0].mxu0
        %5380 = vdwg.mxu0
        %5381 = vmatprep.subr.bf16.mxu0 %v3874
        %5382 = vmatpush1.bf16.msra.mxu0 %v3873
        %5383 = vmatprep.subr.bf16.mxu0 %v3878
        %5384 = vmatpush1.bf16.msra.mxu0 %v3877
        %5385 = vmatprep.subr.bf16.mxu0 %v3882
        %5386 = vmatpush1.bf16.msra.mxu0 %v3881
        %5387 = vmatprep.subr.bf16.mxu0 %v3886
        %5388 = vmatpush1.bf16.msra.mxu0 %v3885
        %5389 = vmatprep.subr.bf16.mxu0 %v3890
        %5390 = vmatpush1.bf16.msra.mxu0 %v3889
        %5391 = vmatprep.subr.bf16.mxu0 %v3894
        %5392 = vmatpush1.bf16.msra.mxu0 %v3893
        %5393 = vmatprep.subr.bf16.mxu0 %v3898
        %5394 = vmatpush1.bf16.msra.mxu0 %v3897
        %5395 = vmatprep.subr.bf16.mxu0 %v3902
        %5396 = vmatpush1.bf16.msra.mxu0 %v3901
        %5397 = vmatprep.subr.bf16.mxu0 %v3906
        %5398 = vmatpush1.bf16.msra.mxu0 %v3905
        %5399 = vmatprep.subr.bf16.mxu0 %v3910
        %5400 = vmatpush1.bf16.msra.mxu0 %v3909
        %5401 = vmatprep.subr.bf16.mxu0 %v3914
        %5402 = vmatpush1.bf16.msra.mxu0 %v3913
        %5403 = vmatprep.subr.bf16.mxu0 %v3918
        %5404 = vmatpush1.bf16.msra.mxu0 %v3917
        %5405 = vmatprep.subr.bf16.mxu0 %v3922
        %5406 = vmatpush1.bf16.msra.mxu0 %v3921
        %5407 = vmatprep.subr.bf16.mxu0 %v3926
        %5408 = vmatpush1.bf16.msra.mxu0 %v3925
        %5409 = vmatprep.subr.bf16.mxu0 %v3930
        %5410 = vmatpush1.bf16.msra.mxu0 %v3929
        %5411 = vmatprep.subr.bf16.mxu0 %v3934
        %5412 = vmatpush1.bf16.msra.mxu0 %v3933
        %5413 = vmatprep.mubr.bf16.mxu0 %v1176
        %5414 = vmatmul.mubr.bf16.gmra.mrb[0].mxu0 %v1175
        %v5415 = vpop.f32.mrb[0].mxu0
        %v5416 = vadd.f32 %v5375, %v5415
        %v5417 = vpop.f32.mrb[0].mxu0
        %v5418 = vadd.f32 %v5377, %v5417
        %v5419 = vpop.f32.mrb[0].mxu0
        %v5420 = vpop.f32.mrb[0].mxu0
        %5421 = vdwg.mxu0
        %5422 = vmatprep.subr.bf16.mxu0 %v3938
        %5423 = vmatpush1.bf16.msra.mxu0 %v3937
        %5424 = vmatprep.subr.bf16.mxu0 %v3942
        %5425 = vmatpush1.bf16.msra.mxu0 %v3941
        %5426 = vmatprep.subr.bf16.mxu0 %v3946
        %5427 = vmatpush1.bf16.msra.mxu0 %v3945
        %5428 = vmatprep.subr.bf16.mxu0 %v3950
        %5429 = vmatpush1.bf16.msra.mxu0 %v3949
        %5430 = vmatprep.subr.bf16.mxu0 %v3954
        %5431 = vmatpush1.bf16.msra.mxu0 %v3953
        %5432 = vmatprep.subr.bf16.mxu0 %v3958
        %5433 = vmatpush1.bf16.msra.mxu0 %v3957
        %5434 = vmatprep.subr.bf16.mxu0 %v3962
        %5435 = vmatpush1.bf16.msra.mxu0 %v3961
        %5436 = vmatprep.subr.bf16.mxu0 %v3966
        %5437 = vmatpush1.bf16.msra.mxu0 %v3965
        %5438 = vmatprep.subr.bf16.mxu0 %v3970
        %5439 = vmatpush1.bf16.msra.mxu0 %v3969
        %5440 = vmatprep.subr.bf16.mxu0 %v3974
        %5441 = vmatpush1.bf16.msra.mxu0 %v3973
        %5442 = vmatprep.subr.bf16.mxu0 %v3978
        %5443 = vmatpush1.bf16.msra.mxu0 %v3977
        %5444 = vmatprep.subr.bf16.mxu0 %v3982
        %5445 = vmatpush1.bf16.msra.mxu0 %v3981
        %5446 = vmatprep.subr.bf16.mxu0 %v3986
        %5447 = vmatpush1.bf16.msra.mxu0 %v3985
        %5448 = vmatprep.subr.bf16.mxu0 %v3990
        %5449 = vmatpush1.bf16.msra.mxu0 %v3989
        %5450 = vmatprep.subr.bf16.mxu0 %v3994
        %5451 = vmatpush1.bf16.msra.mxu0 %v3993
        %5452 = vmatprep.subr.bf16.mxu0 %v3998
        %5453 = vmatpush1.bf16.msra.mxu0 %v3997
        %5454 = vmatprep.mubr.bf16.mxu0 %v1178
        %5455 = vmatmul.mubr.bf16.gmra.mrb[0].mxu0 %v1177
        %v5456 = vpop.f32.mrb[0].mxu0
        %v5457 = vadd.f32 %v5416, %v5456
        %v5458 = vpop.f32.mrb[0].mxu0
        %v5459 = vadd.f32 %v5418, %v5458
        %v5460 = vpop.f32.mrb[0].mxu0
        %v5461 = vpop.f32.mrb[0].mxu0
        %5462 = vdwg.mxu0
        %5463 = vmatprep.subr.bf16.mxu0 %v4002
        %5464 = vmatpush1.bf16.msra.mxu0 %v4001
        %5465 = vmatprep.subr.bf16.mxu0 %v4006
        %5466 = vmatpush1.bf16.msra.mxu0 %v4005
        %5467 = vmatprep.subr.bf16.mxu0 %v4010
        %5468 = vmatpush1.bf16.msra.mxu0 %v4009
        %5469 = vmatprep.subr.bf16.mxu0 %v4014
        %5470 = vmatpush1.bf16.msra.mxu0 %v4013
        %5471 = vmatprep.subr.bf16.mxu0 %v4018
        %5472 = vmatpush1.bf16.msra.mxu0 %v4017
        %5473 = vmatprep.subr.bf16.mxu0 %v4022
        %5474 = vmatpush1.bf16.msra.mxu0 %v4021
        %5475 = vmatprep.subr.bf16.mxu0 %v4026
        %5476 = vmatpush1.bf16.msra.mxu0 %v4025
        %5477 = vmatprep.subr.bf16.mxu0 %v4030
        %5478 = vmatpush1.bf16.msra.mxu0 %v4029
        %5479 = vmatprep.subr.bf16.mxu0 %v4034
        %5480 = vmatpush1.bf16.msra.mxu0 %v4033
        %5481 = vmatprep.subr.bf16.mxu0 %v4038
        %5482 = vmatpush1.bf16.msra.mxu0 %v4037
        %5483 = vmatprep.subr.bf16.mxu0 %v4042
        %5484 = vmatpush1.bf16.msra.mxu0 %v4041
        %5485 = vmatprep.subr.bf16.mxu0 %v4046
        %5486 = vmatpush1.bf16.msra.mxu0 %v4045
        %5487 = vmatprep.subr.bf16.mxu0 %v4050
        %5488 = vmatpush1.bf16.msra.mxu0 %v4049
        %5489 = vmatprep.subr.bf16.mxu0 %v4054
        %5490 = vmatpush1.bf16.msra.mxu0 %v4053
        %5491 = vmatprep.subr.bf16.mxu0 %v4058
        %5492 = vmatpush1.bf16.msra.mxu0 %v4057
        %5493 = vmatprep.subr.bf16.mxu0 %v4062
        %5494 = vmatpush1.bf16.msra.mxu0 %v4061
        %5495 = vmatprep.mubr.bf16.mxu0 %v1180
        %5496 = vmatmul.mubr.bf16.gmra.mrb[0].mxu0 %v1179
        %v5497 = vpop.f32.mrb[0].mxu0
        %v5498 = vadd.f32 %v5457, %v5497
        %v5499 = vpop.f32.mrb[0].mxu0
        %v5500 = vadd.f32 %v5459, %v5499
        %v5501 = vpop.f32.mrb[0].mxu0
        %v5502 = vpop.f32.mrb[0].mxu0
        %5503 = vdwg.mxu0
        %5504 = vmatprep.subr.bf16.mxu0 %v4066
        %5505 = vmatpush1.bf16.msra.mxu0 %v4065
        %5506 = vmatprep.subr.bf16.mxu0 %v4070
        %5507 = vmatpush1.bf16.msra.mxu0 %v4069
        %5508 = vmatprep.subr.bf16.mxu0 %v4074
        %5509 = vmatpush1.bf16.msra.mxu0 %v4073
        %5510 = vmatprep.subr.bf16.mxu0 %v4078
        %5511 = vmatpush1.bf16.msra.mxu0 %v4077
        %5512 = vmatprep.subr.bf16.mxu0 %v4082
        %5513 = vmatpush1.bf16.msra.mxu0 %v4081
        %5514 = vmatprep.subr.bf16.mxu0 %v4086
        %5515 = vmatpush1.bf16.msra.mxu0 %v4085
        %5516 = vmatprep.subr.bf16.mxu0 %v4090
        %5517 = vmatpush1.bf16.msra.mxu0 %v4089
        %5518 = vmatprep.subr.bf16.mxu0 %v4094
        %5519 = vmatpush1.bf16.msra.mxu0 %v4093
        %5520 = vmatprep.subr.bf16.mxu0 %v4098
        %5521 = vmatpush1.bf16.msra.mxu0 %v4097
        %5522 = vmatprep.subr.bf16.mxu0 %v4102
        %5523 = vmatpush1.bf16.msra.mxu0 %v4101
        %5524 = vmatprep.subr.bf16.mxu0 %v4106
        %5525 = vmatpush1.bf16.msra.mxu0 %v4105
        %5526 = vmatprep.subr.bf16.mxu0 %v4110
        %5527 = vmatpush1.bf16.msra.mxu0 %v4109
        %5528 = vmatprep.subr.bf16.mxu0 %v4114
        %5529 = vmatpush1.bf16.msra.mxu0 %v4113
        %5530 = vmatprep.subr.bf16.mxu0 %v4118
        %5531 = vmatpush1.bf16.msra.mxu0 %v4117
        %5532 = vmatprep.subr.bf16.mxu0 %v4122
        %5533 = vmatpush1.bf16.msra.mxu0 %v4121
        %5534 = vmatprep.subr.bf16.mxu0 %v4126
        %5535 = vmatpush1.bf16.msra.mxu0 %v4125
        %5536 = vmatprep.mubr.bf16.mxu0 %v1182
        %5537 = vmatmul.mubr.bf16.gmra.mrb[0].mxu0 %v1181
        %v5538 = vpop.f32.mrb[0].mxu0
        %v5539 = vadd.f32 %v5498, %v5538
        %v5540 = vpop.f32.mrb[0].mxu0
        %v5541 = vadd.f32 %v5500, %v5540
        %v5542 = vpop.f32.mrb[0].mxu0
        %v5543 = vpop.f32.mrb[0].mxu0
        %5544 = vdwg.mxu0
        %5545 = vmatprep.subr.bf16.mxu0 %v4130
        %5546 = vmatpush1.bf16.msra.mxu0 %v4129
        %5547 = vmatprep.subr.bf16.mxu0 %v4134
        %5548 = vmatpush1.bf16.msra.mxu0 %v4133
        %5549 = vmatprep.subr.bf16.mxu0 %v4138
        %5550 = vmatpush1.bf16.msra.mxu0 %v4137
        %5551 = vmatprep.subr.bf16.mxu0 %v4142
        %5552 = vmatpush1.bf16.msra.mxu0 %v4141
        %5553 = vmatprep.subr.bf16.mxu0 %v4146
        %5554 = vmatpush1.bf16.msra.mxu0 %v4145
        %5555 = vmatprep.subr.bf16.mxu0 %v4150
        %5556 = vmatpush1.bf16.msra.mxu0 %v4149
        %5557 = vmatprep.subr.bf16.mxu0 %v4154
        %5558 = vmatpush1.bf16.msra.mxu0 %v4153
        %5559 = vmatprep.subr.bf16.mxu0 %v4158
        %5560 = vmatpush1.bf16.msra.mxu0 %v4157
        %5561 = vmatprep.subr.bf16.mxu0 %v4162
        %5562 = vmatpush1.bf16.msra.mxu0 %v4161
        %5563 = vmatprep.subr.bf16.mxu0 %v4166
        %5564 = vmatpush1.bf16.msra.mxu0 %v4165
        %5565 = vmatprep.subr.bf16.mxu0 %v4170
        %5566 = vmatpush1.bf16.msra.mxu0 %v4169
        %5567 = vmatprep.subr.bf16.mxu0 %v4174
        %5568 = vmatpush1.bf16.msra.mxu0 %v4173
        %5569 = vmatprep.subr.bf16.mxu0 %v4178
        %5570 = vmatpush1.bf16.msra.mxu0 %v4177
        %5571 = vmatprep.subr.bf16.mxu0 %v4182
        %5572 = vmatpush1.bf16.msra.mxu0 %v4181
        %5573 = vmatprep.subr.bf16.mxu0 %v4186
        %5574 = vmatpush1.bf16.msra.mxu0 %v4185
        %5575 = vmatprep.subr.bf16.mxu0 %v4190
        %5576 = vmatpush1.bf16.msra.mxu0 %v4189
        %5577 = vmatprep.mubr.bf16.mxu0 %v1184
        %5578 = vmatmul.mubr.bf16.gmra.mrb[0].mxu0 %v1183
        %v5579 = vpop.f32.mrb[0].mxu0
        %v5580 = vadd.f32 %v5539, %v5579
        %v5581 = vpop.f32.mrb[0].mxu0
        %v5582 = vadd.f32 %v5541, %v5581
        %v5583 = vpop.f32.mrb[0].mxu0
        %v5584 = vpop.f32.mrb[0].mxu0
        %5585 = vdwg.mxu0
        %5586 = vmatprep.subr.bf16.mxu0 %v4194
        %5587 = vmatpush1.bf16.msra.mxu0 %v4193
        %5588 = vmatprep.subr.bf16.mxu0 %v4198
        %5589 = vmatpush1.bf16.msra.mxu0 %v4197
        %5590 = vmatprep.subr.bf16.mxu0 %v4202
        %5591 = vmatpush1.bf16.msra.mxu0 %v4201
        %5592 = vmatprep.subr.bf16.mxu0 %v4206
        %5593 = vmatpush1.bf16.msra.mxu0 %v4205
        %5594 = vmatprep.subr.bf16.mxu0 %v4210
        %5595 = vmatpush1.bf16.msra.mxu0 %v4209
        %5596 = vmatprep.subr.bf16.mxu0 %v4214
        %5597 = vmatpush1.bf16.msra.mxu0 %v4213
        %5598 = vmatprep.subr.bf16.mxu0 %v4218
        %5599 = vmatpush1.bf16.msra.mxu0 %v4217
        %5600 = vmatprep.subr.bf16.mxu0 %v4222
        %5601 = vmatpush1.bf16.msra.mxu0 %v4221
        %5602 = vmatprep.subr.bf16.mxu0 %v4226
        %5603 = vmatpush1.bf16.msra.mxu0 %v4225
        %5604 = vmatprep.subr.bf16.mxu0 %v4230
        %5605 = vmatpush1.bf16.msra.mxu0 %v4229
        %5606 = vmatprep.subr.bf16.mxu0 %v4234
        %5607 = vmatpush1.bf16.msra.mxu0 %v4233
        %5608 = vmatprep.subr.bf16.mxu0 %v4238
        %5609 = vmatpush1.bf16.msra.mxu0 %v4237
        %5610 = vmatprep.subr.bf16.mxu0 %v4242
        %5611 = vmatpush1.bf16.msra.mxu0 %v4241
        %5612 = vmatprep.subr.bf16.mxu0 %v4246
        %5613 = vmatpush1.bf16.msra.mxu0 %v4245
        %5614 = vmatprep.subr.bf16.mxu0 %v4250
        %5615 = vmatpush1.bf16.msra.mxu0 %v4249
        %5616 = vmatprep.subr.bf16.mxu0 %v4254
        %5617 = vmatpush1.bf16.msra.mxu0 %v4253
        %5618 = vmatprep.mubr.bf16.mxu0 %v1186
        %5619 = vmatmul.mubr.bf16.gmra.mrb[0].mxu0 %v1185
        %v5620 = vpop.f32.mrb[0].mxu0
        %v5621 = vadd.f32 %v5580, %v5620
        %v5622 = vpop.f32.mrb[0].mxu0
        %v5623 = vadd.f32 %v5582, %v5622
        %v5624 = vpop.f32.mrb[0].mxu0
        %v5625 = vpop.f32.mrb[0].mxu0
        %5626 = vdwg.mxu0
        %5627 = vmatprep.subr.bf16.mxu0 %v4258
        %5628 = vmatpush1.bf16.msra.mxu0 %v4257
        %5629 = vmatprep.subr.bf16.mxu0 %v4262
        %5630 = vmatpush1.bf16.msra.mxu0 %v4261
        %5631 = vmatprep.subr.bf16.mxu0 %v4266
        %5632 = vmatpush1.bf16.msra.mxu0 %v4265
        %5633 = vmatprep.subr.bf16.mxu0 %v4270
        %5634 = vmatpush1.bf16.msra.mxu0 %v4269
        %5635 = vmatprep.subr.bf16.mxu0 %v4274
        %5636 = vmatpush1.bf16.msra.mxu0 %v4273
        %5637 = vmatprep.subr.bf16.mxu0 %v4278
        %5638 = vmatpush1.bf16.msra.mxu0 %v4277
        %5639 = vmatprep.subr.bf16.mxu0 %v4282
        %5640 = vmatpush1.bf16.msra.mxu0 %v4281
        %5641 = vmatprep.subr.bf16.mxu0 %v4286
        %5642 = vmatpush1.bf16.msra.mxu0 %v4285
        %5643 = vmatprep.subr.bf16.mxu0 %v4290
        %5644 = vmatpush1.bf16.msra.mxu0 %v4289
        %5645 = vmatprep.subr.bf16.mxu0 %v4294
        %5646 = vmatpush1.bf16.msra.mxu0 %v4293
        %5647 = vmatprep.subr.bf16.mxu0 %v4298
        %5648 = vmatpush1.bf16.msra.mxu0 %v4297
        %5649 = vmatprep.subr.bf16.mxu0 %v4302
        %5650 = vmatpush1.bf16.msra.mxu0 %v4301
        %5651 = vmatprep.subr.bf16.mxu0 %v4306
        %5652 = vmatpush1.bf16.msra.mxu0 %v4305
        %5653 = vmatprep.subr.bf16.mxu0 %v4310
        %5654 = vmatpush1.bf16.msra.mxu0 %v4309
        %5655 = vmatprep.subr.bf16.mxu0 %v4314
        %5656 = vmatpush1.bf16.msra.mxu0 %v4313
        %5657 = vmatprep.subr.bf16.mxu0 %v4318
        %5658 = vmatpush1.bf16.msra.mxu0 %v4317
        %5659 = vmatprep.mubr.bf16.mxu0 %v1188
        %5660 = vmatmul.mubr.bf16.gmra.mrb[0].mxu0 %v1187
        %v5661 = vpop.f32.mrb[0].mxu0
        %v5662 = vadd.f32 %v5621, %v5661
        %v5663 = vpop.f32.mrb[0].mxu0
        %v5664 = vadd.f32 %v5623, %v5663
        %v5665 = vpop.f32.mrb[0].mxu0
        %v5666 = vpop.f32.mrb[0].mxu0
        %5667 = vdwg.mxu0
        %5668 = vmatprep.subr.bf16.mxu0 %v4322
        %5669 = vmatpush1.bf16.msra.mxu0 %v4321
        %5670 = vmatprep.subr.bf16.mxu0 %v4326
        %5671 = vmatpush1.bf16.msra.mxu0 %v4325
        %5672 = vmatprep.subr.bf16.mxu0 %v4330
        %5673 = vmatpush1.bf16.msra.mxu0 %v4329
        %5674 = vmatprep.subr.bf16.mxu0 %v4334
        %5675 = vmatpush1.bf16.msra.mxu0 %v4333
        %5676 = vmatprep.subr.bf16.mxu0 %v4338
        %5677 = vmatpush1.bf16.msra.mxu0 %v4337
        %5678 = vmatprep.subr.bf16.mxu0 %v4342
        %5679 = vmatpush1.bf16.msra.mxu0 %v4341
        %5680 = vmatprep.subr.bf16.mxu0 %v4346
        %5681 = vmatpush1.bf16.msra.mxu0 %v4345
        %5682 = vmatprep.subr.bf16.mxu0 %v4350
        %5683 = vmatpush1.bf16.msra.mxu0 %v4349
        %5684 = vmatprep.subr.bf16.mxu0 %v4354
        %5685 = vmatpush1.bf16.msra.mxu0 %v4353
        %5686 = vmatprep.subr.bf16.mxu0 %v4358
        %5687 = vmatpush1.bf16.msra.mxu0 %v4357
        %5688 = vmatprep.subr.bf16.mxu0 %v4362
        %5689 = vmatpush1.bf16.msra.mxu0 %v4361
        %5690 = vmatprep.subr.bf16.mxu0 %v4366
        %5691 = vmatpush1.bf16.msra.mxu0 %v4365
        %5692 = vmatprep.subr.bf16.mxu0 %v4370
        %5693 = vmatpush1.bf16.msra.mxu0 %v4369
        %5694 = vmatprep.subr.bf16.mxu0 %v4374
        %5695 = vmatpush1.bf16.msra.mxu0 %v4373
        %5696 = vmatprep.subr.bf16.mxu0 %v4378
        %5697 = vmatpush1.bf16.msra.mxu0 %v4377
        %5698 = vmatprep.subr.bf16.mxu0 %v4382
        %5699 = vmatpush1.bf16.msra.mxu0 %v4381
        %5700 = vmatprep.mubr.bf16.mxu0 %v1190
        %5701 = vmatmul.mubr.bf16.gmra.mrb[0].mxu0 %v1189
        %v5702 = vpop.f32.mrb[0].mxu0
        %v5703 = vadd.f32 %v5662, %v5702
        %v5704 = vpop.f32.mrb[0].mxu0
        %v5705 = vadd.f32 %v5664, %v5704
        %v5706 = vpop.f32.mrb[0].mxu0
        %v5707 = vpop.f32.mrb[0].mxu0
        %5708 = vdwg.mxu0
        %5709 = vmatprep.subr.bf16.mxu0 %v4386
        %5710 = vmatpush1.bf16.msra.mxu0 %v4385
        %5711 = vmatprep.subr.bf16.mxu0 %v4390
        %5712 = vmatpush1.bf16.msra.mxu0 %v4389
        %5713 = vmatprep.subr.bf16.mxu0 %v4394
        %5714 = vmatpush1.bf16.msra.mxu0 %v4393
        %5715 = vmatprep.subr.bf16.mxu0 %v4398
        %5716 = vmatpush1.bf16.msra.mxu0 %v4397
        %5717 = vmatprep.subr.bf16.mxu0 %v4402
        %5718 = vmatpush1.bf16.msra.mxu0 %v4401
        %5719 = vmatprep.subr.bf16.mxu0 %v4406
        %5720 = vmatpush1.bf16.msra.mxu0 %v4405
        %5721 = vmatprep.subr.bf16.mxu0 %v4410
        %5722 = vmatpush1.bf16.msra.mxu0 %v4409
        %5723 = vmatprep.subr.bf16.mxu0 %v4414
        %5724 = vmatpush1.bf16.msra.mxu0 %v4413
        %5725 = vmatprep.subr.bf16.mxu0 0
        %5726 = vmatpush1.bf16.msra.mxu0 0
        %5727 = vmatprep.subr.bf16.mxu0 0
        %5728 = vmatpush1.bf16.msra.mxu0 0
        %5729 = vmatprep.subr.bf16.mxu0 0
        %5730 = vmatpush1.bf16.msra.mxu0 0
        %5731 = vmatprep.subr.bf16.mxu0 0
        %5732 = vmatpush1.bf16.msra.mxu0 0
        %5733 = vmatprep.subr.bf16.mxu0 0
        %5734 = vmatpush1.bf16.msra.mxu0 0
        %5735 = vmatprep.subr.bf16.mxu0 0
        %5736 = vmatpush1.bf16.msra.mxu0 0
        %5737 = vmatprep.subr.bf16.mxu0 0
        %5738 = vmatpush1.bf16.msra.mxu0 0
        %5739 = vmatprep.subr.bf16.mxu0 0
        %5740 = vmatpush1.bf16.msra.mxu0 0
        %5741 = vmatprep.mubr.bf16.mxu0 0
        %5742 = vmatmul.mubr.bf16.gmra.mrb[0].mxu0 %v1191
        %v5743 = vpop.f32.mrb[0].mxu0
        %v5744 = vadd.f32 %v5703, %v5743
        %v5745 = vpop.f32.mrb[0].mxu0
        %v5746 = vadd.f32 %v5705, %v5745
        %v5747 = vpop.f32.mrb[0].mxu0
        %v5748 = vpop.f32.mrb[0].mxu0
        %5749 = vdwg.mxu0
        %5750 = vmatprep.subr.bf16.mxu0 %v3620
        %5751 = vmatpush1.bf16.msra.mxu0 %v3619
        %5752 = vmatprep.subr.bf16.mxu0 %v3624
        %5753 = vmatpush1.bf16.msra.mxu0 %v3623
        %5754 = vmatprep.subr.bf16.mxu0 %v3628
        %5755 = vmatpush1.bf16.msra.mxu0 %v3627
        %5756 = vmatprep.subr.bf16.mxu0 %v3632
        %5757 = vmatpush1.bf16.msra.mxu0 %v3631
        %5758 = vmatprep.subr.bf16.mxu0 %v3636
        %5759 = vmatpush1.bf16.msra.mxu0 %v3635
        %5760 = vmatprep.subr.bf16.mxu0 %v3640
        %5761 = vmatpush1.bf16.msra.mxu0 %v3639
        %5762 = vmatprep.subr.bf16.mxu0 %v3644
        %5763 = vmatpush1.bf16.msra.mxu0 %v3643
        %5764 = vmatprep.subr.bf16.mxu0 %v3648
        %5765 = vmatpush1.bf16.msra.mxu0 %v3647
        %5766 = vmatprep.subr.bf16.mxu0 %v3652
        %5767 = vmatpush1.bf16.msra.mxu0 %v3651
        %5768 = vmatprep.subr.bf16.mxu0 %v3656
        %5769 = vmatpush1.bf16.msra.mxu0 %v3655
        %5770 = vmatprep.subr.bf16.mxu0 %v3660
        %5771 = vmatpush1.bf16.msra.mxu0 %v3659
        %5772 = vmatprep.subr.bf16.mxu0 %v3664
        %5773 = vmatpush1.bf16.msra.mxu0 %v3663
        %5774 = vmatprep.subr.bf16.mxu0 %v3668
        %5775 = vmatpush1.bf16.msra.mxu0 %v3667
        %5776 = vmatprep.subr.bf16.mxu0 %v3672
        %5777 = vmatpush1.bf16.msra.mxu0 %v3671
        %5778 = vmatprep.subr.bf16.mxu0 %v3676
        %5779 = vmatpush1.bf16.msra.mxu0 %v3675
        %5780 = vmatprep.subr.bf16.mxu0 %v3680
        %5781 = vmatpush1.bf16.msra.mxu0 %v3679
        %5782 = vmatprep.mubr.bf16.mxu0 %v1168
        %5783 = vmatmul.mubr.bf16.gmra.mrb[0].mxu0 %v1167
        %v5784 = vpop.f32.mrb[0].mxu0
        %v5785 = vadd.f32 0.0, %v5784
        %v5786 = vpop.f32.mrb[0].mxu0
        %v5787 = vadd.f32 0.0, %v5786
        %v5788 = vpop.f32.mrb[0].mxu0
        %v5789 = vpop.f32.mrb[0].mxu0
        %5790 = vdwg.mxu0
        %5791 = vmatprep.subr.bf16.mxu0 %v3684
        %5792 = vmatpush1.bf16.msra.mxu0 %v3683
        %5793 = vmatprep.subr.bf16.mxu0 %v3688
        %5794 = vmatpush1.bf16.msra.mxu0 %v3687
        %5795 = vmatprep.subr.bf16.mxu0 %v3692
        %5796 = vmatpush1.bf16.msra.mxu0 %v3691
        %5797 = vmatprep.subr.bf16.mxu0 %v3696
        %5798 = vmatpush1.bf16.msra.mxu0 %v3695
        %5799 = vmatprep.subr.bf16.mxu0 %v3700
        %5800 = vmatpush1.bf16.msra.mxu0 %v3699
        %5801 = vmatprep.subr.bf16.mxu0 %v3704
        %5802 = vmatpush1.bf16.msra.mxu0 %v3703
        %5803 = vmatprep.subr.bf16.mxu0 %v3708
        %5804 = vmatpush1.bf16.msra.mxu0 %v3707
        %5805 = vmatprep.subr.bf16.mxu0 %v3712
        %5806 = vmatpush1.bf16.msra.mxu0 %v3711
        %5807 = vmatprep.subr.bf16.mxu0 %v3716
        %5808 = vmatpush1.bf16.msra.mxu0 %v3715
        %5809 = vmatprep.subr.bf16.mxu0 %v3720
        %5810 = vmatpush1.bf16.msra.mxu0 %v3719
        %5811 = vmatprep.subr.bf16.mxu0 %v3724
        %5812 = vmatpush1.bf16.msra.mxu0 %v3723
        %5813 = vmatprep.subr.bf16.mxu0 %v3728
        %5814 = vmatpush1.bf16.msra.mxu0 %v3727
        %5815 = vmatprep.subr.bf16.mxu0 %v3732
        %5816 = vmatpush1.bf16.msra.mxu0 %v3731
        %5817 = vmatprep.subr.bf16.mxu0 %v3736
        %5818 = vmatpush1.bf16.msra.mxu0 %v3735
        %5819 = vmatprep.subr.bf16.mxu0 %v3740
        %5820 = vmatpush1.bf16.msra.mxu0 %v3739
        %5821 = vmatprep.subr.bf16.mxu0 %v3744
        %5822 = vmatpush1.bf16.msra.mxu0 %v3743
        %5823 = vmatprep.mubr.bf16.mxu0 %v1170
        %5824 = vmatmul.mubr.bf16.gmra.mrb[0].mxu0 %v1169
        %v5825 = vpop.f32.mrb[0].mxu0
        %v5826 = vadd.f32 %v5785, %v5825
        %v5827 = vpop.f32.mrb[0].mxu0
        %v5828 = vadd.f32 %v5787, %v5827
        %v5829 = vpop.f32.mrb[0].mxu0
        %v5830 = vpop.f32.mrb[0].mxu0
        %5831 = vdwg.mxu0
        %5832 = vmatprep.subr.bf16.mxu0 %v3748
        %5833 = vmatpush1.bf16.msra.mxu0 %v3747
        %5834 = vmatprep.subr.bf16.mxu0 %v3752
        %5835 = vmatpush1.bf16.msra.mxu0 %v3751
        %5836 = vmatprep.subr.bf16.mxu0 %v3756
        %5837 = vmatpush1.bf16.msra.mxu0 %v3755
        %5838 = vmatprep.subr.bf16.mxu0 %v3760
        %5839 = vmatpush1.bf16.msra.mxu0 %v3759
        %5840 = vmatprep.subr.bf16.mxu0 %v3764
        %5841 = vmatpush1.bf16.msra.mxu0 %v3763
        %5842 = vmatprep.subr.bf16.mxu0 %v3768
        %5843 = vmatpush1.bf16.msra.mxu0 %v3767
        %5844 = vmatprep.subr.bf16.mxu0 %v3772
        %5845 = vmatpush1.bf16.msra.mxu0 %v3771
        %5846 = vmatprep.subr.bf16.mxu0 %v3776
        %5847 = vmatpush1.bf16.msra.mxu0 %v3775
        %5848 = vmatprep.subr.bf16.mxu0 %v3780
        %5849 = vmatpush1.bf16.msra.mxu0 %v3779
        %5850 = vmatprep.subr.bf16.mxu0 %v3784
        %5851 = vmatpush1.bf16.msra.mxu0 %v3783
        %5852 = vmatprep.subr.bf16.mxu0 %v3788
        %5853 = vmatpush1.bf16.msra.mxu0 %v3787
        %5854 = vmatprep.subr.bf16.mxu0 %v3792
        %5855 = vmatpush1.bf16.msra.mxu0 %v3791
        %5856 = vmatprep.subr.bf16.mxu0 %v3796
        %5857 = vmatpush1.bf16.msra.mxu0 %v3795
        %5858 = vmatprep.subr.bf16.mxu0 %v3800
        %5859 = vmatpush1.bf16.msra.mxu0 %v3799
        %5860 = vmatprep.subr.bf16.mxu0 %v3804
        %5861 = vmatpush1.bf16.msra.mxu0 %v3803
        %5862 = vmatprep.subr.bf16.mxu0 %v3808
        %5863 = vmatpush1.bf16.msra.mxu0 %v3807
        %5864 = vmatprep.mubr.bf16.mxu0 %v1172
        %5865 = vmatmul.mubr.bf16.gmra.mrb[0].mxu0 %v1171
        %v5866 = vpop.f32.mrb[0].mxu0
        %v5867 = vadd.f32 %v5826, %v5866
        %v5868 = vpop.f32.mrb[0].mxu0
        %v5869 = vadd.f32 %v5828, %v5868
        %v5870 = vpop.f32.mrb[0].mxu0
        %v5871 = vpop.f32.mrb[0].mxu0
        %5872 = vdwg.mxu0
        %5873 = vmatprep.subr.bf16.mxu0 %v3812
        %5874 = vmatpush1.bf16.msra.mxu0 %v3811
        %5875 = vmatprep.subr.bf16.mxu0 %v3816
        %5876 = vmatpush1.bf16.msra.mxu0 %v3815
        %5877 = vmatprep.subr.bf16.mxu0 %v3820
        %5878 = vmatpush1.bf16.msra.mxu0 %v3819
        %5879 = vmatprep.subr.bf16.mxu0 %v3824
        %5880 = vmatpush1.bf16.msra.mxu0 %v3823
        %5881 = vmatprep.subr.bf16.mxu0 %v3828
        %5882 = vmatpush1.bf16.msra.mxu0 %v3827
        %5883 = vmatprep.subr.bf16.mxu0 %v3832
        %5884 = vmatpush1.bf16.msra.mxu0 %v3831
        %5885 = vmatprep.subr.bf16.mxu0 %v3836
        %5886 = vmatpush1.bf16.msra.mxu0 %v3835
        %5887 = vmatprep.subr.bf16.mxu0 %v3840
        %5888 = vmatpush1.bf16.msra.mxu0 %v3839
        %5889 = vmatprep.subr.bf16.mxu0 %v3844
        %5890 = vmatpush1.bf16.msra.mxu0 %v3843
        %5891 = vmatprep.subr.bf16.mxu0 %v3848
        %5892 = vmatpush1.bf16.msra.mxu0 %v3847
        %5893 = vmatprep.subr.bf16.mxu0 %v3852
        %5894 = vmatpush1.bf16.msra.mxu0 %v3851
        %5895 = vmatprep.subr.bf16.mxu0 %v3856
        %5896 = vmatpush1.bf16.msra.mxu0 %v3855
        %5897 = vmatprep.subr.bf16.mxu0 %v3860
        %5898 = vmatpush1.bf16.msra.mxu0 %v3859
        %5899 = vmatprep.subr.bf16.mxu0 %v3864
        %5900 = vmatpush1.bf16.msra.mxu0 %v3863
        %5901 = vmatprep.subr.bf16.mxu0 %v3868
        %5902 = vmatpush1.bf16.msra.mxu0 %v3867
        %5903 = vmatprep.subr.bf16.mxu0 %v3872
        %5904 = vmatpush1.bf16.msra.mxu0 %v3871
        %5905 = vmatprep.mubr.bf16.mxu0 %v1174
        %5906 = vmatmul.mubr.bf16.gmra.mrb[0].mxu0 %v1173
        %v5907 = vpop.f32.mrb[0].mxu0
        %v5908 = vadd.f32 %v5867, %v5907
        %v5909 = vpop.f32.mrb[0].mxu0
        %v5910 = vadd.f32 %v5869, %v5909
        %v5911 = vpop.f32.mrb[0].mxu0
        %v5912 = vpop.f32.mrb[0].mxu0
        %5913 = vdwg.mxu0
        %5914 = vmatprep.subr.bf16.mxu0 %v3876
        %5915 = vmatpush1.bf16.msra.mxu0 %v3875
        %5916 = vmatprep.subr.bf16.mxu0 %v3880
        %5917 = vmatpush1.bf16.msra.mxu0 %v3879
        %5918 = vmatprep.subr.bf16.mxu0 %v3884
        %5919 = vmatpush1.bf16.msra.mxu0 %v3883
        %5920 = vmatprep.subr.bf16.mxu0 %v3888
        %5921 = vmatpush1.bf16.msra.mxu0 %v3887
        %5922 = vmatprep.subr.bf16.mxu0 %v3892
        %5923 = vmatpush1.bf16.msra.mxu0 %v3891
        %5924 = vmatprep.subr.bf16.mxu0 %v3896
        %5925 = vmatpush1.bf16.msra.mxu0 %v3895
        %5926 = vmatprep.subr.bf16.mxu0 %v3900
        %5927 = vmatpush1.bf16.msra.mxu0 %v3899
        %5928 = vmatprep.subr.bf16.mxu0 %v3904
        %5929 = vmatpush1.bf16.msra.mxu0 %v3903
        %5930 = vmatprep.subr.bf16.mxu0 %v3908
        %5931 = vmatpush1.bf16.msra.mxu0 %v3907
        %5932 = vmatprep.subr.bf16.mxu0 %v3912
        %5933 = vmatpush1.bf16.msra.mxu0 %v3911
        %5934 = vmatprep.subr.bf16.mxu0 %v3916
        %5935 = vmatpush1.bf16.msra.mxu0 %v3915
        %5936 = vmatprep.subr.bf16.mxu0 %v3920
        %5937 = vmatpush1.bf16.msra.mxu0 %v3919
        %5938 = vmatprep.subr.bf16.mxu0 %v3924
        %5939 = vmatpush1.bf16.msra.mxu0 %v3923
        %5940 = vmatprep.subr.bf16.mxu0 %v3928
        %5941 = vmatpush1.bf16.msra.mxu0 %v3927
        %5942 = vmatprep.subr.bf16.mxu0 %v3932
        %5943 = vmatpush1.bf16.msra.mxu0 %v3931
        %5944 = vmatprep.subr.bf16.mxu0 %v3936
        %5945 = vmatpush1.bf16.msra.mxu0 %v3935
        %5946 = vmatprep.mubr.bf16.mxu0 %v1176
        %5947 = vmatmul.mubr.bf16.gmra.mrb[0].mxu0 %v1175
        %v5948 = vpop.f32.mrb[0].mxu0
        %v5949 = vadd.f32 %v5908, %v5948
        %v5950 = vpop.f32.mrb[0].mxu0
        %v5951 = vadd.f32 %v5910, %v5950
        %v5952 = vpop.f32.mrb[0].mxu0
        %v5953 = vpop.f32.mrb[0].mxu0
        %5954 = vdwg.mxu0
        %5955 = vmatprep.subr.bf16.mxu0 %v3940
        %5956 = vmatpush1.bf16.msra.mxu0 %v3939
        %5957 = vmatprep.subr.bf16.mxu0 %v3944
        %5958 = vmatpush1.bf16.msra.mxu0 %v3943
        %5959 = vmatprep.subr.bf16.mxu0 %v3948
        %5960 = vmatpush1.bf16.msra.mxu0 %v3947
        %5961 = vmatprep.subr.bf16.mxu0 %v3952
        %5962 = vmatpush1.bf16.msra.mxu0 %v3951
        %5963 = vmatprep.subr.bf16.mxu0 %v3956
        %5964 = vmatpush1.bf16.msra.mxu0 %v3955
        %5965 = vmatprep.subr.bf16.mxu0 %v3960
        %5966 = vmatpush1.bf16.msra.mxu0 %v3959
        %5967 = vmatprep.subr.bf16.mxu0 %v3964
        %5968 = vmatpush1.bf16.msra.mxu0 %v3963
        %5969 = vmatprep.subr.bf16.mxu0 %v3968
        %5970 = vmatpush1.bf16.msra.mxu0 %v3967
        %5971 = vmatprep.subr.bf16.mxu0 %v3972
        %5972 = vmatpush1.bf16.msra.mxu0 %v3971
        %5973 = vmatprep.subr.bf16.mxu0 %v3976
        %5974 = vmatpush1.bf16.msra.mxu0 %v3975
        %5975 = vmatprep.subr.bf16.mxu0 %v3980
        %5976 = vmatpush1.bf16.msra.mxu0 %v3979
        %5977 = vmatprep.subr.bf16.mxu0 %v3984
        %5978 = vmatpush1.bf16.msra.mxu0 %v3983
        %5979 = vmatprep.subr.bf16.mxu0 %v3988
        %5980 = vmatpush1.bf16.msra.mxu0 %v3987
        %5981 = vmatprep.subr.bf16.mxu0 %v3992
        %5982 = vmatpush1.bf16.msra.mxu0 %v3991
        %5983 = vmatprep.subr.bf16.mxu0 %v3996
        %5984 = vmatpush1.bf16.msra.mxu0 %v3995
        %5985 = vmatprep.subr.bf16.mxu0 %v4000
        %5986 = vmatpush1.bf16.msra.mxu0 %v3999
        %5987 = vmatprep.mubr.bf16.mxu0 %v1178
        %5988 = vmatmul.mubr.bf16.gmra.mrb[0].mxu0 %v1177
        %v5989 = vpop.f32.mrb[0].mxu0
        %v5990 = vadd.f32 %v5949, %v5989
        %v5991 = vpop.f32.mrb[0].mxu0
        %v5992 = vadd.f32 %v5951, %v5991
        %v5993 = vpop.f32.mrb[0].mxu0
        %v5994 = vpop.f32.mrb[0].mxu0
        %5995 = vdwg.mxu0
        %5996 = vmatprep.subr.bf16.mxu0 %v4004
        %5997 = vmatpush1.bf16.msra.mxu0 %v4003
        %5998 = vmatprep.subr.bf16.mxu0 %v4008
        %5999 = vmatpush1.bf16.msra.mxu0 %v4007
        %6000 = vmatprep.subr.bf16.mxu0 %v4012
        %6001 = vmatpush1.bf16.msra.mxu0 %v4011
        %6002 = vmatprep.subr.bf16.mxu0 %v4016
        %6003 = vmatpush1.bf16.msra.mxu0 %v4015
        %6004 = vmatprep.subr.bf16.mxu0 %v4020
        %6005 = vmatpush1.bf16.msra.mxu0 %v4019
        %6006 = vmatprep.subr.bf16.mxu0 %v4024
        %6007 = vmatpush1.bf16.msra.mxu0 %v4023
        %6008 = vmatprep.subr.bf16.mxu0 %v4028
        %6009 = vmatpush1.bf16.msra.mxu0 %v4027
        %6010 = vmatprep.subr.bf16.mxu0 %v4032
        %6011 = vmatpush1.bf16.msra.mxu0 %v4031
        %6012 = vmatprep.subr.bf16.mxu0 %v4036
        %6013 = vmatpush1.bf16.msra.mxu0 %v4035
        %6014 = vmatprep.subr.bf16.mxu0 %v4040
        %6015 = vmatpush1.bf16.msra.mxu0 %v4039
        %6016 = vmatprep.subr.bf16.mxu0 %v4044
        %6017 = vmatpush1.bf16.msra.mxu0 %v4043
        %6018 = vmatprep.subr.bf16.mxu0 %v4048
        %6019 = vmatpush1.bf16.msra.mxu0 %v4047
        %6020 = vmatprep.subr.bf16.mxu0 %v4052
        %6021 = vmatpush1.bf16.msra.mxu0 %v4051
        %6022 = vmatprep.subr.bf16.mxu0 %v4056
        %6023 = vmatpush1.bf16.msra.mxu0 %v4055
        %6024 = vmatprep.subr.bf16.mxu0 %v4060
        %6025 = vmatpush1.bf16.msra.mxu0 %v4059
        %6026 = vmatprep.subr.bf16.mxu0 %v4064
        %6027 = vmatpush1.bf16.msra.mxu0 %v4063
        %6028 = vmatprep.mubr.bf16.mxu0 %v1180
        %6029 = vmatmul.mubr.bf16.gmra.mrb[0].mxu0 %v1179
        %v6030 = vpop.f32.mrb[0].mxu0
        %v6031 = vadd.f32 %v5990, %v6030
        %v6032 = vpop.f32.mrb[0].mxu0
        %v6033 = vadd.f32 %v5992, %v6032
        %v6034 = vpop.f32.mrb[0].mxu0
        %v6035 = vpop.f32.mrb[0].mxu0
        %6036 = vdwg.mxu0
        %6037 = vmatprep.subr.bf16.mxu0 %v4068
        %6038 = vmatpush1.bf16.msra.mxu0 %v4067
        %6039 = vmatprep.subr.bf16.mxu0 %v4072
        %6040 = vmatpush1.bf16.msra.mxu0 %v4071
        %6041 = vmatprep.subr.bf16.mxu0 %v4076
        %6042 = vmatpush1.bf16.msra.mxu0 %v4075
        %6043 = vmatprep.subr.bf16.mxu0 %v4080
        %6044 = vmatpush1.bf16.msra.mxu0 %v4079
        %6045 = vmatprep.subr.bf16.mxu0 %v4084
        %6046 = vmatpush1.bf16.msra.mxu0 %v4083
        %6047 = vmatprep.subr.bf16.mxu0 %v4088
        %6048 = vmatpush1.bf16.msra.mxu0 %v4087
        %6049 = vmatprep.subr.bf16.mxu0 %v4092
        %6050 = vmatpush1.bf16.msra.mxu0 %v4091
        %6051 = vmatprep.subr.bf16.mxu0 %v4096
        %6052 = vmatpush1.bf16.msra.mxu0 %v4095
        %6053 = vmatprep.subr.bf16.mxu0 %v4100
        %6054 = vmatpush1.bf16.msra.mxu0 %v4099
        %6055 = vmatprep.subr.bf16.mxu0 %v4104
        %6056 = vmatpush1.bf16.msra.mxu0 %v4103
        %6057 = vmatprep.subr.bf16.mxu0 %v4108
        %6058 = vmatpush1.bf16.msra.mxu0 %v4107
        %6059 = vmatprep.subr.bf16.mxu0 %v4112
        %6060 = vmatpush1.bf16.msra.mxu0 %v4111
        %6061 = vmatprep.subr.bf16.mxu0 %v4116
        %6062 = vmatpush1.bf16.msra.mxu0 %v4115
        %6063 = vmatprep.subr.bf16.mxu0 %v4120
        %6064 = vmatpush1.bf16.msra.mxu0 %v4119
        %6065 = vmatprep.subr.bf16.mxu0 %v4124
        %6066 = vmatpush1.bf16.msra.mxu0 %v4123
        %6067 = vmatprep.subr.bf16.mxu0 %v4128
        %6068 = vmatpush1.bf16.msra.mxu0 %v4127
        %6069 = vmatprep.mubr.bf16.mxu0 %v1182
        %6070 = vmatmul.mubr.bf16.gmra.mrb[0].mxu0 %v1181
        %v6071 = vpop.f32.mrb[0].mxu0
        %v6072 = vadd.f32 %v6031, %v6071
        %v6073 = vpop.f32.mrb[0].mxu0
        %v6074 = vadd.f32 %v6033, %v6073
        %v6075 = vpop.f32.mrb[0].mxu0
        %v6076 = vpop.f32.mrb[0].mxu0
        %6077 = vdwg.mxu0
        %6078 = vmatprep.subr.bf16.mxu0 %v4132
        %6079 = vmatpush1.bf16.msra.mxu0 %v4131
        %6080 = vmatprep.subr.bf16.mxu0 %v4136
        %6081 = vmatpush1.bf16.msra.mxu0 %v4135
        %6082 = vmatprep.subr.bf16.mxu0 %v4140
        %6083 = vmatpush1.bf16.msra.mxu0 %v4139
        %6084 = vmatprep.subr.bf16.mxu0 %v4144
        %6085 = vmatpush1.bf16.msra.mxu0 %v4143
        %6086 = vmatprep.subr.bf16.mxu0 %v4148
        %6087 = vmatpush1.bf16.msra.mxu0 %v4147
        %6088 = vmatprep.subr.bf16.mxu0 %v4152
        %6089 = vmatpush1.bf16.msra.mxu0 %v4151
        %6090 = vmatprep.subr.bf16.mxu0 %v4156
        %6091 = vmatpush1.bf16.msra.mxu0 %v4155
        %6092 = vmatprep.subr.bf16.mxu0 %v4160
        %6093 = vmatpush1.bf16.msra.mxu0 %v4159
        %6094 = vmatprep.subr.bf16.mxu0 %v4164
        %6095 = vmatpush1.bf16.msra.mxu0 %v4163
        %6096 = vmatprep.subr.bf16.mxu0 %v4168
        %6097 = vmatpush1.bf16.msra.mxu0 %v4167
        %6098 = vmatprep.subr.bf16.mxu0 %v4172
        %6099 = vmatpush1.bf16.msra.mxu0 %v4171
        %6100 = vmatprep.subr.bf16.mxu0 %v4176
        %6101 = vmatpush1.bf16.msra.mxu0 %v4175
        %6102 = vmatprep.subr.bf16.mxu0 %v4180
        %6103 = vmatpush1.bf16.msra.mxu0 %v4179
        %6104 = vmatprep.subr.bf16.mxu0 %v4184
        %6105 = vmatpush1.bf16.msra.mxu0 %v4183
        %6106 = vmatprep.subr.bf16.mxu0 %v4188
        %6107 = vmatpush1.bf16.msra.mxu0 %v4187
        %6108 = vmatprep.subr.bf16.mxu0 %v4192
        %6109 = vmatpush1.bf16.msra.mxu0 %v4191
        %6110 = vmatprep.mubr.bf16.mxu0 %v1184
        %6111 = vmatmul.mubr.bf16.gmra.mrb[0].mxu0 %v1183
        %v6112 = vpop.f32.mrb[0].mxu0
        %v6113 = vadd.f32 %v6072, %v6112
        %v6114 = vpop.f32.mrb[0].mxu0
        %v6115 = vadd.f32 %v6074, %v6114
        %v6116 = vpop.f32.mrb[0].mxu0
        %v6117 = vpop.f32.mrb[0].mxu0
        %6118 = vdwg.mxu0
        %6119 = vmatprep.subr.bf16.mxu0 %v4196
        %6120 = vmatpush1.bf16.msra.mxu0 %v4195
        %6121 = vmatprep.subr.bf16.mxu0 %v4200
        %6122 = vmatpush1.bf16.msra.mxu0 %v4199
        %6123 = vmatprep.subr.bf16.mxu0 %v4204
        %6124 = vmatpush1.bf16.msra.mxu0 %v4203
        %6125 = vmatprep.subr.bf16.mxu0 %v4208
        %6126 = vmatpush1.bf16.msra.mxu0 %v4207
        %6127 = vmatprep.subr.bf16.mxu0 %v4212
        %6128 = vmatpush1.bf16.msra.mxu0 %v4211
        %6129 = vmatprep.subr.bf16.mxu0 %v4216
        %6130 = vmatpush1.bf16.msra.mxu0 %v4215
        %6131 = vmatprep.subr.bf16.mxu0 %v4220
        %6132 = vmatpush1.bf16.msra.mxu0 %v4219
        %6133 = vmatprep.subr.bf16.mxu0 %v4224
        %6134 = vmatpush1.bf16.msra.mxu0 %v4223
        %6135 = vmatprep.subr.bf16.mxu0 %v4228
        %6136 = vmatpush1.bf16.msra.mxu0 %v4227
        %6137 = vmatprep.subr.bf16.mxu0 %v4232
        %6138 = vmatpush1.bf16.msra.mxu0 %v4231
        %6139 = vmatprep.subr.bf16.mxu0 %v4236
        %6140 = vmatpush1.bf16.msra.mxu0 %v4235
        %6141 = vmatprep.subr.bf16.mxu0 %v4240
        %6142 = vmatpush1.bf16.msra.mxu0 %v4239
        %6143 = vmatprep.subr.bf16.mxu0 %v4244
        %6144 = vmatpush1.bf16.msra.mxu0 %v4243
        %6145 = vmatprep.subr.bf16.mxu0 %v4248
        %6146 = vmatpush1.bf16.msra.mxu0 %v4247
        %6147 = vmatprep.subr.bf16.mxu0 %v4252
        %6148 = vmatpush1.bf16.msra.mxu0 %v4251
        %6149 = vmatprep.subr.bf16.mxu0 %v4256
        %6150 = vmatpush1.bf16.msra.mxu0 %v4255
        %6151 = vmatprep.mubr.bf16.mxu0 %v1186
        %6152 = vmatmul.mubr.bf16.gmra.mrb[0].mxu0 %v1185
        %v6153 = vpop.f32.mrb[0].mxu0
        %v6154 = vadd.f32 %v6113, %v6153
        %v6155 = vpop.f32.mrb[0].mxu0
        %v6156 = vadd.f32 %v6115, %v6155
        %v6157 = vpop.f32.mrb[0].mxu0
        %v6158 = vpop.f32.mrb[0].mxu0
        %6159 = vdwg.mxu0
        %6160 = vmatprep.subr.bf16.mxu0 %v4260
        %6161 = vmatpush1.bf16.msra.mxu0 %v4259
        %6162 = vmatprep.subr.bf16.mxu0 %v4264
        %6163 = vmatpush1.bf16.msra.mxu0 %v4263
        %6164 = vmatprep.subr.bf16.mxu0 %v4268
        %6165 = vmatpush1.bf16.msra.mxu0 %v4267
        %6166 = vmatprep.subr.bf16.mxu0 %v4272
        %6167 = vmatpush1.bf16.msra.mxu0 %v4271
        %6168 = vmatprep.subr.bf16.mxu0 %v4276
        %6169 = vmatpush1.bf16.msra.mxu0 %v4275
        %6170 = vmatprep.subr.bf16.mxu0 %v4280
        %6171 = vmatpush1.bf16.msra.mxu0 %v4279
        %6172 = vmatprep.subr.bf16.mxu0 %v4284
        %6173 = vmatpush1.bf16.msra.mxu0 %v4283
        %6174 = vmatprep.subr.bf16.mxu0 %v4288
        %6175 = vmatpush1.bf16.msra.mxu0 %v4287
        %6176 = vmatprep.subr.bf16.mxu0 %v4292
        %6177 = vmatpush1.bf16.msra.mxu0 %v4291
        %6178 = vmatprep.subr.bf16.mxu0 %v4296
        %6179 = vmatpush1.bf16.msra.mxu0 %v4295
        %6180 = vmatprep.subr.bf16.mxu0 %v4300
        %6181 = vmatpush1.bf16.msra.mxu0 %v4299
        %6182 = vmatprep.subr.bf16.mxu0 %v4304
        %6183 = vmatpush1.bf16.msra.mxu0 %v4303
        %6184 = vmatprep.subr.bf16.mxu0 %v4308
        %6185 = vmatpush1.bf16.msra.mxu0 %v4307
        %6186 = vmatprep.subr.bf16.mxu0 %v4312
        %6187 = vmatpush1.bf16.msra.mxu0 %v4311
        %6188 = vmatprep.subr.bf16.mxu0 %v4316
        %6189 = vmatpush1.bf16.msra.mxu0 %v4315
        %6190 = vmatprep.subr.bf16.mxu0 %v4320
        %6191 = vmatpush1.bf16.msra.mxu0 %v4319
        %6192 = vmatprep.mubr.bf16.mxu0 %v1188
        %6193 = vmatmul.mubr.bf16.gmra.mrb[0].mxu0 %v1187
        %v6194 = vpop.f32.mrb[0].mxu0
        %v6195 = vadd.f32 %v6154, %v6194
        %v6196 = vpop.f32.mrb[0].mxu0
        %v6197 = vadd.f32 %v6156, %v6196
        %v6198 = vpop.f32.mrb[0].mxu0
        %v6199 = vpop.f32.mrb[0].mxu0
        %6200 = vdwg.mxu0
        %6201 = vmatprep.subr.bf16.mxu0 %v4324
        %6202 = vmatpush1.bf16.msra.mxu0 %v4323
        %6203 = vmatprep.subr.bf16.mxu0 %v4328
        %6204 = vmatpush1.bf16.msra.mxu0 %v4327
        %6205 = vmatprep.subr.bf16.mxu0 %v4332
        %6206 = vmatpush1.bf16.msra.mxu0 %v4331
        %6207 = vmatprep.subr.bf16.mxu0 %v4336
        %6208 = vmatpush1.bf16.msra.mxu0 %v4335
        %6209 = vmatprep.subr.bf16.mxu0 %v4340
        %6210 = vmatpush1.bf16.msra.mxu0 %v4339
        %6211 = vmatprep.subr.bf16.mxu0 %v4344
        %6212 = vmatpush1.bf16.msra.mxu0 %v4343
        %6213 = vmatprep.subr.bf16.mxu0 %v4348
        %6214 = vmatpush1.bf16.msra.mxu0 %v4347
        %6215 = vmatprep.subr.bf16.mxu0 %v4352
        %6216 = vmatpush1.bf16.msra.mxu0 %v4351
        %6217 = vmatprep.subr.bf16.mxu0 %v4356
        %6218 = vmatpush1.bf16.msra.mxu0 %v4355
        %6219 = vmatprep.subr.bf16.mxu0 %v4360
        %6220 = vmatpush1.bf16.msra.mxu0 %v4359
        %6221 = vmatprep.subr.bf16.mxu0 %v4364
        %6222 = vmatpush1.bf16.msra.mxu0 %v4363
        %6223 = vmatprep.subr.bf16.mxu0 %v4368
        %6224 = vmatpush1.bf16.msra.mxu0 %v4367
        %6225 = vmatprep.subr.bf16.mxu0 %v4372
        %6226 = vmatpush1.bf16.msra.mxu0 %v4371
        %6227 = vmatprep.subr.bf16.mxu0 %v4376
        %6228 = vmatpush1.bf16.msra.mxu0 %v4375
        %6229 = vmatprep.subr.bf16.mxu0 %v4380
        %6230 = vmatpush1.bf16.msra.mxu0 %v4379
        %6231 = vmatprep.subr.bf16.mxu0 %v4384
        %6232 = vmatpush1.bf16.msra.mxu0 %v4383
        %6233 = vmatprep.mubr.bf16.mxu0 %v1190
        %6234 = vmatmul.mubr.bf16.gmra.mrb[0].mxu0 %v1189
        %v6235 = vpop.f32.mrb[0].mxu0
        %v6236 = vadd.f32 %v6195, %v6235
        %v6237 = vpop.f32.mrb[0].mxu0
        %v6238 = vadd.f32 %v6197, %v6237
        %v6239 = vpop.f32.mrb[0].mxu0
        %v6240 = vpop.f32.mrb[0].mxu0
        %6241 = vdwg.mxu0
        %6242 = vmatprep.subr.bf16.mxu0 %v4388
        %6243 = vmatpush1.bf16.msra.mxu0 %v4387
        %6244 = vmatprep.subr.bf16.mxu0 %v4392
        %6245 = vmatpush1.bf16.msra.mxu0 %v4391
        %6246 = vmatprep.subr.bf16.mxu0 %v4396
        %6247 = vmatpush1.bf16.msra.mxu0 %v4395
        %6248 = vmatprep.subr.bf16.mxu0 %v4400
        %6249 = vmatpush1.bf16.msra.mxu0 %v4399
        %6250 = vmatprep.subr.bf16.mxu0 %v4404
        %6251 = vmatpush1.bf16.msra.mxu0 %v4403
        %6252 = vmatprep.subr.bf16.mxu0 %v4408
        %6253 = vmatpush1.bf16.msra.mxu0 %v4407
        %6254 = vmatprep.subr.bf16.mxu0 %v4412
        %6255 = vmatpush1.bf16.msra.mxu0 %v4411
        %6256 = vmatprep.subr.bf16.mxu0 %v4416
        %6257 = vmatpush1.bf16.msra.mxu0 %v4415
        %6258 = vmatprep.subr.bf16.mxu0 0
        %6259 = vmatpush1.bf16.msra.mxu0 0
        %6260 = vmatprep.subr.bf16.mxu0 0
        %6261 = vmatpush1.bf16.msra.mxu0 0
        %6262 = vmatprep.subr.bf16.mxu0 0
        %6263 = vmatpush1.bf16.msra.mxu0 0
        %6264 = vmatprep.subr.bf16.mxu0 0
        %6265 = vmatpush1.bf16.msra.mxu0 0
        %6266 = vmatprep.subr.bf16.mxu0 0
        %6267 = vmatpush1.bf16.msra.mxu0 0
        %6268 = vmatprep.subr.bf16.mxu0 0
        %6269 = vmatpush1.bf16.msra.mxu0 0
        %6270 = vmatprep.subr.bf16.mxu0 0
        %6271 = vmatpush1.bf16.msra.mxu0 0
        %6272 = vmatprep.subr.bf16.mxu0 0
        %6273 = vmatpush1.bf16.msra.mxu0 0
        %6274 = vmatprep.mubr.bf16.mxu0 0
        %6275 = vmatmul.mubr.bf16.gmra.mrb[0].mxu0 %v1191
        %v6276 = vpop.f32.mrb[0].mxu0
        %v6277 = vadd.f32 %v6236, %v6276
        %v6278 = vpop.f32.mrb[0].mxu0
        %v6279 = vadd.f32 %v6238, %v6278
        %v6280 = vpop.f32.mrb[0].mxu0
        %v6281 = vpop.f32.mrb[0].mxu0
        %6282 = vdwg.mxu0
        %v6283 = vadd.f32 %v312, %v5744
        %v6284 = vadd.f32 %v313, %v5746
        %v6285 = vadd.f32 %v314, %v6277
        %v6286 = vadd.f32 %v315, %v6279
        %6287 = vst [vmem:[#allocation2] sm:$0xff] %v6283
        %6288 = vst [vmem:[#allocation2 + $0x8] sm:$0xff] %v6284
        %6289 = vst [vmem:[#allocation2 + $0x10] sm:$0xff] %v6285
        %6290 = vst [vmem:[#allocation2 + $0x18] sm:$0xff] %v6286
        %p6291 = scmp.eq.s32.totalorder %s27, 7
        // Predicated region
        $region45: #{forward.8} parent=31 // pred_check
          %p6292 = pneg %p6291
        $region46: #{forward.8} parent=31 // pred_check_branch
          %6294 = sbr.rel (%p6292) target = $region48
        $region47: #{forward.8} parent=31 // pred_region
          %v6295 = vld [vmem:[#allocation2] sm:$0xff]
          %v6296 = vld [vmem:[#allocation2 + $0x8] sm:$0xff]
          %v6297 = vld [vmem:[#allocation2 + $0x10] sm:$0xff]
          %v6298 = vld [vmem:[#allocation2 + $0x18] sm:$0xff]
          %v6299 = vld [vmem:[%s239] sm:$0xf]
          %v6301 = vlaneseq
          %v6302 = vshrl.u32 %v6301, 7
          %v6303 = vsub.s32 0, %v6302
          %v6304 = vrot.slane %v6299, %v6303
          %v6305 = vlaneseq
          %v6306 = vshrl.u32 %v6305, 7
          %v6307 = vsub.s32 1, %v6306
          %v6308 = vrot.slane %v6299, %v6307
          %v6309 = vlaneseq
          %v6310 = vshrl.u32 %v6309, 7
          %v6311 = vsub.s32 2, %v6310
          %v6312 = vrot.slane %v6299, %v6311
          %v6313 = vlaneseq
          %v6314 = vshrl.u32 %v6313, 7
          %v6315 = vsub.s32 3, %v6314
          %v6316 = vrot.slane %v6299, %v6315
          %v6321 = vadd.f32 %v6295, %v6304
          %v6322 = vadd.f32 %v6296, %v6308
          %v6323 = vadd.f32 %v6297, %v6312
          %v6324 = vadd.f32 %v6298, %v6316
          %vm6325 = vcmask 1043456
          %v6326 = vsel %vm6325, %v6321, 0.0
          %v6327 = vrot.slane %v6326, 4
          %v6328 = vadd.f32 %v6326, %v6327
          %v6329 = vrot.slane %v6328, 2
          %v6330 = vadd.f32 %v6328, %v6329
          %v6331 = vrot.slane %v6330, 1
          %v6332 = vadd.f32 %v6330, %v6331
          %v6333 = vsel %vm6325, %v6322, 0.0
          %v6334 = vrot.slane %v6333, 4
          %v6335 = vadd.f32 %v6333, %v6334
          %v6336 = vrot.slane %v6335, 2
          %v6337 = vadd.f32 %v6335, %v6336
          %v6338 = vrot.slane %v6337, 1
          %v6339 = vadd.f32 %v6337, %v6338
          %v6340 = vsel %vm6325, %v6323, 0.0
          %v6341 = vrot.slane %v6340, 4
          %v6342 = vadd.f32 %v6340, %v6341
          %v6343 = vrot.slane %v6342, 2
          %v6344 = vadd.f32 %v6342, %v6343
          %v6345 = vrot.slane %v6344, 1
          %v6346 = vadd.f32 %v6344, %v6345
          %v6347 = vsel %vm6325, %v6324, 0.0
          %v6348 = vrot.slane %v6347, 4
          %v6349 = vadd.f32 %v6347, %v6348
          %v6350 = vrot.slane %v6349, 2
          %v6351 = vadd.f32 %v6349, %v6350
          %v6352 = vrot.slane %v6351, 1
          %v6353 = vadd.f32 %v6351, %v6352
          %v6354 = vrcp.pop 4.0
          %v6355 = vmul.f32 %v6332, %v6354
          %v6356 = vmul.f32 %v6339, %v6354
          %v6357 = vmul.f32 %v6346, %v6354
          %v6358 = vmul.f32 %v6353, %v6354
          %v6359 = vsub.f32 %v6321, %v6355
          %v6360 = vsub.f32 %v6322, %v6356
          %v6361 = vsub.f32 %v6323, %v6357
          %v6362 = vsub.f32 %v6324, %v6358
          %v6363 = vmul.f32 %v6359, %v6359
          %v6364 = vmul.f32 %v6360, %v6360
          %v6365 = vmul.f32 %v6361, %v6361
          %v6366 = vmul.f32 %v6362, %v6362
          %v6367 = vsel %vm6325, %v6363, 0.0
          %v6368 = vrot.slane %v6367, 4
          %v6369 = vadd.f32 %v6367, %v6368
          %v6370 = vrot.slane %v6369, 2
          %v6371 = vadd.f32 %v6369, %v6370
          %v6372 = vrot.slane %v6371, 1
          %v6373 = vadd.f32 %v6371, %v6372
          %v6374 = vsel %vm6325, %v6364, 0.0
          %v6375 = vrot.slane %v6374, 4
          %v6376 = vadd.f32 %v6374, %v6375
          %v6377 = vrot.slane %v6376, 2
          %v6378 = vadd.f32 %v6376, %v6377
          %v6379 = vrot.slane %v6378, 1
          %v6380 = vadd.f32 %v6378, %v6379
          %v6381 = vsel %vm6325, %v6365, 0.0
          %v6382 = vrot.slane %v6381, 4
          %v6383 = vadd.f32 %v6381, %v6382
          %v6384 = vrot.slane %v6383, 2
          %v6385 = vadd.f32 %v6383, %v6384
          %v6386 = vrot.slane %v6385, 1
          %v6387 = vadd.f32 %v6385, %v6386
          %v6388 = vsel %vm6325, %v6366, 0.0
          %v6389 = vrot.slane %v6388, 4
          %v6390 = vadd.f32 %v6388, %v6389
          %v6391 = vrot.slane %v6390, 2
          %v6392 = vadd.f32 %v6390, %v6391
          %v6393 = vrot.slane %v6392, 1
          %v6394 = vadd.f32 %v6392, %v6393
          %v6395 = vmul.f32 %v6373, %v6354
          %v6396 = vmul.f32 %v6380, %v6354
          %v6397 = vmul.f32 %v6387, %v6354
          %v6398 = vmul.f32 %v6394, %v6354
          %v6399 = vadd.f32 %v6395, 1e-05
          %v6400 = vadd.f32 %v6396, 1e-05
          %v6401 = vadd.f32 %v6397, 1e-05
          %v6402 = vadd.f32 %v6398, 1e-05
          %v6403 = vrsqrt.pop %v6399
          %v6404 = vrsqrt.pop %v6400
          %v6405 = vrsqrt.pop %v6401
          %v6406 = vrsqrt.pop %v6402
          %v6407 = vmul.f32 %v6359, %v6403
          %v6408 = vmul.f32 %v6360, %v6404
          %v6409 = vmul.f32 %v6361, %v6405
          %v6410 = vmul.f32 %v6362, %v6406
          %vm6411 = vcmp.ge.f32.partialorder %v6407, 0.0
          %vm6412 = vcmp.ge.f32.partialorder %v6408, 0.0
          %vm6413 = vcmp.ge.f32.partialorder %v6409, 0.0
          %vm6414 = vcmp.ge.f32.partialorder %v6410, 0.0
          %v6415 = vmul.f32 %v6407, 0.2
          %v6416 = vmul.f32 %v6408, 0.2
          %v6417 = vmul.f32 %v6409, 0.2
          %v6418 = vmul.f32 %v6410, 0.2
          %v6419 = vsel %vm6411, %v6407, %v6415
          %v6420 = vsel %vm6412, %v6408, %v6416
          %v6421 = vsel %vm6413, %v6409, %v6417
          %v6422 = vsel %vm6414, %v6410, %v6418
          %6423 = vst [vmem:[%s301] sm:$0xf] %v6419
          %6424 = vst [vmem:[%s301 + $0x8] sm:$0xf] %v6420
          %6425 = vst [vmem:[%s301 + $0x10] sm:$0xf] %v6421
          %6426 = vst [vmem:[%s301 + $0x18] sm:$0xf] %v6422
          %v6431 = vrot.slane %v6321, 4
          %v6432 = vrot.slane %v6322, 4
          %v6433 = vrot.slane %v6323, 4
          %v6434 = vrot.slane %v6324, 4
          %v6439 = vsel %vm6325, %v6431, 0.0
          %v6440 = vrot.slane %v6439, 4
          %v6441 = vadd.f32 %v6439, %v6440
          %v6442 = vrot.slane %v6441, 2
          %v6443 = vadd.f32 %v6441, %v6442
          %v6444 = vrot.slane %v6443, 1
          %v6445 = vadd.f32 %v6443, %v6444
          %v6446 = vsel %vm6325, %v6432, 0.0
          %v6447 = vrot.slane %v6446, 4
          %v6448 = vadd.f32 %v6446, %v6447
          %v6449 = vrot.slane %v6448, 2
          %v6450 = vadd.f32 %v6448, %v6449
          %v6451 = vrot.slane %v6450, 1
          %v6452 = vadd.f32 %v6450, %v6451
          %v6453 = vsel %vm6325, %v6433, 0.0
          %v6454 = vrot.slane %v6453, 4
          %v6455 = vadd.f32 %v6453, %v6454
          %v6456 = vrot.slane %v6455, 2
          %v6457 = vadd.f32 %v6455, %v6456
          %v6458 = vrot.slane %v6457, 1
          %v6459 = vadd.f32 %v6457, %v6458
          %v6460 = vsel %vm6325, %v6434, 0.0
          %v6461 = vrot.slane %v6460, 4
          %v6462 = vadd.f32 %v6460, %v6461
          %v6463 = vrot.slane %v6462, 2
          %v6464 = vadd.f32 %v6462, %v6463
          %v6465 = vrot.slane %v6464, 1
          %v6466 = vadd.f32 %v6464, %v6465
          %v6467 = vmul.f32 %v6445, %v6354
          %v6468 = vmul.f32 %v6452, %v6354
          %v6469 = vmul.f32 %v6459, %v6354
          %v6470 = vmul.f32 %v6466, %v6354
          %v6471 = vsub.f32 %v6321, %v6467
          %v6472 = vsub.f32 %v6322, %v6468
          %v6473 = vsub.f32 %v6323, %v6469
          %v6474 = vsub.f32 %v6324, %v6470
          %v6475 = vmul.f32 %v6471, %v6471
          %v6476 = vmul.f32 %v6472, %v6472
          %v6477 = vmul.f32 %v6473, %v6473
          %v6478 = vmul.f32 %v6474, %v6474
          %v6483 = vrot.slane %v6475, 4
          %v6484 = vrot.slane %v6476, 4
          %v6485 = vrot.slane %v6477, 4
          %v6486 = vrot.slane %v6478, 4
          %v6491 = vsel %vm6325, %v6483, 0.0
          %v6492 = vrot.slane %v6491, 4
          %v6493 = vadd.f32 %v6491, %v6492
          %v6494 = vrot.slane %v6493, 2
          %v6495 = vadd.f32 %v6493, %v6494
          %v6496 = vrot.slane %v6495, 1
          %v6497 = vadd.f32 %v6495, %v6496
          %v6498 = vsel %vm6325, %v6484, 0.0
          %v6499 = vrot.slane %v6498, 4
          %v6500 = vadd.f32 %v6498, %v6499
          %v6501 = vrot.slane %v6500, 2
          %v6502 = vadd.f32 %v6500, %v6501
          %v6503 = vrot.slane %v6502, 1
          %v6504 = vadd.f32 %v6502, %v6503
          %v6505 = vsel %vm6325, %v6485, 0.0
          %v6506 = vrot.slane %v6505, 4
          %v6507 = vadd.f32 %v6505, %v6506
          %v6508 = vrot.slane %v6507, 2
          %v6509 = vadd.f32 %v6507, %v6508
          %v6510 = vrot.slane %v6509, 1
          %v6511 = vadd.f32 %v6509, %v6510
          %v6512 = vsel %vm6325, %v6486, 0.0
          %v6513 = vrot.slane %v6512, 4
          %v6514 = vadd.f32 %v6512, %v6513
          %v6515 = vrot.slane %v6514, 2
          %v6516 = vadd.f32 %v6514, %v6515
          %v6517 = vrot.slane %v6516, 1
          %v6518 = vadd.f32 %v6516, %v6517
          %v6519 = vmul.f32 %v6497, %v6354
          %v6520 = vmul.f32 %v6504, %v6354
          %v6521 = vmul.f32 %v6511, %v6354
          %v6522 = vmul.f32 %v6518, %v6354
          %v6523 = vadd.f32 %v6519, 1e-05
          %v6524 = vadd.f32 %v6520, 1e-05
          %v6525 = vadd.f32 %v6521, 1e-05
          %v6526 = vadd.f32 %v6522, 1e-05
          %v6527 = vrsqrt.pop %v6523
          %v6528 = vrsqrt.pop %v6524
          %v6529 = vrsqrt.pop %v6525
          %v6530 = vrsqrt.pop %v6526
          %v6531 = vmul.f32 %v6471, %v6527
          %v6532 = vmul.f32 %v6472, %v6528
          %v6533 = vmul.f32 %v6473, %v6529
          %v6534 = vmul.f32 %v6474, %v6530
          %vm6535 = vcmp.ge.f32.partialorder %v6531, 0.0
          %vm6536 = vcmp.ge.f32.partialorder %v6532, 0.0
          %vm6537 = vcmp.ge.f32.partialorder %v6533, 0.0
          %vm6538 = vcmp.ge.f32.partialorder %v6534, 0.0
          %v6539 = vmul.f32 %v6531, 0.2
          %v6540 = vmul.f32 %v6532, 0.2
          %v6541 = vmul.f32 %v6533, 0.2
          %v6542 = vmul.f32 %v6534, 0.2
          %v6543 = vsel %vm6535, %v6531, %v6539
          %v6544 = vsel %vm6536, %v6532, %v6540
          %v6545 = vsel %vm6537, %v6533, %v6541
          %v6546 = vsel %vm6538, %v6534, %v6542
          %6547 = vst [vmem:[%s301] sm:$0xf0] %v6543
          %6548 = vst [vmem:[%s301 + $0x8] sm:$0xf0] %v6544
          %6549 = vst [vmem:[%s301 + $0x10] sm:$0xf0] %v6545
          %6550 = vst [vmem:[%s301 + $0x18] sm:$0xf0] %v6546
        $region48: #{forward.8} parent=31 // pred_fallthru
          _
        %s6551 = smul.u32 4, %s26
        %p6552 = scmp.lt.s32.totalorder %s25, 0
        %s6553 = scalar_select %p6552, %s25, 0
        %p6554 = scmp.lt.s32.totalorder %s6551, 7
        %s6555 = scalar_select %p6554, %s6551, 7
        %s6556 = smul.addr %s6553, 8
        %s6557 = sadd.s32 %s6555, %s6556
        %s6558 = smul.addr %s6557, 8
        %s6559 = scalar_lea.vmem %s3, %s6558
        // Predicated region
        $region49: #{forward.8} parent=31 // pred_check
          %p6560 = pneg %p141
        $region50: #{forward.8} parent=31 // pred_check_branch
          %6562 = sbr.rel (%p6560) target = $region52
        $region51: #{forward.8} parent=31 // pred_region
          %s6563 = smul.u32 4, %s26
        $region52: #{forward.8} parent=31 // pred_fallthru
          _
      $region32: #{forward.8} parent=5 // pred_fallthru
        _
      %p6564 = scmp.le.s32.totalorder 2, %s15
      // Predicated region
      $region53: #{forward.8} parent=5 // pred_check
        %p6565 = pneg %p6564
      $region54: #{forward.8} parent=5 // pred_check_branch
        %6567 = sbr.rel (%p6565) target = $region56
      $region55: #{forward.8} parent=5 // pred_region
        %s6568 = ssub.s32 %s15, 2
        // Predicated region
        $region57: #{forward.8} parent=55 // pred_check
          %p6569 = pneg %p147
        $region58: #{forward.8} parent=55 // pred_check_branch
          %6571 = sbr.rel (%p6569) target = $region60
        $region59: #{forward.8} parent=55 // pred_region
          %s6572 = smul.u32 4, %s29
          %p6573 = scmp.lt.s32.totalorder %s28, 0
          %s6574 = scalar_select %p6573, %s28, 0
          %p6575 = scmp.lt.s32.totalorder %s6572, 7
          %s6576 = scalar_select %p6575, %s6572, 7
          %s6577 = smul.addr %s6574, 8
          %s6578 = sadd.s32 %s6576, %s6577
          %s6579 = smul.addr %s6578, 8
          %s6580 = scalar_lea.vmem %s3, %s6579
        $region60: #{forward.8} parent=55 // pred_fallthru
          _
      $region56: #{forward.8} parent=5 // pred_fallthru
        _
    $region6: #{forward.8} parent=1 // loop_footer
      %s19 = sadd.s32 1, %s15
    $region7: #{forward.8} parent=1 // loop_footer_branch
      %14 = sbr.rel target = $region3
    $region8: #{forward.8} parent=1 // loop_exit
      _
    %6581 = vsyncpa [#allocation4], 1
    %s6582 = scalar_lea.sflag [#allocation4], 1
    %6583 = vsyncpa %s6582, 1
    %6584 = vsyncpa [#allocation6], 1
    %s6585 = scalar_lea.sflag [#allocation6], 1
    %6586 = vsyncpa %s6585, 1

</llo_original>
